<compile_context>
chip_gen: v7x
topology: tpu7x:2x2x1
jax: 0.10.0
libtpu: 0.0.40
codegen_flags: <defaults>
</compile_context>

<pallas_src>
import numpy as np
import jax
import jax.numpy as jnp
from jax.experimental import pallas as pl
from jax.experimental.pallas import tpu as pltpu


# ---------------------------------------------------------------------------
# Kernel A: conv1 -> ReLU -> maxpool(2,1) -> conv2 -> ReLU -> maxpool(2,1)
# Folded-lane layout: activations are (Bb, 32 rows, W*C lanes).
# ---------------------------------------------------------------------------
def conv_block_kernel(x_ref, w1_ref, b1_ref, w2_ref, b2_ref, o_ref):
    # x_ref : (Bb, 32, 28) f32   input rows 0..27 valid, rows 28..31 zero pad
    # w1_ref: (2, 28, 512) f32   conv1, folded: W1[dy][wx, j*16+c] = w1[c,0,dy,wx-j]
    # b1_ref: (1, 512)     f32   conv1 bias tiled over the 16-lane channel groups
    # w2_ref: (2, 496, 896) f32  conv2, folded: W2[dy][(j+dx)*16+ci, j*32+co] = w2[co,ci,dy,dx]
    # b2_ref: (1, 896)     f32
    # o_ref : (Bb, 24, 768) bf16 pooled conv2 output, lane = w*32 + c (NHWC flatten order)
    bb = x_ref.shape[0]

    def shift_rows(a):  # new[:, i, :] = a[:, i+1, :]; wrapped last row only feeds padding
        return jnp.concatenate([a[:, 1:, :], a[:, :1, :]], axis=1)

    # ---- conv1 (2x2, 1->16): two aligned matmuls, rows=(b,h), lanes=w*16+c ----
    x = x_ref[...]
    x1 = shift_rows(x)
    h1 = jnp.dot(x.reshape(bb * 32, 28), w1_ref[0],
                 preferred_element_type=jnp.float32)
    h1 = h1 + jnp.dot(x1.reshape(bb * 32, 28), w1_ref[1],
                      preferred_element_type=jnp.float32)
    h1 = jnp.maximum(h1.reshape(bb, 32, 512) + b1_ref[...], 0.0)
    # valid: rows 0..26, lanes 0..431 (w = 0..26, c = 0..15)

    # ---- maxpool1 (2x2, stride 1): w+1 == lane shift by 16, h+1 == row shift --
    mw = jnp.maximum(h1[:, :, :496], h1[:, :, 16:])                # (Bb, 32, 496)
    p1 = jnp.maximum(mw, shift_rows(mw))
    # valid: rows 0..25, lanes 0..415 (w = 0..25, c = 0..15)

    # ---- conv2 (2x2, 16->32): two aligned matmuls, K = 496, N = 896 -----------
    p1s = shift_rows(p1)
    h2 = jnp.dot(p1.reshape(bb * 32, 496), w2_ref[0],
                 preferred_element_type=jnp.float32)
    h2 = h2 + jnp.dot(p1s.reshape(bb * 32, 496), w2_ref[1],
                      preferred_element_type=jnp.float32)
    h2 = jnp.maximum(h2.reshape(bb, 32, 896) + b2_ref[...], 0.0)
    # valid: rows 0..24, lanes 0..799 (w = 0..24, c = 0..31)

    # ---- maxpool2 (2x2, stride 1): w+1 == lane shift by 32, h+1 == row shift --
    mw2 = jnp.maximum(h2[:, :, :864], h2[:, :, 32:])               # (Bb, 32, 864)
    p2 = jnp.maximum(mw2, shift_rows(mw2))

    # ---- lane-dense store (768 = 6*128 lanes), NHWC flatten order -------------
    o_ref[...] = p2[:, :24, :768].astype(o_ref.dtype)


def conv_block(xpad, w1, b1, w2, b2, *, block_b):
    B = xpad.shape[0]
    assert B % block_b == 0
    return pl.pallas_call(
        conv_block_kernel,
        out_shape=jax.ShapeDtypeStruct((B, 24, 768), jnp.bfloat16),
        grid=(B // block_b,),
        in_specs=[
            pl.BlockSpec((block_b, 32, 28), lambda i: (i, 0, 0)),
            pl.BlockSpec((2, 28, 512), lambda i: (0, 0, 0)),
            pl.BlockSpec((1, 512), lambda i: (0, 0)),
            pl.BlockSpec((2, 496, 896), lambda i: (0, 0, 0)),
            pl.BlockSpec((1, 896), lambda i: (0, 0)),
        ],
        out_specs=pl.BlockSpec((block_b, 24, 768), lambda i: (i, 0, 0)),
        compiler_params=pltpu.CompilerParams(
            dimension_semantics=("parallel",),
            vmem_limit_bytes=48 * 1024 * 1024),   # v7x-safe (64 MiB physical)
    )(xpad, w1, b1, w2, b2)


# ---------------------------------------------------------------------------
# Kernel B: fc1 (bf16 weight, K-tiled) -> ReLU -> fc2 (padded 128 lanes) -> log_softmax
# ---------------------------------------------------------------------------
def dense_block_kernel(flat_ref, wf1_ref, bf1_ref, wf2_ref, bf2_ref, o_ref, acc_ref):
    k = pl.program_id(1)

    @pl.when(k == 0)
    def _():
        acc_ref[...] = jnp.zeros_like(acc_ref)

    # fc1 partial product for this K tile (bf16 weight/activation, f32 accumulate).
    acc_ref[...] += jnp.dot(flat_ref[...], wf1_ref[...],
                            preferred_element_type=jnp.float32)

    @pl.when(k == pl.num_programs(1) - 1)
    def _():
        h = jnp.maximum(acc_ref[...] + bf1_ref[...], 0.0)                    # (bm, 128)
        logits = jnp.dot(h, wf2_ref[...],
                         preferred_element_type=jnp.float32) + bf2_ref[...]  # (bm, 128)
        # Padded classes (cols 10..127) carry a -1e30 bias -> exp underflows to 0,
        # so log-softmax over 128 lanes == log-softmax over the 10 real classes.
        m = jnp.max(logits, axis=-1, keepdims=True)
        z = logits - m
        lse = jnp.log(jnp.sum(jnp.exp(z), axis=-1, keepdims=True))
        o_ref[...] = (z - lse).astype(o_ref.dtype)


def dense_block(flat, wf1, bf1, wf2, bf2, *, block_k=6144, block_m=256):
    B, K = flat.shape
    assert K % block_k == 0
    bm = block_m if (B % block_m == 0) else B   # M-tile only when it divides evenly
    return pl.pallas_call(
        dense_block_kernel,
        out_shape=jax.ShapeDtypeStruct((B, 128), jnp.float32),
        grid=(B // bm, K // block_k),           # K (reduction) is the innermost axis
        in_specs=[
            pl.BlockSpec((bm, block_k), lambda i, k: (i, k)),
            pl.BlockSpec((block_k, 128), lambda i, k: (k, 0)),
            pl.BlockSpec((1, 128), lambda i, k: (0, 0)),
            pl.BlockSpec((128, 128), lambda i, k: (0, 0)),
            pl.BlockSpec((1, 128), lambda i, k: (0, 0)),
        ],
        out_specs=pl.BlockSpec((bm, 128), lambda i, k: (i, 0)),
        scratch_shapes=[pltpu.VMEM((bm, 128), jnp.float32)],
        compiler_params=pltpu.CompilerParams(
            dimension_semantics=("parallel", "arbitrary"),
            vmem_limit_bytes=32 * 1024 * 1024),
    )(flat, wf1, bf1, wf2, bf2)


# ---------------------------------------------------------------------------
# Full forward
# ---------------------------------------------------------------------------
def _pick_block_b(B):
    # Prefer the largest batch block that fits VMEM; only split the grid further
    # when the device actually has more than one core to feed.
    try:
        n_cores = max(int(getattr(jax.devices()[0], "num_cores", 1)), 1)
    except Exception:  # pragma: no cover
        n_cores = 1
    for bb in (16, 8, 4, 2, 1):
        if B % bb == 0 and (B // bb >= n_cores or bb == 1):
            return bb
    return 1


@jax.jit
def net_forward(x_nchw, kp):
    """x_nchw: (B, 1, 28, 28) f32; kp: kernel-layout params from prepare_params."""
    B = x_nchw.shape[0]
    assert x_nchw.shape[1:] == (1, 28, 28), "fc1=Linear(18432,...) requires 1x28x28 input"
    x = x_nchw.reshape(B, 28, 28)                          # drop Cin=1 (free)
    xpad = jnp.pad(x, ((0, 0), (0, 4), (0, 0)))            # H: 28 -> 32 (sublane aligned)
    pooled = conv_block(xpad, kp["w1"], kp["b1"], kp["w2"], kp["b2"],
                        block_b=_pick_block_b(B))          # (B, 24, 768) bf16
    flat = pooled.reshape(B, 24 * 768)                     # free reshape, NHWC order
    out = dense_block(flat, kp["wf1"], kp["bf1"], kp["wf2"], kp["bf2"])
    return out[:, :10]                                     # drop lane padding


# ---------------------------------------------------------------------------
# One-time parameter re-layout (PyTorch layout -> kernel layout)
# ---------------------------------------------------------------------------
def prepare_params(tp):
    tw1 = np.asarray(tp["conv1_w"], np.float32)            # (16, 1, 2, 2)
    tb1 = np.asarray(tp["conv1_b"], np.float32)
    tw2 = np.asarray(tp["conv2_w"], np.float32)            # (32, 16, 2, 2)
    tb2 = np.asarray(tp["conv2_b"], np.float32)

    # conv1 folded weights: W1[dy][wx, j*16+c] = w1[c, 0, dy, wx-j] (wx-j in {0,1}).
    W1 = np.zeros((2, 28, 512), np.float32)
    for dy in range(2):
        for dx in range(2):
            for j in range(27):
                W1[dy, j + dx, j * 16:(j + 1) * 16] = tw1[:, 0, dy, dx]
    b1f = np.tile(tb1, 32)[None, :]                        # (1, 512)

    # conv2 folded weights: W2[dy][(j+dx)*16+ci, j*32+co] = w2[co, ci, dy, dx].
    W2 = np.zeros((2, 496, 896), np.float32)
    for dy in range(2):
        for dx in range(2):
            for j in range(25):
                W2[dy, (j + dx) * 16:(j + dx) * 16 + 16,
                   j * 32:(j + 1) * 32] = tw2[:, :, dy, dx].T
    b2f = np.tile(tb2, 28)[None, :]                        # (1, 896)

    # fc1: PyTorch flattens NCHW (c*576 + h*24 + w); the kernel flattens NHWC
    # ((h*24 + w)*32 + c).  Permute the weight rows once; store in bf16 (HBM-bound).
    wf1 = np.asarray(tp["fc1_w"], np.float32).T            # (18432, 128)
    wf1 = wf1.reshape(32, 24, 24, 128).transpose(1, 2, 0, 3).reshape(18432, 128)

    # fc2: pad 10 -> 128 output lanes (zero weight, -1e30 bias) for a lane-dense store.
    wf2 = np.zeros((128, 128), np.float32)
    wf2[:, :10] = np.asarray(tp["fc2_w"], np.float32).T
    bf2 = np.full((1, 128), -1e30, np.float32)
    bf2[0, :10] = np.asarray(tp["fc2_b"], np.float32)

    return {
        "w1": jnp.asarray(W1), "b1": jnp.asarray(b1f),
        "w2": jnp.asarray(W2), "b2": jnp.asarray(b2f),
        "wf1": jnp.asarray(wf1).astype(jnp.bfloat16),
        "bf1": jnp.asarray(tp["fc1_b"], dtype=jnp.float32).reshape(1, 128),
        "wf2": jnp.asarray(wf2), "bf2": jnp.asarray(bf2),
    }


# ---------------------------------------------------------------------------
# Pure-JAX reference (PyTorch semantics, PyTorch weight layout) for checking
# ---------------------------------------------------------------------------
def ref_forward(x_nchw, tp):
    B = x_nchw.shape[0]
    dn = ("NCHW", "OIHW", "NCHW")
    hi = jax.lax.Precision.HIGHEST

    def pool_2x2_s1(y):  # MaxPool2d(kernel=2, stride=1) on NCHW
        return jnp.maximum(jnp.maximum(y[:, :, :-1, :-1], y[:, :, :-1, 1:]),
                           jnp.maximum(y[:, :, 1:, :-1], y[:, :, 1:, 1:]))

    y = jax.lax.conv_general_dilated(x_nchw, tp["conv1_w"], (1, 1), "VALID",
                                     dimension_numbers=dn, precision=hi)
    y = pool_2x2_s1(jax.nn.relu(y + tp["conv1_b"][None, :, None, None]))
    y = jax.lax.conv_general_dilated(y, tp["conv2_w"], (1, 1), "VALID",
                                     dimension_numbers=dn, precision=hi)
    y = pool_2x2_s1(jax.nn.relu(y + tp["conv2_b"][None, :, None, None]))
    flat = y.reshape(B, 32 * 24 * 24)                      # torch.flatten on NCHW
    h = jax.nn.relu(jnp.dot(flat, tp["fc1_w"].T, precision=hi) + tp["fc1_b"])
    logits = jnp.dot(h, tp["fc2_w"].T, precision=hi) + tp["fc2_b"]
    return jax.nn.log_softmax(logits, axis=1)


def init_torch_params(key):
    ks = jax.random.split(key, 8)

    def rnd(k, shape, scale):
        return jax.random.normal(k, shape, jnp.float32) * jnp.float32(scale)

    return {
        "conv1_w": rnd(ks[0], (16, 1, 2, 2), 0.5),
        "conv1_b": rnd(ks[1], (16,), 0.1),
        "conv2_w": rnd(ks[2], (32, 16, 2, 2), 0.125),
        "conv2_b": rnd(ks[3], (32,), 0.1),
        "fc1_w":  rnd(ks[4], (128, 18432), 0.0074),
        "fc1_b":  rnd(ks[5], (128,), 0.05),
        "fc2_w":  rnd(ks[6], (10, 128), 0.09),
        "fc2_b":  rnd(ks[7], (10,), 0.05),
    }


if __name__ == "__main__":
    key = jax.random.PRNGKey(0)
    kx, kparam = jax.random.split(key)
    B = 2
    # Input must be (B, 1, 28, 28): fc1 expects 18432 = 32 * 24 * 24 features.
    x = jax.random.normal(kx, (B, 1, 28, 28), jnp.float32)
    torch_params = init_torch_params(kparam)
    kernel_params = prepare_params(torch_params)

    out = jax.block_until_ready(net_forward(x, kernel_params))
    assert out.shape == (B, 10), out.shape

    ref = jax.block_until_ready(ref_forward(x, torch_params))
    err = float(jnp.max(jnp.abs(out - ref)))
    # bf16 fc1 weight + bf16 pooled activations -> relaxed tolerance vs f32 reference.
    assert jnp.allclose(out, ref, atol=5e-2, rtol=5e-2), f"max abs diff {err}"
    print("KERNEL_OK")
</pallas_src>

<mosaic_0001>
module attributes {stable_mosaic.version = 11 : i64} {
  func.func @conv_block_kernel(%arg0: i32, %arg1: memref<2x32x28xf32, #tpu.memory_space<vmem>>, %arg2: memref<2x28x512xf32, #tpu.memory_space<vmem>>, %arg3: memref<1x512xf32, #tpu.memory_space<vmem>>, %arg4: memref<2x496x896xf32, #tpu.memory_space<vmem>>, %arg5: memref<1x896xf32, #tpu.memory_space<vmem>>, %arg6: memref<2x24x768xbf16, #tpu.memory_space<vmem>>) attributes {dimension_semantics = [#tpu.dimension_semantics<parallel>], iteration_bounds = array<i64: 1>, scalar_prefetch = 0 : i64, scratch_operands = 0 : i64, tpu.core_type = #tpu.core_type<tc>, window_params = [{transform_indices = @transform_0, window_bounds = array<i64: 2, 32, 28>}, {pipeline_mode = #tpu.pipeline_mode<synchronous>, transform_indices = @transform_1, window_bounds = array<i64: 2, 28, 512>}, {pipeline_mode = #tpu.pipeline_mode<synchronous>, transform_indices = @transform_2, window_bounds = array<i64: 1, 512>}, {pipeline_mode = #tpu.pipeline_mode<synchronous>, transform_indices = @transform_3, window_bounds = array<i64: 2, 496, 896>}, {pipeline_mode = #tpu.pipeline_mode<synchronous>, transform_indices = @transform_4, window_bounds = array<i64: 1, 896>}, {transform_indices = @transform_5, window_bounds = array<i64: 2, 24, 768>}]} {
    %c0 = arith.constant 0 : index
    %c0_0 = arith.constant 0 : index
    %c0_1 = arith.constant 0 : index
    %0 = vector.load %arg1[%c0, %c0_0, %c0_1] : memref<2x32x28xf32, #tpu.memory_space<vmem>>, vector<2x32x28xf32>
    %1 = vector.extract_strided_slice %0 {offsets = [0, 1, 0], sizes = [2, 31, 28], strides = [1, 1, 1]} : vector<2x32x28xf32> to vector<2x31x28xf32>
    %2 = vector.extract_strided_slice %0 {offsets = [0, 0, 0], sizes = [2, 1, 28], strides = [1, 1, 1]} : vector<2x32x28xf32> to vector<2x1x28xf32>
    %3 = tpu.concatenate %1, %2 in 1 : vector<2x31x28xf32>, vector<2x1x28xf32> -> vector<2x32x28xf32>
    %4 = vector.shape_cast %0 : vector<2x32x28xf32> to vector<64x28xf32>
    %c0_2 = arith.constant 0 : index
    %c0_3 = arith.constant 0 : index
    %c0_4 = arith.constant 0 : index
    %5 = vector.load %arg2[%c0_2, %c0_3, %c0_4] : memref<2x28x512xf32, #tpu.memory_space<vmem>>, vector<1x28x512xf32>
    %6 = vector.shape_cast %5 : vector<1x28x512xf32> to vector<28x512xf32>
    %cst = arith.constant dense<0.000000e+00> : vector<64x512xf32>
    %7 = tpu.matmul %4, %6, %cst {dimension_numbers = #tpu.dot_dimension_numbers<[1], [0], [0], [1], [0, 0, 1, 1], [], []>} : vector<64x28xf32>, vector<28x512xf32>, vector<64x512xf32> -> vector<64x512xf32>
    %8 = vector.shape_cast %3 : vector<2x32x28xf32> to vector<64x28xf32>
    %c1 = arith.constant 1 : index
    %c0_5 = arith.constant 0 : index
    %c0_6 = arith.constant 0 : index
    %9 = vector.load %arg2[%c1, %c0_5, %c0_6] : memref<2x28x512xf32, #tpu.memory_space<vmem>>, vector<1x28x512xf32>
    %10 = vector.shape_cast %9 : vector<1x28x512xf32> to vector<28x512xf32>
    %cst_7 = arith.constant dense<0.000000e+00> : vector<64x512xf32>
    %11 = tpu.matmul %8, %10, %cst_7 {dimension_numbers = #tpu.dot_dimension_numbers<[1], [0], [0], [1], [0, 0, 1, 1], [], []>} : vector<64x28xf32>, vector<28x512xf32>, vector<64x512xf32> -> vector<64x512xf32>
    %12 = arith.addf %7, %11 : vector<64x512xf32>
    %13 = vector.shape_cast %12 : vector<64x512xf32> to vector<2x32x512xf32>
    %c0_8 = arith.constant 0 : index
    %c0_9 = arith.constant 0 : index
    %14 = vector.load %arg3[%c0_8, %c0_9] : memref<1x512xf32, #tpu.memory_space<vmem>>, vector<1x512xf32>
    %15 = vector.shape_cast %14 : vector<1x512xf32> to vector<1x1x512xf32>
    %16 = vector.broadcast %15 : vector<1x1x512xf32> to vector<2x32x512xf32>
    %17 = arith.addf %13, %16 : vector<2x32x512xf32>
    %cst_10 = arith.constant 0.000000e+00 : f32
    %18 = vector.broadcast %cst_10 : f32 to vector<2x32x512xf32>
    %19 = arith.maximumf %17, %18 : vector<2x32x512xf32>
    %20 = vector.extract_strided_slice %19 {offsets = [0, 0, 0], sizes = [2, 32, 496], strides = [1, 1, 1]} : vector<2x32x512xf32> to vector<2x32x496xf32>
    %21 = vector.extract_strided_slice %19 {offsets = [0, 0, 16], sizes = [2, 32, 496], strides = [1, 1, 1]} : vector<2x32x512xf32> to vector<2x32x496xf32>
    %22 = arith.maximumf %20, %21 : vector<2x32x496xf32>
    %23 = vector.extract_strided_slice %22 {offsets = [0, 1, 0], sizes = [2, 31, 496], strides = [1, 1, 1]} : vector<2x32x496xf32> to vector<2x31x496xf32>
    %24 = vector.extract_strided_slice %22 {offsets = [0, 0, 0], sizes = [2, 1, 496], strides = [1, 1, 1]} : vector<2x32x496xf32> to vector<2x1x496xf32>
    %25 = tpu.concatenate %23, %24 in 1 : vector<2x31x496xf32>, vector<2x1x496xf32> -> vector<2x32x496xf32>
    %26 = arith.maximumf %22, %25 : vector<2x32x496xf32>
    %27 = vector.extract_strided_slice %26 {offsets = [0, 1, 0], sizes = [2, 31, 496], strides = [1, 1, 1]} : vector<2x32x496xf32> to vector<2x31x496xf32>
    %28 = vector.extract_strided_slice %26 {offsets = [0, 0, 0], sizes = [2, 1, 496], strides = [1, 1, 1]} : vector<2x32x496xf32> to vector<2x1x496xf32>
    %29 = tpu.concatenate %27, %28 in 1 : vector<2x31x496xf32>, vector<2x1x496xf32> -> vector<2x32x496xf32>
    %30 = vector.shape_cast %26 : vector<2x32x496xf32> to vector<64x496xf32>
    %c0_11 = arith.constant 0 : index
    %c0_12 = arith.constant 0 : index
    %c0_13 = arith.constant 0 : index
    %31 = vector.load %arg4[%c0_11, %c0_12, %c0_13] : memref<2x496x896xf32, #tpu.memory_space<vmem>>, vector<1x496x896xf32>
    %32 = vector.shape_cast %31 : vector<1x496x896xf32> to vector<496x896xf32>
    %cst_14 = arith.constant dense<0.000000e+00> : vector<64x896xf32>
    %33 = tpu.matmul %30, %32, %cst_14 {dimension_numbers = #tpu.dot_dimension_numbers<[1], [0], [0], [1], [0, 0, 1, 1], [], []>} : vector<64x496xf32>, vector<496x896xf32>, vector<64x896xf32> -> vector<64x896xf32>
    %34 = vector.shape_cast %29 : vector<2x32x496xf32> to vector<64x496xf32>
    %c1_15 = arith.constant 1 : index
    %c0_16 = arith.constant 0 : index
    %c0_17 = arith.constant 0 : index
    %35 = vector.load %arg4[%c1_15, %c0_16, %c0_17] : memref<2x496x896xf32, #tpu.memory_space<vmem>>, vector<1x496x896xf32>
    %36 = vector.shape_cast %35 : vector<1x496x896xf32> to vector<496x896xf32>
    %cst_18 = arith.constant dense<0.000000e+00> : vector<64x896xf32>
    %37 = tpu.matmul %34, %36, %cst_18 {dimension_numbers = #tpu.dot_dimension_numbers<[1], [0], [0], [1], [0, 0, 1, 1], [], []>} : vector<64x496xf32>, vector<496x896xf32>, vector<64x896xf32> -> vector<64x896xf32>
    %38 = arith.addf %33, %37 : vector<64x896xf32>
    %39 = vector.shape_cast %38 : vector<64x896xf32> to vector<2x32x896xf32>
    %c0_19 = arith.constant 0 : index
    %c0_20 = arith.constant 0 : index
    %40 = vector.load %arg5[%c0_19, %c0_20] : memref<1x896xf32, #tpu.memory_space<vmem>>, vector<1x896xf32>
    %41 = vector.shape_cast %40 : vector<1x896xf32> to vector<1x1x896xf32>
    %42 = vector.broadcast %41 : vector<1x1x896xf32> to vector<2x32x896xf32>
    %43 = arith.addf %39, %42 : vector<2x32x896xf32>
    %cst_21 = arith.constant 0.000000e+00 : f32
    %44 = vector.broadcast %cst_21 : f32 to vector<2x32x896xf32>
    %45 = arith.maximumf %43, %44 : vector<2x32x896xf32>
    %46 = vector.extract_strided_slice %45 {offsets = [0, 0, 0], sizes = [2, 32, 864], strides = [1, 1, 1]} : vector<2x32x896xf32> to vector<2x32x864xf32>
    %47 = vector.extract_strided_slice %45 {offsets = [0, 0, 32], sizes = [2, 32, 864], strides = [1, 1, 1]} : vector<2x32x896xf32> to vector<2x32x864xf32>
    %48 = arith.maximumf %46, %47 : vector<2x32x864xf32>
    %49 = vector.extract_strided_slice %48 {offsets = [0, 1, 0], sizes = [2, 31, 864], strides = [1, 1, 1]} : vector<2x32x864xf32> to vector<2x31x864xf32>
    %50 = vector.extract_strided_slice %48 {offsets = [0, 0, 0], sizes = [2, 1, 864], strides = [1, 1, 1]} : vector<2x32x864xf32> to vector<2x1x864xf32>
    %51 = tpu.concatenate %49, %50 in 1 : vector<2x31x864xf32>, vector<2x1x864xf32> -> vector<2x32x864xf32>
    %52 = arith.maximumf %48, %51 : vector<2x32x864xf32>
    %53 = vector.extract_strided_slice %52 {offsets = [0, 0, 0], sizes = [2, 24, 768], strides = [1, 1, 1]} : vector<2x32x864xf32> to vector<2x24x768xf32>
    %54 = arith.truncf %53 : vector<2x24x768xf32> to vector<2x24x768xbf16>
    %c0_22 = arith.constant 0 : index
    %c0_23 = arith.constant 0 : index
    %c0_24 = arith.constant 0 : index
    %55 = vector.load %arg6[%c0_22, %c0_23, %c0_24] : memref<2x24x768xbf16, #tpu.memory_space<vmem>>, vector<2x24x768xbf16>
    tpu.vector_store %arg6[%c0_22, %c0_23, %c0_24], %54 {strides = array<i32>} : memref<2x24x768xbf16, #tpu.memory_space<vmem>>, vector<2x24x768xbf16>,
    return
  }
  func.func @transform_0(%arg0: i32) -> (i32, i32, i32) {
    %c0_i32 = arith.constant 0 : i32
    %c0_i32_0 = arith.constant 0 : i32
    %c0_i32_1 = arith.constant 0 : i32
    return %arg0, %c0_i32, %c0_i32_0 : i32, i32, i32
  }
  func.func @transform_1(%arg0: i32) -> (i32, i32, i32) {
    %c0_i32 = arith.constant 0 : i32
    %c0_i32_0 = arith.constant 0 : i32
    %c0_i32_1 = arith.constant 0 : i32
    %c0_i32_2 = arith.constant 0 : i32
    return %c0_i32, %c0_i32_0, %c0_i32_1 : i32, i32, i32
  }
  func.func @transform_2(%arg0: i32) -> (i32, i32) {
    %c0_i32 = arith.constant 0 : i32
    %c0_i32_0 = arith.constant 0 : i32
    %c0_i32_1 = arith.constant 0 : i32
    return %c0_i32, %c0_i32_0 : i32, i32
  }
  func.func @transform_3(%arg0: i32) -> (i32, i32, i32) {
    %c0_i32 = arith.constant 0 : i32
    %c0_i32_0 = arith.constant 0 : i32
    %c0_i32_1 = arith.constant 0 : i32
    %c0_i32_2 = arith.constant 0 : i32
    return %c0_i32, %c0_i32_0, %c0_i32_1 : i32, i32, i32
  }
  func.func @transform_4(%arg0: i32) -> (i32, i32) {
    %c0_i32 = arith.constant 0 : i32
    %c0_i32_0 = arith.constant 0 : i32
    %c0_i32_1 = arith.constant 0 : i32
    return %c0_i32, %c0_i32_0 : i32, i32
  }
  func.func @transform_5(%arg0: i32) -> (i32, i32, i32) {
    %c0_i32 = arith.constant 0 : i32
    %c0_i32_0 = arith.constant 0 : i32
    %c0_i32_1 = arith.constant 0 : i32
    return %arg0, %c0_i32, %c0_i32_0 : i32, i32, i32
  }
}

module attributes {stable_mosaic.version = 11 : i64} {
  func.func @dense_block_kernel(%arg0: i32, %arg1: i32, %arg2: memref<2x6144xbf16, #tpu.memory_space<vmem>>, %arg3: memref<6144x128xbf16, #tpu.memory_space<vmem>>, %arg4: memref<1x128xf32, #tpu.memory_space<vmem>>, %arg5: memref<128x128xf32, #tpu.memory_space<vmem>>, %arg6: memref<1x128xf32, #tpu.memory_space<vmem>>, %arg7: memref<2x128xf32, #tpu.memory_space<vmem>>, %arg8: memref<2x128xf32, #tpu.memory_space<vmem>>) attributes {dimension_semantics = [#tpu.dimension_semantics<parallel>, #tpu.dimension_semantics<arbitrary>], iteration_bounds = array<i64: 1, 3>, scalar_prefetch = 0 : i64, scratch_operands = 1 : i64, tpu.core_type = #tpu.core_type<tc>, window_params = [{transform_indices = @transform_0, window_bounds = array<i64: 2, 6144>}, {transform_indices = @transform_1, window_bounds = array<i64: 6144, 128>}, {pipeline_mode = #tpu.pipeline_mode<synchronous>, transform_indices = @transform_2, window_bounds = array<i64: 1, 128>}, {pipeline_mode = #tpu.pipeline_mode<synchronous>, transform_indices = @transform_3, window_bounds = array<i64: 128, 128>}, {pipeline_mode = #tpu.pipeline_mode<synchronous>, transform_indices = @transform_4, window_bounds = array<i64: 1, 128>}, {transform_indices = @transform_5, window_bounds = array<i64: 2, 128>}]} {
    %c0_i32 = arith.constant 0 : i32
    %0 = arith.cmpi eq, %arg1, %c0_i32 : i32
    %1 = arith.extui %0 : i1 to i32
    %c0_i32_0 = arith.constant 0 : i32
    %2 = arith.cmpi ne, %1, %c0_i32_0 : i32
    scf.if %2 {
      %cst_9 = arith.constant 0.000000e+00 : f32
      %12 = vector.broadcast %cst_9 : f32 to vector<2x128xf32>
      %c0_10 = arith.constant 0 : index
      %c0_11 = arith.constant 0 : index
      %13 = vector.load %arg8[%c0_10, %c0_11] : memref<2x128xf32, #tpu.memory_space<vmem>>, vector<2x128xf32>
      tpu.vector_store %arg8[%c0_10, %c0_11], %12 {strides = array<i32>} : memref<2x128xf32, #tpu.memory_space<vmem>>, vector<2x128xf32>,
    } else {
    }
    %c0 = arith.constant 0 : index
    %c0_1 = arith.constant 0 : index
    %3 = vector.load %arg8[%c0, %c0_1] : memref<2x128xf32, #tpu.memory_space<vmem>>, vector<2x128xf32>
    %c0_2 = arith.constant 0 : index
    %c0_3 = arith.constant 0 : index
    %4 = vector.load %arg2[%c0_2, %c0_3] : memref<2x6144xbf16, #tpu.memory_space<vmem>>, vector<2x6144xbf16>
    %c0_4 = arith.constant 0 : index
    %c0_5 = arith.constant 0 : index
    %5 = vector.load %arg3[%c0_4, %c0_5] : memref<6144x128xbf16, #tpu.memory_space<vmem>>, vector<6144x128xbf16>
    %cst = arith.constant dense<0.000000e+00> : vector<2x128xf32>
    %6 = tpu.matmul %4, %5, %cst {dimension_numbers = #tpu.dot_dimension_numbers<[1], [0], [0], [1], [0, 0, 1, 1], [], []>} : vector<2x6144xbf16>, vector<6144x128xbf16>, vector<2x128xf32> -> vector<2x128xf32>
    %7 = arith.addf %3, %6 : vector<2x128xf32>
    %c0_6 = arith.constant 0 : index
    %c0_7 = arith.constant 0 : index
    %8 = vector.load %arg8[%c0_6, %c0_7] : memref<2x128xf32, #tpu.memory_space<vmem>>, vector<2x128xf32>
    tpu.vector_store %arg8[%c0_6, %c0_7], %7 {strides = array<i32>} : memref<2x128xf32, #tpu.memory_space<vmem>>, vector<2x128xf32>,
    %c2_i32 = arith.constant 2 : i32
    %9 = arith.cmpi eq, %arg1, %c2_i32 : i32
    %10 = arith.extui %9 : i1 to i32
    %c0_i32_8 = arith.constant 0 : i32
    %11 = arith.cmpi ne, %10, %c0_i32_8 : i32
    scf.if %11 {
      %c0_9 = arith.constant 0 : index
      %c0_10 = arith.constant 0 : index
      %12 = vector.load %arg8[%c0_9, %c0_10] : memref<2x128xf32, #tpu.memory_space<vmem>>, vector<2x128xf32>
      %c0_11 = arith.constant 0 : index
      %c0_12 = arith.constant 0 : index
      %13 = vector.load %arg4[%c0_11, %c0_12] : memref<1x128xf32, #tpu.memory_space<vmem>>, vector<1x128xf32>
      %14 = vector.broadcast %13 : vector<1x128xf32> to vector<2x128xf32>
      %15 = arith.addf %12, %14 : vector<2x128xf32>
      %cst_13 = arith.constant 0.000000e+00 : f32
      %16 = vector.broadcast %cst_13 : f32 to vector<2x128xf32>
      %17 = arith.maximumf %15, %16 : vector<2x128xf32>
      %c0_14 = arith.constant 0 : index
      %c0_15 = arith.constant 0 : index
      %18 = vector.load %arg5[%c0_14, %c0_15] : memref<128x128xf32, #tpu.memory_space<vmem>>, vector<128x128xf32>
      %cst_16 = arith.constant dense<0.000000e+00> : vector<2x128xf32>
      %19 = tpu.matmul %17, %18, %cst_16 {dimension_numbers = #tpu.dot_dimension_numbers<[1], [0], [0], [1], [0, 0, 1, 1], [], []>} : vector<2x128xf32>, vector<128x128xf32>, vector<2x128xf32> -> vector<2x128xf32>
      %c0_17 = arith.constant 0 : index
      %c0_18 = arith.constant 0 : index
      %20 = vector.load %arg6[%c0_17, %c0_18] : memref<1x128xf32, #tpu.memory_space<vmem>>, vector<1x128xf32>
      %21 = vector.broadcast %20 : vector<1x128xf32> to vector<2x128xf32>
      %22 = arith.addf %19, %21 : vector<2x128xf32>
      %cst_19 = arith.constant dense<0xFF800000> : vector<2xf32>
      %23 = vector.multi_reduction <maximumf>, %22, %cst_19 [1] : vector<2x128xf32> to vector<2xf32>
      %24 = vector.shape_cast %23 : vector<2xf32> to vector<2x1xf32>
      %25 = vector.broadcast %24 : vector<2x1xf32> to vector<2x128xf32>
      %26 = arith.subf %22, %25 : vector<2x128xf32>
      %27 = math.exp %26 : vector<2x128xf32>
      %cst_20 = arith.constant dense<0.000000e+00> : vector<2xf32>
      %28 = vector.multi_reduction <add>, %27, %cst_20 [1] : vector<2x128xf32> to vector<2xf32>
      %29 = vector.shape_cast %28 : vector<2xf32> to vector<2x1xf32>
      %30 = math.log %29 : vector<2x1xf32>
      %31 = vector.broadcast %30 : vector<2x1xf32> to vector<2x128xf32>
      %32 = arith.subf %26, %31 : vector<2x128xf32>
      %c0_21 = arith.constant 0 : index
      %c0_22 = arith.constant 0 : index
      %33 = vector.load %arg7[%c0_21, %c0_22] : memref<2x128xf32, #tpu.memory_space<vmem>>, vector<2x128xf32>
      tpu.vector_store %arg7[%c0_21, %c0_22], %32 {strides = array<i32>} : memref<2x128xf32, #tpu.memory_space<vmem>>, vector<2x128xf32>,
    } else {
    }
    return
  }
  func.func @transform_0(%arg0: i32, %arg1: i32) -> (i32, i32) {
    %c0_i32 = arith.constant 0 : i32
    return %arg0, %arg1 : i32, i32
  }
  func.func @transform_1(%arg0: i32, %arg1: i32) -> (i32, i32) {
    %c0_i32 = arith.constant 0 : i32
    %c0_i32_0 = arith.constant 0 : i32
    return %arg1, %c0_i32 : i32, i32
  }
  func.func @transform_2(%arg0: i32, %arg1: i32) -> (i32, i32) {
    %c0_i32 = arith.constant 0 : i32
    %c0_i32_0 = arith.constant 0 : i32
    %c0_i32_1 = arith.constant 0 : i32
    return %c0_i32, %c0_i32_0 : i32, i32
  }
  func.func @transform_3(%arg0: i32, %arg1: i32) -> (i32, i32) {
    %c0_i32 = arith.constant 0 : i32
    %c0_i32_0 = arith.constant 0 : i32
    %c0_i32_1 = arith.constant 0 : i32
    return %c0_i32, %c0_i32_0 : i32, i32
  }
  func.func @transform_4(%arg0: i32, %arg1: i32) -> (i32, i32) {
    %c0_i32 = arith.constant 0 : i32
    %c0_i32_0 = arith.constant 0 : i32
    %c0_i32_1 = arith.constant 0 : i32
    return %c0_i32, %c0_i32_0 : i32, i32
  }
  func.func @transform_5(%arg0: i32, %arg1: i32) -> (i32, i32) {
    %c0_i32 = arith.constant 0 : i32
    %c0_i32_0 = arith.constant 0 : i32
    return %arg0, %c0_i32 : i32, i32
  }
}

</mosaic_0001>

<llo_original>
// kernel: net_forward.3
$region0: #{net_forward.3}
  #allocation0 [shape = 'u32[]', space=smem, size = 0x4, offset = 0x4, fixed_abs, tag = 'smem constant byte address 0x4 - core index']
  #allocation1 [shape = 'u32[144,128]{1,0:T(1,128)}', space=vmem, size = 0x12000, scoped, tag = 'internal scratch']
  #allocation2 [shape = 'f32[2,128]{1,0:T(2,128)}', space=vmem, size = 0x400, scoped, tag = 'scratch operand']
  %s0 = inlined_call_operand.vmem [shape: bf16[2,18432], index: 0, kind: input, shape index: {}]
  %s1 = inlined_call_operand.hbm [shape: bf16[18432,128], index: 1, kind: input, shape index: {}]
  %s2 = inlined_call_operand.hbm [shape: f32[1,128], index: 2, kind: input, shape index: {}]
  %s3 = inlined_call_operand.hbm [shape: f32[128,128], index: 3, kind: input, shape index: {}]
  %s4 = inlined_call_operand.hbm [shape: f32[1,128], index: 4, kind: input, shape index: {}]
  %s5 = inlined_call_operand.hbm [shape: f32[2,128], index: 5, kind: output, shape index: {}]
  %s6 = sld [smem:[#allocation0]]
  $region77: #{net_forward.3} parent=0
    _
  %s8 = ssub.s32 1, %s6
  %s9 = scalar_select 0, %s8, %s6
  $region1: #{net_forward.3} parent=0
    #allocation3 [shape = 'u8[3145728]{0}', space=vmem, size = 0x300000, scoped, tag = 'input window, operand 1']
    #allocation4 [shape = 's32[2]{0}', space=sflag, size = 0x8, scoped, tag = 'scoped memory for net_forward.3']
    #allocation5 [shape = 's32[2]{0}', space=sflag, size = 0x8, scoped, tag = 'scoped memory for net_forward.3']
    #allocation6 [shape = 'u8[512]{0}', space=vmem, size = 0x400, scoped, tag = 'input window, operand 2, single buffered']
    #allocation7 [shape = 's32[1]{0}', space=sflag, size = 0x4, scoped, tag = 'scoped memory for net_forward.3']
    #allocation8 [shape = 'u8[65536]{0}', space=vmem, size = 0x10000, scoped, tag = 'input window, operand 3, single buffered']
    #allocation9 [shape = 'u8[512]{0}', space=vmem, size = 0x400, scoped, tag = 'input window, operand 4, single buffered']
    #allocation10 [shape = 's32[1]{0}', space=sflag, size = 0x4, scoped, tag = 'scoped memory for net_forward.3']
    #allocation11 [shape = 'u8[1024]{0}', space=vmem, size = 0x400, scoped, tag = 'output window, operand 0, single buffered']
    %10 = vsyncpa [#allocation4], 0
    %s11 = scalar_lea.sflag [#allocation4], 1
    %12 = vsyncpa %s11, 0
    %13 = vsyncpa [#allocation7], 0
    %14 = vsyncpa [#allocation10], 0
    %15 = vsyncpa [#allocation5], 0
    loop: start=0, step=1, limit=5
    $region2: #{net_forward.3} parent=1 // loop_pre_header
      _
    $region3: #{net_forward.3} parent=1 // loop_header
      %s17 = sphi 0, %s21
      %p18 = scmp.ge.s32.totalorder %s17, 5
      %s24 = sphi 0, %s36
      %s25 = sphi 0, %s32
      %s26 = sphi 0, %s24
      %s27 = sphi 0, %s25
      %s28 = sphi 0, %s26
      %s29 = sphi 0, %s27
      %s41 = sphi 0, %s43
      %s44 = sphi 0, %s41
      %s45 = sphi 0, %s44
      %s61 = sphi 0, %s45
      %s67 = sphi 0, %s69
      %s70 = sphi 0, %s67
      %s71 = sphi 0, %s70
      %s87 = sphi 0, %s71
      %s91 = sphi 0, %s91
      %s93 = sphi 0, %s91
      %s94 = sphi 0, %s93
      %s108 = sphi 0, %s94
      %s112 = sphi 0, %s112
      %s114 = sphi 0, %s112
      %s115 = sphi 0, %s114
      %s129 = sphi 0, %s115
      %s133 = sphi 0, %s133
      %s135 = sphi 0, %s133
      %s136 = sphi 0, %s135
      %s150 = sphi 0, %s136
      %s156 = sphi 0, %s158
      %s159 = sphi 0, %s156
      %s160 = sphi 0, %s159
      %s176 = sphi 0, %s160
    $region4: #{net_forward.3} parent=1 // loop_header_branch
      %20 = sbr.rel (%p18) target = $region8
    $region5: #{net_forward.3} parent=1 // loop_body
      %s22 = ssub.s32 %s17, 1
      %s23 = ssub.s32 %s17, 2
      %s30 = sadd.s32 1, %s25
      %p31 = scmp.ge.s32.totalorder %s30, 3
      %s32 = scalar_select %p31, 0, %s30
      %s33 = sadd.s32 1, %s24
      %s34 = scalar_select %p31, %s33, %s24
      %p35 = scmp.ge.s32.totalorder %s34, 1
      %s36 = scalar_select %p35, 0, %s34
      %s37 = ssub.s32 %s24, %s36
      %s38 = ssub.s32 %s25, %s32
      %s39 = sor.u32 %s37, %s38
      %p40 = scmp.eq.s32.totalorder %s39, 0
      %s42 = sadd.s32 %s41, 1
      %s43 = scalar_select %p40, %s41, %s42
      %p46 = pneg %p40
      %p47 = scmp.eq.s32.totalorder %s17, 2
      %p48 = por %p46, %p47
      %p49 = scmp.ne.s32.totalorder %s41, %s44
      %p50 = scmp.eq.s32.totalorder %s17, 0
      %p51 = por %p49, %p50
      %p52 = scmp.ne.s32.totalorder %s41, %s44
      %p53 = scmp.eq.s32.totalorder %s22, 2
      %p54 = por %p52, %p53
      %p55 = scmp.ne.s32.totalorder %s44, %s45
      %p56 = scmp.eq.s32.totalorder %s22, 0
      %p57 = por %p55, %p56
      %p58 = scmp.ne.s32.totalorder %s44, %s45
      %p59 = scmp.eq.s32.totalorder %s23, 2
      %p60 = por %p58, %p59
      %p62 = scmp.ne.s32.totalorder %s45, %s61
      %p63 = scmp.eq.s32.totalorder %s23, 0
      %p64 = por %p62, %p63
      %s65 = ssub.s32 %s25, %s32
      %p66 = scmp.eq.s32.totalorder %s65, 0
      %s68 = sadd.s32 %s67, 1
      %s69 = scalar_select %p66, %s67, %s68
      %p72 = pneg %p66
      %p73 = scmp.eq.s32.totalorder %s17, 2
      %p74 = por %p72, %p73
      %p75 = scmp.ne.s32.totalorder %s67, %s70
      %p76 = scmp.eq.s32.totalorder %s17, 0
      %p77 = por %p75, %p76
      %p78 = scmp.ne.s32.totalorder %s67, %s70
      %p79 = scmp.eq.s32.totalorder %s22, 2
      %p80 = por %p78, %p79
      %p81 = scmp.ne.s32.totalorder %s70, %s71
      %p82 = scmp.eq.s32.totalorder %s22, 0
      %p83 = por %p81, %p82
      %p84 = scmp.ne.s32.totalorder %s70, %s71
      %p85 = scmp.eq.s32.totalorder %s23, 2
      %p86 = por %p84, %p85
      %p88 = scmp.ne.s32.totalorder %s71, %s87
      %p89 = scmp.eq.s32.totalorder %s23, 0
      %p90 = por %p88, %p89
      %s92 = sadd.s32 %s91, 1
      %p95 = scmp.eq.s32.totalorder %s17, 2
      %p96 = scmp.ne.s32.totalorder %s91, %s93
      %p97 = scmp.eq.s32.totalorder %s17, 0
      %p98 = por %p96, %p97
      %p99 = scmp.ne.s32.totalorder %s91, %s93
      %p100 = scmp.eq.s32.totalorder %s22, 2
      %p101 = por %p99, %p100
      %p102 = scmp.ne.s32.totalorder %s93, %s94
      %p103 = scmp.eq.s32.totalorder %s22, 0
      %p104 = por %p102, %p103
      %p105 = scmp.ne.s32.totalorder %s93, %s94
      %p106 = scmp.eq.s32.totalorder %s23, 2
      %p107 = por %p105, %p106
      %p109 = scmp.ne.s32.totalorder %s94, %s108
      %p110 = scmp.eq.s32.totalorder %s23, 0
      %p111 = por %p109, %p110
      %s113 = sadd.s32 %s112, 1
      %p116 = scmp.eq.s32.totalorder %s17, 2
      %p117 = scmp.ne.s32.totalorder %s112, %s114
      %p118 = scmp.eq.s32.totalorder %s17, 0
      %p119 = por %p117, %p118
      %p120 = scmp.ne.s32.totalorder %s112, %s114
      %p121 = scmp.eq.s32.totalorder %s22, 2
      %p122 = por %p120, %p121
      %p123 = scmp.ne.s32.totalorder %s114, %s115
      %p124 = scmp.eq.s32.totalorder %s22, 0
      %p125 = por %p123, %p124
      %p126 = scmp.ne.s32.totalorder %s114, %s115
      %p127 = scmp.eq.s32.totalorder %s23, 2
      %p128 = por %p126, %p127
      %p130 = scmp.ne.s32.totalorder %s115, %s129
      %p131 = scmp.eq.s32.totalorder %s23, 0
      %p132 = por %p130, %p131
      %s134 = sadd.s32 %s133, 1
      %p137 = scmp.eq.s32.totalorder %s17, 2
      %p138 = scmp.ne.s32.totalorder %s133, %s135
      %p139 = scmp.eq.s32.totalorder %s17, 0
      %p140 = por %p138, %p139
      %p141 = scmp.ne.s32.totalorder %s133, %s135
      %p142 = scmp.eq.s32.totalorder %s22, 2
      %p143 = por %p141, %p142
      %p144 = scmp.ne.s32.totalorder %s135, %s136
      %p145 = scmp.eq.s32.totalorder %s22, 0
      %p146 = por %p144, %p145
      %p147 = scmp.ne.s32.totalorder %s135, %s136
      %p148 = scmp.eq.s32.totalorder %s23, 2
      %p149 = por %p147, %p148
      %p151 = scmp.ne.s32.totalorder %s136, %s150
      %p152 = scmp.eq.s32.totalorder %s23, 0
      %p153 = por %p151, %p152
      %s154 = ssub.s32 %s24, %s36
      %p155 = scmp.eq.s32.totalorder %s154, 0
      %s157 = sadd.s32 %s156, 1
      %s158 = scalar_select %p155, %s156, %s157
      %p161 = pneg %p155
      %p162 = scmp.eq.s32.totalorder %s17, 2
      %p163 = por %p161, %p162
      %p164 = scmp.ne.s32.totalorder %s156, %s159
      %p165 = scmp.eq.s32.totalorder %s17, 0
      %p166 = por %p164, %p165
      %p167 = scmp.ne.s32.totalorder %s156, %s159
      %p168 = scmp.eq.s32.totalorder %s22, 2
      %p169 = por %p167, %p168
      %p170 = scmp.ne.s32.totalorder %s159, %s160
      %p171 = scmp.eq.s32.totalorder %s22, 0
      %p172 = por %p170, %p171
      %p173 = scmp.ne.s32.totalorder %s159, %s160
      %p174 = scmp.eq.s32.totalorder %s23, 2
      %p175 = por %p173, %p174
      %p177 = scmp.ne.s32.totalorder %s160, %s176
      %p178 = scmp.eq.s32.totalorder %s23, 0
      %p179 = por %p177, %p178
      %p180 = scmp.le.s32.totalorder 1, %s17
      %p181 = scmp.lt.s32.totalorder %s17, 4
      %p182 = pnand %p180, %p181
      %p183 = pneg %p182
      // Predicated region
      $region9: #{net_forward.3} parent=5 // pred_check
        _
      $region10: #{net_forward.3} parent=5 // pred_check_branch
        %185 = sbr.rel (%p182) target = $region12
      $region11: #{net_forward.3} parent=5 // pred_region
        %s186 = ssub.s32 %s17, 1
        // Predicated region
        $region13: #{net_forward.3} parent=11 // pred_check
          %p187 = pneg %p104
        $region14: #{net_forward.3} parent=11 // pred_check_branch
          %189 = sbr.rel (%p187) target = $region16
        $region15: #{net_forward.3} parent=11 // pred_region
          %s191 = ssub.s32 16, 16
          %192 = vsyncadd [#allocation7], %s191
          %s194 = sshll.u32 [#allocation6], 4
          %s195 = int_to_ptr.vmem [resolvable:$true] %s194
          %197 = dma.hbm_to_vmem [thread:$0]  %s2, 16, %s195, [#allocation7]
        $region16: #{net_forward.3} parent=11 // pred_fallthru
          _
        // Predicated region
        $region17: #{net_forward.3} parent=11 // pred_check
          %p198 = pneg %p125
        $region18: #{net_forward.3} parent=11 // pred_check_branch
          %200 = sbr.rel (%p198) target = $region20
        $region19: #{net_forward.3} parent=11 // pred_region
          %s202 = ssub.s32 2048, 2048
          %203 = vsyncadd [#allocation7], %s202
          %s204 = sshll.u32 [#allocation8], 4
          %s205 = int_to_ptr.vmem [resolvable:$true] %s204
          %210 = dma.hbm_to_vmem [thread:$0]  %s3, 2048, %s205, [#allocation7], 128, 128, 8
        $region20: #{net_forward.3} parent=11 // pred_fallthru
          _
        // Predicated region
        $region21: #{net_forward.3} parent=11 // pred_check
          %p211 = pneg %p146
        $region22: #{net_forward.3} parent=11 // pred_check_branch
          %213 = sbr.rel (%p211) target = $region24
        $region23: #{net_forward.3} parent=11 // pred_region
          %s215 = ssub.s32 16, 16
          %216 = vsyncadd [#allocation10], %s215
          %s218 = sshll.u32 [#allocation9], 4
          %s219 = int_to_ptr.vmem [resolvable:$true] %s218
          %221 = dma.hbm_to_vmem [thread:$0]  %s4, 16, %s219, [#allocation10]
        $region24: #{net_forward.3} parent=11 // pred_fallthru
          _
      $region12: #{net_forward.3} parent=5 // pred_fallthru
        _
      %p222 = scmp.lt.s32.totalorder %s17, 3
      // Predicated region
      $region25: #{net_forward.3} parent=5 // pred_check
        %p223 = pneg %p222
      $region26: #{net_forward.3} parent=5 // pred_check_branch
        %225 = sbr.rel (%p223) target = $region28
      $region27: #{net_forward.3} parent=5 // pred_region
        // Predicated region
        $region29: #{net_forward.3} parent=27 // pred_check
          %p226 = pneg %p51
        $region30: #{net_forward.3} parent=27 // pred_check_branch
          %228 = sbr.rel (%p226) target = $region32
        $region31: #{net_forward.3} parent=27 // pred_region
          %s229 = smul.u32 48, %s25
          %p230 = scmp.lt.s32.totalorder %s24, 0
          %s231 = scalar_select %p230, %s24, 0
          %p232 = scmp.lt.s32.totalorder %s229, 143
          %s233 = scalar_select %p232, %s229, 143
          %s234 = smul.addr %s231, 144
          %s235 = sadd.s32 %s233, %s234
          %s236 = scalar_lea.vmem %s0, %s235
          %s237 = smul.u32 48, %s25
        $region32: #{net_forward.3} parent=27 // pred_fallthru
          _
        // Predicated region
        $region33: #{net_forward.3} parent=27 // pred_check
          %p238 = pneg %p77
        $region34: #{net_forward.3} parent=27 // pred_check_branch
          %240 = sbr.rel (%p238) target = $region36
        $region35: #{net_forward.3} parent=27 // pred_region
          %s241 = sand.u32 %s67, 1
          %s242 = scalar_lea.sflag [#allocation4], %s241
          %s243 = sand.u32 %s67, 1
          %s244 = smul.addr %s243, 3072
          %s245 = scalar_lea.vmem [#allocation3], %s244
          %s246 = smul.u32 768, %s25
          %s248 = ssub.s32 49152, 49152
          %249 = vsyncadd %s242, %s248
          %s250 = smul.addr %s246, 64
          %s251 = scalar_lea.hbm %s1, %s250
          %s252 = sshll.u32 %s245, 4
          %s253 = int_to_ptr.vmem [resolvable:$true] %s252
          %258 = dma.hbm_to_vmem [thread:$0]  %s251, 49152, %s253, %s242, 64, 64, 4
        $region36: #{net_forward.3} parent=27 // pred_fallthru
          _
      $region28: #{net_forward.3} parent=5 // pred_fallthru
        _
      %p259 = scmp.le.s32.totalorder 1, %s17
      %p260 = scmp.lt.s32.totalorder %s17, 4
      %p261 = pnand %p259, %p260
      %p262 = pneg %p261
      // Predicated region
      $region37: #{net_forward.3} parent=5 // pred_check
        _
      $region38: #{net_forward.3} parent=5 // pred_check_branch
        %264 = sbr.rel (%p261) target = $region40
      $region39: #{net_forward.3} parent=5 // pred_region
        %s265 = ssub.s32 %s17, 1
        %s266 = sand.u32 %s70, 1
        %s267 = scalar_lea.sflag [#allocation4], %s266
        %s268 = sand.u32 %s70, 1
        %s269 = smul.addr %s268, 3072
        %s270 = scalar_lea.vmem [#allocation3], %s269
        // Predicated region
        $region41: #{net_forward.3} parent=39 // pred_check
          %p271 = pneg %p83
        $region42: #{net_forward.3} parent=39 // pred_check_branch
          %273 = sbr.rel (%p271) target = $region44
        $region43: #{net_forward.3} parent=39 // pred_region
          %274 = dma.done %s267, 49152
        $region44: #{net_forward.3} parent=39 // pred_fallthru
          _
        // Predicated region
        $region45: #{net_forward.3} parent=39 // pred_check
          %p275 = pneg %p104
        $region46: #{net_forward.3} parent=39 // pred_check_branch
          %277 = sbr.rel (%p275) target = $region48
        $region47: #{net_forward.3} parent=39 // pred_region
          %278 = dma.done [#allocation7], 16
        $region48: #{net_forward.3} parent=39 // pred_fallthru
          _
        // Predicated region
        $region49: #{net_forward.3} parent=39 // pred_check
          %p279 = pneg %p125
        $region50: #{net_forward.3} parent=39 // pred_check_branch
          %281 = sbr.rel (%p279) target = $region52
        $region51: #{net_forward.3} parent=39 // pred_region
          %282 = dma.done [#allocation7], 2048
        $region52: #{net_forward.3} parent=39 // pred_fallthru
          _
        // Predicated region
        $region53: #{net_forward.3} parent=39 // pred_check
          %p283 = pneg %p146
        $region54: #{net_forward.3} parent=39 // pred_check_branch
          %285 = sbr.rel (%p283) target = $region56
        $region55: #{net_forward.3} parent=39 // pred_region
          %286 = dma.done [#allocation10], 16
        $region56: #{net_forward.3} parent=39 // pred_fallthru
          _
        %s287 = smul.u32 48, %s27
        %p288 = scmp.lt.s32.totalorder %s26, 0
        %s289 = scalar_select %p288, %s26, 0
        %p290 = scmp.lt.s32.totalorder %s287, 143
        %s291 = scalar_select %p290, %s287, 143
        %s292 = smul.addr %s289, 144
        %s293 = sadd.s32 %s291, %s292
        %s294 = scalar_lea.vmem %s0, %s293
        %p295 = pneg %p57
        %p296 = pneg %p54
        %s297 = sand.u32 %s70, 1
        %s298 = scalar_lea.sflag [#allocation4], %s297
        %s299 = sand.u32 %s70, 1
        %s300 = smul.addr %s299, 3072
        %s301 = scalar_lea.vmem [#allocation3], %s300
        %p302 = pneg %p83
        %p303 = pneg %p80
        %p304 = pneg %p104
        %p305 = pneg %p101
        %p306 = pneg %p125
        %p307 = pneg %p122
        %p308 = pneg %p146
        %p309 = pneg %p143
        %p310 = pneg %p172
        %p311 = pneg %p169
        %s312 = smul.u32 48, %s27
        %p313 = scmp.lt.s32.totalorder %s26, 0
        %s314 = scalar_select %p313, %s26, 0
        %p315 = scmp.lt.s32.totalorder %s312, 143
        %s316 = scalar_select %p315, %s312, 143
        %s317 = smul.addr %s314, 144
        %s318 = sadd.s32 %s316, %s317
        %s319 = scalar_lea.vmem %s0, %s318
        %s320 = smul.u32 48, %s27
        %s321 = smul.u32 768, %s27
        %p323 = scmp.eq.s32.totalorder %s27, 0
        // Predicated region
        $region57: #{net_forward.3} parent=39 // pred_check
          %p324 = pneg %p323
        $region58: #{net_forward.3} parent=39 // pred_check_branch
          %326 = sbr.rel (%p324) target = $region60
        $region59: #{net_forward.3} parent=39 // pred_region
          %327 = vst [vmem:[#allocation2] sm:$0x3] 0.0
        $region60: #{net_forward.3} parent=39 // pred_fallthru
          _
        %v328 = vld [vmem:[#allocation2] sm:$0x3]
        %v329 = vld [vmem:[%s319] sm:$0xff]
        %v330 = vld [vmem:[%s319 + $0x8] sm:$0xff]
        %v331 = vld [vmem:[%s319 + $0x10] sm:$0xff]
        %v332 = vld [vmem:[%s319 + $0x18] sm:$0xff]
        %v333 = vld [vmem:[%s319 + $0x20] sm:$0xff]
        %v334 = vld [vmem:[%s319 + $0x28] sm:$0xff]
        %v335 = vld [vmem:[%s270] sm:$0xf]
        %v336 = vld [vmem:[%s270 + $0x4] sm:$0xf]
        %v337 = vld [vmem:[%s270 + $0x8] sm:$0xf]
        %v338 = vld [vmem:[%s270 + $0xc] sm:$0xf]
        %v339 = vld [vmem:[%s270 + $0x10] sm:$0xf]
        %v340 = vld [vmem:[%s270 + $0x14] sm:$0xf]
        %v341 = vld [vmem:[%s270 + $0x18] sm:$0xf]
        %v342 = vld [vmem:[%s270 + $0x1c] sm:$0xf]
        %v343 = vld [vmem:[%s270 + $0x20] sm:$0xf]
        %v344 = vld [vmem:[%s270 + $0x24] sm:$0xf]
        %v345 = vld [vmem:[%s270 + $0x28] sm:$0xf]
        %v346 = vld [vmem:[%s270 + $0x2c] sm:$0xf]
        %v347 = vld [vmem:[%s270 + $0x30] sm:$0xf]
        %v348 = vld [vmem:[%s270 + $0x34] sm:$0xf]
        %v349 = vld [vmem:[%s270 + $0x38] sm:$0xf]
        %v350 = vld [vmem:[%s270 + $0x3c] sm:$0xf]
        %v351 = vld [vmem:[%s270 + $0x40] sm:$0xf]
        %v352 = vld [vmem:[%s270 + $0x44] sm:$0xf]
        %v353 = vld [vmem:[%s270 + $0x48] sm:$0xf]
        %v354 = vld [vmem:[%s270 + $0x4c] sm:$0xf]
        %v355 = vld [vmem:[%s270 + $0x50] sm:$0xf]
        %v356 = vld [vmem:[%s270 + $0x54] sm:$0xf]
        %v357 = vld [vmem:[%s270 + $0x58] sm:$0xf]
        %v358 = vld [vmem:[%s270 + $0x5c] sm:$0xf]
        %v359 = vld [vmem:[%s270 + $0x60] sm:$0xf]
        %v360 = vld [vmem:[%s270 + $0x64] sm:$0xf]
        %v361 = vld [vmem:[%s270 + $0x68] sm:$0xf]
        %v362 = vld [vmem:[%s270 + $0x6c] sm:$0xf]
        %v363 = vld [vmem:[%s270 + $0x70] sm:$0xf]
        %v364 = vld [vmem:[%s270 + $0x74] sm:$0xf]
        %v365 = vld [vmem:[%s270 + $0x78] sm:$0xf]
        %v366 = vld [vmem:[%s270 + $0x7c] sm:$0xf]
        %v367 = vld [vmem:[%s270 + $0x80] sm:$0xf]
        %v368 = vld [vmem:[%s270 + $0x84] sm:$0xf]
        %v369 = vld [vmem:[%s270 + $0x88] sm:$0xf]
        %v370 = vld [vmem:[%s270 + $0x8c] sm:$0xf]
        %v371 = vld [vmem:[%s270 + $0x90] sm:$0xf]
        %v372 = vld [vmem:[%s270 + $0x94] sm:$0xf]
        %v373 = vld [vmem:[%s270 + $0x98] sm:$0xf]
        %v374 = vld [vmem:[%s270 + $0x9c] sm:$0xf]
        %v375 = vld [vmem:[%s270 + $0xa0] sm:$0xf]
        %v376 = vld [vmem:[%s270 + $0xa4] sm:$0xf]
        %v377 = vld [vmem:[%s270 + $0xa8] sm:$0xf]
        %v378 = vld [vmem:[%s270 + $0xac] sm:$0xf]
        %v379 = vld [vmem:[%s270 + $0xb0] sm:$0xf]
        %v380 = vld [vmem:[%s270 + $0xb4] sm:$0xf]
        %v381 = vld [vmem:[%s270 + $0xb8] sm:$0xf]
        %v382 = vld [vmem:[%s270 + $0xbc] sm:$0xf]
        %v383 = vld [vmem:[%s270 + $0xc0] sm:$0xf]
        %v384 = vld [vmem:[%s270 + $0xc4] sm:$0xf]
        %v385 = vld [vmem:[%s270 + $0xc8] sm:$0xf]
        %v386 = vld [vmem:[%s270 + $0xcc] sm:$0xf]
        %v387 = vld [vmem:[%s270 + $0xd0] sm:$0xf]
        %v388 = vld [vmem:[%s270 + $0xd4] sm:$0xf]
        %v389 = vld [vmem:[%s270 + $0xd8] sm:$0xf]
        %v390 = vld [vmem:[%s270 + $0xdc] sm:$0xf]
        %v391 = vld [vmem:[%s270 + $0xe0] sm:$0xf]
        %v392 = vld [vmem:[%s270 + $0xe4] sm:$0xf]
        %v393 = vld [vmem:[%s270 + $0xe8] sm:$0xf]
        %v394 = vld [vmem:[%s270 + $0xec] sm:$0xf]
        %v395 = vld [vmem:[%s270 + $0xf0] sm:$0xf]
        %v396 = vld [vmem:[%s270 + $0xf4] sm:$0xf]
        %v397 = vld [vmem:[%s270 + $0xf8] sm:$0xf]
        %v398 = vld [vmem:[%s270 + $0xfc] sm:$0xf]
        %v399 = vld [vmem:[%s270 + $0x100] sm:$0xf]
        %v400 = vld [vmem:[%s270 + $0x104] sm:$0xf]
        %v401 = vld [vmem:[%s270 + $0x108] sm:$0xf]
        %v402 = vld [vmem:[%s270 + $0x10c] sm:$0xf]
        %v403 = vld [vmem:[%s270 + $0x110] sm:$0xf]
        %v404 = vld [vmem:[%s270 + $0x114] sm:$0xf]
        %v405 = vld [vmem:[%s270 + $0x118] sm:$0xf]
        %v406 = vld [vmem:[%s270 + $0x11c] sm:$0xf]
        %v407 = vld [vmem:[%s270 + $0x120] sm:$0xf]
        %v408 = vld [vmem:[%s270 + $0x124] sm:$0xf]
        %v409 = vld [vmem:[%s270 + $0x128] sm:$0xf]
        %v410 = vld [vmem:[%s270 + $0x12c] sm:$0xf]
        %v411 = vld [vmem:[%s270 + $0x130] sm:$0xf]
        %v412 = vld [vmem:[%s270 + $0x134] sm:$0xf]
        %v413 = vld [vmem:[%s270 + $0x138] sm:$0xf]
        %v414 = vld [vmem:[%s270 + $0x13c] sm:$0xf]
        %v415 = vld [vmem:[%s270 + $0x140] sm:$0xf]
        %v416 = vld [vmem:[%s270 + $0x144] sm:$0xf]
        %v417 = vld [vmem:[%s270 + $0x148] sm:$0xf]
        %v418 = vld [vmem:[%s270 + $0x14c] sm:$0xf]
        %v419 = vld [vmem:[%s270 + $0x150] sm:$0xf]
        %v420 = vld [vmem:[%s270 + $0x154] sm:$0xf]
        %v421 = vld [vmem:[%s270 + $0x158] sm:$0xf]
        %v422 = vld [vmem:[%s270 + $0x15c] sm:$0xf]
        %v423 = vld [vmem:[%s270 + $0x160] sm:$0xf]
        %v424 = vld [vmem:[%s270 + $0x164] sm:$0xf]
        %v425 = vld [vmem:[%s270 + $0x168] sm:$0xf]
        %v426 = vld [vmem:[%s270 + $0x16c] sm:$0xf]
        %v427 = vld [vmem:[%s270 + $0x170] sm:$0xf]
        %v428 = vld [vmem:[%s270 + $0x174] sm:$0xf]
        %v429 = vld [vmem:[%s270 + $0x178] sm:$0xf]
        %v430 = vld [vmem:[%s270 + $0x17c] sm:$0xf]
        %v431 = vld [vmem:[%s270 + $0x180] sm:$0xf]
        %v432 = vld [vmem:[%s270 + $0x184] sm:$0xf]
        %v433 = vld [vmem:[%s270 + $0x188] sm:$0xf]
        %v434 = vld [vmem:[%s270 + $0x18c] sm:$0xf]
        %v435 = vld [vmem:[%s270 + $0x190] sm:$0xf]
        %v436 = vld [vmem:[%s270 + $0x194] sm:$0xf]
        %v437 = vld [vmem:[%s270 + $0x198] sm:$0xf]
        %v438 = vld [vmem:[%s270 + $0x19c] sm:$0xf]
        %v439 = vld [vmem:[%s270 + $0x1a0] sm:$0xf]
        %v440 = vld [vmem:[%s270 + $0x1a4] sm:$0xf]
        %v441 = vld [vmem:[%s270 + $0x1a8] sm:$0xf]
        %v442 = vld [vmem:[%s270 + $0x1ac] sm:$0xf]
        %v443 = vld [vmem:[%s270 + $0x1b0] sm:$0xf]
        %v444 = vld [vmem:[%s270 + $0x1b4] sm:$0xf]
        %v445 = vld [vmem:[%s270 + $0x1b8] sm:$0xf]
        %v446 = vld [vmem:[%s270 + $0x1bc] sm:$0xf]
        %v447 = vld [vmem:[%s270 + $0x1c0] sm:$0xf]
        %v448 = vld [vmem:[%s270 + $0x1c4] sm:$0xf]
        %v449 = vld [vmem:[%s270 + $0x1c8] sm:$0xf]
        %v450 = vld [vmem:[%s270 + $0x1cc] sm:$0xf]
        %v451 = vld [vmem:[%s270 + $0x1d0] sm:$0xf]
        %v452 = vld [vmem:[%s270 + $0x1d4] sm:$0xf]
        %v453 = vld [vmem:[%s270 + $0x1d8] sm:$0xf]
        %v454 = vld [vmem:[%s270 + $0x1dc] sm:$0xf]
        %v455 = vld [vmem:[%s270 + $0x1e0] sm:$0xf]
        %v456 = vld [vmem:[%s270 + $0x1e4] sm:$0xf]
        %v457 = vld [vmem:[%s270 + $0x1e8] sm:$0xf]
        %v458 = vld [vmem:[%s270 + $0x1ec] sm:$0xf]
        %v459 = vld [vmem:[%s270 + $0x1f0] sm:$0xf]
        %v460 = vld [vmem:[%s270 + $0x1f4] sm:$0xf]
        %v461 = vld [vmem:[%s270 + $0x1f8] sm:$0xf]
        %v462 = vld [vmem:[%s270 + $0x1fc] sm:$0xf]
        %v463 = vld [vmem:[%s270 + $0x200] sm:$0xf]
        %v464 = vld [vmem:[%s270 + $0x204] sm:$0xf]
        %v465 = vld [vmem:[%s270 + $0x208] sm:$0xf]
        %v466 = vld [vmem:[%s270 + $0x20c] sm:$0xf]
        %v467 = vld [vmem:[%s270 + $0x210] sm:$0xf]
        %v468 = vld [vmem:[%s270 + $0x214] sm:$0xf]
        %v469 = vld [vmem:[%s270 + $0x218] sm:$0xf]
        %v470 = vld [vmem:[%s270 + $0x21c] sm:$0xf]
        %v471 = vld [vmem:[%s270 + $0x220] sm:$0xf]
        %v472 = vld [vmem:[%s270 + $0x224] sm:$0xf]
        %v473 = vld [vmem:[%s270 + $0x228] sm:$0xf]
        %v474 = vld [vmem:[%s270 + $0x22c] sm:$0xf]
        %v475 = vld [vmem:[%s270 + $0x230] sm:$0xf]
        %v476 = vld [vmem:[%s270 + $0x234] sm:$0xf]
        %v477 = vld [vmem:[%s270 + $0x238] sm:$0xf]
        %v478 = vld [vmem:[%s270 + $0x23c] sm:$0xf]
        %v479 = vld [vmem:[%s270 + $0x240] sm:$0xf]
        %v480 = vld [vmem:[%s270 + $0x244] sm:$0xf]
        %v481 = vld [vmem:[%s270 + $0x248] sm:$0xf]
        %v482 = vld [vmem:[%s270 + $0x24c] sm:$0xf]
        %v483 = vld [vmem:[%s270 + $0x250] sm:$0xf]
        %v484 = vld [vmem:[%s270 + $0x254] sm:$0xf]
        %v485 = vld [vmem:[%s270 + $0x258] sm:$0xf]
        %v486 = vld [vmem:[%s270 + $0x25c] sm:$0xf]
        %v487 = vld [vmem:[%s270 + $0x260] sm:$0xf]
        %v488 = vld [vmem:[%s270 + $0x264] sm:$0xf]
        %v489 = vld [vmem:[%s270 + $0x268] sm:$0xf]
        %v490 = vld [vmem:[%s270 + $0x26c] sm:$0xf]
        %v491 = vld [vmem:[%s270 + $0x270] sm:$0xf]
        %v492 = vld [vmem:[%s270 + $0x274] sm:$0xf]
        %v493 = vld [vmem:[%s270 + $0x278] sm:$0xf]
        %v494 = vld [vmem:[%s270 + $0x27c] sm:$0xf]
        %v495 = vld [vmem:[%s270 + $0x280] sm:$0xf]
        %v496 = vld [vmem:[%s270 + $0x284] sm:$0xf]
        %v497 = vld [vmem:[%s270 + $0x288] sm:$0xf]
        %v498 = vld [vmem:[%s270 + $0x28c] sm:$0xf]
        %v499 = vld [vmem:[%s270 + $0x290] sm:$0xf]
        %v500 = vld [vmem:[%s270 + $0x294] sm:$0xf]
        %v501 = vld [vmem:[%s270 + $0x298] sm:$0xf]
        %v502 = vld [vmem:[%s270 + $0x29c] sm:$0xf]
        %v503 = vld [vmem:[%s270 + $0x2a0] sm:$0xf]
        %v504 = vld [vmem:[%s270 + $0x2a4] sm:$0xf]
        %v505 = vld [vmem:[%s270 + $0x2a8] sm:$0xf]
        %v506 = vld [vmem:[%s270 + $0x2ac] sm:$0xf]
        %v507 = vld [vmem:[%s270 + $0x2b0] sm:$0xf]
        %v508 = vld [vmem:[%s270 + $0x2b4] sm:$0xf]
        %v509 = vld [vmem:[%s270 + $0x2b8] sm:$0xf]
        %v510 = vld [vmem:[%s270 + $0x2bc] sm:$0xf]
        %v511 = vld [vmem:[%s270 + $0x2c0] sm:$0xf]
        %v512 = vld [vmem:[%s270 + $0x2c4] sm:$0xf]
        %v513 = vld [vmem:[%s270 + $0x2c8] sm:$0xf]
        %v514 = vld [vmem:[%s270 + $0x2cc] sm:$0xf]
        %v515 = vld [vmem:[%s270 + $0x2d0] sm:$0xf]
        %v516 = vld [vmem:[%s270 + $0x2d4] sm:$0xf]
        %v517 = vld [vmem:[%s270 + $0x2d8] sm:$0xf]
        %v518 = vld [vmem:[%s270 + $0x2dc] sm:$0xf]
        %v519 = vld [vmem:[%s270 + $0x2e0] sm:$0xf]
        %v520 = vld [vmem:[%s270 + $0x2e4] sm:$0xf]
        %v521 = vld [vmem:[%s270 + $0x2e8] sm:$0xf]
        %v522 = vld [vmem:[%s270 + $0x2ec] sm:$0xf]
        %v523 = vld [vmem:[%s270 + $0x2f0] sm:$0xf]
        %v524 = vld [vmem:[%s270 + $0x2f4] sm:$0xf]
        %v525 = vld [vmem:[%s270 + $0x2f8] sm:$0xf]
        %v526 = vld [vmem:[%s270 + $0x2fc] sm:$0xf]
        %v527 = vld [vmem:[%s270 + $0x300] sm:$0xf]
        %v528 = vld [vmem:[%s270 + $0x304] sm:$0xf]
        %v529 = vld [vmem:[%s270 + $0x308] sm:$0xf]
        %v530 = vld [vmem:[%s270 + $0x30c] sm:$0xf]
        %v531 = vld [vmem:[%s270 + $0x310] sm:$0xf]
        %v532 = vld [vmem:[%s270 + $0x314] sm:$0xf]
        %v533 = vld [vmem:[%s270 + $0x318] sm:$0xf]
        %v534 = vld [vmem:[%s270 + $0x31c] sm:$0xf]
        %v535 = vld [vmem:[%s270 + $0x320] sm:$0xf]
        %v536 = vld [vmem:[%s270 + $0x324] sm:$0xf]
        %v537 = vld [vmem:[%s270 + $0x328] sm:$0xf]
        %v538 = vld [vmem:[%s270 + $0x32c] sm:$0xf]
        %v539 = vld [vmem:[%s270 + $0x330] sm:$0xf]
        %v540 = vld [vmem:[%s270 + $0x334] sm:$0xf]
        %v541 = vld [vmem:[%s270 + $0x338] sm:$0xf]
        %v542 = vld [vmem:[%s270 + $0x33c] sm:$0xf]
        %v543 = vld [vmem:[%s270 + $0x340] sm:$0xf]
        %v544 = vld [vmem:[%s270 + $0x344] sm:$0xf]
        %v545 = vld [vmem:[%s270 + $0x348] sm:$0xf]
        %v546 = vld [vmem:[%s270 + $0x34c] sm:$0xf]
        %v547 = vld [vmem:[%s270 + $0x350] sm:$0xf]
        %v548 = vld [vmem:[%s270 + $0x354] sm:$0xf]
        %v549 = vld [vmem:[%s270 + $0x358] sm:$0xf]
        %v550 = vld [vmem:[%s270 + $0x35c] sm:$0xf]
        %v551 = vld [vmem:[%s270 + $0x360] sm:$0xf]
        %v552 = vld [vmem:[%s270 + $0x364] sm:$0xf]
        %v553 = vld [vmem:[%s270 + $0x368] sm:$0xf]
        %v554 = vld [vmem:[%s270 + $0x36c] sm:$0xf]
        %v555 = vld [vmem:[%s270 + $0x370] sm:$0xf]
        %v556 = vld [vmem:[%s270 + $0x374] sm:$0xf]
        %v557 = vld [vmem:[%s270 + $0x378] sm:$0xf]
        %v558 = vld [vmem:[%s270 + $0x37c] sm:$0xf]
        %v559 = vld [vmem:[%s270 + $0x380] sm:$0xf]
        %v560 = vld [vmem:[%s270 + $0x384] sm:$0xf]
        %v561 = vld [vmem:[%s270 + $0x388] sm:$0xf]
        %v562 = vld [vmem:[%s270 + $0x38c] sm:$0xf]
        %v563 = vld [vmem:[%s270 + $0x390] sm:$0xf]
        %v564 = vld [vmem:[%s270 + $0x394] sm:$0xf]
        %v565 = vld [vmem:[%s270 + $0x398] sm:$0xf]
        %v566 = vld [vmem:[%s270 + $0x39c] sm:$0xf]
        %v567 = vld [vmem:[%s270 + $0x3a0] sm:$0xf]
        %v568 = vld [vmem:[%s270 + $0x3a4] sm:$0xf]
        %v569 = vld [vmem:[%s270 + $0x3a8] sm:$0xf]
        %v570 = vld [vmem:[%s270 + $0x3ac] sm:$0xf]
        %v571 = vld [vmem:[%s270 + $0x3b0] sm:$0xf]
        %v572 = vld [vmem:[%s270 + $0x3b4] sm:$0xf]
        %v573 = vld [vmem:[%s270 + $0x3b8] sm:$0xf]
        %v574 = vld [vmem:[%s270 + $0x3bc] sm:$0xf]
        %v575 = vld [vmem:[%s270 + $0x3c0] sm:$0xf]
        %v576 = vld [vmem:[%s270 + $0x3c4] sm:$0xf]
        %v577 = vld [vmem:[%s270 + $0x3c8] sm:$0xf]
        %v578 = vld [vmem:[%s270 + $0x3cc] sm:$0xf]
        %v579 = vld [vmem:[%s270 + $0x3d0] sm:$0xf]
        %v580 = vld [vmem:[%s270 + $0x3d4] sm:$0xf]
        %v581 = vld [vmem:[%s270 + $0x3d8] sm:$0xf]
        %v582 = vld [vmem:[%s270 + $0x3dc] sm:$0xf]
        %v583 = vld [vmem:[%s270 + $0x3e0] sm:$0xf]
        %v584 = vld [vmem:[%s270 + $0x3e4] sm:$0xf]
        %v585 = vld [vmem:[%s270 + $0x3e8] sm:$0xf]
        %v586 = vld [vmem:[%s270 + $0x3ec] sm:$0xf]
        %v587 = vld [vmem:[%s270 + $0x3f0] sm:$0xf]
        %v588 = vld [vmem:[%s270 + $0x3f4] sm:$0xf]
        %v589 = vld [vmem:[%s270 + $0x3f8] sm:$0xf]
        %v590 = vld [vmem:[%s270 + $0x3fc] sm:$0xf]
        %v591 = vld [vmem:[%s270 + $0x400] sm:$0xf]
        %v592 = vld [vmem:[%s270 + $0x404] sm:$0xf]
        %v593 = vld [vmem:[%s270 + $0x408] sm:$0xf]
        %v594 = vld [vmem:[%s270 + $0x40c] sm:$0xf]
        %v595 = vld [vmem:[%s270 + $0x410] sm:$0xf]
        %v596 = vld [vmem:[%s270 + $0x414] sm:$0xf]
        %v597 = vld [vmem:[%s270 + $0x418] sm:$0xf]
        %v598 = vld [vmem:[%s270 + $0x41c] sm:$0xf]
        %v599 = vld [vmem:[%s270 + $0x420] sm:$0xf]
        %v600 = vld [vmem:[%s270 + $0x424] sm:$0xf]
        %v601 = vld [vmem:[%s270 + $0x428] sm:$0xf]
        %v602 = vld [vmem:[%s270 + $0x42c] sm:$0xf]
        %v603 = vld [vmem:[%s270 + $0x430] sm:$0xf]
        %v604 = vld [vmem:[%s270 + $0x434] sm:$0xf]
        %v605 = vld [vmem:[%s270 + $0x438] sm:$0xf]
        %v606 = vld [vmem:[%s270 + $0x43c] sm:$0xf]
        %v607 = vld [vmem:[%s270 + $0x440] sm:$0xf]
        %v608 = vld [vmem:[%s270 + $0x444] sm:$0xf]
        %v609 = vld [vmem:[%s270 + $0x448] sm:$0xf]
        %v610 = vld [vmem:[%s270 + $0x44c] sm:$0xf]
        %v611 = vld [vmem:[%s270 + $0x450] sm:$0xf]
        %v612 = vld [vmem:[%s270 + $0x454] sm:$0xf]
        %v613 = vld [vmem:[%s270 + $0x458] sm:$0xf]
        %v614 = vld [vmem:[%s270 + $0x45c] sm:$0xf]
        %v615 = vld [vmem:[%s270 + $0x460] sm:$0xf]
        %v616 = vld [vmem:[%s270 + $0x464] sm:$0xf]
        %v617 = vld [vmem:[%s270 + $0x468] sm:$0xf]
        %v618 = vld [vmem:[%s270 + $0x46c] sm:$0xf]
        %v619 = vld [vmem:[%s270 + $0x470] sm:$0xf]
        %v620 = vld [vmem:[%s270 + $0x474] sm:$0xf]
        %v621 = vld [vmem:[%s270 + $0x478] sm:$0xf]
        %v622 = vld [vmem:[%s270 + $0x47c] sm:$0xf]
        %v623 = vld [vmem:[%s270 + $0x480] sm:$0xf]
        %v624 = vld [vmem:[%s270 + $0x484] sm:$0xf]
        %v625 = vld [vmem:[%s270 + $0x488] sm:$0xf]
        %v626 = vld [vmem:[%s270 + $0x48c] sm:$0xf]
        %v627 = vld [vmem:[%s270 + $0x490] sm:$0xf]
        %v628 = vld [vmem:[%s270 + $0x494] sm:$0xf]
        %v629 = vld [vmem:[%s270 + $0x498] sm:$0xf]
        %v630 = vld [vmem:[%s270 + $0x49c] sm:$0xf]
        %v631 = vld [vmem:[%s270 + $0x4a0] sm:$0xf]
        %v632 = vld [vmem:[%s270 + $0x4a4] sm:$0xf]
        %v633 = vld [vmem:[%s270 + $0x4a8] sm:$0xf]
        %v634 = vld [vmem:[%s270 + $0x4ac] sm:$0xf]
        %v635 = vld [vmem:[%s270 + $0x4b0] sm:$0xf]
        %v636 = vld [vmem:[%s270 + $0x4b4] sm:$0xf]
        %v637 = vld [vmem:[%s270 + $0x4b8] sm:$0xf]
        %v638 = vld [vmem:[%s270 + $0x4bc] sm:$0xf]
        %v639 = vld [vmem:[%s270 + $0x4c0] sm:$0xf]
        %v640 = vld [vmem:[%s270 + $0x4c4] sm:$0xf]
        %v641 = vld [vmem:[%s270 + $0x4c8] sm:$0xf]
        %v642 = vld [vmem:[%s270 + $0x4cc] sm:$0xf]
        %v643 = vld [vmem:[%s270 + $0x4d0] sm:$0xf]
        %v644 = vld [vmem:[%s270 + $0x4d4] sm:$0xf]
        %v645 = vld [vmem:[%s270 + $0x4d8] sm:$0xf]
        %v646 = vld [vmem:[%s270 + $0x4dc] sm:$0xf]
        %v647 = vld [vmem:[%s270 + $0x4e0] sm:$0xf]
        %v648 = vld [vmem:[%s270 + $0x4e4] sm:$0xf]
        %v649 = vld [vmem:[%s270 + $0x4e8] sm:$0xf]
        %v650 = vld [vmem:[%s270 + $0x4ec] sm:$0xf]
        %v651 = vld [vmem:[%s270 + $0x4f0] sm:$0xf]
        %v652 = vld [vmem:[%s270 + $0x4f4] sm:$0xf]
        %v653 = vld [vmem:[%s270 + $0x4f8] sm:$0xf]
        %v654 = vld [vmem:[%s270 + $0x4fc] sm:$0xf]
        %v655 = vld [vmem:[%s270 + $0x500] sm:$0xf]
        %v656 = vld [vmem:[%s270 + $0x504] sm:$0xf]
        %v657 = vld [vmem:[%s270 + $0x508] sm:$0xf]
        %v658 = vld [vmem:[%s270 + $0x50c] sm:$0xf]
        %v659 = vld [vmem:[%s270 + $0x510] sm:$0xf]
        %v660 = vld [vmem:[%s270 + $0x514] sm:$0xf]
        %v661 = vld [vmem:[%s270 + $0x518] sm:$0xf]
        %v662 = vld [vmem:[%s270 + $0x51c] sm:$0xf]
        %v663 = vld [vmem:[%s270 + $0x520] sm:$0xf]
        %v664 = vld [vmem:[%s270 + $0x524] sm:$0xf]
        %v665 = vld [vmem:[%s270 + $0x528] sm:$0xf]
        %v666 = vld [vmem:[%s270 + $0x52c] sm:$0xf]
        %v667 = vld [vmem:[%s270 + $0x530] sm:$0xf]
        %v668 = vld [vmem:[%s270 + $0x534] sm:$0xf]
        %v669 = vld [vmem:[%s270 + $0x538] sm:$0xf]
        %v670 = vld [vmem:[%s270 + $0x53c] sm:$0xf]
        %v671 = vld [vmem:[%s270 + $0x540] sm:$0xf]
        %v672 = vld [vmem:[%s270 + $0x544] sm:$0xf]
        %v673 = vld [vmem:[%s270 + $0x548] sm:$0xf]
        %v674 = vld [vmem:[%s270 + $0x54c] sm:$0xf]
        %v675 = vld [vmem:[%s270 + $0x550] sm:$0xf]
        %v676 = vld [vmem:[%s270 + $0x554] sm:$0xf]
        %v677 = vld [vmem:[%s270 + $0x558] sm:$0xf]
        %v678 = vld [vmem:[%s270 + $0x55c] sm:$0xf]
        %v679 = vld [vmem:[%s270 + $0x560] sm:$0xf]
        %v680 = vld [vmem:[%s270 + $0x564] sm:$0xf]
        %v681 = vld [vmem:[%s270 + $0x568] sm:$0xf]
        %v682 = vld [vmem:[%s270 + $0x56c] sm:$0xf]
        %v683 = vld [vmem:[%s270 + $0x570] sm:$0xf]
        %v684 = vld [vmem:[%s270 + $0x574] sm:$0xf]
        %v685 = vld [vmem:[%s270 + $0x578] sm:$0xf]
        %v686 = vld [vmem:[%s270 + $0x57c] sm:$0xf]
        %v687 = vld [vmem:[%s270 + $0x580] sm:$0xf]
        %v688 = vld [vmem:[%s270 + $0x584] sm:$0xf]
        %v689 = vld [vmem:[%s270 + $0x588] sm:$0xf]
        %v690 = vld [vmem:[%s270 + $0x58c] sm:$0xf]
        %v691 = vld [vmem:[%s270 + $0x590] sm:$0xf]
        %v692 = vld [vmem:[%s270 + $0x594] sm:$0xf]
        %v693 = vld [vmem:[%s270 + $0x598] sm:$0xf]
        %v694 = vld [vmem:[%s270 + $0x59c] sm:$0xf]
        %v695 = vld [vmem:[%s270 + $0x5a0] sm:$0xf]
        %v696 = vld [vmem:[%s270 + $0x5a4] sm:$0xf]
        %v697 = vld [vmem:[%s270 + $0x5a8] sm:$0xf]
        %v698 = vld [vmem:[%s270 + $0x5ac] sm:$0xf]
        %v699 = vld [vmem:[%s270 + $0x5b0] sm:$0xf]
        %v700 = vld [vmem:[%s270 + $0x5b4] sm:$0xf]
        %v701 = vld [vmem:[%s270 + $0x5b8] sm:$0xf]
        %v702 = vld [vmem:[%s270 + $0x5bc] sm:$0xf]
        %v703 = vld [vmem:[%s270 + $0x5c0] sm:$0xf]
        %v704 = vld [vmem:[%s270 + $0x5c4] sm:$0xf]
        %v705 = vld [vmem:[%s270 + $0x5c8] sm:$0xf]
        %v706 = vld [vmem:[%s270 + $0x5cc] sm:$0xf]
        %v707 = vld [vmem:[%s270 + $0x5d0] sm:$0xf]
        %v708 = vld [vmem:[%s270 + $0x5d4] sm:$0xf]
        %v709 = vld [vmem:[%s270 + $0x5d8] sm:$0xf]
        %v710 = vld [vmem:[%s270 + $0x5dc] sm:$0xf]
        %v711 = vld [vmem:[%s270 + $0x5e0] sm:$0xf]
        %v712 = vld [vmem:[%s270 + $0x5e4] sm:$0xf]
        %v713 = vld [vmem:[%s270 + $0x5e8] sm:$0xf]
        %v714 = vld [vmem:[%s270 + $0x5ec] sm:$0xf]
        %v715 = vld [vmem:[%s270 + $0x5f0] sm:$0xf]
        %v716 = vld [vmem:[%s270 + $0x5f4] sm:$0xf]
        %v717 = vld [vmem:[%s270 + $0x5f8] sm:$0xf]
        %v718 = vld [vmem:[%s270 + $0x5fc] sm:$0xf]
        %v719 = vld [vmem:[%s270 + $0x600] sm:$0xf]
        %v720 = vld [vmem:[%s270 + $0x604] sm:$0xf]
        %v721 = vld [vmem:[%s270 + $0x608] sm:$0xf]
        %v722 = vld [vmem:[%s270 + $0x60c] sm:$0xf]
        %v723 = vld [vmem:[%s270 + $0x610] sm:$0xf]
        %v724 = vld [vmem:[%s270 + $0x614] sm:$0xf]
        %v725 = vld [vmem:[%s270 + $0x618] sm:$0xf]
        %v726 = vld [vmem:[%s270 + $0x61c] sm:$0xf]
        %v727 = vld [vmem:[%s270 + $0x620] sm:$0xf]
        %v728 = vld [vmem:[%s270 + $0x624] sm:$0xf]
        %v729 = vld [vmem:[%s270 + $0x628] sm:$0xf]
        %v730 = vld [vmem:[%s270 + $0x62c] sm:$0xf]
        %v731 = vld [vmem:[%s270 + $0x630] sm:$0xf]
        %v732 = vld [vmem:[%s270 + $0x634] sm:$0xf]
        %v733 = vld [vmem:[%s270 + $0x638] sm:$0xf]
        %v734 = vld [vmem:[%s270 + $0x63c] sm:$0xf]
        %v735 = vld [vmem:[%s270 + $0x640] sm:$0xf]
        %v736 = vld [vmem:[%s270 + $0x644] sm:$0xf]
        %v737 = vld [vmem:[%s270 + $0x648] sm:$0xf]
        %v738 = vld [vmem:[%s270 + $0x64c] sm:$0xf]
        %v739 = vld [vmem:[%s270 + $0x650] sm:$0xf]
        %v740 = vld [vmem:[%s270 + $0x654] sm:$0xf]
        %v741 = vld [vmem:[%s270 + $0x658] sm:$0xf]
        %v742 = vld [vmem:[%s270 + $0x65c] sm:$0xf]
        %v743 = vld [vmem:[%s270 + $0x660] sm:$0xf]
        %v744 = vld [vmem:[%s270 + $0x664] sm:$0xf]
        %v745 = vld [vmem:[%s270 + $0x668] sm:$0xf]
        %v746 = vld [vmem:[%s270 + $0x66c] sm:$0xf]
        %v747 = vld [vmem:[%s270 + $0x670] sm:$0xf]
        %v748 = vld [vmem:[%s270 + $0x674] sm:$0xf]
        %v749 = vld [vmem:[%s270 + $0x678] sm:$0xf]
        %v750 = vld [vmem:[%s270 + $0x67c] sm:$0xf]
        %v751 = vld [vmem:[%s270 + $0x680] sm:$0xf]
        %v752 = vld [vmem:[%s270 + $0x684] sm:$0xf]
        %v753 = vld [vmem:[%s270 + $0x688] sm:$0xf]
        %v754 = vld [vmem:[%s270 + $0x68c] sm:$0xf]
        %v755 = vld [vmem:[%s270 + $0x690] sm:$0xf]
        %v756 = vld [vmem:[%s270 + $0x694] sm:$0xf]
        %v757 = vld [vmem:[%s270 + $0x698] sm:$0xf]
        %v758 = vld [vmem:[%s270 + $0x69c] sm:$0xf]
        %v759 = vld [vmem:[%s270 + $0x6a0] sm:$0xf]
        %v760 = vld [vmem:[%s270 + $0x6a4] sm:$0xf]
        %v761 = vld [vmem:[%s270 + $0x6a8] sm:$0xf]
        %v762 = vld [vmem:[%s270 + $0x6ac] sm:$0xf]
        %v763 = vld [vmem:[%s270 + $0x6b0] sm:$0xf]
        %v764 = vld [vmem:[%s270 + $0x6b4] sm:$0xf]
        %v765 = vld [vmem:[%s270 + $0x6b8] sm:$0xf]
        %v766 = vld [vmem:[%s270 + $0x6bc] sm:$0xf]
        %v767 = vld [vmem:[%s270 + $0x6c0] sm:$0xf]
        %v768 = vld [vmem:[%s270 + $0x6c4] sm:$0xf]
        %v769 = vld [vmem:[%s270 + $0x6c8] sm:$0xf]
        %v770 = vld [vmem:[%s270 + $0x6cc] sm:$0xf]
        %v771 = vld [vmem:[%s270 + $0x6d0] sm:$0xf]
        %v772 = vld [vmem:[%s270 + $0x6d4] sm:$0xf]
        %v773 = vld [vmem:[%s270 + $0x6d8] sm:$0xf]
        %v774 = vld [vmem:[%s270 + $0x6dc] sm:$0xf]
        %v775 = vld [vmem:[%s270 + $0x6e0] sm:$0xf]
        %v776 = vld [vmem:[%s270 + $0x6e4] sm:$0xf]
        %v777 = vld [vmem:[%s270 + $0x6e8] sm:$0xf]
        %v778 = vld [vmem:[%s270 + $0x6ec] sm:$0xf]
        %v779 = vld [vmem:[%s270 + $0x6f0] sm:$0xf]
        %v780 = vld [vmem:[%s270 + $0x6f4] sm:$0xf]
        %v781 = vld [vmem:[%s270 + $0x6f8] sm:$0xf]
        %v782 = vld [vmem:[%s270 + $0x6fc] sm:$0xf]
        %v783 = vld [vmem:[%s270 + $0x700] sm:$0xf]
        %v784 = vld [vmem:[%s270 + $0x704] sm:$0xf]
        %v785 = vld [vmem:[%s270 + $0x708] sm:$0xf]
        %v786 = vld [vmem:[%s270 + $0x70c] sm:$0xf]
        %v787 = vld [vmem:[%s270 + $0x710] sm:$0xf]
        %v788 = vld [vmem:[%s270 + $0x714] sm:$0xf]
        %v789 = vld [vmem:[%s270 + $0x718] sm:$0xf]
        %v790 = vld [vmem:[%s270 + $0x71c] sm:$0xf]
        %v791 = vld [vmem:[%s270 + $0x720] sm:$0xf]
        %v792 = vld [vmem:[%s270 + $0x724] sm:$0xf]
        %v793 = vld [vmem:[%s270 + $0x728] sm:$0xf]
        %v794 = vld [vmem:[%s270 + $0x72c] sm:$0xf]
        %v795 = vld [vmem:[%s270 + $0x730] sm:$0xf]
        %v796 = vld [vmem:[%s270 + $0x734] sm:$0xf]
        %v797 = vld [vmem:[%s270 + $0x738] sm:$0xf]
        %v798 = vld [vmem:[%s270 + $0x73c] sm:$0xf]
        %v799 = vld [vmem:[%s270 + $0x740] sm:$0xf]
        %v800 = vld [vmem:[%s270 + $0x744] sm:$0xf]
        %v801 = vld [vmem:[%s270 + $0x748] sm:$0xf]
        %v802 = vld [vmem:[%s270 + $0x74c] sm:$0xf]
        %v803 = vld [vmem:[%s270 + $0x750] sm:$0xf]
        %v804 = vld [vmem:[%s270 + $0x754] sm:$0xf]
        %v805 = vld [vmem:[%s270 + $0x758] sm:$0xf]
        %v806 = vld [vmem:[%s270 + $0x75c] sm:$0xf]
        %v807 = vld [vmem:[%s270 + $0x760] sm:$0xf]
        %v808 = vld [vmem:[%s270 + $0x764] sm:$0xf]
        %v809 = vld [vmem:[%s270 + $0x768] sm:$0xf]
        %v810 = vld [vmem:[%s270 + $0x76c] sm:$0xf]
        %v811 = vld [vmem:[%s270 + $0x770] sm:$0xf]
        %v812 = vld [vmem:[%s270 + $0x774] sm:$0xf]
        %v813 = vld [vmem:[%s270 + $0x778] sm:$0xf]
        %v814 = vld [vmem:[%s270 + $0x77c] sm:$0xf]
        %v815 = vld [vmem:[%s270 + $0x780] sm:$0xf]
        %v816 = vld [vmem:[%s270 + $0x784] sm:$0xf]
        %v817 = vld [vmem:[%s270 + $0x788] sm:$0xf]
        %v818 = vld [vmem:[%s270 + $0x78c] sm:$0xf]
        %v819 = vld [vmem:[%s270 + $0x790] sm:$0xf]
        %v820 = vld [vmem:[%s270 + $0x794] sm:$0xf]
        %v821 = vld [vmem:[%s270 + $0x798] sm:$0xf]
        %v822 = vld [vmem:[%s270 + $0x79c] sm:$0xf]
        %v823 = vld [vmem:[%s270 + $0x7a0] sm:$0xf]
        %v824 = vld [vmem:[%s270 + $0x7a4] sm:$0xf]
        %v825 = vld [vmem:[%s270 + $0x7a8] sm:$0xf]
        %v826 = vld [vmem:[%s270 + $0x7ac] sm:$0xf]
        %v827 = vld [vmem:[%s270 + $0x7b0] sm:$0xf]
        %v828 = vld [vmem:[%s270 + $0x7b4] sm:$0xf]
        %v829 = vld [vmem:[%s270 + $0x7b8] sm:$0xf]
        %v830 = vld [vmem:[%s270 + $0x7bc] sm:$0xf]
        %v831 = vld [vmem:[%s270 + $0x7c0] sm:$0xf]
        %v832 = vld [vmem:[%s270 + $0x7c4] sm:$0xf]
        %v833 = vld [vmem:[%s270 + $0x7c8] sm:$0xf]
        %v834 = vld [vmem:[%s270 + $0x7cc] sm:$0xf]
        %v835 = vld [vmem:[%s270 + $0x7d0] sm:$0xf]
        %v836 = vld [vmem:[%s270 + $0x7d4] sm:$0xf]
        %v837 = vld [vmem:[%s270 + $0x7d8] sm:$0xf]
        %v838 = vld [vmem:[%s270 + $0x7dc] sm:$0xf]
        %v839 = vld [vmem:[%s270 + $0x7e0] sm:$0xf]
        %v840 = vld [vmem:[%s270 + $0x7e4] sm:$0xf]
        %v841 = vld [vmem:[%s270 + $0x7e8] sm:$0xf]
        %v842 = vld [vmem:[%s270 + $0x7ec] sm:$0xf]
        %v843 = vld [vmem:[%s270 + $0x7f0] sm:$0xf]
        %v844 = vld [vmem:[%s270 + $0x7f4] sm:$0xf]
        %v845 = vld [vmem:[%s270 + $0x7f8] sm:$0xf]
        %v846 = vld [vmem:[%s270 + $0x7fc] sm:$0xf]
        %v847 = vld [vmem:[%s270 + $0x800] sm:$0xf]
        %v848 = vld [vmem:[%s270 + $0x804] sm:$0xf]
        %v849 = vld [vmem:[%s270 + $0x808] sm:$0xf]
        %v850 = vld [vmem:[%s270 + $0x80c] sm:$0xf]
        %v851 = vld [vmem:[%s270 + $0x810] sm:$0xf]
        %v852 = vld [vmem:[%s270 + $0x814] sm:$0xf]
        %v853 = vld [vmem:[%s270 + $0x818] sm:$0xf]
        %v854 = vld [vmem:[%s270 + $0x81c] sm:$0xf]
        %v855 = vld [vmem:[%s270 + $0x820] sm:$0xf]
        %v856 = vld [vmem:[%s270 + $0x824] sm:$0xf]
        %v857 = vld [vmem:[%s270 + $0x828] sm:$0xf]
        %v858 = vld [vmem:[%s270 + $0x82c] sm:$0xf]
        %v859 = vld [vmem:[%s270 + $0x830] sm:$0xf]
        %v860 = vld [vmem:[%s270 + $0x834] sm:$0xf]
        %v861 = vld [vmem:[%s270 + $0x838] sm:$0xf]
        %v862 = vld [vmem:[%s270 + $0x83c] sm:$0xf]
        %v863 = vld [vmem:[%s270 + $0x840] sm:$0xf]
        %v864 = vld [vmem:[%s270 + $0x844] sm:$0xf]
        %v865 = vld [vmem:[%s270 + $0x848] sm:$0xf]
        %v866 = vld [vmem:[%s270 + $0x84c] sm:$0xf]
        %v867 = vld [vmem:[%s270 + $0x850] sm:$0xf]
        %v868 = vld [vmem:[%s270 + $0x854] sm:$0xf]
        %v869 = vld [vmem:[%s270 + $0x858] sm:$0xf]
        %v870 = vld [vmem:[%s270 + $0x85c] sm:$0xf]
        %v871 = vld [vmem:[%s270 + $0x860] sm:$0xf]
        %v872 = vld [vmem:[%s270 + $0x864] sm:$0xf]
        %v873 = vld [vmem:[%s270 + $0x868] sm:$0xf]
        %v874 = vld [vmem:[%s270 + $0x86c] sm:$0xf]
        %v875 = vld [vmem:[%s270 + $0x870] sm:$0xf]
        %v876 = vld [vmem:[%s270 + $0x874] sm:$0xf]
        %v877 = vld [vmem:[%s270 + $0x878] sm:$0xf]
        %v878 = vld [vmem:[%s270 + $0x87c] sm:$0xf]
        %v879 = vld [vmem:[%s270 + $0x880] sm:$0xf]
        %v880 = vld [vmem:[%s270 + $0x884] sm:$0xf]
        %v881 = vld [vmem:[%s270 + $0x888] sm:$0xf]
        %v882 = vld [vmem:[%s270 + $0x88c] sm:$0xf]
        %v883 = vld [vmem:[%s270 + $0x890] sm:$0xf]
        %v884 = vld [vmem:[%s270 + $0x894] sm:$0xf]
        %v885 = vld [vmem:[%s270 + $0x898] sm:$0xf]
        %v886 = vld [vmem:[%s270 + $0x89c] sm:$0xf]
        %v887 = vld [vmem:[%s270 + $0x8a0] sm:$0xf]
        %v888 = vld [vmem:[%s270 + $0x8a4] sm:$0xf]
        %v889 = vld [vmem:[%s270 + $0x8a8] sm:$0xf]
        %v890 = vld [vmem:[%s270 + $0x8ac] sm:$0xf]
        %v891 = vld [vmem:[%s270 + $0x8b0] sm:$0xf]
        %v892 = vld [vmem:[%s270 + $0x8b4] sm:$0xf]
        %v893 = vld [vmem:[%s270 + $0x8b8] sm:$0xf]
        %v894 = vld [vmem:[%s270 + $0x8bc] sm:$0xf]
        %v895 = vld [vmem:[%s270 + $0x8c0] sm:$0xf]
        %v896 = vld [vmem:[%s270 + $0x8c4] sm:$0xf]
        %v897 = vld [vmem:[%s270 + $0x8c8] sm:$0xf]
        %v898 = vld [vmem:[%s270 + $0x8cc] sm:$0xf]
        %v899 = vld [vmem:[%s270 + $0x8d0] sm:$0xf]
        %v900 = vld [vmem:[%s270 + $0x8d4] sm:$0xf]
        %v901 = vld [vmem:[%s270 + $0x8d8] sm:$0xf]
        %v902 = vld [vmem:[%s270 + $0x8dc] sm:$0xf]
        %v903 = vld [vmem:[%s270 + $0x8e0] sm:$0xf]
        %v904 = vld [vmem:[%s270 + $0x8e4] sm:$0xf]
        %v905 = vld [vmem:[%s270 + $0x8e8] sm:$0xf]
        %v906 = vld [vmem:[%s270 + $0x8ec] sm:$0xf]
        %v907 = vld [vmem:[%s270 + $0x8f0] sm:$0xf]
        %v908 = vld [vmem:[%s270 + $0x8f4] sm:$0xf]
        %v909 = vld [vmem:[%s270 + $0x8f8] sm:$0xf]
        %v910 = vld [vmem:[%s270 + $0x8fc] sm:$0xf]
        %v911 = vld [vmem:[%s270 + $0x900] sm:$0xf]
        %v912 = vld [vmem:[%s270 + $0x904] sm:$0xf]
        %v913 = vld [vmem:[%s270 + $0x908] sm:$0xf]
        %v914 = vld [vmem:[%s270 + $0x90c] sm:$0xf]
        %v915 = vld [vmem:[%s270 + $0x910] sm:$0xf]
        %v916 = vld [vmem:[%s270 + $0x914] sm:$0xf]
        %v917 = vld [vmem:[%s270 + $0x918] sm:$0xf]
        %v918 = vld [vmem:[%s270 + $0x91c] sm:$0xf]
        %v919 = vld [vmem:[%s270 + $0x920] sm:$0xf]
        %v920 = vld [vmem:[%s270 + $0x924] sm:$0xf]
        %v921 = vld [vmem:[%s270 + $0x928] sm:$0xf]
        %v922 = vld [vmem:[%s270 + $0x92c] sm:$0xf]
        %v923 = vld [vmem:[%s270 + $0x930] sm:$0xf]
        %v924 = vld [vmem:[%s270 + $0x934] sm:$0xf]
        %v925 = vld [vmem:[%s270 + $0x938] sm:$0xf]
        %v926 = vld [vmem:[%s270 + $0x93c] sm:$0xf]
        %v927 = vld [vmem:[%s270 + $0x940] sm:$0xf]
        %v928 = vld [vmem:[%s270 + $0x944] sm:$0xf]
        %v929 = vld [vmem:[%s270 + $0x948] sm:$0xf]
        %v930 = vld [vmem:[%s270 + $0x94c] sm:$0xf]
        %v931 = vld [vmem:[%s270 + $0x950] sm:$0xf]
        %v932 = vld [vmem:[%s270 + $0x954] sm:$0xf]
        %v933 = vld [vmem:[%s270 + $0x958] sm:$0xf]
        %v934 = vld [vmem:[%s270 + $0x95c] sm:$0xf]
        %v935 = vld [vmem:[%s270 + $0x960] sm:$0xf]
        %v936 = vld [vmem:[%s270 + $0x964] sm:$0xf]
        %v937 = vld [vmem:[%s270 + $0x968] sm:$0xf]
        %v938 = vld [vmem:[%s270 + $0x96c] sm:$0xf]
        %v939 = vld [vmem:[%s270 + $0x970] sm:$0xf]
        %v940 = vld [vmem:[%s270 + $0x974] sm:$0xf]
        %v941 = vld [vmem:[%s270 + $0x978] sm:$0xf]
        %v942 = vld [vmem:[%s270 + $0x97c] sm:$0xf]
        %v943 = vld [vmem:[%s270 + $0x980] sm:$0xf]
        %v944 = vld [vmem:[%s270 + $0x984] sm:$0xf]
        %v945 = vld [vmem:[%s270 + $0x988] sm:$0xf]
        %v946 = vld [vmem:[%s270 + $0x98c] sm:$0xf]
        %v947 = vld [vmem:[%s270 + $0x990] sm:$0xf]
        %v948 = vld [vmem:[%s270 + $0x994] sm:$0xf]
        %v949 = vld [vmem:[%s270 + $0x998] sm:$0xf]
        %v950 = vld [vmem:[%s270 + $0x99c] sm:$0xf]
        %v951 = vld [vmem:[%s270 + $0x9a0] sm:$0xf]
        %v952 = vld [vmem:[%s270 + $0x9a4] sm:$0xf]
        %v953 = vld [vmem:[%s270 + $0x9a8] sm:$0xf]
        %v954 = vld [vmem:[%s270 + $0x9ac] sm:$0xf]
        %v955 = vld [vmem:[%s270 + $0x9b0] sm:$0xf]
        %v956 = vld [vmem:[%s270 + $0x9b4] sm:$0xf]
        %v957 = vld [vmem:[%s270 + $0x9b8] sm:$0xf]
        %v958 = vld [vmem:[%s270 + $0x9bc] sm:$0xf]
        %v959 = vld [vmem:[%s270 + $0x9c0] sm:$0xf]
        %v960 = vld [vmem:[%s270 + $0x9c4] sm:$0xf]
        %v961 = vld [vmem:[%s270 + $0x9c8] sm:$0xf]
        %v962 = vld [vmem:[%s270 + $0x9cc] sm:$0xf]
        %v963 = vld [vmem:[%s270 + $0x9d0] sm:$0xf]
        %v964 = vld [vmem:[%s270 + $0x9d4] sm:$0xf]
        %v965 = vld [vmem:[%s270 + $0x9d8] sm:$0xf]
        %v966 = vld [vmem:[%s270 + $0x9dc] sm:$0xf]
        %v967 = vld [vmem:[%s270 + $0x9e0] sm:$0xf]
        %v968 = vld [vmem:[%s270 + $0x9e4] sm:$0xf]
        %v969 = vld [vmem:[%s270 + $0x9e8] sm:$0xf]
        %v970 = vld [vmem:[%s270 + $0x9ec] sm:$0xf]
        %v971 = vld [vmem:[%s270 + $0x9f0] sm:$0xf]
        %v972 = vld [vmem:[%s270 + $0x9f4] sm:$0xf]
        %v973 = vld [vmem:[%s270 + $0x9f8] sm:$0xf]
        %v974 = vld [vmem:[%s270 + $0x9fc] sm:$0xf]
        %v975 = vld [vmem:[%s270 + $0xa00] sm:$0xf]
        %v976 = vld [vmem:[%s270 + $0xa04] sm:$0xf]
        %v977 = vld [vmem:[%s270 + $0xa08] sm:$0xf]
        %v978 = vld [vmem:[%s270 + $0xa0c] sm:$0xf]
        %v979 = vld [vmem:[%s270 + $0xa10] sm:$0xf]
        %v980 = vld [vmem:[%s270 + $0xa14] sm:$0xf]
        %v981 = vld [vmem:[%s270 + $0xa18] sm:$0xf]
        %v982 = vld [vmem:[%s270 + $0xa1c] sm:$0xf]
        %v983 = vld [vmem:[%s270 + $0xa20] sm:$0xf]
        %v984 = vld [vmem:[%s270 + $0xa24] sm:$0xf]
        %v985 = vld [vmem:[%s270 + $0xa28] sm:$0xf]
        %v986 = vld [vmem:[%s270 + $0xa2c] sm:$0xf]
        %v987 = vld [vmem:[%s270 + $0xa30] sm:$0xf]
        %v988 = vld [vmem:[%s270 + $0xa34] sm:$0xf]
        %v989 = vld [vmem:[%s270 + $0xa38] sm:$0xf]
        %v990 = vld [vmem:[%s270 + $0xa3c] sm:$0xf]
        %v991 = vld [vmem:[%s270 + $0xa40] sm:$0xf]
        %v992 = vld [vmem:[%s270 + $0xa44] sm:$0xf]
        %v993 = vld [vmem:[%s270 + $0xa48] sm:$0xf]
        %v994 = vld [vmem:[%s270 + $0xa4c] sm:$0xf]
        %v995 = vld [vmem:[%s270 + $0xa50] sm:$0xf]
        %v996 = vld [vmem:[%s270 + $0xa54] sm:$0xf]
        %v997 = vld [vmem:[%s270 + $0xa58] sm:$0xf]
        %v998 = vld [vmem:[%s270 + $0xa5c] sm:$0xf]
        %v999 = vld [vmem:[%s270 + $0xa60] sm:$0xf]
        %v1000 = vld [vmem:[%s270 + $0xa64] sm:$0xf]
        %v1001 = vld [vmem:[%s270 + $0xa68] sm:$0xf]
        %v1002 = vld [vmem:[%s270 + $0xa6c] sm:$0xf]
        %v1003 = vld [vmem:[%s270 + $0xa70] sm:$0xf]
        %v1004 = vld [vmem:[%s270 + $0xa74] sm:$0xf]
        %v1005 = vld [vmem:[%s270 + $0xa78] sm:$0xf]
        %v1006 = vld [vmem:[%s270 + $0xa7c] sm:$0xf]
        %v1007 = vld [vmem:[%s270 + $0xa80] sm:$0xf]
        %v1008 = vld [vmem:[%s270 + $0xa84] sm:$0xf]
        %v1009 = vld [vmem:[%s270 + $0xa88] sm:$0xf]
        %v1010 = vld [vmem:[%s270 + $0xa8c] sm:$0xf]
        %v1011 = vld [vmem:[%s270 + $0xa90] sm:$0xf]
        %v1012 = vld [vmem:[%s270 + $0xa94] sm:$0xf]
        %v1013 = vld [vmem:[%s270 + $0xa98] sm:$0xf]
        %v1014 = vld [vmem:[%s270 + $0xa9c] sm:$0xf]
        %v1015 = vld [vmem:[%s270 + $0xaa0] sm:$0xf]
        %v1016 = vld [vmem:[%s270 + $0xaa4] sm:$0xf]
        %v1017 = vld [vmem:[%s270 + $0xaa8] sm:$0xf]
        %v1018 = vld [vmem:[%s270 + $0xaac] sm:$0xf]
        %v1019 = vld [vmem:[%s270 + $0xab0] sm:$0xf]
        %v1020 = vld [vmem:[%s270 + $0xab4] sm:$0xf]
        %v1021 = vld [vmem:[%s270 + $0xab8] sm:$0xf]
        %v1022 = vld [vmem:[%s270 + $0xabc] sm:$0xf]
        %v1023 = vld [vmem:[%s270 + $0xac0] sm:$0xf]
        %v1024 = vld [vmem:[%s270 + $0xac4] sm:$0xf]
        %v1025 = vld [vmem:[%s270 + $0xac8] sm:$0xf]
        %v1026 = vld [vmem:[%s270 + $0xacc] sm:$0xf]
        %v1027 = vld [vmem:[%s270 + $0xad0] sm:$0xf]
        %v1028 = vld [vmem:[%s270 + $0xad4] sm:$0xf]
        %v1029 = vld [vmem:[%s270 + $0xad8] sm:$0xf]
        %v1030 = vld [vmem:[%s270 + $0xadc] sm:$0xf]
        %v1031 = vld [vmem:[%s270 + $0xae0] sm:$0xf]
        %v1032 = vld [vmem:[%s270 + $0xae4] sm:$0xf]
        %v1033 = vld [vmem:[%s270 + $0xae8] sm:$0xf]
        %v1034 = vld [vmem:[%s270 + $0xaec] sm:$0xf]
        %v1035 = vld [vmem:[%s270 + $0xaf0] sm:$0xf]
        %v1036 = vld [vmem:[%s270 + $0xaf4] sm:$0xf]
        %v1037 = vld [vmem:[%s270 + $0xaf8] sm:$0xf]
        %v1038 = vld [vmem:[%s270 + $0xafc] sm:$0xf]
        %v1039 = vld [vmem:[%s270 + $0xb00] sm:$0xf]
        %v1040 = vld [vmem:[%s270 + $0xb04] sm:$0xf]
        %v1041 = vld [vmem:[%s270 + $0xb08] sm:$0xf]
        %v1042 = vld [vmem:[%s270 + $0xb0c] sm:$0xf]
        %v1043 = vld [vmem:[%s270 + $0xb10] sm:$0xf]
        %v1044 = vld [vmem:[%s270 + $0xb14] sm:$0xf]
        %v1045 = vld [vmem:[%s270 + $0xb18] sm:$0xf]
        %v1046 = vld [vmem:[%s270 + $0xb1c] sm:$0xf]
        %v1047 = vld [vmem:[%s270 + $0xb20] sm:$0xf]
        %v1048 = vld [vmem:[%s270 + $0xb24] sm:$0xf]
        %v1049 = vld [vmem:[%s270 + $0xb28] sm:$0xf]
        %v1050 = vld [vmem:[%s270 + $0xb2c] sm:$0xf]
        %v1051 = vld [vmem:[%s270 + $0xb30] sm:$0xf]
        %v1052 = vld [vmem:[%s270 + $0xb34] sm:$0xf]
        %v1053 = vld [vmem:[%s270 + $0xb38] sm:$0xf]
        %v1054 = vld [vmem:[%s270 + $0xb3c] sm:$0xf]
        %v1055 = vld [vmem:[%s270 + $0xb40] sm:$0xf]
        %v1056 = vld [vmem:[%s270 + $0xb44] sm:$0xf]
        %v1057 = vld [vmem:[%s270 + $0xb48] sm:$0xf]
        %v1058 = vld [vmem:[%s270 + $0xb4c] sm:$0xf]
        %v1059 = vld [vmem:[%s270 + $0xb50] sm:$0xf]
        %v1060 = vld [vmem:[%s270 + $0xb54] sm:$0xf]
        %v1061 = vld [vmem:[%s270 + $0xb58] sm:$0xf]
        %v1062 = vld [vmem:[%s270 + $0xb5c] sm:$0xf]
        %v1063 = vld [vmem:[%s270 + $0xb60] sm:$0xf]
        %v1064 = vld [vmem:[%s270 + $0xb64] sm:$0xf]
        %v1065 = vld [vmem:[%s270 + $0xb68] sm:$0xf]
        %v1066 = vld [vmem:[%s270 + $0xb6c] sm:$0xf]
        %v1067 = vld [vmem:[%s270 + $0xb70] sm:$0xf]
        %v1068 = vld [vmem:[%s270 + $0xb74] sm:$0xf]
        %v1069 = vld [vmem:[%s270 + $0xb78] sm:$0xf]
        %v1070 = vld [vmem:[%s270 + $0xb7c] sm:$0xf]
        %v1071 = vld [vmem:[%s270 + $0xb80] sm:$0xf]
        %v1072 = vld [vmem:[%s270 + $0xb84] sm:$0xf]
        %v1073 = vld [vmem:[%s270 + $0xb88] sm:$0xf]
        %v1074 = vld [vmem:[%s270 + $0xb8c] sm:$0xf]
        %v1075 = vld [vmem:[%s270 + $0xb90] sm:$0xf]
        %v1076 = vld [vmem:[%s270 + $0xb94] sm:$0xf]
        %v1077 = vld [vmem:[%s270 + $0xb98] sm:$0xf]
        %v1078 = vld [vmem:[%s270 + $0xb9c] sm:$0xf]
        %v1079 = vld [vmem:[%s270 + $0xba0] sm:$0xf]
        %v1080 = vld [vmem:[%s270 + $0xba4] sm:$0xf]
        %v1081 = vld [vmem:[%s270 + $0xba8] sm:$0xf]
        %v1082 = vld [vmem:[%s270 + $0xbac] sm:$0xf]
        %v1083 = vld [vmem:[%s270 + $0xbb0] sm:$0xf]
        %v1084 = vld [vmem:[%s270 + $0xbb4] sm:$0xf]
        %v1085 = vld [vmem:[%s270 + $0xbb8] sm:$0xf]
        %v1086 = vld [vmem:[%s270 + $0xbbc] sm:$0xf]
        %v1087 = vld [vmem:[%s270 + $0xbc0] sm:$0xf]
        %v1088 = vld [vmem:[%s270 + $0xbc4] sm:$0xf]
        %v1089 = vld [vmem:[%s270 + $0xbc8] sm:$0xf]
        %v1090 = vld [vmem:[%s270 + $0xbcc] sm:$0xf]
        %v1091 = vld [vmem:[%s270 + $0xbd0] sm:$0xf]
        %v1092 = vld [vmem:[%s270 + $0xbd4] sm:$0xf]
        %v1093 = vld [vmem:[%s270 + $0xbd8] sm:$0xf]
        %v1094 = vld [vmem:[%s270 + $0xbdc] sm:$0xf]
        %v1095 = vld [vmem:[%s270 + $0xbe0] sm:$0xf]
        %v1096 = vld [vmem:[%s270 + $0xbe4] sm:$0xf]
        %v1097 = vld [vmem:[%s270 + $0xbe8] sm:$0xf]
        %v1098 = vld [vmem:[%s270 + $0xbec] sm:$0xf]
        %v1099 = vld [vmem:[%s270 + $0xbf0] sm:$0xf]
        %v1100 = vld [vmem:[%s270 + $0xbf4] sm:$0xf]
        %v1101 = vld [vmem:[%s270 + $0xbf8] sm:$0xf]
        %v1102 = vld [vmem:[%s270 + $0xbfc] sm:$0xf]
        %v1109 = vcombine.high %v329, %v329
        %v1111 = vunpack.c.l.s4 1966171168
        %v1112 = vunpack.c.0.s8 %v1111
        %v1113 = vlaneseq
        %v1114 = vshrl.u32 %v1113, 7
        %v1115 = vsub.s32 %v1112, %v1114
        %v1116 = vrot.slane %v329, %v1115
        %v1118 = vunpack.c.l.s4 1966171168
        %v1119 = vunpack.c.0.s8 %v1118
        %v1120 = vlaneseq
        %v1121 = vshrl.u32 %v1120, 7
        %v1122 = vsub.s32 %v1119, %v1121
        %v1123 = vrot.slane %v1109, %v1122
        %v1124 = vcombine.high %v1116, %v1116
        %v1125 = vcombine.high %v1123, %v1123
        %v1127 = vunpack.c.l.s4 1966171168
        %v1128 = vunpack.c.0.s8 %v1127
        %v1129 = vlaneseq
        %v1130 = vshrl.u32 %v1129, 7
        %v1131 = vsub.s32 %v1128, %v1130
        %v1132 = vrot.slane %v1116, %v1131
        %v1134 = vunpack.c.l.s4 1966171168
        %v1135 = vunpack.c.0.s8 %v1134
        %v1136 = vlaneseq
        %v1137 = vshrl.u32 %v1136, 7
        %v1138 = vsub.s32 %v1135, %v1137
        %v1139 = vrot.slane %v1123, %v1138
        %v1141 = vunpack.c.l.s4 1966171168
        %v1142 = vunpack.c.0.s8 %v1141
        %v1143 = vlaneseq
        %v1144 = vshrl.u32 %v1143, 7
        %v1145 = vsub.s32 %v1142, %v1144
        %v1146 = vrot.slane %v1124, %v1145
        %v1148 = vunpack.c.l.s4 1966171168
        %v1149 = vunpack.c.0.s8 %v1148
        %v1150 = vlaneseq
        %v1151 = vshrl.u32 %v1150, 7
        %v1152 = vsub.s32 %v1149, %v1151
        %v1153 = vrot.slane %v1125, %v1152
        %v1154 = vcombine.high %v1132, %v1132
        %v1155 = vcombine.high %v1139, %v1139
        %v1156 = vcombine.high %v1146, %v1146
        %v1157 = vcombine.high %v1153, %v1153
        %v1158 = vcombine.high %v330, %v330
        %v1160 = vunpack.c.l.s4 1966171168
        %v1161 = vunpack.c.0.s8 %v1160
        %v1162 = vlaneseq
        %v1163 = vshrl.u32 %v1162, 7
        %v1164 = vsub.s32 %v1161, %v1163
        %v1165 = vrot.slane %v330, %v1164
        %v1167 = vunpack.c.l.s4 1966171168
        %v1168 = vunpack.c.0.s8 %v1167
        %v1169 = vlaneseq
        %v1170 = vshrl.u32 %v1169, 7
        %v1171 = vsub.s32 %v1168, %v1170
        %v1172 = vrot.slane %v1158, %v1171
        %v1173 = vcombine.high %v1165, %v1165
        %v1174 = vcombine.high %v1172, %v1172
        %v1176 = vunpack.c.l.s4 1966171168
        %v1177 = vunpack.c.0.s8 %v1176
        %v1178 = vlaneseq
        %v1179 = vshrl.u32 %v1178, 7
        %v1180 = vsub.s32 %v1177, %v1179
        %v1181 = vrot.slane %v1165, %v1180
        %v1183 = vunpack.c.l.s4 1966171168
        %v1184 = vunpack.c.0.s8 %v1183
        %v1185 = vlaneseq
        %v1186 = vshrl.u32 %v1185, 7
        %v1187 = vsub.s32 %v1184, %v1186
        %v1188 = vrot.slane %v1172, %v1187
        %v1190 = vunpack.c.l.s4 1966171168
        %v1191 = vunpack.c.0.s8 %v1190
        %v1192 = vlaneseq
        %v1193 = vshrl.u32 %v1192, 7
        %v1194 = vsub.s32 %v1191, %v1193
        %v1195 = vrot.slane %v1173, %v1194
        %v1197 = vunpack.c.l.s4 1966171168
        %v1198 = vunpack.c.0.s8 %v1197
        %v1199 = vlaneseq
        %v1200 = vshrl.u32 %v1199, 7
        %v1201 = vsub.s32 %v1198, %v1200
        %v1202 = vrot.slane %v1174, %v1201
        %v1203 = vcombine.high %v1181, %v1181
        %v1204 = vcombine.high %v1188, %v1188
        %v1205 = vcombine.high %v1195, %v1195
        %v1206 = vcombine.high %v1202, %v1202
        %v1207 = vcombine.high %v331, %v331
        %v1209 = vunpack.c.l.s4 1966171168
        %v1210 = vunpack.c.0.s8 %v1209
        %v1211 = vlaneseq
        %v1212 = vshrl.u32 %v1211, 7
        %v1213 = vsub.s32 %v1210, %v1212
        %v1214 = vrot.slane %v331, %v1213
        %v1216 = vunpack.c.l.s4 1966171168
        %v1217 = vunpack.c.0.s8 %v1216
        %v1218 = vlaneseq
        %v1219 = vshrl.u32 %v1218, 7
        %v1220 = vsub.s32 %v1217, %v1219
        %v1221 = vrot.slane %v1207, %v1220
        %v1222 = vcombine.high %v1214, %v1214
        %v1223 = vcombine.high %v1221, %v1221
        %v1225 = vunpack.c.l.s4 1966171168
        %v1226 = vunpack.c.0.s8 %v1225
        %v1227 = vlaneseq
        %v1228 = vshrl.u32 %v1227, 7
        %v1229 = vsub.s32 %v1226, %v1228
        %v1230 = vrot.slane %v1214, %v1229
        %v1232 = vunpack.c.l.s4 1966171168
        %v1233 = vunpack.c.0.s8 %v1232
        %v1234 = vlaneseq
        %v1235 = vshrl.u32 %v1234, 7
        %v1236 = vsub.s32 %v1233, %v1235
        %v1237 = vrot.slane %v1221, %v1236
        %v1239 = vunpack.c.l.s4 1966171168
        %v1240 = vunpack.c.0.s8 %v1239
        %v1241 = vlaneseq
        %v1242 = vshrl.u32 %v1241, 7
        %v1243 = vsub.s32 %v1240, %v1242
        %v1244 = vrot.slane %v1222, %v1243
        %v1246 = vunpack.c.l.s4 1966171168
        %v1247 = vunpack.c.0.s8 %v1246
        %v1248 = vlaneseq
        %v1249 = vshrl.u32 %v1248, 7
        %v1250 = vsub.s32 %v1247, %v1249
        %v1251 = vrot.slane %v1223, %v1250
        %v1252 = vcombine.high %v1230, %v1230
        %v1253 = vcombine.high %v1237, %v1237
        %v1254 = vcombine.high %v1244, %v1244
        %v1255 = vcombine.high %v1251, %v1251
        %v1256 = vcombine.high %v332, %v332
        %v1258 = vunpack.c.l.s4 1966171168
        %v1259 = vunpack.c.0.s8 %v1258
        %v1260 = vlaneseq
        %v1261 = vshrl.u32 %v1260, 7
        %v1262 = vsub.s32 %v1259, %v1261
        %v1263 = vrot.slane %v332, %v1262
        %v1265 = vunpack.c.l.s4 1966171168
        %v1266 = vunpack.c.0.s8 %v1265
        %v1267 = vlaneseq
        %v1268 = vshrl.u32 %v1267, 7
        %v1269 = vsub.s32 %v1266, %v1268
        %v1270 = vrot.slane %v1256, %v1269
        %v1271 = vcombine.high %v1263, %v1263
        %v1272 = vcombine.high %v1270, %v1270
        %v1274 = vunpack.c.l.s4 1966171168
        %v1275 = vunpack.c.0.s8 %v1274
        %v1276 = vlaneseq
        %v1277 = vshrl.u32 %v1276, 7
        %v1278 = vsub.s32 %v1275, %v1277
        %v1279 = vrot.slane %v1263, %v1278
        %v1281 = vunpack.c.l.s4 1966171168
        %v1282 = vunpack.c.0.s8 %v1281
        %v1283 = vlaneseq
        %v1284 = vshrl.u32 %v1283, 7
        %v1285 = vsub.s32 %v1282, %v1284
        %v1286 = vrot.slane %v1270, %v1285
        %v1288 = vunpack.c.l.s4 1966171168
        %v1289 = vunpack.c.0.s8 %v1288
        %v1290 = vlaneseq
        %v1291 = vshrl.u32 %v1290, 7
        %v1292 = vsub.s32 %v1289, %v1291
        %v1293 = vrot.slane %v1271, %v1292
        %v1295 = vunpack.c.l.s4 1966171168
        %v1296 = vunpack.c.0.s8 %v1295
        %v1297 = vlaneseq
        %v1298 = vshrl.u32 %v1297, 7
        %v1299 = vsub.s32 %v1296, %v1298
        %v1300 = vrot.slane %v1272, %v1299
        %v1301 = vcombine.high %v1279, %v1279
        %v1302 = vcombine.high %v1286, %v1286
        %v1303 = vcombine.high %v1293, %v1293
        %v1304 = vcombine.high %v1300, %v1300
        %v1305 = vcombine.high %v333, %v333
        %v1307 = vunpack.c.l.s4 1966171168
        %v1308 = vunpack.c.0.s8 %v1307
        %v1309 = vlaneseq
        %v1310 = vshrl.u32 %v1309, 7
        %v1311 = vsub.s32 %v1308, %v1310
        %v1312 = vrot.slane %v333, %v1311
        %v1314 = vunpack.c.l.s4 1966171168
        %v1315 = vunpack.c.0.s8 %v1314
        %v1316 = vlaneseq
        %v1317 = vshrl.u32 %v1316, 7
        %v1318 = vsub.s32 %v1315, %v1317
        %v1319 = vrot.slane %v1305, %v1318
        %v1320 = vcombine.high %v1312, %v1312
        %v1321 = vcombine.high %v1319, %v1319
        %v1323 = vunpack.c.l.s4 1966171168
        %v1324 = vunpack.c.0.s8 %v1323
        %v1325 = vlaneseq
        %v1326 = vshrl.u32 %v1325, 7
        %v1327 = vsub.s32 %v1324, %v1326
        %v1328 = vrot.slane %v1312, %v1327
        %v1330 = vunpack.c.l.s4 1966171168
        %v1331 = vunpack.c.0.s8 %v1330
        %v1332 = vlaneseq
        %v1333 = vshrl.u32 %v1332, 7
        %v1334 = vsub.s32 %v1331, %v1333
        %v1335 = vrot.slane %v1319, %v1334
        %v1337 = vunpack.c.l.s4 1966171168
        %v1338 = vunpack.c.0.s8 %v1337
        %v1339 = vlaneseq
        %v1340 = vshrl.u32 %v1339, 7
        %v1341 = vsub.s32 %v1338, %v1340
        %v1342 = vrot.slane %v1320, %v1341
        %v1344 = vunpack.c.l.s4 1966171168
        %v1345 = vunpack.c.0.s8 %v1344
        %v1346 = vlaneseq
        %v1347 = vshrl.u32 %v1346, 7
        %v1348 = vsub.s32 %v1345, %v1347
        %v1349 = vrot.slane %v1321, %v1348
        %v1350 = vcombine.high %v1328, %v1328
        %v1351 = vcombine.high %v1335, %v1335
        %v1352 = vcombine.high %v1342, %v1342
        %v1353 = vcombine.high %v1349, %v1349
        %v1354 = vcombine.high %v334, %v334
        %v1356 = vunpack.c.l.s4 1966171168
        %v1357 = vunpack.c.0.s8 %v1356
        %v1358 = vlaneseq
        %v1359 = vshrl.u32 %v1358, 7
        %v1360 = vsub.s32 %v1357, %v1359
        %v1361 = vrot.slane %v334, %v1360
        %v1363 = vunpack.c.l.s4 1966171168
        %v1364 = vunpack.c.0.s8 %v1363
        %v1365 = vlaneseq
        %v1366 = vshrl.u32 %v1365, 7
        %v1367 = vsub.s32 %v1364, %v1366
        %v1368 = vrot.slane %v1354, %v1367
        %v1369 = vcombine.high %v1361, %v1361
        %v1370 = vcombine.high %v1368, %v1368
        %v1372 = vunpack.c.l.s4 1966171168
        %v1373 = vunpack.c.0.s8 %v1372
        %v1374 = vlaneseq
        %v1375 = vshrl.u32 %v1374, 7
        %v1376 = vsub.s32 %v1373, %v1375
        %v1377 = vrot.slane %v1361, %v1376
        %v1379 = vunpack.c.l.s4 1966171168
        %v1380 = vunpack.c.0.s8 %v1379
        %v1381 = vlaneseq
        %v1382 = vshrl.u32 %v1381, 7
        %v1383 = vsub.s32 %v1380, %v1382
        %v1384 = vrot.slane %v1368, %v1383
        %v1386 = vunpack.c.l.s4 1966171168
        %v1387 = vunpack.c.0.s8 %v1386
        %v1388 = vlaneseq
        %v1389 = vshrl.u32 %v1388, 7
        %v1390 = vsub.s32 %v1387, %v1389
        %v1391 = vrot.slane %v1369, %v1390
        %v1393 = vunpack.c.l.s4 1966171168
        %v1394 = vunpack.c.0.s8 %v1393
        %v1395 = vlaneseq
        %v1396 = vshrl.u32 %v1395, 7
        %v1397 = vsub.s32 %v1394, %v1396
        %v1398 = vrot.slane %v1370, %v1397
        %v1399 = vcombine.high %v1377, %v1377
        %v1400 = vcombine.high %v1384, %v1384
        %v1401 = vcombine.high %v1391, %v1391
        %v1402 = vcombine.high %v1398, %v1398
        %v2219 = vunpack.c.l.b16 %v335
        %v2220 = vunpack.c.l.b16 %v336
        %v2221 = vunpack.c.l.b16 %v337
        %v2222 = vunpack.c.l.b16 %v338
        %v2223 = vunpack.c.l.b16 %v339
        %v2224 = vunpack.c.l.b16 %v340
        %v2225 = vunpack.c.l.b16 %v341
        %v2226 = vunpack.c.l.b16 %v342
        %v2227 = vunpack.c.l.b16 %v343
        %v2228 = vunpack.c.l.b16 %v344
        %v2229 = vunpack.c.l.b16 %v345
        %v2230 = vunpack.c.l.b16 %v346
        %v2231 = vunpack.c.l.b16 %v347
        %v2232 = vunpack.c.l.b16 %v348
        %v2233 = vunpack.c.l.b16 %v349
        %v2234 = vunpack.c.l.b16 %v350
        %v2235 = vunpack.c.l.b16 %v351
        %v2236 = vunpack.c.l.b16 %v352
        %v2237 = vunpack.c.l.b16 %v353
        %v2238 = vunpack.c.l.b16 %v354
        %v2239 = vunpack.c.l.b16 %v355
        %v2240 = vunpack.c.l.b16 %v356
        %v2241 = vunpack.c.l.b16 %v357
        %v2242 = vunpack.c.l.b16 %v358
        %v2243 = vunpack.c.l.b16 %v359
        %v2244 = vunpack.c.l.b16 %v360
        %v2245 = vunpack.c.l.b16 %v361
        %v2246 = vunpack.c.l.b16 %v362
        %v2247 = vunpack.c.l.b16 %v363
        %v2248 = vunpack.c.l.b16 %v364
        %v2249 = vunpack.c.l.b16 %v365
        %v2250 = vunpack.c.l.b16 %v366
        %v2251 = vunpack.c.l.b16 %v367
        %v2252 = vunpack.c.l.b16 %v368
        %v2253 = vunpack.c.l.b16 %v369
        %v2254 = vunpack.c.l.b16 %v370
        %v2255 = vunpack.c.l.b16 %v371
        %v2256 = vunpack.c.l.b16 %v372
        %v2257 = vunpack.c.l.b16 %v373
        %v2258 = vunpack.c.l.b16 %v374
        %v2259 = vunpack.c.l.b16 %v375
        %v2260 = vunpack.c.l.b16 %v376
        %v2261 = vunpack.c.l.b16 %v377
        %v2262 = vunpack.c.l.b16 %v378
        %v2263 = vunpack.c.l.b16 %v379
        %v2264 = vunpack.c.l.b16 %v380
        %v2265 = vunpack.c.l.b16 %v381
        %v2266 = vunpack.c.l.b16 %v382
        %v2267 = vunpack.c.l.b16 %v383
        %v2268 = vunpack.c.l.b16 %v384
        %v2269 = vunpack.c.l.b16 %v385
        %v2270 = vunpack.c.l.b16 %v386
        %v2271 = vunpack.c.l.b16 %v387
        %v2272 = vunpack.c.l.b16 %v388
        %v2273 = vunpack.c.l.b16 %v389
        %v2274 = vunpack.c.l.b16 %v390
        %v2275 = vunpack.c.l.b16 %v391
        %v2276 = vunpack.c.l.b16 %v392
        %v2277 = vunpack.c.l.b16 %v393
        %v2278 = vunpack.c.l.b16 %v394
        %v2279 = vunpack.c.l.b16 %v395
        %v2280 = vunpack.c.l.b16 %v396
        %v2281 = vunpack.c.l.b16 %v397
        %v2282 = vunpack.c.l.b16 %v398
        %v2283 = vunpack.c.l.b16 %v399
        %v2284 = vunpack.c.l.b16 %v400
        %v2285 = vunpack.c.l.b16 %v401
        %v2286 = vunpack.c.l.b16 %v402
        %v2287 = vunpack.c.l.b16 %v403
        %v2288 = vunpack.c.l.b16 %v404
        %v2289 = vunpack.c.l.b16 %v405
        %v2290 = vunpack.c.l.b16 %v406
        %v2291 = vunpack.c.l.b16 %v407
        %v2292 = vunpack.c.l.b16 %v408
        %v2293 = vunpack.c.l.b16 %v409
        %v2294 = vunpack.c.l.b16 %v410
        %v2295 = vunpack.c.l.b16 %v411
        %v2296 = vunpack.c.l.b16 %v412
        %v2297 = vunpack.c.l.b16 %v413
        %v2298 = vunpack.c.l.b16 %v414
        %v2299 = vunpack.c.l.b16 %v415
        %v2300 = vunpack.c.l.b16 %v416
        %v2301 = vunpack.c.l.b16 %v417
        %v2302 = vunpack.c.l.b16 %v418
        %v2303 = vunpack.c.l.b16 %v419
        %v2304 = vunpack.c.l.b16 %v420
        %v2305 = vunpack.c.l.b16 %v421
        %v2306 = vunpack.c.l.b16 %v422
        %v2307 = vunpack.c.l.b16 %v423
        %v2308 = vunpack.c.l.b16 %v424
        %v2309 = vunpack.c.l.b16 %v425
        %v2310 = vunpack.c.l.b16 %v426
        %v2311 = vunpack.c.l.b16 %v427
        %v2312 = vunpack.c.l.b16 %v428
        %v2313 = vunpack.c.l.b16 %v429
        %v2314 = vunpack.c.l.b16 %v430
        %v2315 = vunpack.c.l.b16 %v431
        %v2316 = vunpack.c.l.b16 %v432
        %v2317 = vunpack.c.l.b16 %v433
        %v2318 = vunpack.c.l.b16 %v434
        %v2319 = vunpack.c.l.b16 %v435
        %v2320 = vunpack.c.l.b16 %v436
        %v2321 = vunpack.c.l.b16 %v437
        %v2322 = vunpack.c.l.b16 %v438
        %v2323 = vunpack.c.l.b16 %v439
        %v2324 = vunpack.c.l.b16 %v440
        %v2325 = vunpack.c.l.b16 %v441
        %v2326 = vunpack.c.l.b16 %v442
        %v2327 = vunpack.c.l.b16 %v443
        %v2328 = vunpack.c.l.b16 %v444
        %v2329 = vunpack.c.l.b16 %v445
        %v2330 = vunpack.c.l.b16 %v446
        %v2331 = vunpack.c.l.b16 %v447
        %v2332 = vunpack.c.l.b16 %v448
        %v2333 = vunpack.c.l.b16 %v449
        %v2334 = vunpack.c.l.b16 %v450
        %v2335 = vunpack.c.l.b16 %v451
        %v2336 = vunpack.c.l.b16 %v452
        %v2337 = vunpack.c.l.b16 %v453
        %v2338 = vunpack.c.l.b16 %v454
        %v2339 = vunpack.c.l.b16 %v455
        %v2340 = vunpack.c.l.b16 %v456
        %v2341 = vunpack.c.l.b16 %v457
        %v2342 = vunpack.c.l.b16 %v458
        %v2343 = vunpack.c.l.b16 %v459
        %v2344 = vunpack.c.l.b16 %v460
        %v2345 = vunpack.c.l.b16 %v461
        %v2346 = vunpack.c.l.b16 %v462
        %v2347 = vunpack.c.l.b16 %v463
        %v2348 = vunpack.c.l.b16 %v464
        %v2349 = vunpack.c.l.b16 %v465
        %v2350 = vunpack.c.l.b16 %v466
        %v2351 = vunpack.c.l.b16 %v467
        %v2352 = vunpack.c.l.b16 %v468
        %v2353 = vunpack.c.l.b16 %v469
        %v2354 = vunpack.c.l.b16 %v470
        %v2355 = vunpack.c.l.b16 %v471
        %v2356 = vunpack.c.l.b16 %v472
        %v2357 = vunpack.c.l.b16 %v473
        %v2358 = vunpack.c.l.b16 %v474
        %v2359 = vunpack.c.l.b16 %v475
        %v2360 = vunpack.c.l.b16 %v476
        %v2361 = vunpack.c.l.b16 %v477
        %v2362 = vunpack.c.l.b16 %v478
        %v2363 = vunpack.c.l.b16 %v479
        %v2364 = vunpack.c.l.b16 %v480
        %v2365 = vunpack.c.l.b16 %v481
        %v2366 = vunpack.c.l.b16 %v482
        %v2367 = vunpack.c.l.b16 %v483
        %v2368 = vunpack.c.l.b16 %v484
        %v2369 = vunpack.c.l.b16 %v485
        %v2370 = vunpack.c.l.b16 %v486
        %v2371 = vunpack.c.l.b16 %v487
        %v2372 = vunpack.c.l.b16 %v488
        %v2373 = vunpack.c.l.b16 %v489
        %v2374 = vunpack.c.l.b16 %v490
        %v2375 = vunpack.c.l.b16 %v491
        %v2376 = vunpack.c.l.b16 %v492
        %v2377 = vunpack.c.l.b16 %v493
        %v2378 = vunpack.c.l.b16 %v494
        %v2379 = vunpack.c.l.b16 %v495
        %v2380 = vunpack.c.l.b16 %v496
        %v2381 = vunpack.c.l.b16 %v497
        %v2382 = vunpack.c.l.b16 %v498
        %v2383 = vunpack.c.l.b16 %v499
        %v2384 = vunpack.c.l.b16 %v500
        %v2385 = vunpack.c.l.b16 %v501
        %v2386 = vunpack.c.l.b16 %v502
        %v2387 = vunpack.c.l.b16 %v503
        %v2388 = vunpack.c.l.b16 %v504
        %v2389 = vunpack.c.l.b16 %v505
        %v2390 = vunpack.c.l.b16 %v506
        %v2391 = vunpack.c.l.b16 %v507
        %v2392 = vunpack.c.l.b16 %v508
        %v2393 = vunpack.c.l.b16 %v509
        %v2394 = vunpack.c.l.b16 %v510
        %v2395 = vunpack.c.l.b16 %v511
        %v2396 = vunpack.c.l.b16 %v512
        %v2397 = vunpack.c.l.b16 %v513
        %v2398 = vunpack.c.l.b16 %v514
        %v2399 = vunpack.c.l.b16 %v515
        %v2400 = vunpack.c.l.b16 %v516
        %v2401 = vunpack.c.l.b16 %v517
        %v2402 = vunpack.c.l.b16 %v518
        %v2403 = vunpack.c.l.b16 %v519
        %v2404 = vunpack.c.l.b16 %v520
        %v2405 = vunpack.c.l.b16 %v521
        %v2406 = vunpack.c.l.b16 %v522
        %v2407 = vunpack.c.l.b16 %v523
        %v2408 = vunpack.c.l.b16 %v524
        %v2409 = vunpack.c.l.b16 %v525
        %v2410 = vunpack.c.l.b16 %v526
        %v2411 = vunpack.c.l.b16 %v527
        %v2412 = vunpack.c.l.b16 %v528
        %v2413 = vunpack.c.l.b16 %v529
        %v2414 = vunpack.c.l.b16 %v530
        %v2415 = vunpack.c.l.b16 %v531
        %v2416 = vunpack.c.l.b16 %v532
        %v2417 = vunpack.c.l.b16 %v533
        %v2418 = vunpack.c.l.b16 %v534
        %v2419 = vunpack.c.l.b16 %v535
        %v2420 = vunpack.c.l.b16 %v536
        %v2421 = vunpack.c.l.b16 %v537
        %v2422 = vunpack.c.l.b16 %v538
        %v2423 = vunpack.c.l.b16 %v539
        %v2424 = vunpack.c.l.b16 %v540
        %v2425 = vunpack.c.l.b16 %v541
        %v2426 = vunpack.c.l.b16 %v542
        %v2427 = vunpack.c.l.b16 %v543
        %v2428 = vunpack.c.l.b16 %v544
        %v2429 = vunpack.c.l.b16 %v545
        %v2430 = vunpack.c.l.b16 %v546
        %v2431 = vunpack.c.l.b16 %v547
        %v2432 = vunpack.c.l.b16 %v548
        %v2433 = vunpack.c.l.b16 %v549
        %v2434 = vunpack.c.l.b16 %v550
        %v2435 = vunpack.c.l.b16 %v551
        %v2436 = vunpack.c.l.b16 %v552
        %v2437 = vunpack.c.l.b16 %v553
        %v2438 = vunpack.c.l.b16 %v554
        %v2439 = vunpack.c.l.b16 %v555
        %v2440 = vunpack.c.l.b16 %v556
        %v2441 = vunpack.c.l.b16 %v557
        %v2442 = vunpack.c.l.b16 %v558
        %v2443 = vunpack.c.l.b16 %v559
        %v2444 = vunpack.c.l.b16 %v560
        %v2445 = vunpack.c.l.b16 %v561
        %v2446 = vunpack.c.l.b16 %v562
        %v2447 = vunpack.c.l.b16 %v563
        %v2448 = vunpack.c.l.b16 %v564
        %v2449 = vunpack.c.l.b16 %v565
        %v2450 = vunpack.c.l.b16 %v566
        %v2451 = vunpack.c.l.b16 %v567
        %v2452 = vunpack.c.l.b16 %v568
        %v2453 = vunpack.c.l.b16 %v569
        %v2454 = vunpack.c.l.b16 %v570
        %v2455 = vunpack.c.l.b16 %v571
        %v2456 = vunpack.c.l.b16 %v572
        %v2457 = vunpack.c.l.b16 %v573
        %v2458 = vunpack.c.l.b16 %v574
        %v2459 = vunpack.c.l.b16 %v575
        %v2460 = vunpack.c.l.b16 %v576
        %v2461 = vunpack.c.l.b16 %v577
        %v2462 = vunpack.c.l.b16 %v578
        %v2463 = vunpack.c.l.b16 %v579
        %v2464 = vunpack.c.l.b16 %v580
        %v2465 = vunpack.c.l.b16 %v581
        %v2466 = vunpack.c.l.b16 %v582
        %v2467 = vunpack.c.l.b16 %v583
        %v2468 = vunpack.c.l.b16 %v584
        %v2469 = vunpack.c.l.b16 %v585
        %v2470 = vunpack.c.l.b16 %v586
        %v2471 = vunpack.c.l.b16 %v587
        %v2472 = vunpack.c.l.b16 %v588
        %v2473 = vunpack.c.l.b16 %v589
        %v2474 = vunpack.c.l.b16 %v590
        %v2475 = vunpack.c.l.b16 %v591
        %v2476 = vunpack.c.l.b16 %v592
        %v2477 = vunpack.c.l.b16 %v593
        %v2478 = vunpack.c.l.b16 %v594
        %v2479 = vunpack.c.l.b16 %v595
        %v2480 = vunpack.c.l.b16 %v596
        %v2481 = vunpack.c.l.b16 %v597
        %v2482 = vunpack.c.l.b16 %v598
        %v2483 = vunpack.c.l.b16 %v599
        %v2484 = vunpack.c.l.b16 %v600
        %v2485 = vunpack.c.l.b16 %v601
        %v2486 = vunpack.c.l.b16 %v602
        %v2487 = vunpack.c.l.b16 %v603
        %v2488 = vunpack.c.l.b16 %v604
        %v2489 = vunpack.c.l.b16 %v605
        %v2490 = vunpack.c.l.b16 %v606
        %v2491 = vunpack.c.l.b16 %v607
        %v2492 = vunpack.c.l.b16 %v608
        %v2493 = vunpack.c.l.b16 %v609
        %v2494 = vunpack.c.l.b16 %v610
        %v2495 = vunpack.c.l.b16 %v611
        %v2496 = vunpack.c.l.b16 %v612
        %v2497 = vunpack.c.l.b16 %v613
        %v2498 = vunpack.c.l.b16 %v614
        %v2499 = vunpack.c.l.b16 %v615
        %v2500 = vunpack.c.l.b16 %v616
        %v2501 = vunpack.c.l.b16 %v617
        %v2502 = vunpack.c.l.b16 %v618
        %v2503 = vunpack.c.l.b16 %v619
        %v2504 = vunpack.c.l.b16 %v620
        %v2505 = vunpack.c.l.b16 %v621
        %v2506 = vunpack.c.l.b16 %v622
        %v2507 = vunpack.c.l.b16 %v623
        %v2508 = vunpack.c.l.b16 %v624
        %v2509 = vunpack.c.l.b16 %v625
        %v2510 = vunpack.c.l.b16 %v626
        %v2511 = vunpack.c.l.b16 %v627
        %v2512 = vunpack.c.l.b16 %v628
        %v2513 = vunpack.c.l.b16 %v629
        %v2514 = vunpack.c.l.b16 %v630
        %v2515 = vunpack.c.l.b16 %v631
        %v2516 = vunpack.c.l.b16 %v632
        %v2517 = vunpack.c.l.b16 %v633
        %v2518 = vunpack.c.l.b16 %v634
        %v2519 = vunpack.c.l.b16 %v635
        %v2520 = vunpack.c.l.b16 %v636
        %v2521 = vunpack.c.l.b16 %v637
        %v2522 = vunpack.c.l.b16 %v638
        %v2523 = vunpack.c.l.b16 %v639
        %v2524 = vunpack.c.l.b16 %v640
        %v2525 = vunpack.c.l.b16 %v641
        %v2526 = vunpack.c.l.b16 %v642
        %v2527 = vunpack.c.l.b16 %v643
        %v2528 = vunpack.c.l.b16 %v644
        %v2529 = vunpack.c.l.b16 %v645
        %v2530 = vunpack.c.l.b16 %v646
        %v2531 = vunpack.c.l.b16 %v647
        %v2532 = vunpack.c.l.b16 %v648
        %v2533 = vunpack.c.l.b16 %v649
        %v2534 = vunpack.c.l.b16 %v650
        %v2535 = vunpack.c.l.b16 %v651
        %v2536 = vunpack.c.l.b16 %v652
        %v2537 = vunpack.c.l.b16 %v653
        %v2538 = vunpack.c.l.b16 %v654
        %v2539 = vunpack.c.l.b16 %v655
        %v2540 = vunpack.c.l.b16 %v656
        %v2541 = vunpack.c.l.b16 %v657
        %v2542 = vunpack.c.l.b16 %v658
        %v2543 = vunpack.c.l.b16 %v659
        %v2544 = vunpack.c.l.b16 %v660
        %v2545 = vunpack.c.l.b16 %v661
        %v2546 = vunpack.c.l.b16 %v662
        %v2547 = vunpack.c.l.b16 %v663
        %v2548 = vunpack.c.l.b16 %v664
        %v2549 = vunpack.c.l.b16 %v665
        %v2550 = vunpack.c.l.b16 %v666
        %v2551 = vunpack.c.l.b16 %v667
        %v2552 = vunpack.c.l.b16 %v668
        %v2553 = vunpack.c.l.b16 %v669
        %v2554 = vunpack.c.l.b16 %v670
        %v2555 = vunpack.c.l.b16 %v671
        %v2556 = vunpack.c.l.b16 %v672
        %v2557 = vunpack.c.l.b16 %v673
        %v2558 = vunpack.c.l.b16 %v674
        %v2559 = vunpack.c.l.b16 %v675
        %v2560 = vunpack.c.l.b16 %v676
        %v2561 = vunpack.c.l.b16 %v677
        %v2562 = vunpack.c.l.b16 %v678
        %v2563 = vunpack.c.l.b16 %v679
        %v2564 = vunpack.c.l.b16 %v680
        %v2565 = vunpack.c.l.b16 %v681
        %v2566 = vunpack.c.l.b16 %v682
        %v2567 = vunpack.c.l.b16 %v683
        %v2568 = vunpack.c.l.b16 %v684
        %v2569 = vunpack.c.l.b16 %v685
        %v2570 = vunpack.c.l.b16 %v686
        %v2571 = vunpack.c.l.b16 %v687
        %v2572 = vunpack.c.l.b16 %v688
        %v2573 = vunpack.c.l.b16 %v689
        %v2574 = vunpack.c.l.b16 %v690
        %v2575 = vunpack.c.l.b16 %v691
        %v2576 = vunpack.c.l.b16 %v692
        %v2577 = vunpack.c.l.b16 %v693
        %v2578 = vunpack.c.l.b16 %v694
        %v2579 = vunpack.c.l.b16 %v695
        %v2580 = vunpack.c.l.b16 %v696
        %v2581 = vunpack.c.l.b16 %v697
        %v2582 = vunpack.c.l.b16 %v698
        %v2583 = vunpack.c.l.b16 %v699
        %v2584 = vunpack.c.l.b16 %v700
        %v2585 = vunpack.c.l.b16 %v701
        %v2586 = vunpack.c.l.b16 %v702
        %v2587 = vunpack.c.l.b16 %v703
        %v2588 = vunpack.c.l.b16 %v704
        %v2589 = vunpack.c.l.b16 %v705
        %v2590 = vunpack.c.l.b16 %v706
        %v2591 = vunpack.c.l.b16 %v707
        %v2592 = vunpack.c.l.b16 %v708
        %v2593 = vunpack.c.l.b16 %v709
        %v2594 = vunpack.c.l.b16 %v710
        %v2595 = vunpack.c.l.b16 %v711
        %v2596 = vunpack.c.l.b16 %v712
        %v2597 = vunpack.c.l.b16 %v713
        %v2598 = vunpack.c.l.b16 %v714
        %v2599 = vunpack.c.l.b16 %v715
        %v2600 = vunpack.c.l.b16 %v716
        %v2601 = vunpack.c.l.b16 %v717
        %v2602 = vunpack.c.l.b16 %v718
        %v2603 = vunpack.c.l.b16 %v719
        %v2604 = vunpack.c.l.b16 %v720
        %v2605 = vunpack.c.l.b16 %v721
        %v2606 = vunpack.c.l.b16 %v722
        %v2607 = vunpack.c.l.b16 %v723
        %v2608 = vunpack.c.l.b16 %v724
        %v2609 = vunpack.c.l.b16 %v725
        %v2610 = vunpack.c.l.b16 %v726
        %v2611 = vunpack.c.l.b16 %v727
        %v2612 = vunpack.c.l.b16 %v728
        %v2613 = vunpack.c.l.b16 %v729
        %v2614 = vunpack.c.l.b16 %v730
        %v2615 = vunpack.c.l.b16 %v731
        %v2616 = vunpack.c.l.b16 %v732
        %v2617 = vunpack.c.l.b16 %v733
        %v2618 = vunpack.c.l.b16 %v734
        %v2619 = vunpack.c.l.b16 %v735
        %v2620 = vunpack.c.l.b16 %v736
        %v2621 = vunpack.c.l.b16 %v737
        %v2622 = vunpack.c.l.b16 %v738
        %v2623 = vunpack.c.l.b16 %v739
        %v2624 = vunpack.c.l.b16 %v740
        %v2625 = vunpack.c.l.b16 %v741
        %v2626 = vunpack.c.l.b16 %v742
        %v2627 = vunpack.c.l.b16 %v743
        %v2628 = vunpack.c.l.b16 %v744
        %v2629 = vunpack.c.l.b16 %v745
        %v2630 = vunpack.c.l.b16 %v746
        %v2631 = vunpack.c.l.b16 %v747
        %v2632 = vunpack.c.l.b16 %v748
        %v2633 = vunpack.c.l.b16 %v749
        %v2634 = vunpack.c.l.b16 %v750
        %v2635 = vunpack.c.l.b16 %v751
        %v2636 = vunpack.c.l.b16 %v752
        %v2637 = vunpack.c.l.b16 %v753
        %v2638 = vunpack.c.l.b16 %v754
        %v2639 = vunpack.c.l.b16 %v755
        %v2640 = vunpack.c.l.b16 %v756
        %v2641 = vunpack.c.l.b16 %v757
        %v2642 = vunpack.c.l.b16 %v758
        %v2643 = vunpack.c.l.b16 %v759
        %v2644 = vunpack.c.l.b16 %v760
        %v2645 = vunpack.c.l.b16 %v761
        %v2646 = vunpack.c.l.b16 %v762
        %v2647 = vunpack.c.l.b16 %v763
        %v2648 = vunpack.c.l.b16 %v764
        %v2649 = vunpack.c.l.b16 %v765
        %v2650 = vunpack.c.l.b16 %v766
        %v2651 = vunpack.c.l.b16 %v767
        %v2652 = vunpack.c.l.b16 %v768
        %v2653 = vunpack.c.l.b16 %v769
        %v2654 = vunpack.c.l.b16 %v770
        %v2655 = vunpack.c.l.b16 %v771
        %v2656 = vunpack.c.l.b16 %v772
        %v2657 = vunpack.c.l.b16 %v773
        %v2658 = vunpack.c.l.b16 %v774
        %v2659 = vunpack.c.l.b16 %v775
        %v2660 = vunpack.c.l.b16 %v776
        %v2661 = vunpack.c.l.b16 %v777
        %v2662 = vunpack.c.l.b16 %v778
        %v2663 = vunpack.c.l.b16 %v779
        %v2664 = vunpack.c.l.b16 %v780
        %v2665 = vunpack.c.l.b16 %v781
        %v2666 = vunpack.c.l.b16 %v782
        %v2667 = vunpack.c.l.b16 %v783
        %v2668 = vunpack.c.l.b16 %v784
        %v2669 = vunpack.c.l.b16 %v785
        %v2670 = vunpack.c.l.b16 %v786
        %v2671 = vunpack.c.l.b16 %v787
        %v2672 = vunpack.c.l.b16 %v788
        %v2673 = vunpack.c.l.b16 %v789
        %v2674 = vunpack.c.l.b16 %v790
        %v2675 = vunpack.c.l.b16 %v791
        %v2676 = vunpack.c.l.b16 %v792
        %v2677 = vunpack.c.l.b16 %v793
        %v2678 = vunpack.c.l.b16 %v794
        %v2679 = vunpack.c.l.b16 %v795
        %v2680 = vunpack.c.l.b16 %v796
        %v2681 = vunpack.c.l.b16 %v797
        %v2682 = vunpack.c.l.b16 %v798
        %v2683 = vunpack.c.l.b16 %v799
        %v2684 = vunpack.c.l.b16 %v800
        %v2685 = vunpack.c.l.b16 %v801
        %v2686 = vunpack.c.l.b16 %v802
        %v2687 = vunpack.c.l.b16 %v803
        %v2688 = vunpack.c.l.b16 %v804
        %v2689 = vunpack.c.l.b16 %v805
        %v2690 = vunpack.c.l.b16 %v806
        %v2691 = vunpack.c.l.b16 %v807
        %v2692 = vunpack.c.l.b16 %v808
        %v2693 = vunpack.c.l.b16 %v809
        %v2694 = vunpack.c.l.b16 %v810
        %v2695 = vunpack.c.l.b16 %v811
        %v2696 = vunpack.c.l.b16 %v812
        %v2697 = vunpack.c.l.b16 %v813
        %v2698 = vunpack.c.l.b16 %v814
        %v2699 = vunpack.c.l.b16 %v815
        %v2700 = vunpack.c.l.b16 %v816
        %v2701 = vunpack.c.l.b16 %v817
        %v2702 = vunpack.c.l.b16 %v818
        %v2703 = vunpack.c.l.b16 %v819
        %v2704 = vunpack.c.l.b16 %v820
        %v2705 = vunpack.c.l.b16 %v821
        %v2706 = vunpack.c.l.b16 %v822
        %v2707 = vunpack.c.l.b16 %v823
        %v2708 = vunpack.c.l.b16 %v824
        %v2709 = vunpack.c.l.b16 %v825
        %v2710 = vunpack.c.l.b16 %v826
        %v2711 = vunpack.c.l.b16 %v827
        %v2712 = vunpack.c.l.b16 %v828
        %v2713 = vunpack.c.l.b16 %v829
        %v2714 = vunpack.c.l.b16 %v830
        %v2715 = vunpack.c.l.b16 %v831
        %v2716 = vunpack.c.l.b16 %v832
        %v2717 = vunpack.c.l.b16 %v833
        %v2718 = vunpack.c.l.b16 %v834
        %v2719 = vunpack.c.l.b16 %v835
        %v2720 = vunpack.c.l.b16 %v836
        %v2721 = vunpack.c.l.b16 %v837
        %v2722 = vunpack.c.l.b16 %v838
        %v2723 = vunpack.c.l.b16 %v839
        %v2724 = vunpack.c.l.b16 %v840
        %v2725 = vunpack.c.l.b16 %v841
        %v2726 = vunpack.c.l.b16 %v842
        %v2727 = vunpack.c.l.b16 %v843
        %v2728 = vunpack.c.l.b16 %v844
        %v2729 = vunpack.c.l.b16 %v845
        %v2730 = vunpack.c.l.b16 %v846
        %v2731 = vunpack.c.l.b16 %v847
        %v2732 = vunpack.c.l.b16 %v848
        %v2733 = vunpack.c.l.b16 %v849
        %v2734 = vunpack.c.l.b16 %v850
        %v2735 = vunpack.c.l.b16 %v851
        %v2736 = vunpack.c.l.b16 %v852
        %v2737 = vunpack.c.l.b16 %v853
        %v2738 = vunpack.c.l.b16 %v854
        %v2739 = vunpack.c.l.b16 %v855
        %v2740 = vunpack.c.l.b16 %v856
        %v2741 = vunpack.c.l.b16 %v857
        %v2742 = vunpack.c.l.b16 %v858
        %v2743 = vunpack.c.l.b16 %v859
        %v2744 = vunpack.c.l.b16 %v860
        %v2745 = vunpack.c.l.b16 %v861
        %v2746 = vunpack.c.l.b16 %v862
        %v2747 = vunpack.c.l.b16 %v863
        %v2748 = vunpack.c.l.b16 %v864
        %v2749 = vunpack.c.l.b16 %v865
        %v2750 = vunpack.c.l.b16 %v866
        %v2751 = vunpack.c.l.b16 %v867
        %v2752 = vunpack.c.l.b16 %v868
        %v2753 = vunpack.c.l.b16 %v869
        %v2754 = vunpack.c.l.b16 %v870
        %v2755 = vunpack.c.l.b16 %v871
        %v2756 = vunpack.c.l.b16 %v872
        %v2757 = vunpack.c.l.b16 %v873
        %v2758 = vunpack.c.l.b16 %v874
        %v2759 = vunpack.c.l.b16 %v875
        %v2760 = vunpack.c.l.b16 %v876
        %v2761 = vunpack.c.l.b16 %v877
        %v2762 = vunpack.c.l.b16 %v878
        %v2763 = vunpack.c.l.b16 %v879
        %v2764 = vunpack.c.l.b16 %v880
        %v2765 = vunpack.c.l.b16 %v881
        %v2766 = vunpack.c.l.b16 %v882
        %v2767 = vunpack.c.l.b16 %v883
        %v2768 = vunpack.c.l.b16 %v884
        %v2769 = vunpack.c.l.b16 %v885
        %v2770 = vunpack.c.l.b16 %v886
        %v2771 = vunpack.c.l.b16 %v887
        %v2772 = vunpack.c.l.b16 %v888
        %v2773 = vunpack.c.l.b16 %v889
        %v2774 = vunpack.c.l.b16 %v890
        %v2775 = vunpack.c.l.b16 %v891
        %v2776 = vunpack.c.l.b16 %v892
        %v2777 = vunpack.c.l.b16 %v893
        %v2778 = vunpack.c.l.b16 %v894
        %v2779 = vunpack.c.l.b16 %v895
        %v2780 = vunpack.c.l.b16 %v896
        %v2781 = vunpack.c.l.b16 %v897
        %v2782 = vunpack.c.l.b16 %v898
        %v2783 = vunpack.c.l.b16 %v899
        %v2784 = vunpack.c.l.b16 %v900
        %v2785 = vunpack.c.l.b16 %v901
        %v2786 = vunpack.c.l.b16 %v902
        %v2787 = vunpack.c.l.b16 %v903
        %v2788 = vunpack.c.l.b16 %v904
        %v2789 = vunpack.c.l.b16 %v905
        %v2790 = vunpack.c.l.b16 %v906
        %v2791 = vunpack.c.l.b16 %v907
        %v2792 = vunpack.c.l.b16 %v908
        %v2793 = vunpack.c.l.b16 %v909
        %v2794 = vunpack.c.l.b16 %v910
        %v2795 = vunpack.c.l.b16 %v911
        %v2796 = vunpack.c.l.b16 %v912
        %v2797 = vunpack.c.l.b16 %v913
        %v2798 = vunpack.c.l.b16 %v914
        %v2799 = vunpack.c.l.b16 %v915
        %v2800 = vunpack.c.l.b16 %v916
        %v2801 = vunpack.c.l.b16 %v917
        %v2802 = vunpack.c.l.b16 %v918
        %v2803 = vunpack.c.l.b16 %v919
        %v2804 = vunpack.c.l.b16 %v920
        %v2805 = vunpack.c.l.b16 %v921
        %v2806 = vunpack.c.l.b16 %v922
        %v2807 = vunpack.c.l.b16 %v923
        %v2808 = vunpack.c.l.b16 %v924
        %v2809 = vunpack.c.l.b16 %v925
        %v2810 = vunpack.c.l.b16 %v926
        %v2811 = vunpack.c.l.b16 %v927
        %v2812 = vunpack.c.l.b16 %v928
        %v2813 = vunpack.c.l.b16 %v929
        %v2814 = vunpack.c.l.b16 %v930
        %v2815 = vunpack.c.l.b16 %v931
        %v2816 = vunpack.c.l.b16 %v932
        %v2817 = vunpack.c.l.b16 %v933
        %v2818 = vunpack.c.l.b16 %v934
        %v2819 = vunpack.c.l.b16 %v935
        %v2820 = vunpack.c.l.b16 %v936
        %v2821 = vunpack.c.l.b16 %v937
        %v2822 = vunpack.c.l.b16 %v938
        %v2823 = vunpack.c.l.b16 %v939
        %v2824 = vunpack.c.l.b16 %v940
        %v2825 = vunpack.c.l.b16 %v941
        %v2826 = vunpack.c.l.b16 %v942
        %v2827 = vunpack.c.l.b16 %v943
        %v2828 = vunpack.c.l.b16 %v944
        %v2829 = vunpack.c.l.b16 %v945
        %v2830 = vunpack.c.l.b16 %v946
        %v2831 = vunpack.c.l.b16 %v947
        %v2832 = vunpack.c.l.b16 %v948
        %v2833 = vunpack.c.l.b16 %v949
        %v2834 = vunpack.c.l.b16 %v950
        %v2835 = vunpack.c.l.b16 %v951
        %v2836 = vunpack.c.l.b16 %v952
        %v2837 = vunpack.c.l.b16 %v953
        %v2838 = vunpack.c.l.b16 %v954
        %v2839 = vunpack.c.l.b16 %v955
        %v2840 = vunpack.c.l.b16 %v956
        %v2841 = vunpack.c.l.b16 %v957
        %v2842 = vunpack.c.l.b16 %v958
        %v2843 = vunpack.c.l.b16 %v959
        %v2844 = vunpack.c.l.b16 %v960
        %v2845 = vunpack.c.l.b16 %v961
        %v2846 = vunpack.c.l.b16 %v962
        %v2847 = vunpack.c.l.b16 %v963
        %v2848 = vunpack.c.l.b16 %v964
        %v2849 = vunpack.c.l.b16 %v965
        %v2850 = vunpack.c.l.b16 %v966
        %v2851 = vunpack.c.l.b16 %v967
        %v2852 = vunpack.c.l.b16 %v968
        %v2853 = vunpack.c.l.b16 %v969
        %v2854 = vunpack.c.l.b16 %v970
        %v2855 = vunpack.c.l.b16 %v971
        %v2856 = vunpack.c.l.b16 %v972
        %v2857 = vunpack.c.l.b16 %v973
        %v2858 = vunpack.c.l.b16 %v974
        %v2859 = vunpack.c.l.b16 %v975
        %v2860 = vunpack.c.l.b16 %v976
        %v2861 = vunpack.c.l.b16 %v977
        %v2862 = vunpack.c.l.b16 %v978
        %v2863 = vunpack.c.l.b16 %v979
        %v2864 = vunpack.c.l.b16 %v980
        %v2865 = vunpack.c.l.b16 %v981
        %v2866 = vunpack.c.l.b16 %v982
        %v2867 = vunpack.c.l.b16 %v983
        %v2868 = vunpack.c.l.b16 %v984
        %v2869 = vunpack.c.l.b16 %v985
        %v2870 = vunpack.c.l.b16 %v986
        %v2871 = vunpack.c.l.b16 %v987
        %v2872 = vunpack.c.l.b16 %v988
        %v2873 = vunpack.c.l.b16 %v989
        %v2874 = vunpack.c.l.b16 %v990
        %v2875 = vunpack.c.l.b16 %v991
        %v2876 = vunpack.c.l.b16 %v992
        %v2877 = vunpack.c.l.b16 %v993
        %v2878 = vunpack.c.l.b16 %v994
        %v2879 = vunpack.c.l.b16 %v995
        %v2880 = vunpack.c.l.b16 %v996
        %v2881 = vunpack.c.l.b16 %v997
        %v2882 = vunpack.c.l.b16 %v998
        %v2883 = vunpack.c.l.b16 %v999
        %v2884 = vunpack.c.l.b16 %v1000
        %v2885 = vunpack.c.l.b16 %v1001
        %v2886 = vunpack.c.l.b16 %v1002
        %v2887 = vunpack.c.l.b16 %v1003
        %v2888 = vunpack.c.l.b16 %v1004
        %v2889 = vunpack.c.l.b16 %v1005
        %v2890 = vunpack.c.l.b16 %v1006
        %v2891 = vunpack.c.l.b16 %v1007
        %v2892 = vunpack.c.l.b16 %v1008
        %v2893 = vunpack.c.l.b16 %v1009
        %v2894 = vunpack.c.l.b16 %v1010
        %v2895 = vunpack.c.l.b16 %v1011
        %v2896 = vunpack.c.l.b16 %v1012
        %v2897 = vunpack.c.l.b16 %v1013
        %v2898 = vunpack.c.l.b16 %v1014
        %v2899 = vunpack.c.l.b16 %v1015
        %v2900 = vunpack.c.l.b16 %v1016
        %v2901 = vunpack.c.l.b16 %v1017
        %v2902 = vunpack.c.l.b16 %v1018
        %v2903 = vunpack.c.l.b16 %v1019
        %v2904 = vunpack.c.l.b16 %v1020
        %v2905 = vunpack.c.l.b16 %v1021
        %v2906 = vunpack.c.l.b16 %v1022
        %v2907 = vunpack.c.l.b16 %v1023
        %v2908 = vunpack.c.l.b16 %v1024
        %v2909 = vunpack.c.l.b16 %v1025
        %v2910 = vunpack.c.l.b16 %v1026
        %v2911 = vunpack.c.l.b16 %v1027
        %v2912 = vunpack.c.l.b16 %v1028
        %v2913 = vunpack.c.l.b16 %v1029
        %v2914 = vunpack.c.l.b16 %v1030
        %v2915 = vunpack.c.l.b16 %v1031
        %v2916 = vunpack.c.l.b16 %v1032
        %v2917 = vunpack.c.l.b16 %v1033
        %v2918 = vunpack.c.l.b16 %v1034
        %v2919 = vunpack.c.l.b16 %v1035
        %v2920 = vunpack.c.l.b16 %v1036
        %v2921 = vunpack.c.l.b16 %v1037
        %v2922 = vunpack.c.l.b16 %v1038
        %v2923 = vunpack.c.l.b16 %v1039
        %v2924 = vunpack.c.l.b16 %v1040
        %v2925 = vunpack.c.l.b16 %v1041
        %v2926 = vunpack.c.l.b16 %v1042
        %v2927 = vunpack.c.l.b16 %v1043
        %v2928 = vunpack.c.l.b16 %v1044
        %v2929 = vunpack.c.l.b16 %v1045
        %v2930 = vunpack.c.l.b16 %v1046
        %v2931 = vunpack.c.l.b16 %v1047
        %v2932 = vunpack.c.l.b16 %v1048
        %v2933 = vunpack.c.l.b16 %v1049
        %v2934 = vunpack.c.l.b16 %v1050
        %v2935 = vunpack.c.l.b16 %v1051
        %v2936 = vunpack.c.l.b16 %v1052
        %v2937 = vunpack.c.l.b16 %v1053
        %v2938 = vunpack.c.l.b16 %v1054
        %v2939 = vunpack.c.l.b16 %v1055
        %v2940 = vunpack.c.l.b16 %v1056
        %v2941 = vunpack.c.l.b16 %v1057
        %v2942 = vunpack.c.l.b16 %v1058
        %v2943 = vunpack.c.l.b16 %v1059
        %v2944 = vunpack.c.l.b16 %v1060
        %v2945 = vunpack.c.l.b16 %v1061
        %v2946 = vunpack.c.l.b16 %v1062
        %v2947 = vunpack.c.l.b16 %v1063
        %v2948 = vunpack.c.l.b16 %v1064
        %v2949 = vunpack.c.l.b16 %v1065
        %v2950 = vunpack.c.l.b16 %v1066
        %v2951 = vunpack.c.l.b16 %v1067
        %v2952 = vunpack.c.l.b16 %v1068
        %v2953 = vunpack.c.l.b16 %v1069
        %v2954 = vunpack.c.l.b16 %v1070
        %v2955 = vunpack.c.l.b16 %v1071
        %v2956 = vunpack.c.l.b16 %v1072
        %v2957 = vunpack.c.l.b16 %v1073
        %v2958 = vunpack.c.l.b16 %v1074
        %v2959 = vunpack.c.l.b16 %v1075
        %v2960 = vunpack.c.l.b16 %v1076
        %v2961 = vunpack.c.l.b16 %v1077
        %v2962 = vunpack.c.l.b16 %v1078
        %v2963 = vunpack.c.l.b16 %v1079
        %v2964 = vunpack.c.l.b16 %v1080
        %v2965 = vunpack.c.l.b16 %v1081
        %v2966 = vunpack.c.l.b16 %v1082
        %v2967 = vunpack.c.l.b16 %v1083
        %v2968 = vunpack.c.l.b16 %v1084
        %v2969 = vunpack.c.l.b16 %v1085
        %v2970 = vunpack.c.l.b16 %v1086
        %v2971 = vunpack.c.l.b16 %v1087
        %v2972 = vunpack.c.l.b16 %v1088
        %v2973 = vunpack.c.l.b16 %v1089
        %v2974 = vunpack.c.l.b16 %v1090
        %v2975 = vunpack.c.l.b16 %v1091
        %v2976 = vunpack.c.l.b16 %v1092
        %v2977 = vunpack.c.l.b16 %v1093
        %v2978 = vunpack.c.l.b16 %v1094
        %v2979 = vunpack.c.l.b16 %v1095
        %v2980 = vunpack.c.l.b16 %v1096
        %v2981 = vunpack.c.l.b16 %v1097
        %v2982 = vunpack.c.l.b16 %v1098
        %v2983 = vunpack.c.l.b16 %v1099
        %v2984 = vunpack.c.l.b16 %v1100
        %v2985 = vunpack.c.l.b16 %v1101
        %v2986 = vunpack.c.l.b16 %v1102
        %v2987 = vpack.c.b16 %v2220, %v2219
        %v2988 = vpack.c.b16 %v2222, %v2221
        %v2989 = vpack.c.b16 %v2224, %v2223
        %v2990 = vpack.c.b16 %v2226, %v2225
        %v2991 = vpack.c.b16 %v2228, %v2227
        %v2992 = vpack.c.b16 %v2230, %v2229
        %v2993 = vpack.c.b16 %v2232, %v2231
        %v2994 = vpack.c.b16 %v2234, %v2233
        %v2995 = vpack.c.b16 %v2236, %v2235
        %v2996 = vpack.c.b16 %v2238, %v2237
        %v2997 = vpack.c.b16 %v2240, %v2239
        %v2998 = vpack.c.b16 %v2242, %v2241
        %v2999 = vpack.c.b16 %v2244, %v2243
        %v3000 = vpack.c.b16 %v2246, %v2245
        %v3001 = vpack.c.b16 %v2248, %v2247
        %v3002 = vpack.c.b16 %v2250, %v2249
        %v3003 = vpack.c.b16 %v2252, %v2251
        %v3004 = vpack.c.b16 %v2254, %v2253
        %v3005 = vpack.c.b16 %v2256, %v2255
        %v3006 = vpack.c.b16 %v2258, %v2257
        %v3007 = vpack.c.b16 %v2260, %v2259
        %v3008 = vpack.c.b16 %v2262, %v2261
        %v3009 = vpack.c.b16 %v2264, %v2263
        %v3010 = vpack.c.b16 %v2266, %v2265
        %v3011 = vpack.c.b16 %v2268, %v2267
        %v3012 = vpack.c.b16 %v2270, %v2269
        %v3013 = vpack.c.b16 %v2272, %v2271
        %v3014 = vpack.c.b16 %v2274, %v2273
        %v3015 = vpack.c.b16 %v2276, %v2275
        %v3016 = vpack.c.b16 %v2278, %v2277
        %v3017 = vpack.c.b16 %v2280, %v2279
        %v3018 = vpack.c.b16 %v2282, %v2281
        %v3019 = vpack.c.b16 %v2284, %v2283
        %v3020 = vpack.c.b16 %v2286, %v2285
        %v3021 = vpack.c.b16 %v2288, %v2287
        %v3022 = vpack.c.b16 %v2290, %v2289
        %v3023 = vpack.c.b16 %v2292, %v2291
        %v3024 = vpack.c.b16 %v2294, %v2293
        %v3025 = vpack.c.b16 %v2296, %v2295
        %v3026 = vpack.c.b16 %v2298, %v2297
        %v3027 = vpack.c.b16 %v2300, %v2299
        %v3028 = vpack.c.b16 %v2302, %v2301
        %v3029 = vpack.c.b16 %v2304, %v2303
        %v3030 = vpack.c.b16 %v2306, %v2305
        %v3031 = vpack.c.b16 %v2308, %v2307
        %v3032 = vpack.c.b16 %v2310, %v2309
        %v3033 = vpack.c.b16 %v2312, %v2311
        %v3034 = vpack.c.b16 %v2314, %v2313
        %v3035 = vpack.c.b16 %v2316, %v2315
        %v3036 = vpack.c.b16 %v2318, %v2317
        %v3037 = vpack.c.b16 %v2320, %v2319
        %v3038 = vpack.c.b16 %v2322, %v2321
        %v3039 = vpack.c.b16 %v2324, %v2323
        %v3040 = vpack.c.b16 %v2326, %v2325
        %v3041 = vpack.c.b16 %v2328, %v2327
        %v3042 = vpack.c.b16 %v2330, %v2329
        %v3043 = vpack.c.b16 %v2332, %v2331
        %v3044 = vpack.c.b16 %v2334, %v2333
        %v3045 = vpack.c.b16 %v2336, %v2335
        %v3046 = vpack.c.b16 %v2338, %v2337
        %v3047 = vpack.c.b16 %v2340, %v2339
        %v3048 = vpack.c.b16 %v2342, %v2341
        %v3049 = vpack.c.b16 %v2344, %v2343
        %v3050 = vpack.c.b16 %v2346, %v2345
        %v3051 = vpack.c.b16 %v2348, %v2347
        %v3052 = vpack.c.b16 %v2350, %v2349
        %v3053 = vpack.c.b16 %v2352, %v2351
        %v3054 = vpack.c.b16 %v2354, %v2353
        %v3055 = vpack.c.b16 %v2356, %v2355
        %v3056 = vpack.c.b16 %v2358, %v2357
        %v3057 = vpack.c.b16 %v2360, %v2359
        %v3058 = vpack.c.b16 %v2362, %v2361
        %v3059 = vpack.c.b16 %v2364, %v2363
        %v3060 = vpack.c.b16 %v2366, %v2365
        %v3061 = vpack.c.b16 %v2368, %v2367
        %v3062 = vpack.c.b16 %v2370, %v2369
        %v3063 = vpack.c.b16 %v2372, %v2371
        %v3064 = vpack.c.b16 %v2374, %v2373
        %v3065 = vpack.c.b16 %v2376, %v2375
        %v3066 = vpack.c.b16 %v2378, %v2377
        %v3067 = vpack.c.b16 %v2380, %v2379
        %v3068 = vpack.c.b16 %v2382, %v2381
        %v3069 = vpack.c.b16 %v2384, %v2383
        %v3070 = vpack.c.b16 %v2386, %v2385
        %v3071 = vpack.c.b16 %v2388, %v2387
        %v3072 = vpack.c.b16 %v2390, %v2389
        %v3073 = vpack.c.b16 %v2392, %v2391
        %v3074 = vpack.c.b16 %v2394, %v2393
        %v3075 = vpack.c.b16 %v2396, %v2395
        %v3076 = vpack.c.b16 %v2398, %v2397
        %v3077 = vpack.c.b16 %v2400, %v2399
        %v3078 = vpack.c.b16 %v2402, %v2401
        %v3079 = vpack.c.b16 %v2404, %v2403
        %v3080 = vpack.c.b16 %v2406, %v2405
        %v3081 = vpack.c.b16 %v2408, %v2407
        %v3082 = vpack.c.b16 %v2410, %v2409
        %v3083 = vpack.c.b16 %v2412, %v2411
        %v3084 = vpack.c.b16 %v2414, %v2413
        %v3085 = vpack.c.b16 %v2416, %v2415
        %v3086 = vpack.c.b16 %v2418, %v2417
        %v3087 = vpack.c.b16 %v2420, %v2419
        %v3088 = vpack.c.b16 %v2422, %v2421
        %v3089 = vpack.c.b16 %v2424, %v2423
        %v3090 = vpack.c.b16 %v2426, %v2425
        %v3091 = vpack.c.b16 %v2428, %v2427
        %v3092 = vpack.c.b16 %v2430, %v2429
        %v3093 = vpack.c.b16 %v2432, %v2431
        %v3094 = vpack.c.b16 %v2434, %v2433
        %v3095 = vpack.c.b16 %v2436, %v2435
        %v3096 = vpack.c.b16 %v2438, %v2437
        %v3097 = vpack.c.b16 %v2440, %v2439
        %v3098 = vpack.c.b16 %v2442, %v2441
        %v3099 = vpack.c.b16 %v2444, %v2443
        %v3100 = vpack.c.b16 %v2446, %v2445
        %v3101 = vpack.c.b16 %v2448, %v2447
        %v3102 = vpack.c.b16 %v2450, %v2449
        %v3103 = vpack.c.b16 %v2452, %v2451
        %v3104 = vpack.c.b16 %v2454, %v2453
        %v3105 = vpack.c.b16 %v2456, %v2455
        %v3106 = vpack.c.b16 %v2458, %v2457
        %v3107 = vpack.c.b16 %v2460, %v2459
        %v3108 = vpack.c.b16 %v2462, %v2461
        %v3109 = vpack.c.b16 %v2464, %v2463
        %v3110 = vpack.c.b16 %v2466, %v2465
        %v3111 = vpack.c.b16 %v2468, %v2467
        %v3112 = vpack.c.b16 %v2470, %v2469
        %v3113 = vpack.c.b16 %v2472, %v2471
        %v3114 = vpack.c.b16 %v2474, %v2473
        %v3115 = vpack.c.b16 %v2476, %v2475
        %v3116 = vpack.c.b16 %v2478, %v2477
        %v3117 = vpack.c.b16 %v2480, %v2479
        %v3118 = vpack.c.b16 %v2482, %v2481
        %v3119 = vpack.c.b16 %v2484, %v2483
        %v3120 = vpack.c.b16 %v2486, %v2485
        %v3121 = vpack.c.b16 %v2488, %v2487
        %v3122 = vpack.c.b16 %v2490, %v2489
        %v3123 = vpack.c.b16 %v2492, %v2491
        %v3124 = vpack.c.b16 %v2494, %v2493
        %v3125 = vpack.c.b16 %v2496, %v2495
        %v3126 = vpack.c.b16 %v2498, %v2497
        %v3127 = vpack.c.b16 %v2500, %v2499
        %v3128 = vpack.c.b16 %v2502, %v2501
        %v3129 = vpack.c.b16 %v2504, %v2503
        %v3130 = vpack.c.b16 %v2506, %v2505
        %v3131 = vpack.c.b16 %v2508, %v2507
        %v3132 = vpack.c.b16 %v2510, %v2509
        %v3133 = vpack.c.b16 %v2512, %v2511
        %v3134 = vpack.c.b16 %v2514, %v2513
        %v3135 = vpack.c.b16 %v2516, %v2515
        %v3136 = vpack.c.b16 %v2518, %v2517
        %v3137 = vpack.c.b16 %v2520, %v2519
        %v3138 = vpack.c.b16 %v2522, %v2521
        %v3139 = vpack.c.b16 %v2524, %v2523
        %v3140 = vpack.c.b16 %v2526, %v2525
        %v3141 = vpack.c.b16 %v2528, %v2527
        %v3142 = vpack.c.b16 %v2530, %v2529
        %v3143 = vpack.c.b16 %v2532, %v2531
        %v3144 = vpack.c.b16 %v2534, %v2533
        %v3145 = vpack.c.b16 %v2536, %v2535
        %v3146 = vpack.c.b16 %v2538, %v2537
        %v3147 = vpack.c.b16 %v2540, %v2539
        %v3148 = vpack.c.b16 %v2542, %v2541
        %v3149 = vpack.c.b16 %v2544, %v2543
        %v3150 = vpack.c.b16 %v2546, %v2545
        %v3151 = vpack.c.b16 %v2548, %v2547
        %v3152 = vpack.c.b16 %v2550, %v2549
        %v3153 = vpack.c.b16 %v2552, %v2551
        %v3154 = vpack.c.b16 %v2554, %v2553
        %v3155 = vpack.c.b16 %v2556, %v2555
        %v3156 = vpack.c.b16 %v2558, %v2557
        %v3157 = vpack.c.b16 %v2560, %v2559
        %v3158 = vpack.c.b16 %v2562, %v2561
        %v3159 = vpack.c.b16 %v2564, %v2563
        %v3160 = vpack.c.b16 %v2566, %v2565
        %v3161 = vpack.c.b16 %v2568, %v2567
        %v3162 = vpack.c.b16 %v2570, %v2569
        %v3163 = vpack.c.b16 %v2572, %v2571
        %v3164 = vpack.c.b16 %v2574, %v2573
        %v3165 = vpack.c.b16 %v2576, %v2575
        %v3166 = vpack.c.b16 %v2578, %v2577
        %v3167 = vpack.c.b16 %v2580, %v2579
        %v3168 = vpack.c.b16 %v2582, %v2581
        %v3169 = vpack.c.b16 %v2584, %v2583
        %v3170 = vpack.c.b16 %v2586, %v2585
        %v3171 = vpack.c.b16 %v2588, %v2587
        %v3172 = vpack.c.b16 %v2590, %v2589
        %v3173 = vpack.c.b16 %v2592, %v2591
        %v3174 = vpack.c.b16 %v2594, %v2593
        %v3175 = vpack.c.b16 %v2596, %v2595
        %v3176 = vpack.c.b16 %v2598, %v2597
        %v3177 = vpack.c.b16 %v2600, %v2599
        %v3178 = vpack.c.b16 %v2602, %v2601
        %v3179 = vpack.c.b16 %v2604, %v2603
        %v3180 = vpack.c.b16 %v2606, %v2605
        %v3181 = vpack.c.b16 %v2608, %v2607
        %v3182 = vpack.c.b16 %v2610, %v2609
        %v3183 = vpack.c.b16 %v2612, %v2611
        %v3184 = vpack.c.b16 %v2614, %v2613
        %v3185 = vpack.c.b16 %v2616, %v2615
        %v3186 = vpack.c.b16 %v2618, %v2617
        %v3187 = vpack.c.b16 %v2620, %v2619
        %v3188 = vpack.c.b16 %v2622, %v2621
        %v3189 = vpack.c.b16 %v2624, %v2623
        %v3190 = vpack.c.b16 %v2626, %v2625
        %v3191 = vpack.c.b16 %v2628, %v2627
        %v3192 = vpack.c.b16 %v2630, %v2629
        %v3193 = vpack.c.b16 %v2632, %v2631
        %v3194 = vpack.c.b16 %v2634, %v2633
        %v3195 = vpack.c.b16 %v2636, %v2635
        %v3196 = vpack.c.b16 %v2638, %v2637
        %v3197 = vpack.c.b16 %v2640, %v2639
        %v3198 = vpack.c.b16 %v2642, %v2641
        %v3199 = vpack.c.b16 %v2644, %v2643
        %v3200 = vpack.c.b16 %v2646, %v2645
        %v3201 = vpack.c.b16 %v2648, %v2647
        %v3202 = vpack.c.b16 %v2650, %v2649
        %v3203 = vpack.c.b16 %v2652, %v2651
        %v3204 = vpack.c.b16 %v2654, %v2653
        %v3205 = vpack.c.b16 %v2656, %v2655
        %v3206 = vpack.c.b16 %v2658, %v2657
        %v3207 = vpack.c.b16 %v2660, %v2659
        %v3208 = vpack.c.b16 %v2662, %v2661
        %v3209 = vpack.c.b16 %v2664, %v2663
        %v3210 = vpack.c.b16 %v2666, %v2665
        %v3211 = vpack.c.b16 %v2668, %v2667
        %v3212 = vpack.c.b16 %v2670, %v2669
        %v3213 = vpack.c.b16 %v2672, %v2671
        %v3214 = vpack.c.b16 %v2674, %v2673
        %v3215 = vpack.c.b16 %v2676, %v2675
        %v3216 = vpack.c.b16 %v2678, %v2677
        %v3217 = vpack.c.b16 %v2680, %v2679
        %v3218 = vpack.c.b16 %v2682, %v2681
        %v3219 = vpack.c.b16 %v2684, %v2683
        %v3220 = vpack.c.b16 %v2686, %v2685
        %v3221 = vpack.c.b16 %v2688, %v2687
        %v3222 = vpack.c.b16 %v2690, %v2689
        %v3223 = vpack.c.b16 %v2692, %v2691
        %v3224 = vpack.c.b16 %v2694, %v2693
        %v3225 = vpack.c.b16 %v2696, %v2695
        %v3226 = vpack.c.b16 %v2698, %v2697
        %v3227 = vpack.c.b16 %v2700, %v2699
        %v3228 = vpack.c.b16 %v2702, %v2701
        %v3229 = vpack.c.b16 %v2704, %v2703
        %v3230 = vpack.c.b16 %v2706, %v2705
        %v3231 = vpack.c.b16 %v2708, %v2707
        %v3232 = vpack.c.b16 %v2710, %v2709
        %v3233 = vpack.c.b16 %v2712, %v2711
        %v3234 = vpack.c.b16 %v2714, %v2713
        %v3235 = vpack.c.b16 %v2716, %v2715
        %v3236 = vpack.c.b16 %v2718, %v2717
        %v3237 = vpack.c.b16 %v2720, %v2719
        %v3238 = vpack.c.b16 %v2722, %v2721
        %v3239 = vpack.c.b16 %v2724, %v2723
        %v3240 = vpack.c.b16 %v2726, %v2725
        %v3241 = vpack.c.b16 %v2728, %v2727
        %v3242 = vpack.c.b16 %v2730, %v2729
        %v3243 = vpack.c.b16 %v2732, %v2731
        %v3244 = vpack.c.b16 %v2734, %v2733
        %v3245 = vpack.c.b16 %v2736, %v2735
        %v3246 = vpack.c.b16 %v2738, %v2737
        %v3247 = vpack.c.b16 %v2740, %v2739
        %v3248 = vpack.c.b16 %v2742, %v2741
        %v3249 = vpack.c.b16 %v2744, %v2743
        %v3250 = vpack.c.b16 %v2746, %v2745
        %v3251 = vpack.c.b16 %v2748, %v2747
        %v3252 = vpack.c.b16 %v2750, %v2749
        %v3253 = vpack.c.b16 %v2752, %v2751
        %v3254 = vpack.c.b16 %v2754, %v2753
        %v3255 = vpack.c.b16 %v2756, %v2755
        %v3256 = vpack.c.b16 %v2758, %v2757
        %v3257 = vpack.c.b16 %v2760, %v2759
        %v3258 = vpack.c.b16 %v2762, %v2761
        %v3259 = vpack.c.b16 %v2764, %v2763
        %v3260 = vpack.c.b16 %v2766, %v2765
        %v3261 = vpack.c.b16 %v2768, %v2767
        %v3262 = vpack.c.b16 %v2770, %v2769
        %v3263 = vpack.c.b16 %v2772, %v2771
        %v3264 = vpack.c.b16 %v2774, %v2773
        %v3265 = vpack.c.b16 %v2776, %v2775
        %v3266 = vpack.c.b16 %v2778, %v2777
        %v3267 = vpack.c.b16 %v2780, %v2779
        %v3268 = vpack.c.b16 %v2782, %v2781
        %v3269 = vpack.c.b16 %v2784, %v2783
        %v3270 = vpack.c.b16 %v2786, %v2785
        %v3271 = vpack.c.b16 %v2788, %v2787
        %v3272 = vpack.c.b16 %v2790, %v2789
        %v3273 = vpack.c.b16 %v2792, %v2791
        %v3274 = vpack.c.b16 %v2794, %v2793
        %v3275 = vpack.c.b16 %v2796, %v2795
        %v3276 = vpack.c.b16 %v2798, %v2797
        %v3277 = vpack.c.b16 %v2800, %v2799
        %v3278 = vpack.c.b16 %v2802, %v2801
        %v3279 = vpack.c.b16 %v2804, %v2803
        %v3280 = vpack.c.b16 %v2806, %v2805
        %v3281 = vpack.c.b16 %v2808, %v2807
        %v3282 = vpack.c.b16 %v2810, %v2809
        %v3283 = vpack.c.b16 %v2812, %v2811
        %v3284 = vpack.c.b16 %v2814, %v2813
        %v3285 = vpack.c.b16 %v2816, %v2815
        %v3286 = vpack.c.b16 %v2818, %v2817
        %v3287 = vpack.c.b16 %v2820, %v2819
        %v3288 = vpack.c.b16 %v2822, %v2821
        %v3289 = vpack.c.b16 %v2824, %v2823
        %v3290 = vpack.c.b16 %v2826, %v2825
        %v3291 = vpack.c.b16 %v2828, %v2827
        %v3292 = vpack.c.b16 %v2830, %v2829
        %v3293 = vpack.c.b16 %v2832, %v2831
        %v3294 = vpack.c.b16 %v2834, %v2833
        %v3295 = vpack.c.b16 %v2836, %v2835
        %v3296 = vpack.c.b16 %v2838, %v2837
        %v3297 = vpack.c.b16 %v2840, %v2839
        %v3298 = vpack.c.b16 %v2842, %v2841
        %v3299 = vpack.c.b16 %v2844, %v2843
        %v3300 = vpack.c.b16 %v2846, %v2845
        %v3301 = vpack.c.b16 %v2848, %v2847
        %v3302 = vpack.c.b16 %v2850, %v2849
        %v3303 = vpack.c.b16 %v2852, %v2851
        %v3304 = vpack.c.b16 %v2854, %v2853
        %v3305 = vpack.c.b16 %v2856, %v2855
        %v3306 = vpack.c.b16 %v2858, %v2857
        %v3307 = vpack.c.b16 %v2860, %v2859
        %v3308 = vpack.c.b16 %v2862, %v2861
        %v3309 = vpack.c.b16 %v2864, %v2863
        %v3310 = vpack.c.b16 %v2866, %v2865
        %v3311 = vpack.c.b16 %v2868, %v2867
        %v3312 = vpack.c.b16 %v2870, %v2869
        %v3313 = vpack.c.b16 %v2872, %v2871
        %v3314 = vpack.c.b16 %v2874, %v2873
        %v3315 = vpack.c.b16 %v2876, %v2875
        %v3316 = vpack.c.b16 %v2878, %v2877
        %v3317 = vpack.c.b16 %v2880, %v2879
        %v3318 = vpack.c.b16 %v2882, %v2881
        %v3319 = vpack.c.b16 %v2884, %v2883
        %v3320 = vpack.c.b16 %v2886, %v2885
        %v3321 = vpack.c.b16 %v2888, %v2887
        %v3322 = vpack.c.b16 %v2890, %v2889
        %v3323 = vpack.c.b16 %v2892, %v2891
        %v3324 = vpack.c.b16 %v2894, %v2893
        %v3325 = vpack.c.b16 %v2896, %v2895
        %v3326 = vpack.c.b16 %v2898, %v2897
        %v3327 = vpack.c.b16 %v2900, %v2899
        %v3328 = vpack.c.b16 %v2902, %v2901
        %v3329 = vpack.c.b16 %v2904, %v2903
        %v3330 = vpack.c.b16 %v2906, %v2905
        %v3331 = vpack.c.b16 %v2908, %v2907
        %v3332 = vpack.c.b16 %v2910, %v2909
        %v3333 = vpack.c.b16 %v2912, %v2911
        %v3334 = vpack.c.b16 %v2914, %v2913
        %v3335 = vpack.c.b16 %v2916, %v2915
        %v3336 = vpack.c.b16 %v2918, %v2917
        %v3337 = vpack.c.b16 %v2920, %v2919
        %v3338 = vpack.c.b16 %v2922, %v2921
        %v3339 = vpack.c.b16 %v2924, %v2923
        %v3340 = vpack.c.b16 %v2926, %v2925
        %v3341 = vpack.c.b16 %v2928, %v2927
        %v3342 = vpack.c.b16 %v2930, %v2929
        %v3343 = vpack.c.b16 %v2932, %v2931
        %v3344 = vpack.c.b16 %v2934, %v2933
        %v3345 = vpack.c.b16 %v2936, %v2935
        %v3346 = vpack.c.b16 %v2938, %v2937
        %v3347 = vpack.c.b16 %v2940, %v2939
        %v3348 = vpack.c.b16 %v2942, %v2941
        %v3349 = vpack.c.b16 %v2944, %v2943
        %v3350 = vpack.c.b16 %v2946, %v2945
        %v3351 = vpack.c.b16 %v2948, %v2947
        %v3352 = vpack.c.b16 %v2950, %v2949
        %v3353 = vpack.c.b16 %v2952, %v2951
        %v3354 = vpack.c.b16 %v2954, %v2953
        %v3355 = vpack.c.b16 %v2956, %v2955
        %v3356 = vpack.c.b16 %v2958, %v2957
        %v3357 = vpack.c.b16 %v2960, %v2959
        %v3358 = vpack.c.b16 %v2962, %v2961
        %v3359 = vpack.c.b16 %v2964, %v2963
        %v3360 = vpack.c.b16 %v2966, %v2965
        %v3361 = vpack.c.b16 %v2968, %v2967
        %v3362 = vpack.c.b16 %v2970, %v2969
        %v3363 = vpack.c.b16 %v2972, %v2971
        %v3364 = vpack.c.b16 %v2974, %v2973
        %v3365 = vpack.c.b16 %v2976, %v2975
        %v3366 = vpack.c.b16 %v2978, %v2977
        %v3367 = vpack.c.b16 %v2980, %v2979
        %v3368 = vpack.c.b16 %v2982, %v2981
        %v3369 = vpack.c.b16 %v2984, %v2983
        %v3370 = vpack.c.b16 %v2986, %v2985
        %3755 = vmatprep.subr.bf16.mxu0 0
        %3756 = vmatpush1.bf16.msra.mxu0 %v2987
        %3757 = vmatprep.subr.bf16.mxu0 0
        %3758 = vmatpush1.bf16.msra.mxu0 %v2988
        %3759 = vmatprep.subr.bf16.mxu0 0
        %3760 = vmatpush1.bf16.msra.mxu0 %v2989
        %3761 = vmatprep.subr.bf16.mxu0 0
        %3762 = vmatpush1.bf16.msra.mxu0 %v2990
        %3763 = vmatprep.subr.bf16.mxu0 0
        %3764 = vmatpush1.bf16.msra.mxu0 %v2991
        %3765 = vmatprep.subr.bf16.mxu0 0
        %3766 = vmatpush1.bf16.msra.mxu0 %v2992
        %3767 = vmatprep.subr.bf16.mxu0 0
        %3768 = vmatpush1.bf16.msra.mxu0 %v2993
        %3769 = vmatprep.subr.bf16.mxu0 0
        %3770 = vmatpush1.bf16.msra.mxu0 %v2994
        %3771 = vmatprep.subr.bf16.mxu0 0
        %3772 = vmatpush1.bf16.msra.mxu0 %v2995
        %3773 = vmatprep.subr.bf16.mxu0 0
        %3774 = vmatpush1.bf16.msra.mxu0 %v2996
        %3775 = vmatprep.subr.bf16.mxu0 0
        %3776 = vmatpush1.bf16.msra.mxu0 %v2997
        %3777 = vmatprep.subr.bf16.mxu0 0
        %3778 = vmatpush1.bf16.msra.mxu0 %v2998
        %3779 = vmatprep.subr.bf16.mxu0 0
        %3780 = vmatpush1.bf16.msra.mxu0 %v2999
        %3781 = vmatprep.subr.bf16.mxu0 0
        %3782 = vmatpush1.bf16.msra.mxu0 %v3000
        %3783 = vmatprep.subr.bf16.mxu0 0
        %3784 = vmatpush1.bf16.msra.mxu0 %v3001
        %3785 = vmatprep.subr.bf16.mxu0 0
        %3786 = vmatpush1.bf16.msra.mxu0 %v3002
        %3787 = vmatprep.mubr.bf16.mxu0 %v1146
        %3788 = vmatmul.mubr.bf16.gmra.mrb[0].mxu0 %v1132
        %v3789 = vpop.f32.mrb[0].mxu0
        %v3790 = vadd.f32 0.0, %v3789
        %v3791 = vpop.f32.mrb[0].mxu0
        %v3792 = vpop.f32.mrb[0].mxu0
        %v3793 = vpop.f32.mrb[0].mxu0
        %3794 = vdwg.mxu0
        %3795 = vmatprep.subr.bf16.mxu0 0
        %3796 = vmatpush1.bf16.msra.mxu0 %v3003
        %3797 = vmatprep.subr.bf16.mxu0 0
        %3798 = vmatpush1.bf16.msra.mxu0 %v3004
        %3799 = vmatprep.subr.bf16.mxu0 0
        %3800 = vmatpush1.bf16.msra.mxu0 %v3005
        %3801 = vmatprep.subr.bf16.mxu0 0
        %3802 = vmatpush1.bf16.msra.mxu0 %v3006
        %3803 = vmatprep.subr.bf16.mxu0 0
        %3804 = vmatpush1.bf16.msra.mxu0 %v3007
        %3805 = vmatprep.subr.bf16.mxu0 0
        %3806 = vmatpush1.bf16.msra.mxu0 %v3008
        %3807 = vmatprep.subr.bf16.mxu0 0
        %3808 = vmatpush1.bf16.msra.mxu0 %v3009
        %3809 = vmatprep.subr.bf16.mxu0 0
        %3810 = vmatpush1.bf16.msra.mxu0 %v3010
        %3811 = vmatprep.subr.bf16.mxu0 0
        %3812 = vmatpush1.bf16.msra.mxu0 %v3011
        %3813 = vmatprep.subr.bf16.mxu0 0
        %3814 = vmatpush1.bf16.msra.mxu0 %v3012
        %3815 = vmatprep.subr.bf16.mxu0 0
        %3816 = vmatpush1.bf16.msra.mxu0 %v3013
        %3817 = vmatprep.subr.bf16.mxu0 0
        %3818 = vmatpush1.bf16.msra.mxu0 %v3014
        %3819 = vmatprep.subr.bf16.mxu0 0
        %3820 = vmatpush1.bf16.msra.mxu0 %v3015
        %3821 = vmatprep.subr.bf16.mxu0 0
        %3822 = vmatpush1.bf16.msra.mxu0 %v3016
        %3823 = vmatprep.subr.bf16.mxu0 0
        %3824 = vmatpush1.bf16.msra.mxu0 %v3017
        %3825 = vmatprep.subr.bf16.mxu0 0
        %3826 = vmatpush1.bf16.msra.mxu0 %v3018
        %3827 = vmatprep.mubr.bf16.mxu0 %v1156
        %3828 = vmatmul.mubr.bf16.gmra.mrb[0].mxu0 %v1154
        %v3829 = vpop.f32.mrb[0].mxu0
        %v3830 = vadd.f32 %v3790, %v3829
        %v3831 = vpop.f32.mrb[0].mxu0
        %v3832 = vpop.f32.mrb[0].mxu0
        %v3833 = vpop.f32.mrb[0].mxu0
        %3834 = vdwg.mxu0
        %3835 = vmatprep.subr.bf16.mxu0 0
        %3836 = vmatpush1.bf16.msra.mxu0 %v3019
        %3837 = vmatprep.subr.bf16.mxu0 0
        %3838 = vmatpush1.bf16.msra.mxu0 %v3020
        %3839 = vmatprep.subr.bf16.mxu0 0
        %3840 = vmatpush1.bf16.msra.mxu0 %v3021
        %3841 = vmatprep.subr.bf16.mxu0 0
        %3842 = vmatpush1.bf16.msra.mxu0 %v3022
        %3843 = vmatprep.subr.bf16.mxu0 0
        %3844 = vmatpush1.bf16.msra.mxu0 %v3023
        %3845 = vmatprep.subr.bf16.mxu0 0
        %3846 = vmatpush1.bf16.msra.mxu0 %v3024
        %3847 = vmatprep.subr.bf16.mxu0 0
        %3848 = vmatpush1.bf16.msra.mxu0 %v3025
        %3849 = vmatprep.subr.bf16.mxu0 0
        %3850 = vmatpush1.bf16.msra.mxu0 %v3026
        %3851 = vmatprep.subr.bf16.mxu0 0
        %3852 = vmatpush1.bf16.msra.mxu0 %v3027
        %3853 = vmatprep.subr.bf16.mxu0 0
        %3854 = vmatpush1.bf16.msra.mxu0 %v3028
        %3855 = vmatprep.subr.bf16.mxu0 0
        %3856 = vmatpush1.bf16.msra.mxu0 %v3029
        %3857 = vmatprep.subr.bf16.mxu0 0
        %3858 = vmatpush1.bf16.msra.mxu0 %v3030
        %3859 = vmatprep.subr.bf16.mxu0 0
        %3860 = vmatpush1.bf16.msra.mxu0 %v3031
        %3861 = vmatprep.subr.bf16.mxu0 0
        %3862 = vmatpush1.bf16.msra.mxu0 %v3032
        %3863 = vmatprep.subr.bf16.mxu0 0
        %3864 = vmatpush1.bf16.msra.mxu0 %v3033
        %3865 = vmatprep.subr.bf16.mxu0 0
        %3866 = vmatpush1.bf16.msra.mxu0 %v3034
        %3867 = vmatprep.mubr.bf16.mxu0 %v1153
        %3868 = vmatmul.mubr.bf16.gmra.mrb[0].mxu0 %v1139
        %v3869 = vpop.f32.mrb[0].mxu0
        %v3870 = vadd.f32 %v3830, %v3869
        %v3871 = vpop.f32.mrb[0].mxu0
        %v3872 = vpop.f32.mrb[0].mxu0
        %v3873 = vpop.f32.mrb[0].mxu0
        %3874 = vdwg.mxu0
        %3875 = vmatprep.subr.bf16.mxu0 0
        %3876 = vmatpush1.bf16.msra.mxu0 %v3035
        %3877 = vmatprep.subr.bf16.mxu0 0
        %3878 = vmatpush1.bf16.msra.mxu0 %v3036
        %3879 = vmatprep.subr.bf16.mxu0 0
        %3880 = vmatpush1.bf16.msra.mxu0 %v3037
        %3881 = vmatprep.subr.bf16.mxu0 0
        %3882 = vmatpush1.bf16.msra.mxu0 %v3038
        %3883 = vmatprep.subr.bf16.mxu0 0
        %3884 = vmatpush1.bf16.msra.mxu0 %v3039
        %3885 = vmatprep.subr.bf16.mxu0 0
        %3886 = vmatpush1.bf16.msra.mxu0 %v3040
        %3887 = vmatprep.subr.bf16.mxu0 0
        %3888 = vmatpush1.bf16.msra.mxu0 %v3041
        %3889 = vmatprep.subr.bf16.mxu0 0
        %3890 = vmatpush1.bf16.msra.mxu0 %v3042
        %3891 = vmatprep.subr.bf16.mxu0 0
        %3892 = vmatpush1.bf16.msra.mxu0 %v3043
        %3893 = vmatprep.subr.bf16.mxu0 0
        %3894 = vmatpush1.bf16.msra.mxu0 %v3044
        %3895 = vmatprep.subr.bf16.mxu0 0
        %3896 = vmatpush1.bf16.msra.mxu0 %v3045
        %3897 = vmatprep.subr.bf16.mxu0 0
        %3898 = vmatpush1.bf16.msra.mxu0 %v3046
        %3899 = vmatprep.subr.bf16.mxu0 0
        %3900 = vmatpush1.bf16.msra.mxu0 %v3047
        %3901 = vmatprep.subr.bf16.mxu0 0
        %3902 = vmatpush1.bf16.msra.mxu0 %v3048
        %3903 = vmatprep.subr.bf16.mxu0 0
        %3904 = vmatpush1.bf16.msra.mxu0 %v3049
        %3905 = vmatprep.subr.bf16.mxu0 0
        %3906 = vmatpush1.bf16.msra.mxu0 %v3050
        %3907 = vmatprep.mubr.bf16.mxu0 %v1157
        %3908 = vmatmul.mubr.bf16.gmra.mrb[0].mxu0 %v1155
        %v3909 = vpop.f32.mrb[0].mxu0
        %v3910 = vadd.f32 %v3870, %v3909
        %v3911 = vpop.f32.mrb[0].mxu0
        %v3912 = vpop.f32.mrb[0].mxu0
        %v3913 = vpop.f32.mrb[0].mxu0
        %3914 = vdwg.mxu0
        %3915 = vmatprep.subr.bf16.mxu0 0
        %3916 = vmatpush1.bf16.msra.mxu0 %v3051
        %3917 = vmatprep.subr.bf16.mxu0 0
        %3918 = vmatpush1.bf16.msra.mxu0 %v3052
        %3919 = vmatprep.subr.bf16.mxu0 0
        %3920 = vmatpush1.bf16.msra.mxu0 %v3053
        %3921 = vmatprep.subr.bf16.mxu0 0
        %3922 = vmatpush1.bf16.msra.mxu0 %v3054
        %3923 = vmatprep.subr.bf16.mxu0 0
        %3924 = vmatpush1.bf16.msra.mxu0 %v3055
        %3925 = vmatprep.subr.bf16.mxu0 0
        %3926 = vmatpush1.bf16.msra.mxu0 %v3056
        %3927 = vmatprep.subr.bf16.mxu0 0
        %3928 = vmatpush1.bf16.msra.mxu0 %v3057
        %3929 = vmatprep.subr.bf16.mxu0 0
        %3930 = vmatpush1.bf16.msra.mxu0 %v3058
        %3931 = vmatprep.subr.bf16.mxu0 0
        %3932 = vmatpush1.bf16.msra.mxu0 %v3059
        %3933 = vmatprep.subr.bf16.mxu0 0
        %3934 = vmatpush1.bf16.msra.mxu0 %v3060
        %3935 = vmatprep.subr.bf16.mxu0 0
        %3936 = vmatpush1.bf16.msra.mxu0 %v3061
        %3937 = vmatprep.subr.bf16.mxu0 0
        %3938 = vmatpush1.bf16.msra.mxu0 %v3062
        %3939 = vmatprep.subr.bf16.mxu0 0
        %3940 = vmatpush1.bf16.msra.mxu0 %v3063
        %3941 = vmatprep.subr.bf16.mxu0 0
        %3942 = vmatpush1.bf16.msra.mxu0 %v3064
        %3943 = vmatprep.subr.bf16.mxu0 0
        %3944 = vmatpush1.bf16.msra.mxu0 %v3065
        %3945 = vmatprep.subr.bf16.mxu0 0
        %3946 = vmatpush1.bf16.msra.mxu0 %v3066
        %3947 = vmatprep.mubr.bf16.mxu0 %v1195
        %3948 = vmatmul.mubr.bf16.gmra.mrb[0].mxu0 %v1181
        %v3949 = vpop.f32.mrb[0].mxu0
        %v3950 = vadd.f32 %v3910, %v3949
        %v3951 = vpop.f32.mrb[0].mxu0
        %v3952 = vpop.f32.mrb[0].mxu0
        %v3953 = vpop.f32.mrb[0].mxu0
        %3954 = vdwg.mxu0
        %3955 = vmatprep.subr.bf16.mxu0 0
        %3956 = vmatpush1.bf16.msra.mxu0 %v3067
        %3957 = vmatprep.subr.bf16.mxu0 0
        %3958 = vmatpush1.bf16.msra.mxu0 %v3068
        %3959 = vmatprep.subr.bf16.mxu0 0
        %3960 = vmatpush1.bf16.msra.mxu0 %v3069
        %3961 = vmatprep.subr.bf16.mxu0 0
        %3962 = vmatpush1.bf16.msra.mxu0 %v3070
        %3963 = vmatprep.subr.bf16.mxu0 0
        %3964 = vmatpush1.bf16.msra.mxu0 %v3071
        %3965 = vmatprep.subr.bf16.mxu0 0
        %3966 = vmatpush1.bf16.msra.mxu0 %v3072
        %3967 = vmatprep.subr.bf16.mxu0 0
        %3968 = vmatpush1.bf16.msra.mxu0 %v3073
        %3969 = vmatprep.subr.bf16.mxu0 0
        %3970 = vmatpush1.bf16.msra.mxu0 %v3074
        %3971 = vmatprep.subr.bf16.mxu0 0
        %3972 = vmatpush1.bf16.msra.mxu0 %v3075
        %3973 = vmatprep.subr.bf16.mxu0 0
        %3974 = vmatpush1.bf16.msra.mxu0 %v3076
        %3975 = vmatprep.subr.bf16.mxu0 0
        %3976 = vmatpush1.bf16.msra.mxu0 %v3077
        %3977 = vmatprep.subr.bf16.mxu0 0
        %3978 = vmatpush1.bf16.msra.mxu0 %v3078
        %3979 = vmatprep.subr.bf16.mxu0 0
        %3980 = vmatpush1.bf16.msra.mxu0 %v3079
        %3981 = vmatprep.subr.bf16.mxu0 0
        %3982 = vmatpush1.bf16.msra.mxu0 %v3080
        %3983 = vmatprep.subr.bf16.mxu0 0
        %3984 = vmatpush1.bf16.msra.mxu0 %v3081
        %3985 = vmatprep.subr.bf16.mxu0 0
        %3986 = vmatpush1.bf16.msra.mxu0 %v3082
        %3987 = vmatprep.mubr.bf16.mxu0 %v1205
        %3988 = vmatmul.mubr.bf16.gmra.mrb[0].mxu0 %v1203
        %v3989 = vpop.f32.mrb[0].mxu0
        %v3990 = vadd.f32 %v3950, %v3989
        %v3991 = vpop.f32.mrb[0].mxu0
        %v3992 = vpop.f32.mrb[0].mxu0
        %v3993 = vpop.f32.mrb[0].mxu0
        %3994 = vdwg.mxu0
        %3995 = vmatprep.subr.bf16.mxu0 0
        %3996 = vmatpush1.bf16.msra.mxu0 %v3083
        %3997 = vmatprep.subr.bf16.mxu0 0
        %3998 = vmatpush1.bf16.msra.mxu0 %v3084
        %3999 = vmatprep.subr.bf16.mxu0 0
        %4000 = vmatpush1.bf16.msra.mxu0 %v3085
        %4001 = vmatprep.subr.bf16.mxu0 0
        %4002 = vmatpush1.bf16.msra.mxu0 %v3086
        %4003 = vmatprep.subr.bf16.mxu0 0
        %4004 = vmatpush1.bf16.msra.mxu0 %v3087
        %4005 = vmatprep.subr.bf16.mxu0 0
        %4006 = vmatpush1.bf16.msra.mxu0 %v3088
        %4007 = vmatprep.subr.bf16.mxu0 0
        %4008 = vmatpush1.bf16.msra.mxu0 %v3089
        %4009 = vmatprep.subr.bf16.mxu0 0
        %4010 = vmatpush1.bf16.msra.mxu0 %v3090
        %4011 = vmatprep.subr.bf16.mxu0 0
        %4012 = vmatpush1.bf16.msra.mxu0 %v3091
        %4013 = vmatprep.subr.bf16.mxu0 0
        %4014 = vmatpush1.bf16.msra.mxu0 %v3092
        %4015 = vmatprep.subr.bf16.mxu0 0
        %4016 = vmatpush1.bf16.msra.mxu0 %v3093
        %4017 = vmatprep.subr.bf16.mxu0 0
        %4018 = vmatpush1.bf16.msra.mxu0 %v3094
        %4019 = vmatprep.subr.bf16.mxu0 0
        %4020 = vmatpush1.bf16.msra.mxu0 %v3095
        %4021 = vmatprep.subr.bf16.mxu0 0
        %4022 = vmatpush1.bf16.msra.mxu0 %v3096
        %4023 = vmatprep.subr.bf16.mxu0 0
        %4024 = vmatpush1.bf16.msra.mxu0 %v3097
        %4025 = vmatprep.subr.bf16.mxu0 0
        %4026 = vmatpush1.bf16.msra.mxu0 %v3098
        %4027 = vmatprep.mubr.bf16.mxu0 %v1202
        %4028 = vmatmul.mubr.bf16.gmra.mrb[0].mxu0 %v1188
        %v4029 = vpop.f32.mrb[0].mxu0
        %v4030 = vadd.f32 %v3990, %v4029
        %v4031 = vpop.f32.mrb[0].mxu0
        %v4032 = vpop.f32.mrb[0].mxu0
        %v4033 = vpop.f32.mrb[0].mxu0
        %4034 = vdwg.mxu0
        %4035 = vmatprep.subr.bf16.mxu0 0
        %4036 = vmatpush1.bf16.msra.mxu0 %v3099
        %4037 = vmatprep.subr.bf16.mxu0 0
        %4038 = vmatpush1.bf16.msra.mxu0 %v3100
        %4039 = vmatprep.subr.bf16.mxu0 0
        %4040 = vmatpush1.bf16.msra.mxu0 %v3101
        %4041 = vmatprep.subr.bf16.mxu0 0
        %4042 = vmatpush1.bf16.msra.mxu0 %v3102
        %4043 = vmatprep.subr.bf16.mxu0 0
        %4044 = vmatpush1.bf16.msra.mxu0 %v3103
        %4045 = vmatprep.subr.bf16.mxu0 0
        %4046 = vmatpush1.bf16.msra.mxu0 %v3104
        %4047 = vmatprep.subr.bf16.mxu0 0
        %4048 = vmatpush1.bf16.msra.mxu0 %v3105
        %4049 = vmatprep.subr.bf16.mxu0 0
        %4050 = vmatpush1.bf16.msra.mxu0 %v3106
        %4051 = vmatprep.subr.bf16.mxu0 0
        %4052 = vmatpush1.bf16.msra.mxu0 %v3107
        %4053 = vmatprep.subr.bf16.mxu0 0
        %4054 = vmatpush1.bf16.msra.mxu0 %v3108
        %4055 = vmatprep.subr.bf16.mxu0 0
        %4056 = vmatpush1.bf16.msra.mxu0 %v3109
        %4057 = vmatprep.subr.bf16.mxu0 0
        %4058 = vmatpush1.bf16.msra.mxu0 %v3110
        %4059 = vmatprep.subr.bf16.mxu0 0
        %4060 = vmatpush1.bf16.msra.mxu0 %v3111
        %4061 = vmatprep.subr.bf16.mxu0 0
        %4062 = vmatpush1.bf16.msra.mxu0 %v3112
        %4063 = vmatprep.subr.bf16.mxu0 0
        %4064 = vmatpush1.bf16.msra.mxu0 %v3113
        %4065 = vmatprep.subr.bf16.mxu0 0
        %4066 = vmatpush1.bf16.msra.mxu0 %v3114
        %4067 = vmatprep.mubr.bf16.mxu0 %v1206
        %4068 = vmatmul.mubr.bf16.gmra.mrb[0].mxu0 %v1204
        %v4069 = vpop.f32.mrb[0].mxu0
        %v4070 = vadd.f32 %v4030, %v4069
        %v4071 = vpop.f32.mrb[0].mxu0
        %v4072 = vpop.f32.mrb[0].mxu0
        %v4073 = vpop.f32.mrb[0].mxu0
        %4074 = vdwg.mxu0
        %4075 = vmatprep.subr.bf16.mxu0 0
        %4076 = vmatpush1.bf16.msra.mxu0 %v3115
        %4077 = vmatprep.subr.bf16.mxu0 0
        %4078 = vmatpush1.bf16.msra.mxu0 %v3116
        %4079 = vmatprep.subr.bf16.mxu0 0
        %4080 = vmatpush1.bf16.msra.mxu0 %v3117
        %4081 = vmatprep.subr.bf16.mxu0 0
        %4082 = vmatpush1.bf16.msra.mxu0 %v3118
        %4083 = vmatprep.subr.bf16.mxu0 0
        %4084 = vmatpush1.bf16.msra.mxu0 %v3119
        %4085 = vmatprep.subr.bf16.mxu0 0
        %4086 = vmatpush1.bf16.msra.mxu0 %v3120
        %4087 = vmatprep.subr.bf16.mxu0 0
        %4088 = vmatpush1.bf16.msra.mxu0 %v3121
        %4089 = vmatprep.subr.bf16.mxu0 0
        %4090 = vmatpush1.bf16.msra.mxu0 %v3122
        %4091 = vmatprep.subr.bf16.mxu0 0
        %4092 = vmatpush1.bf16.msra.mxu0 %v3123
        %4093 = vmatprep.subr.bf16.mxu0 0
        %4094 = vmatpush1.bf16.msra.mxu0 %v3124
        %4095 = vmatprep.subr.bf16.mxu0 0
        %4096 = vmatpush1.bf16.msra.mxu0 %v3125
        %4097 = vmatprep.subr.bf16.mxu0 0
        %4098 = vmatpush1.bf16.msra.mxu0 %v3126
        %4099 = vmatprep.subr.bf16.mxu0 0
        %4100 = vmatpush1.bf16.msra.mxu0 %v3127
        %4101 = vmatprep.subr.bf16.mxu0 0
        %4102 = vmatpush1.bf16.msra.mxu0 %v3128
        %4103 = vmatprep.subr.bf16.mxu0 0
        %4104 = vmatpush1.bf16.msra.mxu0 %v3129
        %4105 = vmatprep.subr.bf16.mxu0 0
        %4106 = vmatpush1.bf16.msra.mxu0 %v3130
        %4107 = vmatprep.mubr.bf16.mxu0 %v1244
        %4108 = vmatmul.mubr.bf16.gmra.mrb[0].mxu0 %v1230
        %v4109 = vpop.f32.mrb[0].mxu0
        %v4110 = vadd.f32 %v4070, %v4109
        %v4111 = vpop.f32.mrb[0].mxu0
        %v4112 = vpop.f32.mrb[0].mxu0
        %v4113 = vpop.f32.mrb[0].mxu0
        %4114 = vdwg.mxu0
        %4115 = vmatprep.subr.bf16.mxu0 0
        %4116 = vmatpush1.bf16.msra.mxu0 %v3131
        %4117 = vmatprep.subr.bf16.mxu0 0
        %4118 = vmatpush1.bf16.msra.mxu0 %v3132
        %4119 = vmatprep.subr.bf16.mxu0 0
        %4120 = vmatpush1.bf16.msra.mxu0 %v3133
        %4121 = vmatprep.subr.bf16.mxu0 0
        %4122 = vmatpush1.bf16.msra.mxu0 %v3134
        %4123 = vmatprep.subr.bf16.mxu0 0
        %4124 = vmatpush1.bf16.msra.mxu0 %v3135
        %4125 = vmatprep.subr.bf16.mxu0 0
        %4126 = vmatpush1.bf16.msra.mxu0 %v3136
        %4127 = vmatprep.subr.bf16.mxu0 0
        %4128 = vmatpush1.bf16.msra.mxu0 %v3137
        %4129 = vmatprep.subr.bf16.mxu0 0
        %4130 = vmatpush1.bf16.msra.mxu0 %v3138
        %4131 = vmatprep.subr.bf16.mxu0 0
        %4132 = vmatpush1.bf16.msra.mxu0 %v3139
        %4133 = vmatprep.subr.bf16.mxu0 0
        %4134 = vmatpush1.bf16.msra.mxu0 %v3140
        %4135 = vmatprep.subr.bf16.mxu0 0
        %4136 = vmatpush1.bf16.msra.mxu0 %v3141
        %4137 = vmatprep.subr.bf16.mxu0 0
        %4138 = vmatpush1.bf16.msra.mxu0 %v3142
        %4139 = vmatprep.subr.bf16.mxu0 0
        %4140 = vmatpush1.bf16.msra.mxu0 %v3143
        %4141 = vmatprep.subr.bf16.mxu0 0
        %4142 = vmatpush1.bf16.msra.mxu0 %v3144
        %4143 = vmatprep.subr.bf16.mxu0 0
        %4144 = vmatpush1.bf16.msra.mxu0 %v3145
        %4145 = vmatprep.subr.bf16.mxu0 0
        %4146 = vmatpush1.bf16.msra.mxu0 %v3146
        %4147 = vmatprep.mubr.bf16.mxu0 %v1254
        %4148 = vmatmul.mubr.bf16.gmra.mrb[0].mxu0 %v1252
        %v4149 = vpop.f32.mrb[0].mxu0
        %v4150 = vadd.f32 %v4110, %v4149
        %v4151 = vpop.f32.mrb[0].mxu0
        %v4152 = vpop.f32.mrb[0].mxu0
        %v4153 = vpop.f32.mrb[0].mxu0
        %4154 = vdwg.mxu0
        %4155 = vmatprep.subr.bf16.mxu0 0
        %4156 = vmatpush1.bf16.msra.mxu0 %v3147
        %4157 = vmatprep.subr.bf16.mxu0 0
        %4158 = vmatpush1.bf16.msra.mxu0 %v3148
        %4159 = vmatprep.subr.bf16.mxu0 0
        %4160 = vmatpush1.bf16.msra.mxu0 %v3149
        %4161 = vmatprep.subr.bf16.mxu0 0
        %4162 = vmatpush1.bf16.msra.mxu0 %v3150
        %4163 = vmatprep.subr.bf16.mxu0 0
        %4164 = vmatpush1.bf16.msra.mxu0 %v3151
        %4165 = vmatprep.subr.bf16.mxu0 0
        %4166 = vmatpush1.bf16.msra.mxu0 %v3152
        %4167 = vmatprep.subr.bf16.mxu0 0
        %4168 = vmatpush1.bf16.msra.mxu0 %v3153
        %4169 = vmatprep.subr.bf16.mxu0 0
        %4170 = vmatpush1.bf16.msra.mxu0 %v3154
        %4171 = vmatprep.subr.bf16.mxu0 0
        %4172 = vmatpush1.bf16.msra.mxu0 %v3155
        %4173 = vmatprep.subr.bf16.mxu0 0
        %4174 = vmatpush1.bf16.msra.mxu0 %v3156
        %4175 = vmatprep.subr.bf16.mxu0 0
        %4176 = vmatpush1.bf16.msra.mxu0 %v3157
        %4177 = vmatprep.subr.bf16.mxu0 0
        %4178 = vmatpush1.bf16.msra.mxu0 %v3158
        %4179 = vmatprep.subr.bf16.mxu0 0
        %4180 = vmatpush1.bf16.msra.mxu0 %v3159
        %4181 = vmatprep.subr.bf16.mxu0 0
        %4182 = vmatpush1.bf16.msra.mxu0 %v3160
        %4183 = vmatprep.subr.bf16.mxu0 0
        %4184 = vmatpush1.bf16.msra.mxu0 %v3161
        %4185 = vmatprep.subr.bf16.mxu0 0
        %4186 = vmatpush1.bf16.msra.mxu0 %v3162
        %4187 = vmatprep.mubr.bf16.mxu0 %v1251
        %4188 = vmatmul.mubr.bf16.gmra.mrb[0].mxu0 %v1237
        %v4189 = vpop.f32.mrb[0].mxu0
        %v4190 = vadd.f32 %v4150, %v4189
        %v4191 = vpop.f32.mrb[0].mxu0
        %v4192 = vpop.f32.mrb[0].mxu0
        %v4193 = vpop.f32.mrb[0].mxu0
        %4194 = vdwg.mxu0
        %4195 = vmatprep.subr.bf16.mxu0 0
        %4196 = vmatpush1.bf16.msra.mxu0 %v3163
        %4197 = vmatprep.subr.bf16.mxu0 0
        %4198 = vmatpush1.bf16.msra.mxu0 %v3164
        %4199 = vmatprep.subr.bf16.mxu0 0
        %4200 = vmatpush1.bf16.msra.mxu0 %v3165
        %4201 = vmatprep.subr.bf16.mxu0 0
        %4202 = vmatpush1.bf16.msra.mxu0 %v3166
        %4203 = vmatprep.subr.bf16.mxu0 0
        %4204 = vmatpush1.bf16.msra.mxu0 %v3167
        %4205 = vmatprep.subr.bf16.mxu0 0
        %4206 = vmatpush1.bf16.msra.mxu0 %v3168
        %4207 = vmatprep.subr.bf16.mxu0 0
        %4208 = vmatpush1.bf16.msra.mxu0 %v3169
        %4209 = vmatprep.subr.bf16.mxu0 0
        %4210 = vmatpush1.bf16.msra.mxu0 %v3170
        %4211 = vmatprep.subr.bf16.mxu0 0
        %4212 = vmatpush1.bf16.msra.mxu0 %v3171
        %4213 = vmatprep.subr.bf16.mxu0 0
        %4214 = vmatpush1.bf16.msra.mxu0 %v3172
        %4215 = vmatprep.subr.bf16.mxu0 0
        %4216 = vmatpush1.bf16.msra.mxu0 %v3173
        %4217 = vmatprep.subr.bf16.mxu0 0
        %4218 = vmatpush1.bf16.msra.mxu0 %v3174
        %4219 = vmatprep.subr.bf16.mxu0 0
        %4220 = vmatpush1.bf16.msra.mxu0 %v3175
        %4221 = vmatprep.subr.bf16.mxu0 0
        %4222 = vmatpush1.bf16.msra.mxu0 %v3176
        %4223 = vmatprep.subr.bf16.mxu0 0
        %4224 = vmatpush1.bf16.msra.mxu0 %v3177
        %4225 = vmatprep.subr.bf16.mxu0 0
        %4226 = vmatpush1.bf16.msra.mxu0 %v3178
        %4227 = vmatprep.mubr.bf16.mxu0 %v1255
        %4228 = vmatmul.mubr.bf16.gmra.mrb[0].mxu0 %v1253
        %v4229 = vpop.f32.mrb[0].mxu0
        %v4230 = vadd.f32 %v4190, %v4229
        %v4231 = vpop.f32.mrb[0].mxu0
        %v4232 = vpop.f32.mrb[0].mxu0
        %v4233 = vpop.f32.mrb[0].mxu0
        %4234 = vdwg.mxu0
        %4235 = vmatprep.subr.bf16.mxu0 0
        %4236 = vmatpush1.bf16.msra.mxu0 %v3179
        %4237 = vmatprep.subr.bf16.mxu0 0
        %4238 = vmatpush1.bf16.msra.mxu0 %v3180
        %4239 = vmatprep.subr.bf16.mxu0 0
        %4240 = vmatpush1.bf16.msra.mxu0 %v3181
        %4241 = vmatprep.subr.bf16.mxu0 0
        %4242 = vmatpush1.bf16.msra.mxu0 %v3182
        %4243 = vmatprep.subr.bf16.mxu0 0
        %4244 = vmatpush1.bf16.msra.mxu0 %v3183
        %4245 = vmatprep.subr.bf16.mxu0 0
        %4246 = vmatpush1.bf16.msra.mxu0 %v3184
        %4247 = vmatprep.subr.bf16.mxu0 0
        %4248 = vmatpush1.bf16.msra.mxu0 %v3185
        %4249 = vmatprep.subr.bf16.mxu0 0
        %4250 = vmatpush1.bf16.msra.mxu0 %v3186
        %4251 = vmatprep.subr.bf16.mxu0 0
        %4252 = vmatpush1.bf16.msra.mxu0 %v3187
        %4253 = vmatprep.subr.bf16.mxu0 0
        %4254 = vmatpush1.bf16.msra.mxu0 %v3188
        %4255 = vmatprep.subr.bf16.mxu0 0
        %4256 = vmatpush1.bf16.msra.mxu0 %v3189
        %4257 = vmatprep.subr.bf16.mxu0 0
        %4258 = vmatpush1.bf16.msra.mxu0 %v3190
        %4259 = vmatprep.subr.bf16.mxu0 0
        %4260 = vmatpush1.bf16.msra.mxu0 %v3191
        %4261 = vmatprep.subr.bf16.mxu0 0
        %4262 = vmatpush1.bf16.msra.mxu0 %v3192
        %4263 = vmatprep.subr.bf16.mxu0 0
        %4264 = vmatpush1.bf16.msra.mxu0 %v3193
        %4265 = vmatprep.subr.bf16.mxu0 0
        %4266 = vmatpush1.bf16.msra.mxu0 %v3194
        %4267 = vmatprep.mubr.bf16.mxu0 %v1293
        %4268 = vmatmul.mubr.bf16.gmra.mrb[0].mxu0 %v1279
        %v4269 = vpop.f32.mrb[0].mxu0
        %v4270 = vadd.f32 %v4230, %v4269
        %v4271 = vpop.f32.mrb[0].mxu0
        %v4272 = vpop.f32.mrb[0].mxu0
        %v4273 = vpop.f32.mrb[0].mxu0
        %4274 = vdwg.mxu0
        %4275 = vmatprep.subr.bf16.mxu0 0
        %4276 = vmatpush1.bf16.msra.mxu0 %v3195
        %4277 = vmatprep.subr.bf16.mxu0 0
        %4278 = vmatpush1.bf16.msra.mxu0 %v3196
        %4279 = vmatprep.subr.bf16.mxu0 0
        %4280 = vmatpush1.bf16.msra.mxu0 %v3197
        %4281 = vmatprep.subr.bf16.mxu0 0
        %4282 = vmatpush1.bf16.msra.mxu0 %v3198
        %4283 = vmatprep.subr.bf16.mxu0 0
        %4284 = vmatpush1.bf16.msra.mxu0 %v3199
        %4285 = vmatprep.subr.bf16.mxu0 0
        %4286 = vmatpush1.bf16.msra.mxu0 %v3200
        %4287 = vmatprep.subr.bf16.mxu0 0
        %4288 = vmatpush1.bf16.msra.mxu0 %v3201
        %4289 = vmatprep.subr.bf16.mxu0 0
        %4290 = vmatpush1.bf16.msra.mxu0 %v3202
        %4291 = vmatprep.subr.bf16.mxu0 0
        %4292 = vmatpush1.bf16.msra.mxu0 %v3203
        %4293 = vmatprep.subr.bf16.mxu0 0
        %4294 = vmatpush1.bf16.msra.mxu0 %v3204
        %4295 = vmatprep.subr.bf16.mxu0 0
        %4296 = vmatpush1.bf16.msra.mxu0 %v3205
        %4297 = vmatprep.subr.bf16.mxu0 0
        %4298 = vmatpush1.bf16.msra.mxu0 %v3206
        %4299 = vmatprep.subr.bf16.mxu0 0
        %4300 = vmatpush1.bf16.msra.mxu0 %v3207
        %4301 = vmatprep.subr.bf16.mxu0 0
        %4302 = vmatpush1.bf16.msra.mxu0 %v3208
        %4303 = vmatprep.subr.bf16.mxu0 0
        %4304 = vmatpush1.bf16.msra.mxu0 %v3209
        %4305 = vmatprep.subr.bf16.mxu0 0
        %4306 = vmatpush1.bf16.msra.mxu0 %v3210
        %4307 = vmatprep.mubr.bf16.mxu0 %v1303
        %4308 = vmatmul.mubr.bf16.gmra.mrb[0].mxu0 %v1301
        %v4309 = vpop.f32.mrb[0].mxu0
        %v4310 = vadd.f32 %v4270, %v4309
        %v4311 = vpop.f32.mrb[0].mxu0
        %v4312 = vpop.f32.mrb[0].mxu0
        %v4313 = vpop.f32.mrb[0].mxu0
        %4314 = vdwg.mxu0
        %4315 = vmatprep.subr.bf16.mxu0 0
        %4316 = vmatpush1.bf16.msra.mxu0 %v3211
        %4317 = vmatprep.subr.bf16.mxu0 0
        %4318 = vmatpush1.bf16.msra.mxu0 %v3212
        %4319 = vmatprep.subr.bf16.mxu0 0
        %4320 = vmatpush1.bf16.msra.mxu0 %v3213
        %4321 = vmatprep.subr.bf16.mxu0 0
        %4322 = vmatpush1.bf16.msra.mxu0 %v3214
        %4323 = vmatprep.subr.bf16.mxu0 0
        %4324 = vmatpush1.bf16.msra.mxu0 %v3215
        %4325 = vmatprep.subr.bf16.mxu0 0
        %4326 = vmatpush1.bf16.msra.mxu0 %v3216
        %4327 = vmatprep.subr.bf16.mxu0 0
        %4328 = vmatpush1.bf16.msra.mxu0 %v3217
        %4329 = vmatprep.subr.bf16.mxu0 0
        %4330 = vmatpush1.bf16.msra.mxu0 %v3218
        %4331 = vmatprep.subr.bf16.mxu0 0
        %4332 = vmatpush1.bf16.msra.mxu0 %v3219
        %4333 = vmatprep.subr.bf16.mxu0 0
        %4334 = vmatpush1.bf16.msra.mxu0 %v3220
        %4335 = vmatprep.subr.bf16.mxu0 0
        %4336 = vmatpush1.bf16.msra.mxu0 %v3221
        %4337 = vmatprep.subr.bf16.mxu0 0
        %4338 = vmatpush1.bf16.msra.mxu0 %v3222
        %4339 = vmatprep.subr.bf16.mxu0 0
        %4340 = vmatpush1.bf16.msra.mxu0 %v3223
        %4341 = vmatprep.subr.bf16.mxu0 0
        %4342 = vmatpush1.bf16.msra.mxu0 %v3224
        %4343 = vmatprep.subr.bf16.mxu0 0
        %4344 = vmatpush1.bf16.msra.mxu0 %v3225
        %4345 = vmatprep.subr.bf16.mxu0 0
        %4346 = vmatpush1.bf16.msra.mxu0 %v3226
        %4347 = vmatprep.mubr.bf16.mxu0 %v1300
        %4348 = vmatmul.mubr.bf16.gmra.mrb[0].mxu0 %v1286
        %v4349 = vpop.f32.mrb[0].mxu0
        %v4350 = vadd.f32 %v4310, %v4349
        %v4351 = vpop.f32.mrb[0].mxu0
        %v4352 = vpop.f32.mrb[0].mxu0
        %v4353 = vpop.f32.mrb[0].mxu0
        %4354 = vdwg.mxu0
        %4355 = vmatprep.subr.bf16.mxu0 0
        %4356 = vmatpush1.bf16.msra.mxu0 %v3227
        %4357 = vmatprep.subr.bf16.mxu0 0
        %4358 = vmatpush1.bf16.msra.mxu0 %v3228
        %4359 = vmatprep.subr.bf16.mxu0 0
        %4360 = vmatpush1.bf16.msra.mxu0 %v3229
        %4361 = vmatprep.subr.bf16.mxu0 0
        %4362 = vmatpush1.bf16.msra.mxu0 %v3230
        %4363 = vmatprep.subr.bf16.mxu0 0
        %4364 = vmatpush1.bf16.msra.mxu0 %v3231
        %4365 = vmatprep.subr.bf16.mxu0 0
        %4366 = vmatpush1.bf16.msra.mxu0 %v3232
        %4367 = vmatprep.subr.bf16.mxu0 0
        %4368 = vmatpush1.bf16.msra.mxu0 %v3233
        %4369 = vmatprep.subr.bf16.mxu0 0
        %4370 = vmatpush1.bf16.msra.mxu0 %v3234
        %4371 = vmatprep.subr.bf16.mxu0 0
        %4372 = vmatpush1.bf16.msra.mxu0 %v3235
        %4373 = vmatprep.subr.bf16.mxu0 0
        %4374 = vmatpush1.bf16.msra.mxu0 %v3236
        %4375 = vmatprep.subr.bf16.mxu0 0
        %4376 = vmatpush1.bf16.msra.mxu0 %v3237
        %4377 = vmatprep.subr.bf16.mxu0 0
        %4378 = vmatpush1.bf16.msra.mxu0 %v3238
        %4379 = vmatprep.subr.bf16.mxu0 0
        %4380 = vmatpush1.bf16.msra.mxu0 %v3239
        %4381 = vmatprep.subr.bf16.mxu0 0
        %4382 = vmatpush1.bf16.msra.mxu0 %v3240
        %4383 = vmatprep.subr.bf16.mxu0 0
        %4384 = vmatpush1.bf16.msra.mxu0 %v3241
        %4385 = vmatprep.subr.bf16.mxu0 0
        %4386 = vmatpush1.bf16.msra.mxu0 %v3242
        %4387 = vmatprep.mubr.bf16.mxu0 %v1304
        %4388 = vmatmul.mubr.bf16.gmra.mrb[0].mxu0 %v1302
        %v4389 = vpop.f32.mrb[0].mxu0
        %v4390 = vadd.f32 %v4350, %v4389
        %v4391 = vpop.f32.mrb[0].mxu0
        %v4392 = vpop.f32.mrb[0].mxu0
        %v4393 = vpop.f32.mrb[0].mxu0
        %4394 = vdwg.mxu0
        %4395 = vmatprep.subr.bf16.mxu0 0
        %4396 = vmatpush1.bf16.msra.mxu0 %v3243
        %4397 = vmatprep.subr.bf16.mxu0 0
        %4398 = vmatpush1.bf16.msra.mxu0 %v3244
        %4399 = vmatprep.subr.bf16.mxu0 0
        %4400 = vmatpush1.bf16.msra.mxu0 %v3245
        %4401 = vmatprep.subr.bf16.mxu0 0
        %4402 = vmatpush1.bf16.msra.mxu0 %v3246
        %4403 = vmatprep.subr.bf16.mxu0 0
        %4404 = vmatpush1.bf16.msra.mxu0 %v3247
        %4405 = vmatprep.subr.bf16.mxu0 0
        %4406 = vmatpush1.bf16.msra.mxu0 %v3248
        %4407 = vmatprep.subr.bf16.mxu0 0
        %4408 = vmatpush1.bf16.msra.mxu0 %v3249
        %4409 = vmatprep.subr.bf16.mxu0 0
        %4410 = vmatpush1.bf16.msra.mxu0 %v3250
        %4411 = vmatprep.subr.bf16.mxu0 0
        %4412 = vmatpush1.bf16.msra.mxu0 %v3251
        %4413 = vmatprep.subr.bf16.mxu0 0
        %4414 = vmatpush1.bf16.msra.mxu0 %v3252
        %4415 = vmatprep.subr.bf16.mxu0 0
        %4416 = vmatpush1.bf16.msra.mxu0 %v3253
        %4417 = vmatprep.subr.bf16.mxu0 0
        %4418 = vmatpush1.bf16.msra.mxu0 %v3254
        %4419 = vmatprep.subr.bf16.mxu0 0
        %4420 = vmatpush1.bf16.msra.mxu0 %v3255
        %4421 = vmatprep.subr.bf16.mxu0 0
        %4422 = vmatpush1.bf16.msra.mxu0 %v3256
        %4423 = vmatprep.subr.bf16.mxu0 0
        %4424 = vmatpush1.bf16.msra.mxu0 %v3257
        %4425 = vmatprep.subr.bf16.mxu0 0
        %4426 = vmatpush1.bf16.msra.mxu0 %v3258
        %4427 = vmatprep.mubr.bf16.mxu0 %v1342
        %4428 = vmatmul.mubr.bf16.gmra.mrb[0].mxu0 %v1328
        %v4429 = vpop.f32.mrb[0].mxu0
        %v4430 = vadd.f32 %v4390, %v4429
        %v4431 = vpop.f32.mrb[0].mxu0
        %v4432 = vpop.f32.mrb[0].mxu0
        %v4433 = vpop.f32.mrb[0].mxu0
        %4434 = vdwg.mxu0
        %4435 = vmatprep.subr.bf16.mxu0 0
        %4436 = vmatpush1.bf16.msra.mxu0 %v3259
        %4437 = vmatprep.subr.bf16.mxu0 0
        %4438 = vmatpush1.bf16.msra.mxu0 %v3260
        %4439 = vmatprep.subr.bf16.mxu0 0
        %4440 = vmatpush1.bf16.msra.mxu0 %v3261
        %4441 = vmatprep.subr.bf16.mxu0 0
        %4442 = vmatpush1.bf16.msra.mxu0 %v3262
        %4443 = vmatprep.subr.bf16.mxu0 0
        %4444 = vmatpush1.bf16.msra.mxu0 %v3263
        %4445 = vmatprep.subr.bf16.mxu0 0
        %4446 = vmatpush1.bf16.msra.mxu0 %v3264
        %4447 = vmatprep.subr.bf16.mxu0 0
        %4448 = vmatpush1.bf16.msra.mxu0 %v3265
        %4449 = vmatprep.subr.bf16.mxu0 0
        %4450 = vmatpush1.bf16.msra.mxu0 %v3266
        %4451 = vmatprep.subr.bf16.mxu0 0
        %4452 = vmatpush1.bf16.msra.mxu0 %v3267
        %4453 = vmatprep.subr.bf16.mxu0 0
        %4454 = vmatpush1.bf16.msra.mxu0 %v3268
        %4455 = vmatprep.subr.bf16.mxu0 0
        %4456 = vmatpush1.bf16.msra.mxu0 %v3269
        %4457 = vmatprep.subr.bf16.mxu0 0
        %4458 = vmatpush1.bf16.msra.mxu0 %v3270
        %4459 = vmatprep.subr.bf16.mxu0 0
        %4460 = vmatpush1.bf16.msra.mxu0 %v3271
        %4461 = vmatprep.subr.bf16.mxu0 0
        %4462 = vmatpush1.bf16.msra.mxu0 %v3272
        %4463 = vmatprep.subr.bf16.mxu0 0
        %4464 = vmatpush1.bf16.msra.mxu0 %v3273
        %4465 = vmatprep.subr.bf16.mxu0 0
        %4466 = vmatpush1.bf16.msra.mxu0 %v3274
        %4467 = vmatprep.mubr.bf16.mxu0 %v1352
        %4468 = vmatmul.mubr.bf16.gmra.mrb[0].mxu0 %v1350
        %v4469 = vpop.f32.mrb[0].mxu0
        %v4470 = vadd.f32 %v4430, %v4469
        %v4471 = vpop.f32.mrb[0].mxu0
        %v4472 = vpop.f32.mrb[0].mxu0
        %v4473 = vpop.f32.mrb[0].mxu0
        %4474 = vdwg.mxu0
        %4475 = vmatprep.subr.bf16.mxu0 0
        %4476 = vmatpush1.bf16.msra.mxu0 %v3275
        %4477 = vmatprep.subr.bf16.mxu0 0
        %4478 = vmatpush1.bf16.msra.mxu0 %v3276
        %4479 = vmatprep.subr.bf16.mxu0 0
        %4480 = vmatpush1.bf16.msra.mxu0 %v3277
        %4481 = vmatprep.subr.bf16.mxu0 0
        %4482 = vmatpush1.bf16.msra.mxu0 %v3278
        %4483 = vmatprep.subr.bf16.mxu0 0
        %4484 = vmatpush1.bf16.msra.mxu0 %v3279
        %4485 = vmatprep.subr.bf16.mxu0 0
        %4486 = vmatpush1.bf16.msra.mxu0 %v3280
        %4487 = vmatprep.subr.bf16.mxu0 0
        %4488 = vmatpush1.bf16.msra.mxu0 %v3281
        %4489 = vmatprep.subr.bf16.mxu0 0
        %4490 = vmatpush1.bf16.msra.mxu0 %v3282
        %4491 = vmatprep.subr.bf16.mxu0 0
        %4492 = vmatpush1.bf16.msra.mxu0 %v3283
        %4493 = vmatprep.subr.bf16.mxu0 0
        %4494 = vmatpush1.bf16.msra.mxu0 %v3284
        %4495 = vmatprep.subr.bf16.mxu0 0
        %4496 = vmatpush1.bf16.msra.mxu0 %v3285
        %4497 = vmatprep.subr.bf16.mxu0 0
        %4498 = vmatpush1.bf16.msra.mxu0 %v3286
        %4499 = vmatprep.subr.bf16.mxu0 0
        %4500 = vmatpush1.bf16.msra.mxu0 %v3287
        %4501 = vmatprep.subr.bf16.mxu0 0
        %4502 = vmatpush1.bf16.msra.mxu0 %v3288
        %4503 = vmatprep.subr.bf16.mxu0 0
        %4504 = vmatpush1.bf16.msra.mxu0 %v3289
        %4505 = vmatprep.subr.bf16.mxu0 0
        %4506 = vmatpush1.bf16.msra.mxu0 %v3290
        %4507 = vmatprep.mubr.bf16.mxu0 %v1349
        %4508 = vmatmul.mubr.bf16.gmra.mrb[0].mxu0 %v1335
        %v4509 = vpop.f32.mrb[0].mxu0
        %v4510 = vadd.f32 %v4470, %v4509
        %v4511 = vpop.f32.mrb[0].mxu0
        %v4512 = vpop.f32.mrb[0].mxu0
        %v4513 = vpop.f32.mrb[0].mxu0
        %4514 = vdwg.mxu0
        %4515 = vmatprep.subr.bf16.mxu0 0
        %4516 = vmatpush1.bf16.msra.mxu0 %v3291
        %4517 = vmatprep.subr.bf16.mxu0 0
        %4518 = vmatpush1.bf16.msra.mxu0 %v3292
        %4519 = vmatprep.subr.bf16.mxu0 0
        %4520 = vmatpush1.bf16.msra.mxu0 %v3293
        %4521 = vmatprep.subr.bf16.mxu0 0
        %4522 = vmatpush1.bf16.msra.mxu0 %v3294
        %4523 = vmatprep.subr.bf16.mxu0 0
        %4524 = vmatpush1.bf16.msra.mxu0 %v3295
        %4525 = vmatprep.subr.bf16.mxu0 0
        %4526 = vmatpush1.bf16.msra.mxu0 %v3296
        %4527 = vmatprep.subr.bf16.mxu0 0
        %4528 = vmatpush1.bf16.msra.mxu0 %v3297
        %4529 = vmatprep.subr.bf16.mxu0 0
        %4530 = vmatpush1.bf16.msra.mxu0 %v3298
        %4531 = vmatprep.subr.bf16.mxu0 0
        %4532 = vmatpush1.bf16.msra.mxu0 %v3299
        %4533 = vmatprep.subr.bf16.mxu0 0
        %4534 = vmatpush1.bf16.msra.mxu0 %v3300
        %4535 = vmatprep.subr.bf16.mxu0 0
        %4536 = vmatpush1.bf16.msra.mxu0 %v3301
        %4537 = vmatprep.subr.bf16.mxu0 0
        %4538 = vmatpush1.bf16.msra.mxu0 %v3302
        %4539 = vmatprep.subr.bf16.mxu0 0
        %4540 = vmatpush1.bf16.msra.mxu0 %v3303
        %4541 = vmatprep.subr.bf16.mxu0 0
        %4542 = vmatpush1.bf16.msra.mxu0 %v3304
        %4543 = vmatprep.subr.bf16.mxu0 0
        %4544 = vmatpush1.bf16.msra.mxu0 %v3305
        %4545 = vmatprep.subr.bf16.mxu0 0
        %4546 = vmatpush1.bf16.msra.mxu0 %v3306
        %4547 = vmatprep.mubr.bf16.mxu0 %v1353
        %4548 = vmatmul.mubr.bf16.gmra.mrb[0].mxu0 %v1351
        %v4549 = vpop.f32.mrb[0].mxu0
        %v4550 = vadd.f32 %v4510, %v4549
        %v4551 = vpop.f32.mrb[0].mxu0
        %v4552 = vpop.f32.mrb[0].mxu0
        %v4553 = vpop.f32.mrb[0].mxu0
        %4554 = vdwg.mxu0
        %4555 = vmatprep.subr.bf16.mxu0 0
        %4556 = vmatpush1.bf16.msra.mxu0 %v3307
        %4557 = vmatprep.subr.bf16.mxu0 0
        %4558 = vmatpush1.bf16.msra.mxu0 %v3308
        %4559 = vmatprep.subr.bf16.mxu0 0
        %4560 = vmatpush1.bf16.msra.mxu0 %v3309
        %4561 = vmatprep.subr.bf16.mxu0 0
        %4562 = vmatpush1.bf16.msra.mxu0 %v3310
        %4563 = vmatprep.subr.bf16.mxu0 0
        %4564 = vmatpush1.bf16.msra.mxu0 %v3311
        %4565 = vmatprep.subr.bf16.mxu0 0
        %4566 = vmatpush1.bf16.msra.mxu0 %v3312
        %4567 = vmatprep.subr.bf16.mxu0 0
        %4568 = vmatpush1.bf16.msra.mxu0 %v3313
        %4569 = vmatprep.subr.bf16.mxu0 0
        %4570 = vmatpush1.bf16.msra.mxu0 %v3314
        %4571 = vmatprep.subr.bf16.mxu0 0
        %4572 = vmatpush1.bf16.msra.mxu0 %v3315
        %4573 = vmatprep.subr.bf16.mxu0 0
        %4574 = vmatpush1.bf16.msra.mxu0 %v3316
        %4575 = vmatprep.subr.bf16.mxu0 0
        %4576 = vmatpush1.bf16.msra.mxu0 %v3317
        %4577 = vmatprep.subr.bf16.mxu0 0
        %4578 = vmatpush1.bf16.msra.mxu0 %v3318
        %4579 = vmatprep.subr.bf16.mxu0 0
        %4580 = vmatpush1.bf16.msra.mxu0 %v3319
        %4581 = vmatprep.subr.bf16.mxu0 0
        %4582 = vmatpush1.bf16.msra.mxu0 %v3320
        %4583 = vmatprep.subr.bf16.mxu0 0
        %4584 = vmatpush1.bf16.msra.mxu0 %v3321
        %4585 = vmatprep.subr.bf16.mxu0 0
        %4586 = vmatpush1.bf16.msra.mxu0 %v3322
        %4587 = vmatprep.mubr.bf16.mxu0 %v1391
        %4588 = vmatmul.mubr.bf16.gmra.mrb[0].mxu0 %v1377
        %v4589 = vpop.f32.mrb[0].mxu0
        %v4590 = vadd.f32 %v4550, %v4589
        %v4591 = vpop.f32.mrb[0].mxu0
        %v4592 = vpop.f32.mrb[0].mxu0
        %v4593 = vpop.f32.mrb[0].mxu0
        %4594 = vdwg.mxu0
        %4595 = vmatprep.subr.bf16.mxu0 0
        %4596 = vmatpush1.bf16.msra.mxu0 %v3323
        %4597 = vmatprep.subr.bf16.mxu0 0
        %4598 = vmatpush1.bf16.msra.mxu0 %v3324
        %4599 = vmatprep.subr.bf16.mxu0 0
        %4600 = vmatpush1.bf16.msra.mxu0 %v3325
        %4601 = vmatprep.subr.bf16.mxu0 0
        %4602 = vmatpush1.bf16.msra.mxu0 %v3326
        %4603 = vmatprep.subr.bf16.mxu0 0
        %4604 = vmatpush1.bf16.msra.mxu0 %v3327
        %4605 = vmatprep.subr.bf16.mxu0 0
        %4606 = vmatpush1.bf16.msra.mxu0 %v3328
        %4607 = vmatprep.subr.bf16.mxu0 0
        %4608 = vmatpush1.bf16.msra.mxu0 %v3329
        %4609 = vmatprep.subr.bf16.mxu0 0
        %4610 = vmatpush1.bf16.msra.mxu0 %v3330
        %4611 = vmatprep.subr.bf16.mxu0 0
        %4612 = vmatpush1.bf16.msra.mxu0 %v3331
        %4613 = vmatprep.subr.bf16.mxu0 0
        %4614 = vmatpush1.bf16.msra.mxu0 %v3332
        %4615 = vmatprep.subr.bf16.mxu0 0
        %4616 = vmatpush1.bf16.msra.mxu0 %v3333
        %4617 = vmatprep.subr.bf16.mxu0 0
        %4618 = vmatpush1.bf16.msra.mxu0 %v3334
        %4619 = vmatprep.subr.bf16.mxu0 0
        %4620 = vmatpush1.bf16.msra.mxu0 %v3335
        %4621 = vmatprep.subr.bf16.mxu0 0
        %4622 = vmatpush1.bf16.msra.mxu0 %v3336
        %4623 = vmatprep.subr.bf16.mxu0 0
        %4624 = vmatpush1.bf16.msra.mxu0 %v3337
        %4625 = vmatprep.subr.bf16.mxu0 0
        %4626 = vmatpush1.bf16.msra.mxu0 %v3338
        %4627 = vmatprep.mubr.bf16.mxu0 %v1401
        %4628 = vmatmul.mubr.bf16.gmra.mrb[0].mxu0 %v1399
        %v4629 = vpop.f32.mrb[0].mxu0
        %v4630 = vadd.f32 %v4590, %v4629
        %v4631 = vpop.f32.mrb[0].mxu0
        %v4632 = vpop.f32.mrb[0].mxu0
        %v4633 = vpop.f32.mrb[0].mxu0
        %4634 = vdwg.mxu0
        %4635 = vmatprep.subr.bf16.mxu0 0
        %4636 = vmatpush1.bf16.msra.mxu0 %v3339
        %4637 = vmatprep.subr.bf16.mxu0 0
        %4638 = vmatpush1.bf16.msra.mxu0 %v3340
        %4639 = vmatprep.subr.bf16.mxu0 0
        %4640 = vmatpush1.bf16.msra.mxu0 %v3341
        %4641 = vmatprep.subr.bf16.mxu0 0
        %4642 = vmatpush1.bf16.msra.mxu0 %v3342
        %4643 = vmatprep.subr.bf16.mxu0 0
        %4644 = vmatpush1.bf16.msra.mxu0 %v3343
        %4645 = vmatprep.subr.bf16.mxu0 0
        %4646 = vmatpush1.bf16.msra.mxu0 %v3344
        %4647 = vmatprep.subr.bf16.mxu0 0
        %4648 = vmatpush1.bf16.msra.mxu0 %v3345
        %4649 = vmatprep.subr.bf16.mxu0 0
        %4650 = vmatpush1.bf16.msra.mxu0 %v3346
        %4651 = vmatprep.subr.bf16.mxu0 0
        %4652 = vmatpush1.bf16.msra.mxu0 %v3347
        %4653 = vmatprep.subr.bf16.mxu0 0
        %4654 = vmatpush1.bf16.msra.mxu0 %v3348
        %4655 = vmatprep.subr.bf16.mxu0 0
        %4656 = vmatpush1.bf16.msra.mxu0 %v3349
        %4657 = vmatprep.subr.bf16.mxu0 0
        %4658 = vmatpush1.bf16.msra.mxu0 %v3350
        %4659 = vmatprep.subr.bf16.mxu0 0
        %4660 = vmatpush1.bf16.msra.mxu0 %v3351
        %4661 = vmatprep.subr.bf16.mxu0 0
        %4662 = vmatpush1.bf16.msra.mxu0 %v3352
        %4663 = vmatprep.subr.bf16.mxu0 0
        %4664 = vmatpush1.bf16.msra.mxu0 %v3353
        %4665 = vmatprep.subr.bf16.mxu0 0
        %4666 = vmatpush1.bf16.msra.mxu0 %v3354
        %4667 = vmatprep.mubr.bf16.mxu0 %v1398
        %4668 = vmatmul.mubr.bf16.gmra.mrb[0].mxu0 %v1384
        %v4669 = vpop.f32.mrb[0].mxu0
        %v4670 = vadd.f32 %v4630, %v4669
        %v4671 = vpop.f32.mrb[0].mxu0
        %v4672 = vpop.f32.mrb[0].mxu0
        %v4673 = vpop.f32.mrb[0].mxu0
        %4674 = vdwg.mxu0
        %4675 = vmatprep.subr.bf16.mxu0 0
        %4676 = vmatpush1.bf16.msra.mxu0 %v3355
        %4677 = vmatprep.subr.bf16.mxu0 0
        %4678 = vmatpush1.bf16.msra.mxu0 %v3356
        %4679 = vmatprep.subr.bf16.mxu0 0
        %4680 = vmatpush1.bf16.msra.mxu0 %v3357
        %4681 = vmatprep.subr.bf16.mxu0 0
        %4682 = vmatpush1.bf16.msra.mxu0 %v3358
        %4683 = vmatprep.subr.bf16.mxu0 0
        %4684 = vmatpush1.bf16.msra.mxu0 %v3359
        %4685 = vmatprep.subr.bf16.mxu0 0
        %4686 = vmatpush1.bf16.msra.mxu0 %v3360
        %4687 = vmatprep.subr.bf16.mxu0 0
        %4688 = vmatpush1.bf16.msra.mxu0 %v3361
        %4689 = vmatprep.subr.bf16.mxu0 0
        %4690 = vmatpush1.bf16.msra.mxu0 %v3362
        %4691 = vmatprep.subr.bf16.mxu0 0
        %4692 = vmatpush1.bf16.msra.mxu0 %v3363
        %4693 = vmatprep.subr.bf16.mxu0 0
        %4694 = vmatpush1.bf16.msra.mxu0 %v3364
        %4695 = vmatprep.subr.bf16.mxu0 0
        %4696 = vmatpush1.bf16.msra.mxu0 %v3365
        %4697 = vmatprep.subr.bf16.mxu0 0
        %4698 = vmatpush1.bf16.msra.mxu0 %v3366
        %4699 = vmatprep.subr.bf16.mxu0 0
        %4700 = vmatpush1.bf16.msra.mxu0 %v3367
        %4701 = vmatprep.subr.bf16.mxu0 0
        %4702 = vmatpush1.bf16.msra.mxu0 %v3368
        %4703 = vmatprep.subr.bf16.mxu0 0
        %4704 = vmatpush1.bf16.msra.mxu0 %v3369
        %4705 = vmatprep.subr.bf16.mxu0 0
        %4706 = vmatpush1.bf16.msra.mxu0 %v3370
        %4707 = vmatprep.mubr.bf16.mxu0 %v1402
        %4708 = vmatmul.mubr.bf16.gmra.mrb[0].mxu0 %v1400
        %v4709 = vpop.f32.mrb[0].mxu0
        %v4710 = vadd.f32 %v4670, %v4709
        %v4711 = vpop.f32.mrb[0].mxu0
        %v4712 = vpop.f32.mrb[0].mxu0
        %v4713 = vpop.f32.mrb[0].mxu0
        %4714 = vdwg.mxu0
        %v4715 = vadd.f32 %v328, %v4710
        %4716 = vst [vmem:[#allocation2] sm:$0x3] %v4715
        %p4717 = scmp.eq.s32.totalorder %s27, 2
        // Predicated region
        $region61: #{net_forward.3} parent=39 // pred_check
          %p4718 = pneg %p4717
        $region62: #{net_forward.3} parent=39 // pred_check_branch
          %4720 = sbr.rel (%p4718) target = $region64
        $region63: #{net_forward.3} parent=39 // pred_region
          %v4721 = vld [vmem:[#allocation2] sm:$0x3]
          %v4722 = vld [vmem:[#allocation6] sm:$0x1]
          %v4724 = vlaneseq
          %v4725 = vshrl.u32 %v4724, 7
          %v4726 = vsub.s32 0, %v4725
          %v4727 = vrot.slane %v4722, %v4726
          %v4729 = vadd.f32 %v4721, %v4727
          %v4730 = vmax.f32 %v4729, 0.0
          %v4731 = vld [vmem:[#allocation8] sm:$0xff]
          %v4732 = vld [vmem:[#allocation8 + $0x8] sm:$0xff]
          %v4733 = vld [vmem:[#allocation8 + $0x10] sm:$0xff]
          %v4734 = vld [vmem:[#allocation8 + $0x18] sm:$0xff]
          %v4735 = vld [vmem:[#allocation8 + $0x20] sm:$0xff]
          %v4736 = vld [vmem:[#allocation8 + $0x28] sm:$0xff]
          %v4737 = vld [vmem:[#allocation8 + $0x30] sm:$0xff]
          %v4738 = vld [vmem:[#allocation8 + $0x38] sm:$0xff]
          %v4739 = vld [vmem:[#allocation8 + $0x40] sm:$0xff]
          %v4740 = vld [vmem:[#allocation8 + $0x48] sm:$0xff]
          %v4741 = vld [vmem:[#allocation8 + $0x50] sm:$0xff]
          %v4742 = vld [vmem:[#allocation8 + $0x58] sm:$0xff]
          %v4743 = vld [vmem:[#allocation8 + $0x60] sm:$0xff]
          %v4744 = vld [vmem:[#allocation8 + $0x68] sm:$0xff]
          %v4745 = vld [vmem:[#allocation8 + $0x70] sm:$0xff]
          %v4746 = vld [vmem:[#allocation8 + $0x78] sm:$0xff]
          %v4747 = vld [vmem:[#allocation9] sm:$0x1]
          %v4749 = vlaneseq
          %v4750 = vshrl.u32 %v4749, 7
          %v4751 = vsub.s32 0, %v4750
          %v4752 = vrot.slane %v4747, %v4751
          %4754 = vmatprep.subr.mxu0 0.0
          %4755 = vmatpush1.msra.mxu0 %v4731
          %4756 = vmatprep.subr.mxu0 0.0
          %4757 = vmatpush1.msra.mxu0 %v4732
          %4758 = vmatprep.subr.mxu0 0.0
          %4759 = vmatpush1.msra.mxu0 %v4733
          %4760 = vmatprep.subr.mxu0 0.0
          %4761 = vmatpush1.msra.mxu0 %v4734
          %4762 = vmatprep.subr.mxu0 0.0
          %4763 = vmatpush1.msra.mxu0 %v4735
          %4764 = vmatprep.subr.mxu0 0.0
          %4765 = vmatpush1.msra.mxu0 %v4736
          %4766 = vmatprep.subr.mxu0 0.0
          %4767 = vmatpush1.msra.mxu0 %v4737
          %4768 = vmatprep.subr.mxu0 0.0
          %4769 = vmatpush1.msra.mxu0 %v4738
          %4770 = vmatprep.subr.mxu0 0.0
          %4771 = vmatpush1.msra.mxu0 %v4739
          %4772 = vmatprep.subr.mxu0 0.0
          %4773 = vmatpush1.msra.mxu0 %v4740
          %4774 = vmatprep.subr.mxu0 0.0
          %4775 = vmatpush1.msra.mxu0 %v4741
          %4776 = vmatprep.subr.mxu0 0.0
          %4777 = vmatpush1.msra.mxu0 %v4742
          %4778 = vmatprep.subr.mxu0 0.0
          %4779 = vmatpush1.msra.mxu0 %v4743
          %4780 = vmatprep.subr.mxu0 0.0
          %4781 = vmatpush1.msra.mxu0 %v4744
          %4782 = vmatprep.subr.mxu0 0.0
          %4783 = vmatpush1.msra.mxu0 %v4745
          %4784 = vmatprep.subr.mxu0 0.0
          %4785 = vmatpush1.msra.mxu0 %v4746
          %4786 = vmatprep.subr.mxu0 0.0
          %4787 = vmatpush1.msra.mxu0 0.0
          %4788 = vmatprep.subr.mxu0 0.0
          %4789 = vmatpush1.msra.mxu0 0.0
          %4790 = vmatprep.subr.mxu0 0.0
          %4791 = vmatpush1.msra.mxu0 0.0
          %4792 = vmatprep.subr.mxu0 0.0
          %4793 = vmatpush1.msra.mxu0 0.0
          %4794 = vmatprep.subr.mxu0 0.0
          %4795 = vmatpush1.msra.mxu0 0.0
          %4796 = vmatprep.subr.mxu0 0.0
          %4797 = vmatpush1.msra.mxu0 0.0
          %4798 = vmatprep.subr.mxu0 0.0
          %4799 = vmatpush1.msra.mxu0 0.0
          %4800 = vmatprep.subr.mxu0 0.0
          %4801 = vmatpush1.msra.mxu0 0.0
          %4802 = vmatprep.subr.mxu0 0.0
          %4803 = vmatpush1.msra.mxu0 0.0
          %4804 = vmatprep.subr.mxu0 0.0
          %4805 = vmatpush1.msra.mxu0 0.0
          %4806 = vmatprep.subr.mxu0 0.0
          %4807 = vmatpush1.msra.mxu0 0.0
          %4808 = vmatprep.subr.mxu0 0.0
          %4809 = vmatpush1.msra.mxu0 0.0
          %4810 = vmatprep.subr.mxu0 0.0
          %4811 = vmatpush1.msra.mxu0 0.0
          %4812 = vmatprep.subr.mxu0 0.0
          %4813 = vmatpush1.msra.mxu0 0.0
          %4814 = vmatprep.subr.mxu0 0.0
          %4815 = vmatpush1.msra.mxu0 0.0
          %4816 = vmatprep.subr.mxu0 0.0
          %4817 = vmatpush1.msra.mxu0 0.0
          %4818 = vmatprep.mubr.f32.mxu0 0.0
          %4819 = vmatmul.mubr.f32.gmra.mrb[0].mxu0 %v4730
          %v4820 = vpop.f32.mrb[0].mxu0
          %v4821 = vadd.f32 %v4752, %v4820
          %v4822 = vpop.f32.mrb[0].mxu0
          %4823 = vdwg.mxu0
          %vm4824 = vcmask 1041408
          %v4825 = vsel %vm4824, %v4821, -inf
          %4826 = vmax.xlane.f32.xlu0 %v4825
          %v4827 = vpop.xlane.xlu0 %4826
          %v4828 = vsub.f32 %v4821, %v4827
          %v4829 = vmul.f32 %v4828, 1.442695
          %v4830 = vpow.pop %v4829
          %v4831 = vsel %vm4824, %v4830, 0.0
          %4832 = vadd.xlane.f32.xlu0 %v4831
          %v4833 = vpop.xlane.xlu0 %4832
          %v4834 = vlog2.pop %v4833
          %v4835 = vmul.f32 %v4834, 0.6931472
          %v4836 = vsub.f32 %v4828, %v4835
          %4837 = vst [vmem:[#allocation11] sm:$0x3] %v4836
        $region64: #{net_forward.3} parent=39 // pred_fallthru
          _
        // Predicated region
        $region65: #{net_forward.3} parent=39 // pred_check
          %p4838 = pneg %p169
        $region66: #{net_forward.3} parent=39 // pred_check_branch
          %4840 = sbr.rel (%p4838) target = $region68
        $region67: #{net_forward.3} parent=39 // pred_region
          %s4842 = ssub.s32 32, 32
          %4843 = vsyncadd [#allocation5], %s4842
          %s4844 = smul.addr %s26, 32
          %s4845 = scalar_lea.hbm %s5, %s4844
          %s4847 = sshll.u32 [#allocation11], 4
          %s4848 = int_to_ptr.vmem [resolvable:$true] %s4847
          %4850 = dma.vmem_to_hbm [thread:$0]  %s4848, 32, %s4845, [#allocation5]
        $region68: #{net_forward.3} parent=39 // pred_fallthru
          _
        // Predicated region
        $region69: #{net_forward.3} parent=39 // pred_check
          %p4851 = pneg %p169
        $region70: #{net_forward.3} parent=39 // pred_check_branch
          %4853 = sbr.rel (%p4851) target = $region72
        $region71: #{net_forward.3} parent=39 // pred_region
          %4854 = dma.done [#allocation5], 32
        $region72: #{net_forward.3} parent=39 // pred_fallthru
          _
      $region40: #{net_forward.3} parent=5 // pred_fallthru
        _
      %p4855 = scmp.le.s32.totalorder 2, %s17
      // Predicated region
      $region73: #{net_forward.3} parent=5 // pred_check
        %p4856 = pneg %p4855
      $region74: #{net_forward.3} parent=5 // pred_check_branch
        %4858 = sbr.rel (%p4856) target = $region76
      $region75: #{net_forward.3} parent=5 // pred_region
        %s4859 = ssub.s32 %s17, 2
      $region76: #{net_forward.3} parent=5 // pred_fallthru
        _
    $region6: #{net_forward.3} parent=1 // loop_footer
      %s21 = sadd.s32 1, %s17
    $region7: #{net_forward.3} parent=1 // loop_footer_branch
      %16 = sbr.rel target = $region3
    $region8: #{net_forward.3} parent=1 // loop_exit
      _
    %4860 = vsyncpa [#allocation4], 1
    %s4861 = scalar_lea.sflag [#allocation4], 1
    %4862 = vsyncpa %s4861, 1
    %4863 = vsyncpa [#allocation7], 1
    %4864 = vsyncpa [#allocation10], 1
    %4865 = vsyncpa [#allocation5], 1
    %s4866 = scalar_lea.sflag [#allocation5], 1
    %4867 = vsyncpa %s4866, 1

// kernel: net_forward.2
$region0: #{net_forward.2}
  #allocation0 [shape = 'u32[]', space=smem, size = 0x4, offset = 0x4, fixed_abs, tag = 'smem constant byte address 0x4 - core index']
  #allocation1 [shape = 'u32[144,128]{1,0:T(1,128)}', space=vmem, size = 0x12000, scoped, tag = 'internal scratch']
  %s0 = inlined_call_operand.vmem [shape: f32[2,32,28], index: 0, kind: input, shape index: {}]
  %s1 = inlined_call_operand.vmem [shape: f32[2,28,512], index: 1, kind: input, shape index: {}]
  %s2 = inlined_call_operand.hbm [shape: f32[1,512], index: 2, kind: input, shape index: {}]
  %s3 = inlined_call_operand.hbm [shape: f32[2,496,896], index: 3, kind: input, shape index: {}]
  %s4 = inlined_call_operand.hbm [shape: f32[1,896], index: 4, kind: input, shape index: {}]
  %s5 = inlined_call_operand.vmem [shape: bf16[2,24,768], index: 5, kind: output, shape index: {}]
  %s6 = sld [smem:[#allocation0]]
  $region42: #{net_forward.2} parent=0
    _
  %s8 = ssub.s32 1, %s6
  %s9 = scalar_select 0, %s8, %s6
  $region1: #{net_forward.2} parent=0
    #allocation2 [shape = 'u8[2048]{0}', space=vmem, size = 0x800, scoped, tag = 'input window, operand 2, single buffered']
    #allocation3 [shape = 's32[1]{0}', space=sflag, size = 0x4, scoped, tag = 'scoped memory for net_forward.2']
    #allocation4 [shape = 'u8[3555328]{0}', space=vmem, size = 0x364000, scoped, tag = 'input window, operand 3, single buffered']
    #allocation5 [shape = 's32[1]{0}', space=sflag, size = 0x4, scoped, tag = 'scoped memory for net_forward.2']
    #allocation6 [shape = 'u8[3584]{0}', space=vmem, size = 0x1000, scoped, tag = 'input window, operand 4, single buffered']
    %10 = vsyncpa [#allocation3], 0
    %11 = vsyncpa [#allocation5], 0
    // Predicated region
    $region2: #{net_forward.2} parent=1 // pred_check
      _
    $region3: #{net_forward.2} parent=1 // pred_check_branch
      %13 = sbr.rel (0) target = $region5
    $region4: #{net_forward.2} parent=1 // pred_region
      _
    $region5: #{net_forward.2} parent=1 // pred_fallthru
      _
    // Predicated region
    $region6: #{net_forward.2} parent=1 // pred_check
      _
    $region7: #{net_forward.2} parent=1 // pred_check_branch
      %15 = sbr.rel (0) target = $region9
    $region8: #{net_forward.2} parent=1 // pred_region
      _
    $region9: #{net_forward.2} parent=1 // pred_fallthru
      _
    // Predicated region
    $region10: #{net_forward.2} parent=1 // pred_check
      _
    $region11: #{net_forward.2} parent=1 // pred_check_branch
      %17 = sbr.rel (0) target = $region13
    $region12: #{net_forward.2} parent=1 // pred_region
      %s19 = ssub.s32 64, 64
      %20 = vsyncadd [#allocation3], %s19
      %s22 = sshll.u32 [#allocation2], 4
      %s23 = int_to_ptr.vmem [resolvable:$true] %s22
      %25 = dma.hbm_to_vmem [thread:$0]  %s2, 64, %s23, [#allocation3]
    $region13: #{net_forward.2} parent=1 // pred_fallthru
      _
    // Predicated region
    $region14: #{net_forward.2} parent=1 // pred_check
      _
    $region15: #{net_forward.2} parent=1 // pred_check_branch
      %27 = sbr.rel (0) target = $region17
    $region16: #{net_forward.2} parent=1 // pred_region
      %s29 = ssub.s32 111104, 111104
      %30 = vsyncadd [#allocation5], %s29
      %s31 = sshll.u32 [#allocation4], 4
      %s32 = int_to_ptr.vmem [resolvable:$true] %s31
      %37 = dma.hbm_to_vmem [thread:$0]  %s3, 111104, %s32, [#allocation5], 896, 896, 56
    $region17: #{net_forward.2} parent=1 // pred_fallthru
      _
    // Predicated region
    $region18: #{net_forward.2} parent=1 // pred_check
      _
    $region19: #{net_forward.2} parent=1 // pred_check_branch
      %39 = sbr.rel (0) target = $region21
    $region20: #{net_forward.2} parent=1 // pred_region
      %s41 = ssub.s32 112, 112
      %42 = vsyncadd [#allocation5], %s41
      %s44 = sshll.u32 [#allocation6], 4
      %s45 = int_to_ptr.vmem [resolvable:$true] %s44
      %47 = dma.hbm_to_vmem [thread:$0]  %s4, 112, %s45, [#allocation5]
    $region21: #{net_forward.2} parent=1 // pred_fallthru
      _
    // Predicated region
    $region22: #{net_forward.2} parent=1 // pred_check
      _
    $region23: #{net_forward.2} parent=1 // pred_check_branch
      %49 = sbr.rel (0) target = $region25
    $region24: #{net_forward.2} parent=1 // pred_region
      %50 = dma.done [#allocation3], 64
    $region25: #{net_forward.2} parent=1 // pred_fallthru
      _
    // Predicated region
    $region26: #{net_forward.2} parent=1 // pred_check
      _
    $region27: #{net_forward.2} parent=1 // pred_check_branch
      %52 = sbr.rel (0) target = $region29
    $region28: #{net_forward.2} parent=1 // pred_region
      %53 = dma.done [#allocation5], 111104
    $region29: #{net_forward.2} parent=1 // pred_fallthru
      _
    // Predicated region
    $region30: #{net_forward.2} parent=1 // pred_check
      _
    $region31: #{net_forward.2} parent=1 // pred_check_branch
      %55 = sbr.rel (0) target = $region33
    $region32: #{net_forward.2} parent=1 // pred_region
      %56 = dma.done [#allocation5], 112
    $region33: #{net_forward.2} parent=1 // pred_fallthru
      _
    %v57 = vld [vmem:[%s0] sm:$0xff]
    %v58 = vld [vmem:[%s0 + $0x8] sm:$0xff]
    %v59 = vld [vmem:[%s0 + $0x10] sm:$0xff]
    %v60 = vld [vmem:[%s0 + $0x18] sm:$0xff]
    %v61 = vld [vmem:[%s0 + $0x20] sm:$0xff]
    %v62 = vld [vmem:[%s0 + $0x28] sm:$0xff]
    %v63 = vld [vmem:[%s0 + $0x30] sm:$0xff]
    %v64 = vld [vmem:[%s0 + $0x38] sm:$0xff]
    %vm73 = vcmask 1046528
    %v74 = vrot.slane %v57, 1
    %v75 = vrot.slane %v58, 1
    %v76 = vsel %vm73, %v74, %v75
    %v77 = vrot.slane %v59, 1
    %v78 = vsel %vm73, %v75, %v77
    %v79 = vrot.slane %v60, 1
    %v80 = vsel %vm73, %v77, %v79
    %v81 = vrot.slane %v61, 1
    %v82 = vrot.slane %v62, 1
    %v83 = vsel %vm73, %v81, %v82
    %v84 = vrot.slane %v63, 1
    %v85 = vsel %vm73, %v82, %v84
    %v86 = vrot.slane %v64, 1
    %v87 = vsel %vm73, %v84, %v86
    %v92 = vsel %vm73, %v79, %v74
    %v93 = vsel %vm73, %v86, %v81
    %v94 = vld [vmem:[%s1] sm:$0xff]
    %v95 = vld [vmem:[%s1 + $0x8] sm:$0xff]
    %v96 = vld [vmem:[%s1 + $0x10] sm:$0xff]
    %v97 = vld [vmem:[%s1 + $0x18] sm:$0xff]
    %v98 = vld [vmem:[%s1 + $0x20] sm:$0xff]
    %v99 = vld [vmem:[%s1 + $0x28] sm:$0xff]
    %v100 = vld [vmem:[%s1 + $0x30] sm:$0xff]
    %v101 = vld [vmem:[%s1 + $0x38] sm:$0xff]
    %v102 = vld [vmem:[%s1 + $0x40] sm:$0xff]
    %v103 = vld [vmem:[%s1 + $0x48] sm:$0xff]
    %v104 = vld [vmem:[%s1 + $0x50] sm:$0xff]
    %v105 = vld [vmem:[%s1 + $0x58] sm:$0xff]
    %v106 = vld [vmem:[%s1 + $0x60] sm:$0xf]
    %v107 = vld [vmem:[%s1 + $0x68] sm:$0xf]
    %v108 = vld [vmem:[%s1 + $0x70] sm:$0xf]
    %v109 = vld [vmem:[%s1 + $0x78] sm:$0xf]
    %s110 = scalar_lea.vmem %s1, 128
    %v111 = vld [vmem:[%s110] sm:$0xff]
    %v112 = vld [vmem:[%s110 + $0x8] sm:$0xff]
    %v113 = vld [vmem:[%s110 + $0x10] sm:$0xff]
    %v114 = vld [vmem:[%s110 + $0x18] sm:$0xff]
    %v115 = vld [vmem:[%s110 + $0x20] sm:$0xff]
    %v116 = vld [vmem:[%s110 + $0x28] sm:$0xff]
    %v117 = vld [vmem:[%s110 + $0x30] sm:$0xff]
    %v118 = vld [vmem:[%s110 + $0x38] sm:$0xff]
    %v119 = vld [vmem:[%s110 + $0x40] sm:$0xff]
    %v120 = vld [vmem:[%s110 + $0x48] sm:$0xff]
    %v121 = vld [vmem:[%s110 + $0x50] sm:$0xff]
    %v122 = vld [vmem:[%s110 + $0x58] sm:$0xff]
    %v123 = vld [vmem:[%s110 + $0x60] sm:$0xf]
    %v124 = vld [vmem:[%s110 + $0x68] sm:$0xf]
    %v125 = vld [vmem:[%s110 + $0x70] sm:$0xf]
    %v126 = vld [vmem:[%s110 + $0x78] sm:$0xf]
    %vm127 = vcmask 228352
    %v128 = vsel %vm127, %v76, 0
    %v130 = vsel %vm127, %v78, 0
    %v132 = vsel %vm127, %v80, 0
    %v135 = vsel %vm127, %v92, 0
    %v137 = vsel %vm127, %v83, 0
    %v139 = vsel %vm127, %v85, 0
    %v141 = vsel %vm127, %v87, 0
    %v144 = vsel %vm127, %v93, 0
    %vm146 = vcmask 1043456
    %v148 = vsel %vm146, %v123, 0
    %v151 = vsel %vm146, %v124, 0
    %v154 = vsel %vm146, %v125, 0
    %v157 = vsel %vm146, %v126, 0
    %159 = vmatprep.subr.mxu0 %v112
    %160 = vmatpush1.msra.mxu0 %v111
    %161 = vmatprep.subr.mxu0 %v116
    %162 = vmatpush1.msra.mxu0 %v115
    %163 = vmatprep.subr.mxu0 %v120
    %164 = vmatpush1.msra.mxu0 %v119
    %165 = vmatprep.subr.mxu0 %v151
    %166 = vmatpush1.msra.mxu0 %v148
    %167 = vmatprep.subr.mxu0 0.0
    %168 = vmatpush1.msra.mxu0 0.0
    %169 = vmatprep.subr.mxu0 0.0
    %170 = vmatpush1.msra.mxu0 0.0
    %171 = vmatprep.subr.mxu0 0.0
    %172 = vmatpush1.msra.mxu0 0.0
    %173 = vmatprep.subr.mxu0 0.0
    %174 = vmatpush1.msra.mxu0 0.0
    %175 = vmatprep.subr.mxu0 0.0
    %176 = vmatpush1.msra.mxu0 0.0
    %177 = vmatprep.subr.mxu0 0.0
    %178 = vmatpush1.msra.mxu0 0.0
    %179 = vmatprep.subr.mxu0 0.0
    %180 = vmatpush1.msra.mxu0 0.0
    %181 = vmatprep.subr.mxu0 0.0
    %182 = vmatpush1.msra.mxu0 0.0
    %183 = vmatprep.subr.mxu0 0.0
    %184 = vmatpush1.msra.mxu0 0.0
    %185 = vmatprep.subr.mxu0 0.0
    %186 = vmatpush1.msra.mxu0 0.0
    %187 = vmatprep.subr.mxu0 0.0
    %188 = vmatpush1.msra.mxu0 0.0
    %189 = vmatprep.subr.mxu0 0.0
    %190 = vmatpush1.msra.mxu0 0.0
    %191 = vmatprep.subr.mxu0 0.0
    %192 = vmatpush1.msra.mxu0 0.0
    %193 = vmatprep.subr.mxu0 0.0
    %194 = vmatpush1.msra.mxu0 0.0
    %195 = vmatprep.subr.mxu0 0.0
    %196 = vmatpush1.msra.mxu0 0.0
    %197 = vmatprep.subr.mxu0 0.0
    %198 = vmatpush1.msra.mxu0 0.0
    %199 = vmatprep.subr.mxu0 0.0
    %200 = vmatpush1.msra.mxu0 0.0
    %201 = vmatprep.subr.mxu0 0.0
    %202 = vmatpush1.msra.mxu0 0.0
    %203 = vmatprep.subr.mxu0 0.0
    %204 = vmatpush1.msra.mxu0 0.0
    %205 = vmatprep.subr.mxu0 0.0
    %206 = vmatpush1.msra.mxu0 0.0
    %207 = vmatprep.subr.mxu0 0.0
    %208 = vmatpush1.msra.mxu0 0.0
    %209 = vmatprep.subr.mxu0 0.0
    %210 = vmatpush1.msra.mxu0 0.0
    %211 = vmatprep.subr.mxu0 0.0
    %212 = vmatpush1.msra.mxu0 0.0
    %213 = vmatprep.subr.mxu0 0.0
    %214 = vmatpush1.msra.mxu0 0.0
    %215 = vmatprep.subr.mxu0 0.0
    %216 = vmatpush1.msra.mxu0 0.0
    %217 = vmatprep.subr.mxu0 0.0
    %218 = vmatpush1.msra.mxu0 0.0
    %219 = vmatprep.subr.mxu0 0.0
    %220 = vmatpush1.msra.mxu0 0.0
    %221 = vmatprep.subr.mxu0 0.0
    %222 = vmatpush1.msra.mxu0 0.0
    %223 = vmatprep.mubr.f32.mxu0 0.0
    %224 = vmatmul.mubr.f32.gmra.mrb[0].mxu0 %v128
    %v225 = vpop.f32.mrb[0].mxu0
    %v226 = vadd.f32 0.0, %v225
    %v227 = vpop.f32.mrb[0].mxu0
    %v228 = vadd.f32 0.0, %v227
    %229 = vmatprep.mubr.f32.mxu0 0.0
    %230 = vmatmul.mubr.f32.gmra.mrb[0].mxu0 %v130
    %v231 = vpop.f32.mrb[0].mxu0
    %v232 = vadd.f32 0.0, %v231
    %v233 = vpop.f32.mrb[0].mxu0
    %v234 = vadd.f32 0.0, %v233
    %235 = vmatprep.mubr.f32.mxu0 0.0
    %236 = vmatmul.mubr.f32.gmra.mrb[0].mxu0 %v132
    %v237 = vpop.f32.mrb[0].mxu0
    %v238 = vadd.f32 0.0, %v237
    %v239 = vpop.f32.mrb[0].mxu0
    %v240 = vadd.f32 0.0, %v239
    %241 = vmatprep.mubr.f32.mxu0 0.0
    %242 = vmatmul.mubr.f32.gmra.mrb[0].mxu0 %v135
    %v243 = vpop.f32.mrb[0].mxu0
    %v244 = vadd.f32 0.0, %v243
    %v245 = vpop.f32.mrb[0].mxu0
    %v246 = vadd.f32 0.0, %v245
    %247 = vmatprep.mubr.f32.mxu0 0.0
    %248 = vmatmul.mubr.f32.gmra.mrb[0].mxu0 %v137
    %v249 = vpop.f32.mrb[0].mxu0
    %v250 = vadd.f32 0.0, %v249
    %v251 = vpop.f32.mrb[0].mxu0
    %v252 = vadd.f32 0.0, %v251
    %253 = vmatprep.mubr.f32.mxu0 0.0
    %254 = vmatmul.mubr.f32.gmra.mrb[0].mxu0 %v139
    %v255 = vpop.f32.mrb[0].mxu0
    %v256 = vadd.f32 0.0, %v255
    %v257 = vpop.f32.mrb[0].mxu0
    %v258 = vadd.f32 0.0, %v257
    %259 = vmatprep.mubr.f32.mxu0 0.0
    %260 = vmatmul.mubr.f32.gmra.mrb[0].mxu0 %v141
    %v261 = vpop.f32.mrb[0].mxu0
    %v262 = vadd.f32 0.0, %v261
    %v263 = vpop.f32.mrb[0].mxu0
    %v264 = vadd.f32 0.0, %v263
    %265 = vmatprep.mubr.f32.mxu0 0.0
    %266 = vmatmul.mubr.f32.gmra.mrb[0].mxu0 %v144
    %v267 = vpop.f32.mrb[0].mxu0
    %v268 = vadd.f32 0.0, %v267
    %v269 = vpop.f32.mrb[0].mxu0
    %v270 = vadd.f32 0.0, %v269
    %271 = vdwg.mxu0
    %272 = vmatprep.subr.mxu0 %v114
    %273 = vmatpush1.msra.mxu0 %v113
    %274 = vmatprep.subr.mxu0 %v118
    %275 = vmatpush1.msra.mxu0 %v117
    %276 = vmatprep.subr.mxu0 %v122
    %277 = vmatpush1.msra.mxu0 %v121
    %278 = vmatprep.subr.mxu0 %v157
    %279 = vmatpush1.msra.mxu0 %v154
    %280 = vmatprep.subr.mxu0 0.0
    %281 = vmatpush1.msra.mxu0 0.0
    %282 = vmatprep.subr.mxu0 0.0
    %283 = vmatpush1.msra.mxu0 0.0
    %284 = vmatprep.subr.mxu0 0.0
    %285 = vmatpush1.msra.mxu0 0.0
    %286 = vmatprep.subr.mxu0 0.0
    %287 = vmatpush1.msra.mxu0 0.0
    %288 = vmatprep.subr.mxu0 0.0
    %289 = vmatpush1.msra.mxu0 0.0
    %290 = vmatprep.subr.mxu0 0.0
    %291 = vmatpush1.msra.mxu0 0.0
    %292 = vmatprep.subr.mxu0 0.0
    %293 = vmatpush1.msra.mxu0 0.0
    %294 = vmatprep.subr.mxu0 0.0
    %295 = vmatpush1.msra.mxu0 0.0
    %296 = vmatprep.subr.mxu0 0.0
    %297 = vmatpush1.msra.mxu0 0.0
    %298 = vmatprep.subr.mxu0 0.0
    %299 = vmatpush1.msra.mxu0 0.0
    %300 = vmatprep.subr.mxu0 0.0
    %301 = vmatpush1.msra.mxu0 0.0
    %302 = vmatprep.subr.mxu0 0.0
    %303 = vmatpush1.msra.mxu0 0.0
    %304 = vmatprep.subr.mxu0 0.0
    %305 = vmatpush1.msra.mxu0 0.0
    %306 = vmatprep.subr.mxu0 0.0
    %307 = vmatpush1.msra.mxu0 0.0
    %308 = vmatprep.subr.mxu0 0.0
    %309 = vmatpush1.msra.mxu0 0.0
    %310 = vmatprep.subr.mxu0 0.0
    %311 = vmatpush1.msra.mxu0 0.0
    %312 = vmatprep.subr.mxu0 0.0
    %313 = vmatpush1.msra.mxu0 0.0
    %314 = vmatprep.subr.mxu0 0.0
    %315 = vmatpush1.msra.mxu0 0.0
    %316 = vmatprep.subr.mxu0 0.0
    %317 = vmatpush1.msra.mxu0 0.0
    %318 = vmatprep.subr.mxu0 0.0
    %319 = vmatpush1.msra.mxu0 0.0
    %320 = vmatprep.subr.mxu0 0.0
    %321 = vmatpush1.msra.mxu0 0.0
    %322 = vmatprep.subr.mxu0 0.0
    %323 = vmatpush1.msra.mxu0 0.0
    %324 = vmatprep.subr.mxu0 0.0
    %325 = vmatpush1.msra.mxu0 0.0
    %326 = vmatprep.subr.mxu0 0.0
    %327 = vmatpush1.msra.mxu0 0.0
    %328 = vmatprep.subr.mxu0 0.0
    %329 = vmatpush1.msra.mxu0 0.0
    %330 = vmatprep.subr.mxu0 0.0
    %331 = vmatpush1.msra.mxu0 0.0
    %332 = vmatprep.subr.mxu0 0.0
    %333 = vmatpush1.msra.mxu0 0.0
    %334 = vmatprep.subr.mxu0 0.0
    %335 = vmatpush1.msra.mxu0 0.0
    %336 = vmatprep.mubr.f32.mxu0 0.0
    %337 = vmatmul.mubr.f32.gmra.mrb[0].mxu0 %v128
    %v338 = vpop.f32.mrb[0].mxu0
    %v339 = vadd.f32 0.0, %v338
    %v340 = vpop.f32.mrb[0].mxu0
    %v341 = vadd.f32 0.0, %v340
    %342 = vmatprep.mubr.f32.mxu0 0.0
    %343 = vmatmul.mubr.f32.gmra.mrb[0].mxu0 %v130
    %v344 = vpop.f32.mrb[0].mxu0
    %v345 = vadd.f32 0.0, %v344
    %v346 = vpop.f32.mrb[0].mxu0
    %v347 = vadd.f32 0.0, %v346
    %348 = vmatprep.mubr.f32.mxu0 0.0
    %349 = vmatmul.mubr.f32.gmra.mrb[0].mxu0 %v132
    %v350 = vpop.f32.mrb[0].mxu0
    %v351 = vadd.f32 0.0, %v350
    %v352 = vpop.f32.mrb[0].mxu0
    %v353 = vadd.f32 0.0, %v352
    %354 = vmatprep.mubr.f32.mxu0 0.0
    %355 = vmatmul.mubr.f32.gmra.mrb[0].mxu0 %v135
    %v356 = vpop.f32.mrb[0].mxu0
    %v357 = vadd.f32 0.0, %v356
    %v358 = vpop.f32.mrb[0].mxu0
    %v359 = vadd.f32 0.0, %v358
    %360 = vmatprep.mubr.f32.mxu0 0.0
    %361 = vmatmul.mubr.f32.gmra.mrb[0].mxu0 %v137
    %v362 = vpop.f32.mrb[0].mxu0
    %v363 = vadd.f32 0.0, %v362
    %v364 = vpop.f32.mrb[0].mxu0
    %v365 = vadd.f32 0.0, %v364
    %366 = vmatprep.mubr.f32.mxu0 0.0
    %367 = vmatmul.mubr.f32.gmra.mrb[0].mxu0 %v139
    %v368 = vpop.f32.mrb[0].mxu0
    %v369 = vadd.f32 0.0, %v368
    %v370 = vpop.f32.mrb[0].mxu0
    %v371 = vadd.f32 0.0, %v370
    %372 = vmatprep.mubr.f32.mxu0 0.0
    %373 = vmatmul.mubr.f32.gmra.mrb[0].mxu0 %v141
    %v374 = vpop.f32.mrb[0].mxu0
    %v375 = vadd.f32 0.0, %v374
    %v376 = vpop.f32.mrb[0].mxu0
    %v377 = vadd.f32 0.0, %v376
    %378 = vmatprep.mubr.f32.mxu0 0.0
    %379 = vmatmul.mubr.f32.gmra.mrb[0].mxu0 %v144
    %v380 = vpop.f32.mrb[0].mxu0
    %v381 = vadd.f32 0.0, %v380
    %v382 = vpop.f32.mrb[0].mxu0
    %v383 = vadd.f32 0.0, %v382
    %384 = vdwg.mxu0
    %v385 = vsel %vm127, %v57, 0
    %v387 = vsel %vm127, %v58, 0
    %v389 = vsel %vm127, %v59, 0
    %v391 = vsel %vm127, %v60, 0
    %v393 = vsel %vm127, %v61, 0
    %v395 = vsel %vm127, %v62, 0
    %v397 = vsel %vm127, %v63, 0
    %v399 = vsel %vm127, %v64, 0
    %v402 = vsel %vm146, %v106, 0
    %v405 = vsel %vm146, %v107, 0
    %v408 = vsel %vm146, %v108, 0
    %v411 = vsel %vm146, %v109, 0
    %413 = vmatprep.subr.mxu0 %v95
    %414 = vmatpush1.msra.mxu0 %v94
    %415 = vmatprep.subr.mxu0 %v99
    %416 = vmatpush1.msra.mxu0 %v98
    %417 = vmatprep.subr.mxu0 %v103
    %418 = vmatpush1.msra.mxu0 %v102
    %419 = vmatprep.subr.mxu0 %v405
    %420 = vmatpush1.msra.mxu0 %v402
    %421 = vmatprep.subr.mxu0 0.0
    %422 = vmatpush1.msra.mxu0 0.0
    %423 = vmatprep.subr.mxu0 0.0
    %424 = vmatpush1.msra.mxu0 0.0
    %425 = vmatprep.subr.mxu0 0.0
    %426 = vmatpush1.msra.mxu0 0.0
    %427 = vmatprep.subr.mxu0 0.0
    %428 = vmatpush1.msra.mxu0 0.0
    %429 = vmatprep.subr.mxu0 0.0
    %430 = vmatpush1.msra.mxu0 0.0
    %431 = vmatprep.subr.mxu0 0.0
    %432 = vmatpush1.msra.mxu0 0.0
    %433 = vmatprep.subr.mxu0 0.0
    %434 = vmatpush1.msra.mxu0 0.0
    %435 = vmatprep.subr.mxu0 0.0
    %436 = vmatpush1.msra.mxu0 0.0
    %437 = vmatprep.subr.mxu0 0.0
    %438 = vmatpush1.msra.mxu0 0.0
    %439 = vmatprep.subr.mxu0 0.0
    %440 = vmatpush1.msra.mxu0 0.0
    %441 = vmatprep.subr.mxu0 0.0
    %442 = vmatpush1.msra.mxu0 0.0
    %443 = vmatprep.subr.mxu0 0.0
    %444 = vmatpush1.msra.mxu0 0.0
    %445 = vmatprep.subr.mxu0 0.0
    %446 = vmatpush1.msra.mxu0 0.0
    %447 = vmatprep.subr.mxu0 0.0
    %448 = vmatpush1.msra.mxu0 0.0
    %449 = vmatprep.subr.mxu0 0.0
    %450 = vmatpush1.msra.mxu0 0.0
    %451 = vmatprep.subr.mxu0 0.0
    %452 = vmatpush1.msra.mxu0 0.0
    %453 = vmatprep.subr.mxu0 0.0
    %454 = vmatpush1.msra.mxu0 0.0
    %455 = vmatprep.subr.mxu0 0.0
    %456 = vmatpush1.msra.mxu0 0.0
    %457 = vmatprep.subr.mxu0 0.0
    %458 = vmatpush1.msra.mxu0 0.0
    %459 = vmatprep.subr.mxu0 0.0
    %460 = vmatpush1.msra.mxu0 0.0
    %461 = vmatprep.subr.mxu0 0.0
    %462 = vmatpush1.msra.mxu0 0.0
    %463 = vmatprep.subr.mxu0 0.0
    %464 = vmatpush1.msra.mxu0 0.0
    %465 = vmatprep.subr.mxu0 0.0
    %466 = vmatpush1.msra.mxu0 0.0
    %467 = vmatprep.subr.mxu0 0.0
    %468 = vmatpush1.msra.mxu0 0.0
    %469 = vmatprep.subr.mxu0 0.0
    %470 = vmatpush1.msra.mxu0 0.0
    %471 = vmatprep.subr.mxu0 0.0
    %472 = vmatpush1.msra.mxu0 0.0
    %473 = vmatprep.subr.mxu0 0.0
    %474 = vmatpush1.msra.mxu0 0.0
    %475 = vmatprep.subr.mxu0 0.0
    %476 = vmatpush1.msra.mxu0 0.0
    %477 = vmatprep.mubr.f32.mxu0 0.0
    %478 = vmatmul.mubr.f32.gmra.mrb[0].mxu0 %v385
    %v479 = vpop.f32.mrb[0].mxu0
    %v480 = vadd.f32 %v226, %v479
    %v481 = vpop.f32.mrb[0].mxu0
    %v482 = vadd.f32 %v228, %v481
    %483 = vmatprep.mubr.f32.mxu0 0.0
    %484 = vmatmul.mubr.f32.gmra.mrb[0].mxu0 %v387
    %v485 = vpop.f32.mrb[0].mxu0
    %v486 = vadd.f32 %v232, %v485
    %v487 = vpop.f32.mrb[0].mxu0
    %v488 = vadd.f32 %v234, %v487
    %489 = vmatprep.mubr.f32.mxu0 0.0
    %490 = vmatmul.mubr.f32.gmra.mrb[0].mxu0 %v389
    %v491 = vpop.f32.mrb[0].mxu0
    %v492 = vadd.f32 %v238, %v491
    %v493 = vpop.f32.mrb[0].mxu0
    %v494 = vadd.f32 %v240, %v493
    %495 = vmatprep.mubr.f32.mxu0 0.0
    %496 = vmatmul.mubr.f32.gmra.mrb[0].mxu0 %v391
    %v497 = vpop.f32.mrb[0].mxu0
    %v498 = vadd.f32 %v244, %v497
    %v499 = vpop.f32.mrb[0].mxu0
    %v500 = vadd.f32 %v246, %v499
    %501 = vmatprep.mubr.f32.mxu0 0.0
    %502 = vmatmul.mubr.f32.gmra.mrb[0].mxu0 %v393
    %v503 = vpop.f32.mrb[0].mxu0
    %v504 = vadd.f32 %v250, %v503
    %v505 = vpop.f32.mrb[0].mxu0
    %v506 = vadd.f32 %v252, %v505
    %507 = vmatprep.mubr.f32.mxu0 0.0
    %508 = vmatmul.mubr.f32.gmra.mrb[0].mxu0 %v395
    %v509 = vpop.f32.mrb[0].mxu0
    %v510 = vadd.f32 %v256, %v509
    %v511 = vpop.f32.mrb[0].mxu0
    %v512 = vadd.f32 %v258, %v511
    %513 = vmatprep.mubr.f32.mxu0 0.0
    %514 = vmatmul.mubr.f32.gmra.mrb[0].mxu0 %v397
    %v515 = vpop.f32.mrb[0].mxu0
    %v516 = vadd.f32 %v262, %v515
    %v517 = vpop.f32.mrb[0].mxu0
    %v518 = vadd.f32 %v264, %v517
    %519 = vmatprep.mubr.f32.mxu0 0.0
    %520 = vmatmul.mubr.f32.gmra.mrb[0].mxu0 %v399
    %v521 = vpop.f32.mrb[0].mxu0
    %v522 = vadd.f32 %v268, %v521
    %v523 = vpop.f32.mrb[0].mxu0
    %v524 = vadd.f32 %v270, %v523
    %525 = vdwg.mxu0
    %526 = vmatprep.subr.mxu0 %v97
    %527 = vmatpush1.msra.mxu0 %v96
    %528 = vmatprep.subr.mxu0 %v101
    %529 = vmatpush1.msra.mxu0 %v100
    %530 = vmatprep.subr.mxu0 %v105
    %531 = vmatpush1.msra.mxu0 %v104
    %532 = vmatprep.subr.mxu0 %v411
    %533 = vmatpush1.msra.mxu0 %v408
    %534 = vmatprep.subr.mxu0 0.0
    %535 = vmatpush1.msra.mxu0 0.0
    %536 = vmatprep.subr.mxu0 0.0
    %537 = vmatpush1.msra.mxu0 0.0
    %538 = vmatprep.subr.mxu0 0.0
    %539 = vmatpush1.msra.mxu0 0.0
    %540 = vmatprep.subr.mxu0 0.0
    %541 = vmatpush1.msra.mxu0 0.0
    %542 = vmatprep.subr.mxu0 0.0
    %543 = vmatpush1.msra.mxu0 0.0
    %544 = vmatprep.subr.mxu0 0.0
    %545 = vmatpush1.msra.mxu0 0.0
    %546 = vmatprep.subr.mxu0 0.0
    %547 = vmatpush1.msra.mxu0 0.0
    %548 = vmatprep.subr.mxu0 0.0
    %549 = vmatpush1.msra.mxu0 0.0
    %550 = vmatprep.subr.mxu0 0.0
    %551 = vmatpush1.msra.mxu0 0.0
    %552 = vmatprep.subr.mxu0 0.0
    %553 = vmatpush1.msra.mxu0 0.0
    %554 = vmatprep.subr.mxu0 0.0
    %555 = vmatpush1.msra.mxu0 0.0
    %556 = vmatprep.subr.mxu0 0.0
    %557 = vmatpush1.msra.mxu0 0.0
    %558 = vmatprep.subr.mxu0 0.0
    %559 = vmatpush1.msra.mxu0 0.0
    %560 = vmatprep.subr.mxu0 0.0
    %561 = vmatpush1.msra.mxu0 0.0
    %562 = vmatprep.subr.mxu0 0.0
    %563 = vmatpush1.msra.mxu0 0.0
    %564 = vmatprep.subr.mxu0 0.0
    %565 = vmatpush1.msra.mxu0 0.0
    %566 = vmatprep.subr.mxu0 0.0
    %567 = vmatpush1.msra.mxu0 0.0
    %568 = vmatprep.subr.mxu0 0.0
    %569 = vmatpush1.msra.mxu0 0.0
    %570 = vmatprep.subr.mxu0 0.0
    %571 = vmatpush1.msra.mxu0 0.0
    %572 = vmatprep.subr.mxu0 0.0
    %573 = vmatpush1.msra.mxu0 0.0
    %574 = vmatprep.subr.mxu0 0.0
    %575 = vmatpush1.msra.mxu0 0.0
    %576 = vmatprep.subr.mxu0 0.0
    %577 = vmatpush1.msra.mxu0 0.0
    %578 = vmatprep.subr.mxu0 0.0
    %579 = vmatpush1.msra.mxu0 0.0
    %580 = vmatprep.subr.mxu0 0.0
    %581 = vmatpush1.msra.mxu0 0.0
    %582 = vmatprep.subr.mxu0 0.0
    %583 = vmatpush1.msra.mxu0 0.0
    %584 = vmatprep.subr.mxu0 0.0
    %585 = vmatpush1.msra.mxu0 0.0
    %586 = vmatprep.subr.mxu0 0.0
    %587 = vmatpush1.msra.mxu0 0.0
    %588 = vmatprep.subr.mxu0 0.0
    %589 = vmatpush1.msra.mxu0 0.0
    %590 = vmatprep.mubr.f32.mxu0 0.0
    %591 = vmatmul.mubr.f32.gmra.mrb[0].mxu0 %v385
    %v592 = vpop.f32.mrb[0].mxu0
    %v593 = vadd.f32 %v339, %v592
    %v594 = vpop.f32.mrb[0].mxu0
    %v595 = vadd.f32 %v341, %v594
    %596 = vmatprep.mubr.f32.mxu0 0.0
    %597 = vmatmul.mubr.f32.gmra.mrb[0].mxu0 %v387
    %v598 = vpop.f32.mrb[0].mxu0
    %v599 = vadd.f32 %v345, %v598
    %v600 = vpop.f32.mrb[0].mxu0
    %v601 = vadd.f32 %v347, %v600
    %602 = vmatprep.mubr.f32.mxu0 0.0
    %603 = vmatmul.mubr.f32.gmra.mrb[0].mxu0 %v389
    %v604 = vpop.f32.mrb[0].mxu0
    %v605 = vadd.f32 %v351, %v604
    %v606 = vpop.f32.mrb[0].mxu0
    %v607 = vadd.f32 %v353, %v606
    %608 = vmatprep.mubr.f32.mxu0 0.0
    %609 = vmatmul.mubr.f32.gmra.mrb[0].mxu0 %v391
    %v610 = vpop.f32.mrb[0].mxu0
    %v611 = vadd.f32 %v357, %v610
    %v612 = vpop.f32.mrb[0].mxu0
    %v613 = vadd.f32 %v359, %v612
    %614 = vmatprep.mubr.f32.mxu0 0.0
    %615 = vmatmul.mubr.f32.gmra.mrb[0].mxu0 %v393
    %v616 = vpop.f32.mrb[0].mxu0
    %v617 = vadd.f32 %v363, %v616
    %v618 = vpop.f32.mrb[0].mxu0
    %v619 = vadd.f32 %v365, %v618
    %620 = vmatprep.mubr.f32.mxu0 0.0
    %621 = vmatmul.mubr.f32.gmra.mrb[0].mxu0 %v395
    %v622 = vpop.f32.mrb[0].mxu0
    %v623 = vadd.f32 %v369, %v622
    %v624 = vpop.f32.mrb[0].mxu0
    %v625 = vadd.f32 %v371, %v624
    %626 = vmatprep.mubr.f32.mxu0 0.0
    %627 = vmatmul.mubr.f32.gmra.mrb[0].mxu0 %v397
    %v628 = vpop.f32.mrb[0].mxu0
    %v629 = vadd.f32 %v375, %v628
    %v630 = vpop.f32.mrb[0].mxu0
    %v631 = vadd.f32 %v377, %v630
    %632 = vmatprep.mubr.f32.mxu0 0.0
    %633 = vmatmul.mubr.f32.gmra.mrb[0].mxu0 %v399
    %v634 = vpop.f32.mrb[0].mxu0
    %v635 = vadd.f32 %v381, %v634
    %v636 = vpop.f32.mrb[0].mxu0
    %v637 = vadd.f32 %v383, %v636
    %638 = vdwg.mxu0
    %v639 = vld [vmem:[#allocation2] sm:$0xf]
    %v641 = vlaneseq
    %v642 = vshrl.u32 %v641, 7
    %v643 = vsub.s32 0, %v642
    %v644 = vrot.slane %v639, %v643
    %v645 = vlaneseq
    %v646 = vshrl.u32 %v645, 7
    %v647 = vsub.s32 1, %v646
    %v648 = vrot.slane %v639, %v647
    %v649 = vlaneseq
    %v650 = vshrl.u32 %v649, 7
    %v651 = vsub.s32 2, %v650
    %v652 = vrot.slane %v639, %v651
    %v653 = vlaneseq
    %v654 = vshrl.u32 %v653, 7
    %v655 = vsub.s32 3, %v654
    %v656 = vrot.slane %v639, %v655
    %v661 = vadd.f32 %v480, %v644
    %v662 = vadd.f32 %v482, %v648
    %v663 = vadd.f32 %v593, %v652
    %v664 = vadd.f32 %v595, %v656
    %v665 = vadd.f32 %v486, %v644
    %v666 = vadd.f32 %v488, %v648
    %v667 = vadd.f32 %v599, %v652
    %v668 = vadd.f32 %v601, %v656
    %v669 = vadd.f32 %v492, %v644
    %v670 = vadd.f32 %v494, %v648
    %v671 = vadd.f32 %v605, %v652
    %v672 = vadd.f32 %v607, %v656
    %v673 = vadd.f32 %v498, %v644
    %v674 = vadd.f32 %v500, %v648
    %v675 = vadd.f32 %v611, %v652
    %v676 = vadd.f32 %v613, %v656
    %v677 = vadd.f32 %v504, %v644
    %v678 = vadd.f32 %v506, %v648
    %v679 = vadd.f32 %v617, %v652
    %v680 = vadd.f32 %v619, %v656
    %v681 = vadd.f32 %v510, %v644
    %v682 = vadd.f32 %v512, %v648
    %v683 = vadd.f32 %v623, %v652
    %v684 = vadd.f32 %v625, %v656
    %v685 = vadd.f32 %v516, %v644
    %v686 = vadd.f32 %v518, %v648
    %v687 = vadd.f32 %v629, %v652
    %v688 = vadd.f32 %v631, %v656
    %v689 = vadd.f32 %v522, %v644
    %v690 = vadd.f32 %v524, %v648
    %v691 = vadd.f32 %v635, %v652
    %v692 = vadd.f32 %v637, %v656
    %v693 = vmax.f32 %v661, 0.0
    %v694 = vmax.f32 %v662, 0.0
    %v695 = vmax.f32 %v663, 0.0
    %v696 = vmax.f32 %v664, 0.0
    %v697 = vmax.f32 %v665, 0.0
    %v698 = vmax.f32 %v666, 0.0
    %v699 = vmax.f32 %v667, 0.0
    %v700 = vmax.f32 %v668, 0.0
    %v701 = vmax.f32 %v669, 0.0
    %v702 = vmax.f32 %v670, 0.0
    %v703 = vmax.f32 %v671, 0.0
    %v704 = vmax.f32 %v672, 0.0
    %v705 = vmax.f32 %v673, 0.0
    %v706 = vmax.f32 %v674, 0.0
    %v707 = vmax.f32 %v675, 0.0
    %v708 = vmax.f32 %v676, 0.0
    %v709 = vmax.f32 %v677, 0.0
    %v710 = vmax.f32 %v678, 0.0
    %v711 = vmax.f32 %v679, 0.0
    %v712 = vmax.f32 %v680, 0.0
    %v713 = vmax.f32 %v681, 0.0
    %v714 = vmax.f32 %v682, 0.0
    %v715 = vmax.f32 %v683, 0.0
    %v716 = vmax.f32 %v684, 0.0
    %v717 = vmax.f32 %v685, 0.0
    %v718 = vmax.f32 %v686, 0.0
    %v719 = vmax.f32 %v687, 0.0
    %v720 = vmax.f32 %v688, 0.0
    %v721 = vmax.f32 %v689, 0.0
    %v722 = vmax.f32 %v690, 0.0
    %v723 = vmax.f32 %v691, 0.0
    %v724 = vmax.f32 %v692, 0.0
    %757 = vrot.lane.b32.xlu0 %v693, 112
    %v758 = vpop.permute.xlu0 %757
    %759 = vrot.lane.b32.xlu0 %v694, 112
    %v760 = vpop.permute.xlu0 %759
    %761 = vrot.lane.b32.xlu0 %v695, 112
    %v762 = vpop.permute.xlu0 %761
    %763 = vrot.lane.b32.xlu0 %v696, 112
    %v764 = vpop.permute.xlu0 %763
    %765 = vrot.lane.b32.xlu0 %v697, 112
    %v766 = vpop.permute.xlu0 %765
    %767 = vrot.lane.b32.xlu0 %v698, 112
    %v768 = vpop.permute.xlu0 %767
    %769 = vrot.lane.b32.xlu0 %v699, 112
    %v770 = vpop.permute.xlu0 %769
    %771 = vrot.lane.b32.xlu0 %v700, 112
    %v772 = vpop.permute.xlu0 %771
    %773 = vrot.lane.b32.xlu0 %v701, 112
    %v774 = vpop.permute.xlu0 %773
    %775 = vrot.lane.b32.xlu0 %v702, 112
    %v776 = vpop.permute.xlu0 %775
    %777 = vrot.lane.b32.xlu0 %v703, 112
    %v778 = vpop.permute.xlu0 %777
    %779 = vrot.lane.b32.xlu0 %v704, 112
    %v780 = vpop.permute.xlu0 %779
    %781 = vrot.lane.b32.xlu0 %v705, 112
    %v782 = vpop.permute.xlu0 %781
    %783 = vrot.lane.b32.xlu0 %v706, 112
    %v784 = vpop.permute.xlu0 %783
    %785 = vrot.lane.b32.xlu0 %v707, 112
    %v786 = vpop.permute.xlu0 %785
    %787 = vrot.lane.b32.xlu0 %v708, 112
    %v788 = vpop.permute.xlu0 %787
    %789 = vrot.lane.b32.xlu0 %v709, 112
    %v790 = vpop.permute.xlu0 %789
    %791 = vrot.lane.b32.xlu0 %v710, 112
    %v792 = vpop.permute.xlu0 %791
    %793 = vrot.lane.b32.xlu0 %v711, 112
    %v794 = vpop.permute.xlu0 %793
    %795 = vrot.lane.b32.xlu0 %v712, 112
    %v796 = vpop.permute.xlu0 %795
    %797 = vrot.lane.b32.xlu0 %v713, 112
    %v798 = vpop.permute.xlu0 %797
    %799 = vrot.lane.b32.xlu0 %v714, 112
    %v800 = vpop.permute.xlu0 %799
    %801 = vrot.lane.b32.xlu0 %v715, 112
    %v802 = vpop.permute.xlu0 %801
    %803 = vrot.lane.b32.xlu0 %v716, 112
    %v804 = vpop.permute.xlu0 %803
    %805 = vrot.lane.b32.xlu0 %v717, 112
    %v806 = vpop.permute.xlu0 %805
    %807 = vrot.lane.b32.xlu0 %v718, 112
    %v808 = vpop.permute.xlu0 %807
    %809 = vrot.lane.b32.xlu0 %v719, 112
    %v810 = vpop.permute.xlu0 %809
    %811 = vrot.lane.b32.xlu0 %v720, 112
    %v812 = vpop.permute.xlu0 %811
    %813 = vrot.lane.b32.xlu0 %v721, 112
    %v814 = vpop.permute.xlu0 %813
    %815 = vrot.lane.b32.xlu0 %v722, 112
    %v816 = vpop.permute.xlu0 %815
    %817 = vrot.lane.b32.xlu0 %v723, 112
    %v818 = vpop.permute.xlu0 %817
    %819 = vrot.lane.b32.xlu0 %v724, 112
    %v820 = vpop.permute.xlu0 %819
    %vm821 = vcmask 916480
    %v822 = vsel %vm821, %v758, %v760
    %v823 = vsel %vm821, %v760, %v762
    %v824 = vsel %vm821, %v762, %v764
    %v825 = vsel %vm821, %v766, %v768
    %v826 = vsel %vm821, %v768, %v770
    %v827 = vsel %vm821, %v770, %v772
    %v828 = vsel %vm821, %v774, %v776
    %v829 = vsel %vm821, %v776, %v778
    %v830 = vsel %vm821, %v778, %v780
    %v831 = vsel %vm821, %v782, %v784
    %v832 = vsel %vm821, %v784, %v786
    %v833 = vsel %vm821, %v786, %v788
    %v834 = vsel %vm821, %v790, %v792
    %v835 = vsel %vm821, %v792, %v794
    %v836 = vsel %vm821, %v794, %v796
    %v837 = vsel %vm821, %v798, %v800
    %v838 = vsel %vm821, %v800, %v802
    %v839 = vsel %vm821, %v802, %v804
    %v840 = vsel %vm821, %v806, %v808
    %v841 = vsel %vm821, %v808, %v810
    %v842 = vsel %vm821, %v810, %v812
    %v843 = vsel %vm821, %v814, %v816
    %v844 = vsel %vm821, %v816, %v818
    %v845 = vsel %vm821, %v818, %v820
    %v878 = vmax.f32 %v693, %v822
    %v879 = vmax.f32 %v694, %v823
    %v880 = vmax.f32 %v695, %v824
    %v881 = vmax.f32 %v696, %v764
    %v882 = vmax.f32 %v697, %v825
    %v883 = vmax.f32 %v698, %v826
    %v884 = vmax.f32 %v699, %v827
    %v885 = vmax.f32 %v700, %v772
    %v886 = vmax.f32 %v701, %v828
    %v887 = vmax.f32 %v702, %v829
    %v888 = vmax.f32 %v703, %v830
    %v889 = vmax.f32 %v704, %v780
    %v890 = vmax.f32 %v705, %v831
    %v891 = vmax.f32 %v706, %v832
    %v892 = vmax.f32 %v707, %v833
    %v893 = vmax.f32 %v708, %v788
    %v894 = vmax.f32 %v709, %v834
    %v895 = vmax.f32 %v710, %v835
    %v896 = vmax.f32 %v711, %v836
    %v897 = vmax.f32 %v712, %v796
    %v898 = vmax.f32 %v713, %v837
    %v899 = vmax.f32 %v714, %v838
    %v900 = vmax.f32 %v715, %v839
    %v901 = vmax.f32 %v716, %v804
    %v902 = vmax.f32 %v717, %v840
    %v903 = vmax.f32 %v718, %v841
    %v904 = vmax.f32 %v719, %v842
    %v905 = vmax.f32 %v720, %v812
    %v906 = vmax.f32 %v721, %v843
    %v907 = vmax.f32 %v722, %v844
    %v908 = vmax.f32 %v723, %v845
    %v909 = vmax.f32 %v724, %v820
    %v942 = vrot.slane %v878, 1
    %v943 = vrot.slane %v882, 1
    %v944 = vsel %vm73, %v942, %v943
    %v945 = vrot.slane %v879, 1
    %v946 = vrot.slane %v883, 1
    %v947 = vsel %vm73, %v945, %v946
    %v948 = vrot.slane %v880, 1
    %v949 = vrot.slane %v884, 1
    %v950 = vsel %vm73, %v948, %v949
    %v951 = vrot.slane %v881, 1
    %v952 = vrot.slane %v885, 1
    %v953 = vsel %vm73, %v951, %v952
    %v954 = vrot.slane %v886, 1
    %v955 = vsel %vm73, %v943, %v954
    %v956 = vrot.slane %v887, 1
    %v957 = vsel %vm73, %v946, %v956
    %v958 = vrot.slane %v888, 1
    %v959 = vsel %vm73, %v949, %v958
    %v960 = vrot.slane %v889, 1
    %v961 = vsel %vm73, %v952, %v960
    %v962 = vrot.slane %v890, 1
    %v963 = vsel %vm73, %v954, %v962
    %v964 = vrot.slane %v891, 1
    %v965 = vsel %vm73, %v956, %v964
    %v966 = vrot.slane %v892, 1
    %v967 = vsel %vm73, %v958, %v966
    %v968 = vrot.slane %v893, 1
    %v969 = vsel %vm73, %v960, %v968
    %v970 = vrot.slane %v894, 1
    %v971 = vrot.slane %v898, 1
    %v972 = vsel %vm73, %v970, %v971
    %v973 = vrot.slane %v895, 1
    %v974 = vrot.slane %v899, 1
    %v975 = vsel %vm73, %v973, %v974
    %v976 = vrot.slane %v896, 1
    %v977 = vrot.slane %v900, 1
    %v978 = vsel %vm73, %v976, %v977
    %v979 = vrot.slane %v897, 1
    %v980 = vrot.slane %v901, 1
    %v981 = vsel %vm73, %v979, %v980
    %v982 = vrot.slane %v902, 1
    %v983 = vsel %vm73, %v971, %v982
    %v984 = vrot.slane %v903, 1
    %v985 = vsel %vm73, %v974, %v984
    %v986 = vrot.slane %v904, 1
    %v987 = vsel %vm73, %v977, %v986
    %v988 = vrot.slane %v905, 1
    %v989 = vsel %vm73, %v980, %v988
    %v990 = vrot.slane %v906, 1
    %v991 = vsel %vm73, %v982, %v990
    %v992 = vrot.slane %v907, 1
    %v993 = vsel %vm73, %v984, %v992
    %v994 = vrot.slane %v908, 1
    %v995 = vsel %vm73, %v986, %v994
    %v996 = vrot.slane %v909, 1
    %v997 = vsel %vm73, %v988, %v996
    %v1038 = vsel %vm73, %v962, %v942
    %v1039 = vsel %vm73, %v964, %v945
    %v1040 = vsel %vm73, %v966, %v948
    %v1041 = vsel %vm73, %v968, %v951
    %v1042 = vsel %vm73, %v990, %v970
    %v1043 = vsel %vm73, %v992, %v973
    %v1044 = vsel %vm73, %v994, %v976
    %v1045 = vsel %vm73, %v996, %v979
    %v1046 = vmax.f32 %v878, %v944
    %v1047 = vmax.f32 %v879, %v947
    %v1048 = vmax.f32 %v880, %v950
    %v1049 = vmax.f32 %v881, %v953
    %v1050 = vmax.f32 %v882, %v955
    %v1051 = vmax.f32 %v883, %v957
    %v1052 = vmax.f32 %v884, %v959
    %v1053 = vmax.f32 %v885, %v961
    %v1054 = vmax.f32 %v886, %v963
    %v1055 = vmax.f32 %v887, %v965
    %v1056 = vmax.f32 %v888, %v967
    %v1057 = vmax.f32 %v889, %v969
    %v1058 = vmax.f32 %v890, %v1038
    %v1059 = vmax.f32 %v891, %v1039
    %v1060 = vmax.f32 %v892, %v1040
    %v1061 = vmax.f32 %v893, %v1041
    %v1062 = vmax.f32 %v894, %v972
    %v1063 = vmax.f32 %v895, %v975
    %v1064 = vmax.f32 %v896, %v978
    %v1065 = vmax.f32 %v897, %v981
    %v1066 = vmax.f32 %v898, %v983
    %v1067 = vmax.f32 %v899, %v985
    %v1068 = vmax.f32 %v900, %v987
    %v1069 = vmax.f32 %v901, %v989
    %v1070 = vmax.f32 %v902, %v991
    %v1071 = vmax.f32 %v903, %v993
    %v1072 = vmax.f32 %v904, %v995
    %v1073 = vmax.f32 %v905, %v997
    %v1074 = vmax.f32 %v906, %v1042
    %v1075 = vmax.f32 %v907, %v1043
    %v1076 = vmax.f32 %v908, %v1044
    %v1077 = vmax.f32 %v909, %v1045
    %v1110 = vrot.slane %v1046, 1
    %v1111 = vrot.slane %v1050, 1
    %v1112 = vsel %vm73, %v1110, %v1111
    %v1113 = vrot.slane %v1047, 1
    %v1114 = vrot.slane %v1051, 1
    %v1115 = vsel %vm73, %v1113, %v1114
    %v1116 = vrot.slane %v1048, 1
    %v1117 = vrot.slane %v1052, 1
    %v1118 = vsel %vm73, %v1116, %v1117
    %v1119 = vrot.slane %v1049, 1
    %v1120 = vrot.slane %v1053, 1
    %v1121 = vsel %vm73, %v1119, %v1120
    %v1122 = vrot.slane %v1054, 1
    %v1123 = vsel %vm73, %v1111, %v1122
    %v1124 = vrot.slane %v1055, 1
    %v1125 = vsel %vm73, %v1114, %v1124
    %v1126 = vrot.slane %v1056, 1
    %v1127 = vsel %vm73, %v1117, %v1126
    %v1128 = vrot.slane %v1057, 1
    %v1129 = vsel %vm73, %v1120, %v1128
    %v1130 = vrot.slane %v1058, 1
    %v1131 = vsel %vm73, %v1122, %v1130
    %v1132 = vrot.slane %v1059, 1
    %v1133 = vsel %vm73, %v1124, %v1132
    %v1134 = vrot.slane %v1060, 1
    %v1135 = vsel %vm73, %v1126, %v1134
    %v1136 = vrot.slane %v1061, 1
    %v1137 = vsel %vm73, %v1128, %v1136
    %v1138 = vrot.slane %v1062, 1
    %v1139 = vrot.slane %v1066, 1
    %v1140 = vsel %vm73, %v1138, %v1139
    %v1141 = vrot.slane %v1063, 1
    %v1142 = vrot.slane %v1067, 1
    %v1143 = vsel %vm73, %v1141, %v1142
    %v1144 = vrot.slane %v1064, 1
    %v1145 = vrot.slane %v1068, 1
    %v1146 = vsel %vm73, %v1144, %v1145
    %v1147 = vrot.slane %v1065, 1
    %v1148 = vrot.slane %v1069, 1
    %v1149 = vsel %vm73, %v1147, %v1148
    %v1150 = vrot.slane %v1070, 1
    %v1151 = vsel %vm73, %v1139, %v1150
    %v1152 = vrot.slane %v1071, 1
    %v1153 = vsel %vm73, %v1142, %v1152
    %v1154 = vrot.slane %v1072, 1
    %v1155 = vsel %vm73, %v1145, %v1154
    %v1156 = vrot.slane %v1073, 1
    %v1157 = vsel %vm73, %v1148, %v1156
    %v1158 = vrot.slane %v1074, 1
    %v1159 = vsel %vm73, %v1150, %v1158
    %v1160 = vrot.slane %v1075, 1
    %v1161 = vsel %vm73, %v1152, %v1160
    %v1162 = vrot.slane %v1076, 1
    %v1163 = vsel %vm73, %v1154, %v1162
    %v1164 = vrot.slane %v1077, 1
    %v1165 = vsel %vm73, %v1156, %v1164
    %v1200 = vsel %vm73, %v1130, %v1110
    %v1201 = vsel %vm73, %v1132, %v1113
    %v1202 = vsel %vm73, %v1134, %v1116
    %v1203 = vsel %vm73, %v1136, %v1119
    %v1204 = vsel %vm73, %v1158, %v1138
    %v1205 = vsel %vm73, %v1160, %v1141
    %v1206 = vsel %vm73, %v1162, %v1144
    %v1207 = vsel %vm73, %v1164, %v1147
    %v1208 = vld [vmem:[#allocation4] sm:$0xff]
    %v1209 = vld [vmem:[#allocation4 + $0x8] sm:$0xff]
    %v1210 = vld [vmem:[#allocation4 + $0x10] sm:$0xff]
    %v1211 = vld [vmem:[#allocation4 + $0x18] sm:$0xff]
    %v1212 = vld [vmem:[#allocation4 + $0x20] sm:$0xff]
    %v1213 = vld [vmem:[#allocation4 + $0x28] sm:$0xff]
    %v1214 = vld [vmem:[#allocation4 + $0x30] sm:$0xff]
    %v1215 = vld [vmem:[#allocation4 + $0x38] sm:$0xff]
    %v1216 = vld [vmem:[#allocation4 + $0x40] sm:$0xff]
    %v1217 = vld [vmem:[#allocation4 + $0x48] sm:$0xff]
    %v1218 = vld [vmem:[#allocation4 + $0x50] sm:$0xff]
    %v1219 = vld [vmem:[#allocation4 + $0x58] sm:$0xff]
    %v1220 = vld [vmem:[#allocation4 + $0x60] sm:$0xff]
    %v1221 = vld [vmem:[#allocation4 + $0x68] sm:$0xff]
    %v1222 = vld [vmem:[#allocation4 + $0x70] sm:$0xff]
    %v1223 = vld [vmem:[#allocation4 + $0x78] sm:$0xff]
    %v1224 = vld [vmem:[#allocation4 + $0x80] sm:$0xff]
    %v1225 = vld [vmem:[#allocation4 + $0x88] sm:$0xff]
    %v1226 = vld [vmem:[#allocation4 + $0x90] sm:$0xff]
    %v1227 = vld [vmem:[#allocation4 + $0x98] sm:$0xff]
    %v1228 = vld [vmem:[#allocation4 + $0xa0] sm:$0xff]
    %v1229 = vld [vmem:[#allocation4 + $0xa8] sm:$0xff]
    %v1230 = vld [vmem:[#allocation4 + $0xb0] sm:$0xff]
    %v1231 = vld [vmem:[#allocation4 + $0xb8] sm:$0xff]
    %v1232 = vld [vmem:[#allocation4 + $0xc0] sm:$0xff]
    %v1233 = vld [vmem:[#allocation4 + $0xc8] sm:$0xff]
    %v1234 = vld [vmem:[#allocation4 + $0xd0] sm:$0xff]
    %v1235 = vld [vmem:[#allocation4 + $0xd8] sm:$0xff]
    %v1236 = vld [vmem:[#allocation4 + $0xe0] sm:$0xff]
    %v1237 = vld [vmem:[#allocation4 + $0xe8] sm:$0xff]
    %v1238 = vld [vmem:[#allocation4 + $0xf0] sm:$0xff]
    %v1239 = vld [vmem:[#allocation4 + $0xf8] sm:$0xff]
    %v1240 = vld [vmem:[#allocation4 + $0x100] sm:$0xff]
    %v1241 = vld [vmem:[#allocation4 + $0x108] sm:$0xff]
    %v1242 = vld [vmem:[#allocation4 + $0x110] sm:$0xff]
    %v1243 = vld [vmem:[#allocation4 + $0x118] sm:$0xff]
    %v1244 = vld [vmem:[#allocation4 + $0x120] sm:$0xff]
    %v1245 = vld [vmem:[#allocation4 + $0x128] sm:$0xff]
    %v1246 = vld [vmem:[#allocation4 + $0x130] sm:$0xff]
    %v1247 = vld [vmem:[#allocation4 + $0x138] sm:$0xff]
    %v1248 = vld [vmem:[#allocation4 + $0x140] sm:$0xff]
    %v1249 = vld [vmem:[#allocation4 + $0x148] sm:$0xff]
    %v1250 = vld [vmem:[#allocation4 + $0x150] sm:$0xff]
    %v1251 = vld [vmem:[#allocation4 + $0x158] sm:$0xff]
    %v1252 = vld [vmem:[#allocation4 + $0x160] sm:$0xff]
    %v1253 = vld [vmem:[#allocation4 + $0x168] sm:$0xff]
    %v1254 = vld [vmem:[#allocation4 + $0x170] sm:$0xff]
    %v1255 = vld [vmem:[#allocation4 + $0x178] sm:$0xff]
    %v1256 = vld [vmem:[#allocation4 + $0x180] sm:$0xff]
    %v1257 = vld [vmem:[#allocation4 + $0x188] sm:$0xff]
    %v1258 = vld [vmem:[#allocation4 + $0x190] sm:$0xff]
    %v1259 = vld [vmem:[#allocation4 + $0x198] sm:$0xff]
    %v1260 = vld [vmem:[#allocation4 + $0x1a0] sm:$0xff]
    %v1261 = vld [vmem:[#allocation4 + $0x1a8] sm:$0xff]
    %v1262 = vld [vmem:[#allocation4 + $0x1b0] sm:$0xff]
    %v1263 = vld [vmem:[#allocation4 + $0x1b8] sm:$0xff]
    %v1264 = vld [vmem:[#allocation4 + $0x1c0] sm:$0xff]
    %v1265 = vld [vmem:[#allocation4 + $0x1c8] sm:$0xff]
    %v1266 = vld [vmem:[#allocation4 + $0x1d0] sm:$0xff]
    %v1267 = vld [vmem:[#allocation4 + $0x1d8] sm:$0xff]
    %v1268 = vld [vmem:[#allocation4 + $0x1e0] sm:$0xff]
    %v1269 = vld [vmem:[#allocation4 + $0x1e8] sm:$0xff]
    %v1270 = vld [vmem:[#allocation4 + $0x1f0] sm:$0xff]
    %v1271 = vld [vmem:[#allocation4 + $0x1f8] sm:$0xff]
    %v1272 = vld [vmem:[#allocation4 + $0x200] sm:$0xff]
    %v1273 = vld [vmem:[#allocation4 + $0x208] sm:$0xff]
    %v1274 = vld [vmem:[#allocation4 + $0x210] sm:$0xff]
    %v1275 = vld [vmem:[#allocation4 + $0x218] sm:$0xff]
    %v1276 = vld [vmem:[#allocation4 + $0x220] sm:$0xff]
    %v1277 = vld [vmem:[#allocation4 + $0x228] sm:$0xff]
    %v1278 = vld [vmem:[#allocation4 + $0x230] sm:$0xff]
    %v1279 = vld [vmem:[#allocation4 + $0x238] sm:$0xff]
    %v1280 = vld [vmem:[#allocation4 + $0x240] sm:$0xff]
    %v1281 = vld [vmem:[#allocation4 + $0x248] sm:$0xff]
    %v1282 = vld [vmem:[#allocation4 + $0x250] sm:$0xff]
    %v1283 = vld [vmem:[#allocation4 + $0x258] sm:$0xff]
    %v1284 = vld [vmem:[#allocation4 + $0x260] sm:$0xff]
    %v1285 = vld [vmem:[#allocation4 + $0x268] sm:$0xff]
    %v1286 = vld [vmem:[#allocation4 + $0x270] sm:$0xff]
    %v1287 = vld [vmem:[#allocation4 + $0x278] sm:$0xff]
    %v1288 = vld [vmem:[#allocation4 + $0x280] sm:$0xff]
    %v1289 = vld [vmem:[#allocation4 + $0x288] sm:$0xff]
    %v1290 = vld [vmem:[#allocation4 + $0x290] sm:$0xff]
    %v1291 = vld [vmem:[#allocation4 + $0x298] sm:$0xff]
    %v1292 = vld [vmem:[#allocation4 + $0x2a0] sm:$0xff]
    %v1293 = vld [vmem:[#allocation4 + $0x2a8] sm:$0xff]
    %v1294 = vld [vmem:[#allocation4 + $0x2b0] sm:$0xff]
    %v1295 = vld [vmem:[#allocation4 + $0x2b8] sm:$0xff]
    %v1296 = vld [vmem:[#allocation4 + $0x2c0] sm:$0xff]
    %v1297 = vld [vmem:[#allocation4 + $0x2c8] sm:$0xff]
    %v1298 = vld [vmem:[#allocation4 + $0x2d0] sm:$0xff]
    %v1299 = vld [vmem:[#allocation4 + $0x2d8] sm:$0xff]
    %v1300 = vld [vmem:[#allocation4 + $0x2e0] sm:$0xff]
    %v1301 = vld [vmem:[#allocation4 + $0x2e8] sm:$0xff]
    %v1302 = vld [vmem:[#allocation4 + $0x2f0] sm:$0xff]
    %v1303 = vld [vmem:[#allocation4 + $0x2f8] sm:$0xff]
    %v1304 = vld [vmem:[#allocation4 + $0x300] sm:$0xff]
    %v1305 = vld [vmem:[#allocation4 + $0x308] sm:$0xff]
    %v1306 = vld [vmem:[#allocation4 + $0x310] sm:$0xff]
    %v1307 = vld [vmem:[#allocation4 + $0x318] sm:$0xff]
    %v1308 = vld [vmem:[#allocation4 + $0x320] sm:$0xff]
    %v1309 = vld [vmem:[#allocation4 + $0x328] sm:$0xff]
    %v1310 = vld [vmem:[#allocation4 + $0x330] sm:$0xff]
    %v1311 = vld [vmem:[#allocation4 + $0x338] sm:$0xff]
    %v1312 = vld [vmem:[#allocation4 + $0x340] sm:$0xff]
    %v1313 = vld [vmem:[#allocation4 + $0x348] sm:$0xff]
    %v1314 = vld [vmem:[#allocation4 + $0x350] sm:$0xff]
    %v1315 = vld [vmem:[#allocation4 + $0x358] sm:$0xff]
    %v1316 = vld [vmem:[#allocation4 + $0x360] sm:$0xff]
    %v1317 = vld [vmem:[#allocation4 + $0x368] sm:$0xff]
    %v1318 = vld [vmem:[#allocation4 + $0x370] sm:$0xff]
    %v1319 = vld [vmem:[#allocation4 + $0x378] sm:$0xff]
    %v1320 = vld [vmem:[#allocation4 + $0x380] sm:$0xff]
    %v1321 = vld [vmem:[#allocation4 + $0x388] sm:$0xff]
    %v1322 = vld [vmem:[#allocation4 + $0x390] sm:$0xff]
    %v1323 = vld [vmem:[#allocation4 + $0x398] sm:$0xff]
    %v1324 = vld [vmem:[#allocation4 + $0x3a0] sm:$0xff]
    %v1325 = vld [vmem:[#allocation4 + $0x3a8] sm:$0xff]
    %v1326 = vld [vmem:[#allocation4 + $0x3b0] sm:$0xff]
    %v1327 = vld [vmem:[#allocation4 + $0x3b8] sm:$0xff]
    %v1328 = vld [vmem:[#allocation4 + $0x3c0] sm:$0xff]
    %v1329 = vld [vmem:[#allocation4 + $0x3c8] sm:$0xff]
    %v1330 = vld [vmem:[#allocation4 + $0x3d0] sm:$0xff]
    %v1331 = vld [vmem:[#allocation4 + $0x3d8] sm:$0xff]
    %v1332 = vld [vmem:[#allocation4 + $0x3e0] sm:$0xff]
    %v1333 = vld [vmem:[#allocation4 + $0x3e8] sm:$0xff]
    %v1334 = vld [vmem:[#allocation4 + $0x3f0] sm:$0xff]
    %v1335 = vld [vmem:[#allocation4 + $0x3f8] sm:$0xff]
    %v1336 = vld [vmem:[#allocation4 + $0x400] sm:$0xff]
    %v1337 = vld [vmem:[#allocation4 + $0x408] sm:$0xff]
    %v1338 = vld [vmem:[#allocation4 + $0x410] sm:$0xff]
    %v1339 = vld [vmem:[#allocation4 + $0x418] sm:$0xff]
    %v1340 = vld [vmem:[#allocation4 + $0x420] sm:$0xff]
    %v1341 = vld [vmem:[#allocation4 + $0x428] sm:$0xff]
    %v1342 = vld [vmem:[#allocation4 + $0x430] sm:$0xff]
    %v1343 = vld [vmem:[#allocation4 + $0x438] sm:$0xff]
    %v1344 = vld [vmem:[#allocation4 + $0x440] sm:$0xff]
    %v1345 = vld [vmem:[#allocation4 + $0x448] sm:$0xff]
    %v1346 = vld [vmem:[#allocation4 + $0x450] sm:$0xff]
    %v1347 = vld [vmem:[#allocation4 + $0x458] sm:$0xff]
    %v1348 = vld [vmem:[#allocation4 + $0x460] sm:$0xff]
    %v1349 = vld [vmem:[#allocation4 + $0x468] sm:$0xff]
    %v1350 = vld [vmem:[#allocation4 + $0x470] sm:$0xff]
    %v1351 = vld [vmem:[#allocation4 + $0x478] sm:$0xff]
    %v1352 = vld [vmem:[#allocation4 + $0x480] sm:$0xff]
    %v1353 = vld [vmem:[#allocation4 + $0x488] sm:$0xff]
    %v1354 = vld [vmem:[#allocation4 + $0x490] sm:$0xff]
    %v1355 = vld [vmem:[#allocation4 + $0x498] sm:$0xff]
    %v1356 = vld [vmem:[#allocation4 + $0x4a0] sm:$0xff]
    %v1357 = vld [vmem:[#allocation4 + $0x4a8] sm:$0xff]
    %v1358 = vld [vmem:[#allocation4 + $0x4b0] sm:$0xff]
    %v1359 = vld [vmem:[#allocation4 + $0x4b8] sm:$0xff]
    %v1360 = vld [vmem:[#allocation4 + $0x4c0] sm:$0xff]
    %v1361 = vld [vmem:[#allocation4 + $0x4c8] sm:$0xff]
    %v1362 = vld [vmem:[#allocation4 + $0x4d0] sm:$0xff]
    %v1363 = vld [vmem:[#allocation4 + $0x4d8] sm:$0xff]
    %v1364 = vld [vmem:[#allocation4 + $0x4e0] sm:$0xff]
    %v1365 = vld [vmem:[#allocation4 + $0x4e8] sm:$0xff]
    %v1366 = vld [vmem:[#allocation4 + $0x4f0] sm:$0xff]
    %v1367 = vld [vmem:[#allocation4 + $0x4f8] sm:$0xff]
    %v1368 = vld [vmem:[#allocation4 + $0x500] sm:$0xff]
    %v1369 = vld [vmem:[#allocation4 + $0x508] sm:$0xff]
    %v1370 = vld [vmem:[#allocation4 + $0x510] sm:$0xff]
    %v1371 = vld [vmem:[#allocation4 + $0x518] sm:$0xff]
    %v1372 = vld [vmem:[#allocation4 + $0x520] sm:$0xff]
    %v1373 = vld [vmem:[#allocation4 + $0x528] sm:$0xff]
    %v1374 = vld [vmem:[#allocation4 + $0x530] sm:$0xff]
    %v1375 = vld [vmem:[#allocation4 + $0x538] sm:$0xff]
    %v1376 = vld [vmem:[#allocation4 + $0x540] sm:$0xff]
    %v1377 = vld [vmem:[#allocation4 + $0x548] sm:$0xff]
    %v1378 = vld [vmem:[#allocation4 + $0x550] sm:$0xff]
    %v1379 = vld [vmem:[#allocation4 + $0x558] sm:$0xff]
    %v1380 = vld [vmem:[#allocation4 + $0x560] sm:$0xff]
    %v1381 = vld [vmem:[#allocation4 + $0x568] sm:$0xff]
    %v1382 = vld [vmem:[#allocation4 + $0x570] sm:$0xff]
    %v1383 = vld [vmem:[#allocation4 + $0x578] sm:$0xff]
    %v1384 = vld [vmem:[#allocation4 + $0x580] sm:$0xff]
    %v1385 = vld [vmem:[#allocation4 + $0x588] sm:$0xff]
    %v1386 = vld [vmem:[#allocation4 + $0x590] sm:$0xff]
    %v1387 = vld [vmem:[#allocation4 + $0x598] sm:$0xff]
    %v1388 = vld [vmem:[#allocation4 + $0x5a0] sm:$0xff]
    %v1389 = vld [vmem:[#allocation4 + $0x5a8] sm:$0xff]
    %v1390 = vld [vmem:[#allocation4 + $0x5b0] sm:$0xff]
    %v1391 = vld [vmem:[#allocation4 + $0x5b8] sm:$0xff]
    %v1392 = vld [vmem:[#allocation4 + $0x5c0] sm:$0xff]
    %v1393 = vld [vmem:[#allocation4 + $0x5c8] sm:$0xff]
    %v1394 = vld [vmem:[#allocation4 + $0x5d0] sm:$0xff]
    %v1395 = vld [vmem:[#allocation4 + $0x5d8] sm:$0xff]
    %v1396 = vld [vmem:[#allocation4 + $0x5e0] sm:$0xff]
    %v1397 = vld [vmem:[#allocation4 + $0x5e8] sm:$0xff]
    %v1398 = vld [vmem:[#allocation4 + $0x5f0] sm:$0xff]
    %v1399 = vld [vmem:[#allocation4 + $0x5f8] sm:$0xff]
    %v1400 = vld [vmem:[#allocation4 + $0x600] sm:$0xff]
    %v1401 = vld [vmem:[#allocation4 + $0x608] sm:$0xff]
    %v1402 = vld [vmem:[#allocation4 + $0x610] sm:$0xff]
    %v1403 = vld [vmem:[#allocation4 + $0x618] sm:$0xff]
    %v1404 = vld [vmem:[#allocation4 + $0x620] sm:$0xff]
    %v1405 = vld [vmem:[#allocation4 + $0x628] sm:$0xff]
    %v1406 = vld [vmem:[#allocation4 + $0x630] sm:$0xff]
    %v1407 = vld [vmem:[#allocation4 + $0x638] sm:$0xff]
    %v1408 = vld [vmem:[#allocation4 + $0x640] sm:$0xff]
    %v1409 = vld [vmem:[#allocation4 + $0x648] sm:$0xff]
    %v1410 = vld [vmem:[#allocation4 + $0x650] sm:$0xff]
    %v1411 = vld [vmem:[#allocation4 + $0x658] sm:$0xff]
    %v1412 = vld [vmem:[#allocation4 + $0x660] sm:$0xff]
    %v1413 = vld [vmem:[#allocation4 + $0x668] sm:$0xff]
    %v1414 = vld [vmem:[#allocation4 + $0x670] sm:$0xff]
    %v1415 = vld [vmem:[#allocation4 + $0x678] sm:$0xff]
    %v1416 = vld [vmem:[#allocation4 + $0x680] sm:$0xff]
    %v1417 = vld [vmem:[#allocation4 + $0x688] sm:$0xff]
    %v1418 = vld [vmem:[#allocation4 + $0x690] sm:$0xff]
    %v1419 = vld [vmem:[#allocation4 + $0x698] sm:$0xff]
    %v1420 = vld [vmem:[#allocation4 + $0x6a0] sm:$0xff]
    %v1421 = vld [vmem:[#allocation4 + $0x6a8] sm:$0xff]
    %v1422 = vld [vmem:[#allocation4 + $0x6b0] sm:$0xff]
    %v1423 = vld [vmem:[#allocation4 + $0x6b8] sm:$0xff]
    %v1424 = vld [vmem:[#allocation4 + $0x6c0] sm:$0xff]
    %v1425 = vld [vmem:[#allocation4 + $0x6c8] sm:$0xff]
    %v1426 = vld [vmem:[#allocation4 + $0x6d0] sm:$0xff]
    %v1427 = vld [vmem:[#allocation4 + $0x6d8] sm:$0xff]
    %v1428 = vld [vmem:[#allocation4 + $0x6e0] sm:$0xff]
    %v1429 = vld [vmem:[#allocation4 + $0x6e8] sm:$0xff]
    %v1430 = vld [vmem:[#allocation4 + $0x6f0] sm:$0xff]
    %v1431 = vld [vmem:[#allocation4 + $0x6f8] sm:$0xff]
    %v1432 = vld [vmem:[#allocation4 + $0x700] sm:$0xff]
    %v1433 = vld [vmem:[#allocation4 + $0x708] sm:$0xff]
    %v1434 = vld [vmem:[#allocation4 + $0x710] sm:$0xff]
    %v1435 = vld [vmem:[#allocation4 + $0x718] sm:$0xff]
    %v1436 = vld [vmem:[#allocation4 + $0x720] sm:$0xff]
    %v1437 = vld [vmem:[#allocation4 + $0x728] sm:$0xff]
    %v1438 = vld [vmem:[#allocation4 + $0x730] sm:$0xff]
    %v1439 = vld [vmem:[#allocation4 + $0x738] sm:$0xff]
    %v1440 = vld [vmem:[#allocation4 + $0x740] sm:$0xff]
    %v1441 = vld [vmem:[#allocation4 + $0x748] sm:$0xff]
    %v1442 = vld [vmem:[#allocation4 + $0x750] sm:$0xff]
    %v1443 = vld [vmem:[#allocation4 + $0x758] sm:$0xff]
    %v1444 = vld [vmem:[#allocation4 + $0x760] sm:$0xff]
    %v1445 = vld [vmem:[#allocation4 + $0x768] sm:$0xff]
    %v1446 = vld [vmem:[#allocation4 + $0x770] sm:$0xff]
    %v1447 = vld [vmem:[#allocation4 + $0x778] sm:$0xff]
    %v1448 = vld [vmem:[#allocation4 + $0x780] sm:$0xff]
    %v1449 = vld [vmem:[#allocation4 + $0x788] sm:$0xff]
    %v1450 = vld [vmem:[#allocation4 + $0x790] sm:$0xff]
    %v1451 = vld [vmem:[#allocation4 + $0x798] sm:$0xff]
    %v1452 = vld [vmem:[#allocation4 + $0x7a0] sm:$0xff]
    %v1453 = vld [vmem:[#allocation4 + $0x7a8] sm:$0xff]
    %v1454 = vld [vmem:[#allocation4 + $0x7b0] sm:$0xff]
    %v1455 = vld [vmem:[#allocation4 + $0x7b8] sm:$0xff]
    %v1456 = vld [vmem:[#allocation4 + $0x7c0] sm:$0xff]
    %v1457 = vld [vmem:[#allocation4 + $0x7c8] sm:$0xff]
    %v1458 = vld [vmem:[#allocation4 + $0x7d0] sm:$0xff]
    %v1459 = vld [vmem:[#allocation4 + $0x7d8] sm:$0xff]
    %v1460 = vld [vmem:[#allocation4 + $0x7e0] sm:$0xff]
    %v1461 = vld [vmem:[#allocation4 + $0x7e8] sm:$0xff]
    %v1462 = vld [vmem:[#allocation4 + $0x7f0] sm:$0xff]
    %v1463 = vld [vmem:[#allocation4 + $0x7f8] sm:$0xff]
    %v1464 = vld [vmem:[#allocation4 + $0x800] sm:$0xff]
    %v1465 = vld [vmem:[#allocation4 + $0x808] sm:$0xff]
    %v1466 = vld [vmem:[#allocation4 + $0x810] sm:$0xff]
    %v1467 = vld [vmem:[#allocation4 + $0x818] sm:$0xff]
    %v1468 = vld [vmem:[#allocation4 + $0x820] sm:$0xff]
    %v1469 = vld [vmem:[#allocation4 + $0x828] sm:$0xff]
    %v1470 = vld [vmem:[#allocation4 + $0x830] sm:$0xff]
    %v1471 = vld [vmem:[#allocation4 + $0x838] sm:$0xff]
    %v1472 = vld [vmem:[#allocation4 + $0x840] sm:$0xff]
    %v1473 = vld [vmem:[#allocation4 + $0x848] sm:$0xff]
    %v1474 = vld [vmem:[#allocation4 + $0x850] sm:$0xff]
    %v1475 = vld [vmem:[#allocation4 + $0x858] sm:$0xff]
    %v1476 = vld [vmem:[#allocation4 + $0x860] sm:$0xff]
    %v1477 = vld [vmem:[#allocation4 + $0x868] sm:$0xff]
    %v1478 = vld [vmem:[#allocation4 + $0x870] sm:$0xff]
    %v1479 = vld [vmem:[#allocation4 + $0x878] sm:$0xff]
    %v1480 = vld [vmem:[#allocation4 + $0x880] sm:$0xff]
    %v1481 = vld [vmem:[#allocation4 + $0x888] sm:$0xff]
    %v1482 = vld [vmem:[#allocation4 + $0x890] sm:$0xff]
    %v1483 = vld [vmem:[#allocation4 + $0x898] sm:$0xff]
    %v1484 = vld [vmem:[#allocation4 + $0x8a0] sm:$0xff]
    %v1485 = vld [vmem:[#allocation4 + $0x8a8] sm:$0xff]
    %v1486 = vld [vmem:[#allocation4 + $0x8b0] sm:$0xff]
    %v1487 = vld [vmem:[#allocation4 + $0x8b8] sm:$0xff]
    %v1488 = vld [vmem:[#allocation4 + $0x8c0] sm:$0xff]
    %v1489 = vld [vmem:[#allocation4 + $0x8c8] sm:$0xff]
    %v1490 = vld [vmem:[#allocation4 + $0x8d0] sm:$0xff]
    %v1491 = vld [vmem:[#allocation4 + $0x8d8] sm:$0xff]
    %v1492 = vld [vmem:[#allocation4 + $0x8e0] sm:$0xff]
    %v1493 = vld [vmem:[#allocation4 + $0x8e8] sm:$0xff]
    %v1494 = vld [vmem:[#allocation4 + $0x8f0] sm:$0xff]
    %v1495 = vld [vmem:[#allocation4 + $0x8f8] sm:$0xff]
    %v1496 = vld [vmem:[#allocation4 + $0x900] sm:$0xff]
    %v1497 = vld [vmem:[#allocation4 + $0x908] sm:$0xff]
    %v1498 = vld [vmem:[#allocation4 + $0x910] sm:$0xff]
    %v1499 = vld [vmem:[#allocation4 + $0x918] sm:$0xff]
    %v1500 = vld [vmem:[#allocation4 + $0x920] sm:$0xff]
    %v1501 = vld [vmem:[#allocation4 + $0x928] sm:$0xff]
    %v1502 = vld [vmem:[#allocation4 + $0x930] sm:$0xff]
    %v1503 = vld [vmem:[#allocation4 + $0x938] sm:$0xff]
    %v1504 = vld [vmem:[#allocation4 + $0x940] sm:$0xff]
    %v1505 = vld [vmem:[#allocation4 + $0x948] sm:$0xff]
    %v1506 = vld [vmem:[#allocation4 + $0x950] sm:$0xff]
    %v1507 = vld [vmem:[#allocation4 + $0x958] sm:$0xff]
    %v1508 = vld [vmem:[#allocation4 + $0x960] sm:$0xff]
    %v1509 = vld [vmem:[#allocation4 + $0x968] sm:$0xff]
    %v1510 = vld [vmem:[#allocation4 + $0x970] sm:$0xff]
    %v1511 = vld [vmem:[#allocation4 + $0x978] sm:$0xff]
    %v1512 = vld [vmem:[#allocation4 + $0x980] sm:$0xff]
    %v1513 = vld [vmem:[#allocation4 + $0x988] sm:$0xff]
    %v1514 = vld [vmem:[#allocation4 + $0x990] sm:$0xff]
    %v1515 = vld [vmem:[#allocation4 + $0x998] sm:$0xff]
    %v1516 = vld [vmem:[#allocation4 + $0x9a0] sm:$0xff]
    %v1517 = vld [vmem:[#allocation4 + $0x9a8] sm:$0xff]
    %v1518 = vld [vmem:[#allocation4 + $0x9b0] sm:$0xff]
    %v1519 = vld [vmem:[#allocation4 + $0x9b8] sm:$0xff]
    %v1520 = vld [vmem:[#allocation4 + $0x9c0] sm:$0xff]
    %v1521 = vld [vmem:[#allocation4 + $0x9c8] sm:$0xff]
    %v1522 = vld [vmem:[#allocation4 + $0x9d0] sm:$0xff]
    %v1523 = vld [vmem:[#allocation4 + $0x9d8] sm:$0xff]
    %v1524 = vld [vmem:[#allocation4 + $0x9e0] sm:$0xff]
    %v1525 = vld [vmem:[#allocation4 + $0x9e8] sm:$0xff]
    %v1526 = vld [vmem:[#allocation4 + $0x9f0] sm:$0xff]
    %v1527 = vld [vmem:[#allocation4 + $0x9f8] sm:$0xff]
    %v1528 = vld [vmem:[#allocation4 + $0xa00] sm:$0xff]
    %v1529 = vld [vmem:[#allocation4 + $0xa08] sm:$0xff]
    %v1530 = vld [vmem:[#allocation4 + $0xa10] sm:$0xff]
    %v1531 = vld [vmem:[#allocation4 + $0xa18] sm:$0xff]
    %v1532 = vld [vmem:[#allocation4 + $0xa20] sm:$0xff]
    %v1533 = vld [vmem:[#allocation4 + $0xa28] sm:$0xff]
    %v1534 = vld [vmem:[#allocation4 + $0xa30] sm:$0xff]
    %v1535 = vld [vmem:[#allocation4 + $0xa38] sm:$0xff]
    %v1536 = vld [vmem:[#allocation4 + $0xa40] sm:$0xff]
    %v1537 = vld [vmem:[#allocation4 + $0xa48] sm:$0xff]
    %v1538 = vld [vmem:[#allocation4 + $0xa50] sm:$0xff]
    %v1539 = vld [vmem:[#allocation4 + $0xa58] sm:$0xff]
    %v1540 = vld [vmem:[#allocation4 + $0xa60] sm:$0xff]
    %v1541 = vld [vmem:[#allocation4 + $0xa68] sm:$0xff]
    %v1542 = vld [vmem:[#allocation4 + $0xa70] sm:$0xff]
    %v1543 = vld [vmem:[#allocation4 + $0xa78] sm:$0xff]
    %v1544 = vld [vmem:[#allocation4 + $0xa80] sm:$0xff]
    %v1545 = vld [vmem:[#allocation4 + $0xa88] sm:$0xff]
    %v1546 = vld [vmem:[#allocation4 + $0xa90] sm:$0xff]
    %v1547 = vld [vmem:[#allocation4 + $0xa98] sm:$0xff]
    %v1548 = vld [vmem:[#allocation4 + $0xaa0] sm:$0xff]
    %v1549 = vld [vmem:[#allocation4 + $0xaa8] sm:$0xff]
    %v1550 = vld [vmem:[#allocation4 + $0xab0] sm:$0xff]
    %v1551 = vld [vmem:[#allocation4 + $0xab8] sm:$0xff]
    %v1552 = vld [vmem:[#allocation4 + $0xac0] sm:$0xff]
    %v1553 = vld [vmem:[#allocation4 + $0xac8] sm:$0xff]
    %v1554 = vld [vmem:[#allocation4 + $0xad0] sm:$0xff]
    %v1555 = vld [vmem:[#allocation4 + $0xad8] sm:$0xff]
    %v1556 = vld [vmem:[#allocation4 + $0xae0] sm:$0xff]
    %v1557 = vld [vmem:[#allocation4 + $0xae8] sm:$0xff]
    %v1558 = vld [vmem:[#allocation4 + $0xaf0] sm:$0xff]
    %v1559 = vld [vmem:[#allocation4 + $0xaf8] sm:$0xff]
    %v1560 = vld [vmem:[#allocation4 + $0xb00] sm:$0xff]
    %v1561 = vld [vmem:[#allocation4 + $0xb08] sm:$0xff]
    %v1562 = vld [vmem:[#allocation4 + $0xb10] sm:$0xff]
    %v1563 = vld [vmem:[#allocation4 + $0xb18] sm:$0xff]
    %v1564 = vld [vmem:[#allocation4 + $0xb20] sm:$0xff]
    %v1565 = vld [vmem:[#allocation4 + $0xb28] sm:$0xff]
    %v1566 = vld [vmem:[#allocation4 + $0xb30] sm:$0xff]
    %v1567 = vld [vmem:[#allocation4 + $0xb38] sm:$0xff]
    %v1568 = vld [vmem:[#allocation4 + $0xb40] sm:$0xff]
    %v1569 = vld [vmem:[#allocation4 + $0xb48] sm:$0xff]
    %v1570 = vld [vmem:[#allocation4 + $0xb50] sm:$0xff]
    %v1571 = vld [vmem:[#allocation4 + $0xb58] sm:$0xff]
    %v1572 = vld [vmem:[#allocation4 + $0xb60] sm:$0xff]
    %v1573 = vld [vmem:[#allocation4 + $0xb68] sm:$0xff]
    %v1574 = vld [vmem:[#allocation4 + $0xb70] sm:$0xff]
    %v1575 = vld [vmem:[#allocation4 + $0xb78] sm:$0xff]
    %v1576 = vld [vmem:[#allocation4 + $0xb80] sm:$0xff]
    %v1577 = vld [vmem:[#allocation4 + $0xb88] sm:$0xff]
    %v1578 = vld [vmem:[#allocation4 + $0xb90] sm:$0xff]
    %v1579 = vld [vmem:[#allocation4 + $0xb98] sm:$0xff]
    %v1580 = vld [vmem:[#allocation4 + $0xba0] sm:$0xff]
    %v1581 = vld [vmem:[#allocation4 + $0xba8] sm:$0xff]
    %v1582 = vld [vmem:[#allocation4 + $0xbb0] sm:$0xff]
    %v1583 = vld [vmem:[#allocation4 + $0xbb8] sm:$0xff]
    %v1584 = vld [vmem:[#allocation4 + $0xbc0] sm:$0xff]
    %v1585 = vld [vmem:[#allocation4 + $0xbc8] sm:$0xff]
    %v1586 = vld [vmem:[#allocation4 + $0xbd0] sm:$0xff]
    %v1587 = vld [vmem:[#allocation4 + $0xbd8] sm:$0xff]
    %v1588 = vld [vmem:[#allocation4 + $0xbe0] sm:$0xff]
    %v1589 = vld [vmem:[#allocation4 + $0xbe8] sm:$0xff]
    %v1590 = vld [vmem:[#allocation4 + $0xbf0] sm:$0xff]
    %v1591 = vld [vmem:[#allocation4 + $0xbf8] sm:$0xff]
    %v1592 = vld [vmem:[#allocation4 + $0xc00] sm:$0xff]
    %v1593 = vld [vmem:[#allocation4 + $0xc08] sm:$0xff]
    %v1594 = vld [vmem:[#allocation4 + $0xc10] sm:$0xff]
    %v1595 = vld [vmem:[#allocation4 + $0xc18] sm:$0xff]
    %v1596 = vld [vmem:[#allocation4 + $0xc20] sm:$0xff]
    %v1597 = vld [vmem:[#allocation4 + $0xc28] sm:$0xff]
    %v1598 = vld [vmem:[#allocation4 + $0xc30] sm:$0xff]
    %v1599 = vld [vmem:[#allocation4 + $0xc38] sm:$0xff]
    %v1600 = vld [vmem:[#allocation4 + $0xc40] sm:$0xff]
    %v1601 = vld [vmem:[#allocation4 + $0xc48] sm:$0xff]
    %v1602 = vld [vmem:[#allocation4 + $0xc50] sm:$0xff]
    %v1603 = vld [vmem:[#allocation4 + $0xc58] sm:$0xff]
    %v1604 = vld [vmem:[#allocation4 + $0xc60] sm:$0xff]
    %v1605 = vld [vmem:[#allocation4 + $0xc68] sm:$0xff]
    %v1606 = vld [vmem:[#allocation4 + $0xc70] sm:$0xff]
    %v1607 = vld [vmem:[#allocation4 + $0xc78] sm:$0xff]
    %v1608 = vld [vmem:[#allocation4 + $0xc80] sm:$0xff]
    %v1609 = vld [vmem:[#allocation4 + $0xc88] sm:$0xff]
    %v1610 = vld [vmem:[#allocation4 + $0xc90] sm:$0xff]
    %v1611 = vld [vmem:[#allocation4 + $0xc98] sm:$0xff]
    %v1612 = vld [vmem:[#allocation4 + $0xca0] sm:$0xff]
    %v1613 = vld [vmem:[#allocation4 + $0xca8] sm:$0xff]
    %v1614 = vld [vmem:[#allocation4 + $0xcb0] sm:$0xff]
    %v1615 = vld [vmem:[#allocation4 + $0xcb8] sm:$0xff]
    %v1616 = vld [vmem:[#allocation4 + $0xcc0] sm:$0xff]
    %v1617 = vld [vmem:[#allocation4 + $0xcc8] sm:$0xff]
    %v1618 = vld [vmem:[#allocation4 + $0xcd0] sm:$0xff]
    %v1619 = vld [vmem:[#allocation4 + $0xcd8] sm:$0xff]
    %v1620 = vld [vmem:[#allocation4 + $0xce0] sm:$0xff]
    %v1621 = vld [vmem:[#allocation4 + $0xce8] sm:$0xff]
    %v1622 = vld [vmem:[#allocation4 + $0xcf0] sm:$0xff]
    %v1623 = vld [vmem:[#allocation4 + $0xcf8] sm:$0xff]
    %v1624 = vld [vmem:[#allocation4 + $0xd00] sm:$0xff]
    %v1625 = vld [vmem:[#allocation4 + $0xd08] sm:$0xff]
    %v1626 = vld [vmem:[#allocation4 + $0xd10] sm:$0xff]
    %v1627 = vld [vmem:[#allocation4 + $0xd18] sm:$0xff]
    %v1628 = vld [vmem:[#allocation4 + $0xd20] sm:$0xff]
    %v1629 = vld [vmem:[#allocation4 + $0xd28] sm:$0xff]
    %v1630 = vld [vmem:[#allocation4 + $0xd30] sm:$0xff]
    %v1631 = vld [vmem:[#allocation4 + $0xd38] sm:$0xff]
    %v1632 = vld [vmem:[#allocation4 + $0xd40] sm:$0xff]
    %v1633 = vld [vmem:[#allocation4 + $0xd48] sm:$0xff]
    %v1634 = vld [vmem:[#allocation4 + $0xd50] sm:$0xff]
    %v1635 = vld [vmem:[#allocation4 + $0xd58] sm:$0xff]
    %v1636 = vld [vmem:[#allocation4 + $0xd60] sm:$0xff]
    %v1637 = vld [vmem:[#allocation4 + $0xd68] sm:$0xff]
    %v1638 = vld [vmem:[#allocation4 + $0xd70] sm:$0xff]
    %v1639 = vld [vmem:[#allocation4 + $0xd78] sm:$0xff]
    %v1640 = vld [vmem:[#allocation4 + $0xd80] sm:$0xff]
    %v1641 = vld [vmem:[#allocation4 + $0xd88] sm:$0xff]
    %s1642 = scalar_lea.vmem [#allocation4], 3472
    %v1643 = vld [vmem:[%s1642] sm:$0xff]
    %v1644 = vld [vmem:[%s1642 + $0x8] sm:$0xff]
    %v1645 = vld [vmem:[%s1642 + $0x10] sm:$0xff]
    %v1646 = vld [vmem:[%s1642 + $0x18] sm:$0xff]
    %v1647 = vld [vmem:[%s1642 + $0x20] sm:$0xff]
    %v1648 = vld [vmem:[%s1642 + $0x28] sm:$0xff]
    %v1649 = vld [vmem:[%s1642 + $0x30] sm:$0xff]
    %v1650 = vld [vmem:[%s1642 + $0x38] sm:$0xff]
    %v1651 = vld [vmem:[%s1642 + $0x40] sm:$0xff]
    %v1652 = vld [vmem:[%s1642 + $0x48] sm:$0xff]
    %v1653 = vld [vmem:[%s1642 + $0x50] sm:$0xff]
    %v1654 = vld [vmem:[%s1642 + $0x58] sm:$0xff]
    %v1655 = vld [vmem:[%s1642 + $0x60] sm:$0xff]
    %v1656 = vld [vmem:[%s1642 + $0x68] sm:$0xff]
    %v1657 = vld [vmem:[%s1642 + $0x70] sm:$0xff]
    %v1658 = vld [vmem:[%s1642 + $0x78] sm:$0xff]
    %v1659 = vld [vmem:[%s1642 + $0x80] sm:$0xff]
    %v1660 = vld [vmem:[%s1642 + $0x88] sm:$0xff]
    %v1661 = vld [vmem:[%s1642 + $0x90] sm:$0xff]
    %v1662 = vld [vmem:[%s1642 + $0x98] sm:$0xff]
    %v1663 = vld [vmem:[%s1642 + $0xa0] sm:$0xff]
    %v1664 = vld [vmem:[%s1642 + $0xa8] sm:$0xff]
    %v1665 = vld [vmem:[%s1642 + $0xb0] sm:$0xff]
    %v1666 = vld [vmem:[%s1642 + $0xb8] sm:$0xff]
    %v1667 = vld [vmem:[%s1642 + $0xc0] sm:$0xff]
    %v1668 = vld [vmem:[%s1642 + $0xc8] sm:$0xff]
    %v1669 = vld [vmem:[%s1642 + $0xd0] sm:$0xff]
    %v1670 = vld [vmem:[%s1642 + $0xd8] sm:$0xff]
    %v1671 = vld [vmem:[%s1642 + $0xe0] sm:$0xff]
    %v1672 = vld [vmem:[%s1642 + $0xe8] sm:$0xff]
    %v1673 = vld [vmem:[%s1642 + $0xf0] sm:$0xff]
    %v1674 = vld [vmem:[%s1642 + $0xf8] sm:$0xff]
    %v1675 = vld [vmem:[%s1642 + $0x100] sm:$0xff]
    %v1676 = vld [vmem:[%s1642 + $0x108] sm:$0xff]
    %v1677 = vld [vmem:[%s1642 + $0x110] sm:$0xff]
    %v1678 = vld [vmem:[%s1642 + $0x118] sm:$0xff]
    %v1679 = vld [vmem:[%s1642 + $0x120] sm:$0xff]
    %v1680 = vld [vmem:[%s1642 + $0x128] sm:$0xff]
    %v1681 = vld [vmem:[%s1642 + $0x130] sm:$0xff]
    %v1682 = vld [vmem:[%s1642 + $0x138] sm:$0xff]
    %v1683 = vld [vmem:[%s1642 + $0x140] sm:$0xff]
    %v1684 = vld [vmem:[%s1642 + $0x148] sm:$0xff]
    %v1685 = vld [vmem:[%s1642 + $0x150] sm:$0xff]
    %v1686 = vld [vmem:[%s1642 + $0x158] sm:$0xff]
    %v1687 = vld [vmem:[%s1642 + $0x160] sm:$0xff]
    %v1688 = vld [vmem:[%s1642 + $0x168] sm:$0xff]
    %v1689 = vld [vmem:[%s1642 + $0x170] sm:$0xff]
    %v1690 = vld [vmem:[%s1642 + $0x178] sm:$0xff]
    %v1691 = vld [vmem:[%s1642 + $0x180] sm:$0xff]
    %v1692 = vld [vmem:[%s1642 + $0x188] sm:$0xff]
    %v1693 = vld [vmem:[%s1642 + $0x190] sm:$0xff]
    %v1694 = vld [vmem:[%s1642 + $0x198] sm:$0xff]
    %v1695 = vld [vmem:[%s1642 + $0x1a0] sm:$0xff]
    %v1696 = vld [vmem:[%s1642 + $0x1a8] sm:$0xff]
    %v1697 = vld [vmem:[%s1642 + $0x1b0] sm:$0xff]
    %v1698 = vld [vmem:[%s1642 + $0x1b8] sm:$0xff]
    %v1699 = vld [vmem:[%s1642 + $0x1c0] sm:$0xff]
    %v1700 = vld [vmem:[%s1642 + $0x1c8] sm:$0xff]
    %v1701 = vld [vmem:[%s1642 + $0x1d0] sm:$0xff]
    %v1702 = vld [vmem:[%s1642 + $0x1d8] sm:$0xff]
    %v1703 = vld [vmem:[%s1642 + $0x1e0] sm:$0xff]
    %v1704 = vld [vmem:[%s1642 + $0x1e8] sm:$0xff]
    %v1705 = vld [vmem:[%s1642 + $0x1f0] sm:$0xff]
    %v1706 = vld [vmem:[%s1642 + $0x1f8] sm:$0xff]
    %v1707 = vld [vmem:[%s1642 + $0x200] sm:$0xff]
    %v1708 = vld [vmem:[%s1642 + $0x208] sm:$0xff]
    %v1709 = vld [vmem:[%s1642 + $0x210] sm:$0xff]
    %v1710 = vld [vmem:[%s1642 + $0x218] sm:$0xff]
    %v1711 = vld [vmem:[%s1642 + $0x220] sm:$0xff]
    %v1712 = vld [vmem:[%s1642 + $0x228] sm:$0xff]
    %v1713 = vld [vmem:[%s1642 + $0x230] sm:$0xff]
    %v1714 = vld [vmem:[%s1642 + $0x238] sm:$0xff]
    %v1715 = vld [vmem:[%s1642 + $0x240] sm:$0xff]
    %v1716 = vld [vmem:[%s1642 + $0x248] sm:$0xff]
    %v1717 = vld [vmem:[%s1642 + $0x250] sm:$0xff]
    %v1718 = vld [vmem:[%s1642 + $0x258] sm:$0xff]
    %v1719 = vld [vmem:[%s1642 + $0x260] sm:$0xff]
    %v1720 = vld [vmem:[%s1642 + $0x268] sm:$0xff]
    %v1721 = vld [vmem:[%s1642 + $0x270] sm:$0xff]
    %v1722 = vld [vmem:[%s1642 + $0x278] sm:$0xff]
    %v1723 = vld [vmem:[%s1642 + $0x280] sm:$0xff]
    %v1724 = vld [vmem:[%s1642 + $0x288] sm:$0xff]
    %v1725 = vld [vmem:[%s1642 + $0x290] sm:$0xff]
    %v1726 = vld [vmem:[%s1642 + $0x298] sm:$0xff]
    %v1727 = vld [vmem:[%s1642 + $0x2a0] sm:$0xff]
    %v1728 = vld [vmem:[%s1642 + $0x2a8] sm:$0xff]
    %v1729 = vld [vmem:[%s1642 + $0x2b0] sm:$0xff]
    %v1730 = vld [vmem:[%s1642 + $0x2b8] sm:$0xff]
    %v1731 = vld [vmem:[%s1642 + $0x2c0] sm:$0xff]
    %v1732 = vld [vmem:[%s1642 + $0x2c8] sm:$0xff]
    %v1733 = vld [vmem:[%s1642 + $0x2d0] sm:$0xff]
    %v1734 = vld [vmem:[%s1642 + $0x2d8] sm:$0xff]
    %v1735 = vld [vmem:[%s1642 + $0x2e0] sm:$0xff]
    %v1736 = vld [vmem:[%s1642 + $0x2e8] sm:$0xff]
    %v1737 = vld [vmem:[%s1642 + $0x2f0] sm:$0xff]
    %v1738 = vld [vmem:[%s1642 + $0x2f8] sm:$0xff]
    %v1739 = vld [vmem:[%s1642 + $0x300] sm:$0xff]
    %v1740 = vld [vmem:[%s1642 + $0x308] sm:$0xff]
    %v1741 = vld [vmem:[%s1642 + $0x310] sm:$0xff]
    %v1742 = vld [vmem:[%s1642 + $0x318] sm:$0xff]
    %v1743 = vld [vmem:[%s1642 + $0x320] sm:$0xff]
    %v1744 = vld [vmem:[%s1642 + $0x328] sm:$0xff]
    %v1745 = vld [vmem:[%s1642 + $0x330] sm:$0xff]
    %v1746 = vld [vmem:[%s1642 + $0x338] sm:$0xff]
    %v1747 = vld [vmem:[%s1642 + $0x340] sm:$0xff]
    %v1748 = vld [vmem:[%s1642 + $0x348] sm:$0xff]
    %v1749 = vld [vmem:[%s1642 + $0x350] sm:$0xff]
    %v1750 = vld [vmem:[%s1642 + $0x358] sm:$0xff]
    %v1751 = vld [vmem:[%s1642 + $0x360] sm:$0xff]
    %v1752 = vld [vmem:[%s1642 + $0x368] sm:$0xff]
    %v1753 = vld [vmem:[%s1642 + $0x370] sm:$0xff]
    %v1754 = vld [vmem:[%s1642 + $0x378] sm:$0xff]
    %v1755 = vld [vmem:[%s1642 + $0x380] sm:$0xff]
    %v1756 = vld [vmem:[%s1642 + $0x388] sm:$0xff]
    %v1757 = vld [vmem:[%s1642 + $0x390] sm:$0xff]
    %v1758 = vld [vmem:[%s1642 + $0x398] sm:$0xff]
    %v1759 = vld [vmem:[%s1642 + $0x3a0] sm:$0xff]
    %v1760 = vld [vmem:[%s1642 + $0x3a8] sm:$0xff]
    %v1761 = vld [vmem:[%s1642 + $0x3b0] sm:$0xff]
    %v1762 = vld [vmem:[%s1642 + $0x3b8] sm:$0xff]
    %v1763 = vld [vmem:[%s1642 + $0x3c0] sm:$0xff]
    %v1764 = vld [vmem:[%s1642 + $0x3c8] sm:$0xff]
    %v1765 = vld [vmem:[%s1642 + $0x3d0] sm:$0xff]
    %v1766 = vld [vmem:[%s1642 + $0x3d8] sm:$0xff]
    %v1767 = vld [vmem:[%s1642 + $0x3e0] sm:$0xff]
    %v1768 = vld [vmem:[%s1642 + $0x3e8] sm:$0xff]
    %v1769 = vld [vmem:[%s1642 + $0x3f0] sm:$0xff]
    %v1770 = vld [vmem:[%s1642 + $0x3f8] sm:$0xff]
    %v1771 = vld [vmem:[%s1642 + $0x400] sm:$0xff]
    %v1772 = vld [vmem:[%s1642 + $0x408] sm:$0xff]
    %v1773 = vld [vmem:[%s1642 + $0x410] sm:$0xff]
    %v1774 = vld [vmem:[%s1642 + $0x418] sm:$0xff]
    %v1775 = vld [vmem:[%s1642 + $0x420] sm:$0xff]
    %v1776 = vld [vmem:[%s1642 + $0x428] sm:$0xff]
    %v1777 = vld [vmem:[%s1642 + $0x430] sm:$0xff]
    %v1778 = vld [vmem:[%s1642 + $0x438] sm:$0xff]
    %v1779 = vld [vmem:[%s1642 + $0x440] sm:$0xff]
    %v1780 = vld [vmem:[%s1642 + $0x448] sm:$0xff]
    %v1781 = vld [vmem:[%s1642 + $0x450] sm:$0xff]
    %v1782 = vld [vmem:[%s1642 + $0x458] sm:$0xff]
    %v1783 = vld [vmem:[%s1642 + $0x460] sm:$0xff]
    %v1784 = vld [vmem:[%s1642 + $0x468] sm:$0xff]
    %v1785 = vld [vmem:[%s1642 + $0x470] sm:$0xff]
    %v1786 = vld [vmem:[%s1642 + $0x478] sm:$0xff]
    %v1787 = vld [vmem:[%s1642 + $0x480] sm:$0xff]
    %v1788 = vld [vmem:[%s1642 + $0x488] sm:$0xff]
    %v1789 = vld [vmem:[%s1642 + $0x490] sm:$0xff]
    %v1790 = vld [vmem:[%s1642 + $0x498] sm:$0xff]
    %v1791 = vld [vmem:[%s1642 + $0x4a0] sm:$0xff]
    %v1792 = vld [vmem:[%s1642 + $0x4a8] sm:$0xff]
    %v1793 = vld [vmem:[%s1642 + $0x4b0] sm:$0xff]
    %v1794 = vld [vmem:[%s1642 + $0x4b8] sm:$0xff]
    %v1795 = vld [vmem:[%s1642 + $0x4c0] sm:$0xff]
    %v1796 = vld [vmem:[%s1642 + $0x4c8] sm:$0xff]
    %v1797 = vld [vmem:[%s1642 + $0x4d0] sm:$0xff]
    %v1798 = vld [vmem:[%s1642 + $0x4d8] sm:$0xff]
    %v1799 = vld [vmem:[%s1642 + $0x4e0] sm:$0xff]
    %v1800 = vld [vmem:[%s1642 + $0x4e8] sm:$0xff]
    %v1801 = vld [vmem:[%s1642 + $0x4f0] sm:$0xff]
    %v1802 = vld [vmem:[%s1642 + $0x4f8] sm:$0xff]
    %v1803 = vld [vmem:[%s1642 + $0x500] sm:$0xff]
    %v1804 = vld [vmem:[%s1642 + $0x508] sm:$0xff]
    %v1805 = vld [vmem:[%s1642 + $0x510] sm:$0xff]
    %v1806 = vld [vmem:[%s1642 + $0x518] sm:$0xff]
    %v1807 = vld [vmem:[%s1642 + $0x520] sm:$0xff]
    %v1808 = vld [vmem:[%s1642 + $0x528] sm:$0xff]
    %v1809 = vld [vmem:[%s1642 + $0x530] sm:$0xff]
    %v1810 = vld [vmem:[%s1642 + $0x538] sm:$0xff]
    %v1811 = vld [vmem:[%s1642 + $0x540] sm:$0xff]
    %v1812 = vld [vmem:[%s1642 + $0x548] sm:$0xff]
    %v1813 = vld [vmem:[%s1642 + $0x550] sm:$0xff]
    %v1814 = vld [vmem:[%s1642 + $0x558] sm:$0xff]
    %v1815 = vld [vmem:[%s1642 + $0x560] sm:$0xff]
    %v1816 = vld [vmem:[%s1642 + $0x568] sm:$0xff]
    %v1817 = vld [vmem:[%s1642 + $0x570] sm:$0xff]
    %v1818 = vld [vmem:[%s1642 + $0x578] sm:$0xff]
    %v1819 = vld [vmem:[%s1642 + $0x580] sm:$0xff]
    %v1820 = vld [vmem:[%s1642 + $0x588] sm:$0xff]
    %v1821 = vld [vmem:[%s1642 + $0x590] sm:$0xff]
    %v1822 = vld [vmem:[%s1642 + $0x598] sm:$0xff]
    %v1823 = vld [vmem:[%s1642 + $0x5a0] sm:$0xff]
    %v1824 = vld [vmem:[%s1642 + $0x5a8] sm:$0xff]
    %v1825 = vld [vmem:[%s1642 + $0x5b0] sm:$0xff]
    %v1826 = vld [vmem:[%s1642 + $0x5b8] sm:$0xff]
    %v1827 = vld [vmem:[%s1642 + $0x5c0] sm:$0xff]
    %v1828 = vld [vmem:[%s1642 + $0x5c8] sm:$0xff]
    %v1829 = vld [vmem:[%s1642 + $0x5d0] sm:$0xff]
    %v1830 = vld [vmem:[%s1642 + $0x5d8] sm:$0xff]
    %v1831 = vld [vmem:[%s1642 + $0x5e0] sm:$0xff]
    %v1832 = vld [vmem:[%s1642 + $0x5e8] sm:$0xff]
    %v1833 = vld [vmem:[%s1642 + $0x5f0] sm:$0xff]
    %v1834 = vld [vmem:[%s1642 + $0x5f8] sm:$0xff]
    %v1835 = vld [vmem:[%s1642 + $0x600] sm:$0xff]
    %v1836 = vld [vmem:[%s1642 + $0x608] sm:$0xff]
    %v1837 = vld [vmem:[%s1642 + $0x610] sm:$0xff]
    %v1838 = vld [vmem:[%s1642 + $0x618] sm:$0xff]
    %v1839 = vld [vmem:[%s1642 + $0x620] sm:$0xff]
    %v1840 = vld [vmem:[%s1642 + $0x628] sm:$0xff]
    %v1841 = vld [vmem:[%s1642 + $0x630] sm:$0xff]
    %v1842 = vld [vmem:[%s1642 + $0x638] sm:$0xff]
    %v1843 = vld [vmem:[%s1642 + $0x640] sm:$0xff]
    %v1844 = vld [vmem:[%s1642 + $0x648] sm:$0xff]
    %v1845 = vld [vmem:[%s1642 + $0x650] sm:$0xff]
    %v1846 = vld [vmem:[%s1642 + $0x658] sm:$0xff]
    %v1847 = vld [vmem:[%s1642 + $0x660] sm:$0xff]
    %v1848 = vld [vmem:[%s1642 + $0x668] sm:$0xff]
    %v1849 = vld [vmem:[%s1642 + $0x670] sm:$0xff]
    %v1850 = vld [vmem:[%s1642 + $0x678] sm:$0xff]
    %v1851 = vld [vmem:[%s1642 + $0x680] sm:$0xff]
    %v1852 = vld [vmem:[%s1642 + $0x688] sm:$0xff]
    %v1853 = vld [vmem:[%s1642 + $0x690] sm:$0xff]
    %v1854 = vld [vmem:[%s1642 + $0x698] sm:$0xff]
    %v1855 = vld [vmem:[%s1642 + $0x6a0] sm:$0xff]
    %v1856 = vld [vmem:[%s1642 + $0x6a8] sm:$0xff]
    %v1857 = vld [vmem:[%s1642 + $0x6b0] sm:$0xff]
    %v1858 = vld [vmem:[%s1642 + $0x6b8] sm:$0xff]
    %v1859 = vld [vmem:[%s1642 + $0x6c0] sm:$0xff]
    %v1860 = vld [vmem:[%s1642 + $0x6c8] sm:$0xff]
    %v1861 = vld [vmem:[%s1642 + $0x6d0] sm:$0xff]
    %v1862 = vld [vmem:[%s1642 + $0x6d8] sm:$0xff]
    %v1863 = vld [vmem:[%s1642 + $0x6e0] sm:$0xff]
    %v1864 = vld [vmem:[%s1642 + $0x6e8] sm:$0xff]
    %v1865 = vld [vmem:[%s1642 + $0x6f0] sm:$0xff]
    %v1866 = vld [vmem:[%s1642 + $0x6f8] sm:$0xff]
    %v1867 = vld [vmem:[%s1642 + $0x700] sm:$0xff]
    %v1868 = vld [vmem:[%s1642 + $0x708] sm:$0xff]
    %v1869 = vld [vmem:[%s1642 + $0x710] sm:$0xff]
    %v1870 = vld [vmem:[%s1642 + $0x718] sm:$0xff]
    %v1871 = vld [vmem:[%s1642 + $0x720] sm:$0xff]
    %v1872 = vld [vmem:[%s1642 + $0x728] sm:$0xff]
    %v1873 = vld [vmem:[%s1642 + $0x730] sm:$0xff]
    %v1874 = vld [vmem:[%s1642 + $0x738] sm:$0xff]
    %v1875 = vld [vmem:[%s1642 + $0x740] sm:$0xff]
    %v1876 = vld [vmem:[%s1642 + $0x748] sm:$0xff]
    %v1877 = vld [vmem:[%s1642 + $0x750] sm:$0xff]
    %v1878 = vld [vmem:[%s1642 + $0x758] sm:$0xff]
    %v1879 = vld [vmem:[%s1642 + $0x760] sm:$0xff]
    %v1880 = vld [vmem:[%s1642 + $0x768] sm:$0xff]
    %v1881 = vld [vmem:[%s1642 + $0x770] sm:$0xff]
    %v1882 = vld [vmem:[%s1642 + $0x778] sm:$0xff]
    %v1883 = vld [vmem:[%s1642 + $0x780] sm:$0xff]
    %v1884 = vld [vmem:[%s1642 + $0x788] sm:$0xff]
    %v1885 = vld [vmem:[%s1642 + $0x790] sm:$0xff]
    %v1886 = vld [vmem:[%s1642 + $0x798] sm:$0xff]
    %v1887 = vld [vmem:[%s1642 + $0x7a0] sm:$0xff]
    %v1888 = vld [vmem:[%s1642 + $0x7a8] sm:$0xff]
    %v1889 = vld [vmem:[%s1642 + $0x7b0] sm:$0xff]
    %v1890 = vld [vmem:[%s1642 + $0x7b8] sm:$0xff]
    %v1891 = vld [vmem:[%s1642 + $0x7c0] sm:$0xff]
    %v1892 = vld [vmem:[%s1642 + $0x7c8] sm:$0xff]
    %v1893 = vld [vmem:[%s1642 + $0x7d0] sm:$0xff]
    %v1894 = vld [vmem:[%s1642 + $0x7d8] sm:$0xff]
    %v1895 = vld [vmem:[%s1642 + $0x7e0] sm:$0xff]
    %v1896 = vld [vmem:[%s1642 + $0x7e8] sm:$0xff]
    %v1897 = vld [vmem:[%s1642 + $0x7f0] sm:$0xff]
    %v1898 = vld [vmem:[%s1642 + $0x7f8] sm:$0xff]
    %v1899 = vld [vmem:[%s1642 + $0x800] sm:$0xff]
    %v1900 = vld [vmem:[%s1642 + $0x808] sm:$0xff]
    %v1901 = vld [vmem:[%s1642 + $0x810] sm:$0xff]
    %v1902 = vld [vmem:[%s1642 + $0x818] sm:$0xff]
    %v1903 = vld [vmem:[%s1642 + $0x820] sm:$0xff]
    %v1904 = vld [vmem:[%s1642 + $0x828] sm:$0xff]
    %v1905 = vld [vmem:[%s1642 + $0x830] sm:$0xff]
    %v1906 = vld [vmem:[%s1642 + $0x838] sm:$0xff]
    %v1907 = vld [vmem:[%s1642 + $0x840] sm:$0xff]
    %v1908 = vld [vmem:[%s1642 + $0x848] sm:$0xff]
    %v1909 = vld [vmem:[%s1642 + $0x850] sm:$0xff]
    %v1910 = vld [vmem:[%s1642 + $0x858] sm:$0xff]
    %v1911 = vld [vmem:[%s1642 + $0x860] sm:$0xff]
    %v1912 = vld [vmem:[%s1642 + $0x868] sm:$0xff]
    %v1913 = vld [vmem:[%s1642 + $0x870] sm:$0xff]
    %v1914 = vld [vmem:[%s1642 + $0x878] sm:$0xff]
    %v1915 = vld [vmem:[%s1642 + $0x880] sm:$0xff]
    %v1916 = vld [vmem:[%s1642 + $0x888] sm:$0xff]
    %v1917 = vld [vmem:[%s1642 + $0x890] sm:$0xff]
    %v1918 = vld [vmem:[%s1642 + $0x898] sm:$0xff]
    %v1919 = vld [vmem:[%s1642 + $0x8a0] sm:$0xff]
    %v1920 = vld [vmem:[%s1642 + $0x8a8] sm:$0xff]
    %v1921 = vld [vmem:[%s1642 + $0x8b0] sm:$0xff]
    %v1922 = vld [vmem:[%s1642 + $0x8b8] sm:$0xff]
    %v1923 = vld [vmem:[%s1642 + $0x8c0] sm:$0xff]
    %v1924 = vld [vmem:[%s1642 + $0x8c8] sm:$0xff]
    %v1925 = vld [vmem:[%s1642 + $0x8d0] sm:$0xff]
    %v1926 = vld [vmem:[%s1642 + $0x8d8] sm:$0xff]
    %v1927 = vld [vmem:[%s1642 + $0x8e0] sm:$0xff]
    %v1928 = vld [vmem:[%s1642 + $0x8e8] sm:$0xff]
    %v1929 = vld [vmem:[%s1642 + $0x8f0] sm:$0xff]
    %v1930 = vld [vmem:[%s1642 + $0x8f8] sm:$0xff]
    %v1931 = vld [vmem:[%s1642 + $0x900] sm:$0xff]
    %v1932 = vld [vmem:[%s1642 + $0x908] sm:$0xff]
    %v1933 = vld [vmem:[%s1642 + $0x910] sm:$0xff]
    %v1934 = vld [vmem:[%s1642 + $0x918] sm:$0xff]
    %v1935 = vld [vmem:[%s1642 + $0x920] sm:$0xff]
    %v1936 = vld [vmem:[%s1642 + $0x928] sm:$0xff]
    %v1937 = vld [vmem:[%s1642 + $0x930] sm:$0xff]
    %v1938 = vld [vmem:[%s1642 + $0x938] sm:$0xff]
    %v1939 = vld [vmem:[%s1642 + $0x940] sm:$0xff]
    %v1940 = vld [vmem:[%s1642 + $0x948] sm:$0xff]
    %v1941 = vld [vmem:[%s1642 + $0x950] sm:$0xff]
    %v1942 = vld [vmem:[%s1642 + $0x958] sm:$0xff]
    %v1943 = vld [vmem:[%s1642 + $0x960] sm:$0xff]
    %v1944 = vld [vmem:[%s1642 + $0x968] sm:$0xff]
    %v1945 = vld [vmem:[%s1642 + $0x970] sm:$0xff]
    %v1946 = vld [vmem:[%s1642 + $0x978] sm:$0xff]
    %v1947 = vld [vmem:[%s1642 + $0x980] sm:$0xff]
    %v1948 = vld [vmem:[%s1642 + $0x988] sm:$0xff]
    %v1949 = vld [vmem:[%s1642 + $0x990] sm:$0xff]
    %v1950 = vld [vmem:[%s1642 + $0x998] sm:$0xff]
    %v1951 = vld [vmem:[%s1642 + $0x9a0] sm:$0xff]
    %v1952 = vld [vmem:[%s1642 + $0x9a8] sm:$0xff]
    %v1953 = vld [vmem:[%s1642 + $0x9b0] sm:$0xff]
    %v1954 = vld [vmem:[%s1642 + $0x9b8] sm:$0xff]
    %v1955 = vld [vmem:[%s1642 + $0x9c0] sm:$0xff]
    %v1956 = vld [vmem:[%s1642 + $0x9c8] sm:$0xff]
    %v1957 = vld [vmem:[%s1642 + $0x9d0] sm:$0xff]
    %v1958 = vld [vmem:[%s1642 + $0x9d8] sm:$0xff]
    %v1959 = vld [vmem:[%s1642 + $0x9e0] sm:$0xff]
    %v1960 = vld [vmem:[%s1642 + $0x9e8] sm:$0xff]
    %v1961 = vld [vmem:[%s1642 + $0x9f0] sm:$0xff]
    %v1962 = vld [vmem:[%s1642 + $0x9f8] sm:$0xff]
    %v1963 = vld [vmem:[%s1642 + $0xa00] sm:$0xff]
    %v1964 = vld [vmem:[%s1642 + $0xa08] sm:$0xff]
    %v1965 = vld [vmem:[%s1642 + $0xa10] sm:$0xff]
    %v1966 = vld [vmem:[%s1642 + $0xa18] sm:$0xff]
    %v1967 = vld [vmem:[%s1642 + $0xa20] sm:$0xff]
    %v1968 = vld [vmem:[%s1642 + $0xa28] sm:$0xff]
    %v1969 = vld [vmem:[%s1642 + $0xa30] sm:$0xff]
    %v1970 = vld [vmem:[%s1642 + $0xa38] sm:$0xff]
    %v1971 = vld [vmem:[%s1642 + $0xa40] sm:$0xff]
    %v1972 = vld [vmem:[%s1642 + $0xa48] sm:$0xff]
    %v1973 = vld [vmem:[%s1642 + $0xa50] sm:$0xff]
    %v1974 = vld [vmem:[%s1642 + $0xa58] sm:$0xff]
    %v1975 = vld [vmem:[%s1642 + $0xa60] sm:$0xff]
    %v1976 = vld [vmem:[%s1642 + $0xa68] sm:$0xff]
    %v1977 = vld [vmem:[%s1642 + $0xa70] sm:$0xff]
    %v1978 = vld [vmem:[%s1642 + $0xa78] sm:$0xff]
    %v1979 = vld [vmem:[%s1642 + $0xa80] sm:$0xff]
    %v1980 = vld [vmem:[%s1642 + $0xa88] sm:$0xff]
    %v1981 = vld [vmem:[%s1642 + $0xa90] sm:$0xff]
    %v1982 = vld [vmem:[%s1642 + $0xa98] sm:$0xff]
    %v1983 = vld [vmem:[%s1642 + $0xaa0] sm:$0xff]
    %v1984 = vld [vmem:[%s1642 + $0xaa8] sm:$0xff]
    %v1985 = vld [vmem:[%s1642 + $0xab0] sm:$0xff]
    %v1986 = vld [vmem:[%s1642 + $0xab8] sm:$0xff]
    %v1987 = vld [vmem:[%s1642 + $0xac0] sm:$0xff]
    %v1988 = vld [vmem:[%s1642 + $0xac8] sm:$0xff]
    %v1989 = vld [vmem:[%s1642 + $0xad0] sm:$0xff]
    %v1990 = vld [vmem:[%s1642 + $0xad8] sm:$0xff]
    %v1991 = vld [vmem:[%s1642 + $0xae0] sm:$0xff]
    %v1992 = vld [vmem:[%s1642 + $0xae8] sm:$0xff]
    %v1993 = vld [vmem:[%s1642 + $0xaf0] sm:$0xff]
    %v1994 = vld [vmem:[%s1642 + $0xaf8] sm:$0xff]
    %v1995 = vld [vmem:[%s1642 + $0xb00] sm:$0xff]
    %v1996 = vld [vmem:[%s1642 + $0xb08] sm:$0xff]
    %v1997 = vld [vmem:[%s1642 + $0xb10] sm:$0xff]
    %v1998 = vld [vmem:[%s1642 + $0xb18] sm:$0xff]
    %v1999 = vld [vmem:[%s1642 + $0xb20] sm:$0xff]
    %v2000 = vld [vmem:[%s1642 + $0xb28] sm:$0xff]
    %v2001 = vld [vmem:[%s1642 + $0xb30] sm:$0xff]
    %v2002 = vld [vmem:[%s1642 + $0xb38] sm:$0xff]
    %v2003 = vld [vmem:[%s1642 + $0xb40] sm:$0xff]
    %v2004 = vld [vmem:[%s1642 + $0xb48] sm:$0xff]
    %v2005 = vld [vmem:[%s1642 + $0xb50] sm:$0xff]
    %v2006 = vld [vmem:[%s1642 + $0xb58] sm:$0xff]
    %v2007 = vld [vmem:[%s1642 + $0xb60] sm:$0xff]
    %v2008 = vld [vmem:[%s1642 + $0xb68] sm:$0xff]
    %v2009 = vld [vmem:[%s1642 + $0xb70] sm:$0xff]
    %v2010 = vld [vmem:[%s1642 + $0xb78] sm:$0xff]
    %v2011 = vld [vmem:[%s1642 + $0xb80] sm:$0xff]
    %v2012 = vld [vmem:[%s1642 + $0xb88] sm:$0xff]
    %v2013 = vld [vmem:[%s1642 + $0xb90] sm:$0xff]
    %v2014 = vld [vmem:[%s1642 + $0xb98] sm:$0xff]
    %v2015 = vld [vmem:[%s1642 + $0xba0] sm:$0xff]
    %v2016 = vld [vmem:[%s1642 + $0xba8] sm:$0xff]
    %v2017 = vld [vmem:[%s1642 + $0xbb0] sm:$0xff]
    %v2018 = vld [vmem:[%s1642 + $0xbb8] sm:$0xff]
    %v2019 = vld [vmem:[%s1642 + $0xbc0] sm:$0xff]
    %v2020 = vld [vmem:[%s1642 + $0xbc8] sm:$0xff]
    %v2021 = vld [vmem:[%s1642 + $0xbd0] sm:$0xff]
    %v2022 = vld [vmem:[%s1642 + $0xbd8] sm:$0xff]
    %v2023 = vld [vmem:[%s1642 + $0xbe0] sm:$0xff]
    %v2024 = vld [vmem:[%s1642 + $0xbe8] sm:$0xff]
    %v2025 = vld [vmem:[%s1642 + $0xbf0] sm:$0xff]
    %v2026 = vld [vmem:[%s1642 + $0xbf8] sm:$0xff]
    %v2027 = vld [vmem:[%s1642 + $0xc00] sm:$0xff]
    %v2028 = vld [vmem:[%s1642 + $0xc08] sm:$0xff]
    %v2029 = vld [vmem:[%s1642 + $0xc10] sm:$0xff]
    %v2030 = vld [vmem:[%s1642 + $0xc18] sm:$0xff]
    %v2031 = vld [vmem:[%s1642 + $0xc20] sm:$0xff]
    %v2032 = vld [vmem:[%s1642 + $0xc28] sm:$0xff]
    %v2033 = vld [vmem:[%s1642 + $0xc30] sm:$0xff]
    %v2034 = vld [vmem:[%s1642 + $0xc38] sm:$0xff]
    %v2035 = vld [vmem:[%s1642 + $0xc40] sm:$0xff]
    %v2036 = vld [vmem:[%s1642 + $0xc48] sm:$0xff]
    %v2037 = vld [vmem:[%s1642 + $0xc50] sm:$0xff]
    %v2038 = vld [vmem:[%s1642 + $0xc58] sm:$0xff]
    %v2039 = vld [vmem:[%s1642 + $0xc60] sm:$0xff]
    %v2040 = vld [vmem:[%s1642 + $0xc68] sm:$0xff]
    %v2041 = vld [vmem:[%s1642 + $0xc70] sm:$0xff]
    %v2042 = vld [vmem:[%s1642 + $0xc78] sm:$0xff]
    %v2043 = vld [vmem:[%s1642 + $0xc80] sm:$0xff]
    %v2044 = vld [vmem:[%s1642 + $0xc88] sm:$0xff]
    %v2045 = vld [vmem:[%s1642 + $0xc90] sm:$0xff]
    %v2046 = vld [vmem:[%s1642 + $0xc98] sm:$0xff]
    %v2047 = vld [vmem:[%s1642 + $0xca0] sm:$0xff]
    %v2048 = vld [vmem:[%s1642 + $0xca8] sm:$0xff]
    %v2049 = vld [vmem:[%s1642 + $0xcb0] sm:$0xff]
    %v2050 = vld [vmem:[%s1642 + $0xcb8] sm:$0xff]
    %v2051 = vld [vmem:[%s1642 + $0xcc0] sm:$0xff]
    %v2052 = vld [vmem:[%s1642 + $0xcc8] sm:$0xff]
    %v2053 = vld [vmem:[%s1642 + $0xcd0] sm:$0xff]
    %v2054 = vld [vmem:[%s1642 + $0xcd8] sm:$0xff]
    %v2055 = vld [vmem:[%s1642 + $0xce0] sm:$0xff]
    %v2056 = vld [vmem:[%s1642 + $0xce8] sm:$0xff]
    %v2057 = vld [vmem:[%s1642 + $0xcf0] sm:$0xff]
    %v2058 = vld [vmem:[%s1642 + $0xcf8] sm:$0xff]
    %v2059 = vld [vmem:[%s1642 + $0xd00] sm:$0xff]
    %v2060 = vld [vmem:[%s1642 + $0xd08] sm:$0xff]
    %v2061 = vld [vmem:[%s1642 + $0xd10] sm:$0xff]
    %v2062 = vld [vmem:[%s1642 + $0xd18] sm:$0xff]
    %v2063 = vld [vmem:[%s1642 + $0xd20] sm:$0xff]
    %v2064 = vld [vmem:[%s1642 + $0xd28] sm:$0xff]
    %v2065 = vld [vmem:[%s1642 + $0xd30] sm:$0xff]
    %v2066 = vld [vmem:[%s1642 + $0xd38] sm:$0xff]
    %v2067 = vld [vmem:[%s1642 + $0xd40] sm:$0xff]
    %v2068 = vld [vmem:[%s1642 + $0xd48] sm:$0xff]
    %v2069 = vld [vmem:[%s1642 + $0xd50] sm:$0xff]
    %v2070 = vld [vmem:[%s1642 + $0xd58] sm:$0xff]
    %v2071 = vld [vmem:[%s1642 + $0xd60] sm:$0xff]
    %v2072 = vld [vmem:[%s1642 + $0xd68] sm:$0xff]
    %v2073 = vld [vmem:[%s1642 + $0xd70] sm:$0xff]
    %v2074 = vld [vmem:[%s1642 + $0xd78] sm:$0xff]
    %v2075 = vld [vmem:[%s1642 + $0xd80] sm:$0xff]
    %v2076 = vld [vmem:[%s1642 + $0xd88] sm:$0xff]
    %v2077 = vsel %vm821, %v1121, 0
    %v2079 = vsel %vm821, %v1129, 0
    %v2081 = vsel %vm821, %v1137, 0
    %v2084 = vsel %vm821, %v1203, 0
    %v2086 = vsel %vm821, %v1149, 0
    %v2088 = vsel %vm821, %v1157, 0
    %v2090 = vsel %vm821, %v1165, 0
    %v2093 = vsel %vm821, %v1207, 0
    %2095 = vmatprep.subr.mxu0 %v1644
    %2096 = vmatpush1.msra.mxu0 %v1643
    %2097 = vmatprep.subr.mxu0 %v1651
    %2098 = vmatpush1.msra.mxu0 %v1650
    %2099 = vmatprep.subr.mxu0 %v1658
    %2100 = vmatpush1.msra.mxu0 %v1657
    %2101 = vmatprep.subr.mxu0 %v1665
    %2102 = vmatpush1.msra.mxu0 %v1664
    %2103 = vmatprep.subr.mxu0 %v1672
    %2104 = vmatpush1.msra.mxu0 %v1671
    %2105 = vmatprep.subr.mxu0 %v1679
    %2106 = vmatpush1.msra.mxu0 %v1678
    %2107 = vmatprep.subr.mxu0 %v1686
    %2108 = vmatpush1.msra.mxu0 %v1685
    %2109 = vmatprep.subr.mxu0 %v1693
    %2110 = vmatpush1.msra.mxu0 %v1692
    %2111 = vmatprep.subr.mxu0 %v1700
    %2112 = vmatpush1.msra.mxu0 %v1699
    %2113 = vmatprep.subr.mxu0 %v1707
    %2114 = vmatpush1.msra.mxu0 %v1706
    %2115 = vmatprep.subr.mxu0 %v1714
    %2116 = vmatpush1.msra.mxu0 %v1713
    %2117 = vmatprep.subr.mxu0 %v1721
    %2118 = vmatpush1.msra.mxu0 %v1720
    %2119 = vmatprep.subr.mxu0 %v1728
    %2120 = vmatpush1.msra.mxu0 %v1727
    %2121 = vmatprep.subr.mxu0 %v1735
    %2122 = vmatpush1.msra.mxu0 %v1734
    %2123 = vmatprep.subr.mxu0 %v1742
    %2124 = vmatpush1.msra.mxu0 %v1741
    %2125 = vmatprep.subr.mxu0 %v1749
    %2126 = vmatpush1.msra.mxu0 %v1748
    %2127 = vmatprep.subr.mxu0 %v1756
    %2128 = vmatpush1.msra.mxu0 %v1755
    %2129 = vmatprep.subr.mxu0 %v1763
    %2130 = vmatpush1.msra.mxu0 %v1762
    %2131 = vmatprep.subr.mxu0 %v1770
    %2132 = vmatpush1.msra.mxu0 %v1769
    %2133 = vmatprep.subr.mxu0 %v1777
    %2134 = vmatpush1.msra.mxu0 %v1776
    %2135 = vmatprep.subr.mxu0 %v1784
    %2136 = vmatpush1.msra.mxu0 %v1783
    %2137 = vmatprep.subr.mxu0 %v1791
    %2138 = vmatpush1.msra.mxu0 %v1790
    %2139 = vmatprep.subr.mxu0 %v1798
    %2140 = vmatpush1.msra.mxu0 %v1797
    %2141 = vmatprep.subr.mxu0 %v1805
    %2142 = vmatpush1.msra.mxu0 %v1804
    %2143 = vmatprep.subr.mxu0 %v1812
    %2144 = vmatpush1.msra.mxu0 %v1811
    %2145 = vmatprep.subr.mxu0 %v1819
    %2146 = vmatpush1.msra.mxu0 %v1818
    %2147 = vmatprep.subr.mxu0 %v1826
    %2148 = vmatpush1.msra.mxu0 %v1825
    %2149 = vmatprep.subr.mxu0 %v1833
    %2150 = vmatpush1.msra.mxu0 %v1832
    %2151 = vmatprep.subr.mxu0 %v1840
    %2152 = vmatpush1.msra.mxu0 %v1839
    %2153 = vmatprep.subr.mxu0 %v1847
    %2154 = vmatpush1.msra.mxu0 %v1846
    %2155 = vmatprep.subr.mxu0 %v1854
    %2156 = vmatpush1.msra.mxu0 %v1853
    %2157 = vmatprep.subr.mxu0 %v1861
    %2158 = vmatpush1.msra.mxu0 %v1860
    %2159 = vmatprep.mubr.f32.mxu0 %v1115
    %2160 = vmatmul.mubr.f32.gmra.mrb[0].mxu0 %v1112
    %v2161 = vpop.f32.mrb[0].mxu0
    %v2162 = vadd.f32 0.0, %v2161
    %v2163 = vpop.f32.mrb[0].mxu0
    %v2164 = vadd.f32 0.0, %v2163
    %2165 = vmatprep.mubr.f32.mxu0 %v1125
    %2166 = vmatmul.mubr.f32.gmra.mrb[0].mxu0 %v1123
    %v2167 = vpop.f32.mrb[0].mxu0
    %v2168 = vadd.f32 0.0, %v2167
    %v2169 = vpop.f32.mrb[0].mxu0
    %v2170 = vadd.f32 0.0, %v2169
    %2171 = vmatprep.mubr.f32.mxu0 %v1133
    %2172 = vmatmul.mubr.f32.gmra.mrb[0].mxu0 %v1131
    %v2173 = vpop.f32.mrb[0].mxu0
    %v2174 = vadd.f32 0.0, %v2173
    %v2175 = vpop.f32.mrb[0].mxu0
    %v2176 = vadd.f32 0.0, %v2175
    %2177 = vmatprep.mubr.f32.mxu0 %v1201
    %2178 = vmatmul.mubr.f32.gmra.mrb[0].mxu0 %v1200
    %v2179 = vpop.f32.mrb[0].mxu0
    %v2180 = vadd.f32 0.0, %v2179
    %v2181 = vpop.f32.mrb[0].mxu0
    %v2182 = vadd.f32 0.0, %v2181
    %2183 = vmatprep.mubr.f32.mxu0 %v1143
    %2184 = vmatmul.mubr.f32.gmra.mrb[0].mxu0 %v1140
    %v2185 = vpop.f32.mrb[0].mxu0
    %v2186 = vadd.f32 0.0, %v2185
    %v2187 = vpop.f32.mrb[0].mxu0
    %v2188 = vadd.f32 0.0, %v2187
    %2189 = vmatprep.mubr.f32.mxu0 %v1153
    %2190 = vmatmul.mubr.f32.gmra.mrb[0].mxu0 %v1151
    %v2191 = vpop.f32.mrb[0].mxu0
    %v2192 = vadd.f32 0.0, %v2191
    %v2193 = vpop.f32.mrb[0].mxu0
    %v2194 = vadd.f32 0.0, %v2193
    %2195 = vmatprep.mubr.f32.mxu0 %v1161
    %2196 = vmatmul.mubr.f32.gmra.mrb[0].mxu0 %v1159
    %v2197 = vpop.f32.mrb[0].mxu0
    %v2198 = vadd.f32 0.0, %v2197
    %v2199 = vpop.f32.mrb[0].mxu0
    %v2200 = vadd.f32 0.0, %v2199
    %2201 = vmatprep.mubr.f32.mxu0 %v1205
    %2202 = vmatmul.mubr.f32.gmra.mrb[0].mxu0 %v1204
    %v2203 = vpop.f32.mrb[0].mxu0
    %v2204 = vadd.f32 0.0, %v2203
    %v2205 = vpop.f32.mrb[0].mxu0
    %v2206 = vadd.f32 0.0, %v2205
    %2207 = vdwg.mxu0
    %2208 = vmatprep.subr.mxu0 %v1868
    %2209 = vmatpush1.msra.mxu0 %v1867
    %2210 = vmatprep.subr.mxu0 %v1875
    %2211 = vmatpush1.msra.mxu0 %v1874
    %2212 = vmatprep.subr.mxu0 %v1882
    %2213 = vmatpush1.msra.mxu0 %v1881
    %2214 = vmatprep.subr.mxu0 %v1889
    %2215 = vmatpush1.msra.mxu0 %v1888
    %2216 = vmatprep.subr.mxu0 %v1896
    %2217 = vmatpush1.msra.mxu0 %v1895
    %2218 = vmatprep.subr.mxu0 %v1903
    %2219 = vmatpush1.msra.mxu0 %v1902
    %2220 = vmatprep.subr.mxu0 %v1910
    %2221 = vmatpush1.msra.mxu0 %v1909
    %2222 = vmatprep.subr.mxu0 %v1917
    %2223 = vmatpush1.msra.mxu0 %v1916
    %2224 = vmatprep.subr.mxu0 %v1924
    %2225 = vmatpush1.msra.mxu0 %v1923
    %2226 = vmatprep.subr.mxu0 %v1931
    %2227 = vmatpush1.msra.mxu0 %v1930
    %2228 = vmatprep.subr.mxu0 %v1938
    %2229 = vmatpush1.msra.mxu0 %v1937
    %2230 = vmatprep.subr.mxu0 %v1945
    %2231 = vmatpush1.msra.mxu0 %v1944
    %2232 = vmatprep.subr.mxu0 %v1952
    %2233 = vmatpush1.msra.mxu0 %v1951
    %2234 = vmatprep.subr.mxu0 %v1959
    %2235 = vmatpush1.msra.mxu0 %v1958
    %2236 = vmatprep.subr.mxu0 %v1966
    %2237 = vmatpush1.msra.mxu0 %v1965
    %2238 = vmatprep.subr.mxu0 %v1973
    %2239 = vmatpush1.msra.mxu0 %v1972
    %2240 = vmatprep.subr.mxu0 %v1980
    %2241 = vmatpush1.msra.mxu0 %v1979
    %2242 = vmatprep.subr.mxu0 %v1987
    %2243 = vmatpush1.msra.mxu0 %v1986
    %2244 = vmatprep.subr.mxu0 %v1994
    %2245 = vmatpush1.msra.mxu0 %v1993
    %2246 = vmatprep.subr.mxu0 %v2001
    %2247 = vmatpush1.msra.mxu0 %v2000
    %2248 = vmatprep.subr.mxu0 %v2008
    %2249 = vmatpush1.msra.mxu0 %v2007
    %2250 = vmatprep.subr.mxu0 %v2015
    %2251 = vmatpush1.msra.mxu0 %v2014
    %2252 = vmatprep.subr.mxu0 %v2022
    %2253 = vmatpush1.msra.mxu0 %v2021
    %2254 = vmatprep.subr.mxu0 %v2029
    %2255 = vmatpush1.msra.mxu0 %v2028
    %2256 = vmatprep.subr.mxu0 %v2036
    %2257 = vmatpush1.msra.mxu0 %v2035
    %2258 = vmatprep.subr.mxu0 %v2043
    %2259 = vmatpush1.msra.mxu0 %v2042
    %2260 = vmatprep.subr.mxu0 %v2050
    %2261 = vmatpush1.msra.mxu0 %v2049
    %2262 = vmatprep.subr.mxu0 %v2057
    %2263 = vmatpush1.msra.mxu0 %v2056
    %2264 = vmatprep.subr.mxu0 %v2064
    %2265 = vmatpush1.msra.mxu0 %v2063
    %2266 = vmatprep.subr.mxu0 %v2071
    %2267 = vmatpush1.msra.mxu0 %v2070
    %2268 = vmatprep.subr.mxu0 0.0
    %2269 = vmatpush1.msra.mxu0 0.0
    %2270 = vmatprep.subr.mxu0 0.0
    %2271 = vmatpush1.msra.mxu0 0.0
    %2272 = vmatprep.mubr.f32.mxu0 %v2077
    %2273 = vmatmul.mubr.f32.gmra.mrb[0].mxu0 %v1118
    %v2274 = vpop.f32.mrb[0].mxu0
    %v2275 = vadd.f32 %v2162, %v2274
    %v2276 = vpop.f32.mrb[0].mxu0
    %v2277 = vadd.f32 %v2164, %v2276
    %2278 = vmatprep.mubr.f32.mxu0 %v2079
    %2279 = vmatmul.mubr.f32.gmra.mrb[0].mxu0 %v1127
    %v2280 = vpop.f32.mrb[0].mxu0
    %v2281 = vadd.f32 %v2168, %v2280
    %v2282 = vpop.f32.mrb[0].mxu0
    %v2283 = vadd.f32 %v2170, %v2282
    %2284 = vmatprep.mubr.f32.mxu0 %v2081
    %2285 = vmatmul.mubr.f32.gmra.mrb[0].mxu0 %v1135
    %v2286 = vpop.f32.mrb[0].mxu0
    %v2287 = vadd.f32 %v2174, %v2286
    %v2288 = vpop.f32.mrb[0].mxu0
    %v2289 = vadd.f32 %v2176, %v2288
    %2290 = vmatprep.mubr.f32.mxu0 %v2084
    %2291 = vmatmul.mubr.f32.gmra.mrb[0].mxu0 %v1202
    %v2292 = vpop.f32.mrb[0].mxu0
    %v2293 = vadd.f32 %v2180, %v2292
    %v2294 = vpop.f32.mrb[0].mxu0
    %v2295 = vadd.f32 %v2182, %v2294
    %2296 = vmatprep.mubr.f32.mxu0 %v2086
    %2297 = vmatmul.mubr.f32.gmra.mrb[0].mxu0 %v1146
    %v2298 = vpop.f32.mrb[0].mxu0
    %v2299 = vadd.f32 %v2186, %v2298
    %v2300 = vpop.f32.mrb[0].mxu0
    %v2301 = vadd.f32 %v2188, %v2300
    %2302 = vmatprep.mubr.f32.mxu0 %v2088
    %2303 = vmatmul.mubr.f32.gmra.mrb[0].mxu0 %v1155
    %v2304 = vpop.f32.mrb[0].mxu0
    %v2305 = vadd.f32 %v2192, %v2304
    %v2306 = vpop.f32.mrb[0].mxu0
    %v2307 = vadd.f32 %v2194, %v2306
    %2308 = vmatprep.mubr.f32.mxu0 %v2090
    %2309 = vmatmul.mubr.f32.gmra.mrb[0].mxu0 %v1163
    %v2310 = vpop.f32.mrb[0].mxu0
    %v2311 = vadd.f32 %v2198, %v2310
    %v2312 = vpop.f32.mrb[0].mxu0
    %v2313 = vadd.f32 %v2200, %v2312
    %2314 = vmatprep.mubr.f32.mxu0 %v2093
    %2315 = vmatmul.mubr.f32.gmra.mrb[0].mxu0 %v1206
    %v2316 = vpop.f32.mrb[0].mxu0
    %v2317 = vadd.f32 %v2204, %v2316
    %v2318 = vpop.f32.mrb[0].mxu0
    %v2319 = vadd.f32 %v2206, %v2318
    %2320 = vdwg.mxu0
    %2321 = vmatprep.subr.mxu0 %v1646
    %2322 = vmatpush1.msra.mxu0 %v1645
    %2323 = vmatprep.subr.mxu0 %v1653
    %2324 = vmatpush1.msra.mxu0 %v1652
    %2325 = vmatprep.subr.mxu0 %v1660
    %2326 = vmatpush1.msra.mxu0 %v1659
    %2327 = vmatprep.subr.mxu0 %v1667
    %2328 = vmatpush1.msra.mxu0 %v1666
    %2329 = vmatprep.subr.mxu0 %v1674
    %2330 = vmatpush1.msra.mxu0 %v1673
    %2331 = vmatprep.subr.mxu0 %v1681
    %2332 = vmatpush1.msra.mxu0 %v1680
    %2333 = vmatprep.subr.mxu0 %v1688
    %2334 = vmatpush1.msra.mxu0 %v1687
    %2335 = vmatprep.subr.mxu0 %v1695
    %2336 = vmatpush1.msra.mxu0 %v1694
    %2337 = vmatprep.subr.mxu0 %v1702
    %2338 = vmatpush1.msra.mxu0 %v1701
    %2339 = vmatprep.subr.mxu0 %v1709
    %2340 = vmatpush1.msra.mxu0 %v1708
    %2341 = vmatprep.subr.mxu0 %v1716
    %2342 = vmatpush1.msra.mxu0 %v1715
    %2343 = vmatprep.subr.mxu0 %v1723
    %2344 = vmatpush1.msra.mxu0 %v1722
    %2345 = vmatprep.subr.mxu0 %v1730
    %2346 = vmatpush1.msra.mxu0 %v1729
    %2347 = vmatprep.subr.mxu0 %v1737
    %2348 = vmatpush1.msra.mxu0 %v1736
    %2349 = vmatprep.subr.mxu0 %v1744
    %2350 = vmatpush1.msra.mxu0 %v1743
    %2351 = vmatprep.subr.mxu0 %v1751
    %2352 = vmatpush1.msra.mxu0 %v1750
    %2353 = vmatprep.subr.mxu0 %v1758
    %2354 = vmatpush1.msra.mxu0 %v1757
    %2355 = vmatprep.subr.mxu0 %v1765
    %2356 = vmatpush1.msra.mxu0 %v1764
    %2357 = vmatprep.subr.mxu0 %v1772
    %2358 = vmatpush1.msra.mxu0 %v1771
    %2359 = vmatprep.subr.mxu0 %v1779
    %2360 = vmatpush1.msra.mxu0 %v1778
    %2361 = vmatprep.subr.mxu0 %v1786
    %2362 = vmatpush1.msra.mxu0 %v1785
    %2363 = vmatprep.subr.mxu0 %v1793
    %2364 = vmatpush1.msra.mxu0 %v1792
    %2365 = vmatprep.subr.mxu0 %v1800
    %2366 = vmatpush1.msra.mxu0 %v1799
    %2367 = vmatprep.subr.mxu0 %v1807
    %2368 = vmatpush1.msra.mxu0 %v1806
    %2369 = vmatprep.subr.mxu0 %v1814
    %2370 = vmatpush1.msra.mxu0 %v1813
    %2371 = vmatprep.subr.mxu0 %v1821
    %2372 = vmatpush1.msra.mxu0 %v1820
    %2373 = vmatprep.subr.mxu0 %v1828
    %2374 = vmatpush1.msra.mxu0 %v1827
    %2375 = vmatprep.subr.mxu0 %v1835
    %2376 = vmatpush1.msra.mxu0 %v1834
    %2377 = vmatprep.subr.mxu0 %v1842
    %2378 = vmatpush1.msra.mxu0 %v1841
    %2379 = vmatprep.subr.mxu0 %v1849
    %2380 = vmatpush1.msra.mxu0 %v1848
    %2381 = vmatprep.subr.mxu0 %v1856
    %2382 = vmatpush1.msra.mxu0 %v1855
    %2383 = vmatprep.subr.mxu0 %v1863
    %2384 = vmatpush1.msra.mxu0 %v1862
    %2385 = vmatprep.mubr.f32.mxu0 %v1115
    %2386 = vmatmul.mubr.f32.gmra.mrb[0].mxu0 %v1112
    %v2387 = vpop.f32.mrb[0].mxu0
    %v2388 = vadd.f32 0.0, %v2387
    %v2389 = vpop.f32.mrb[0].mxu0
    %v2390 = vadd.f32 0.0, %v2389
    %2391 = vmatprep.mubr.f32.mxu0 %v1125
    %2392 = vmatmul.mubr.f32.gmra.mrb[0].mxu0 %v1123
    %v2393 = vpop.f32.mrb[0].mxu0
    %v2394 = vadd.f32 0.0, %v2393
    %v2395 = vpop.f32.mrb[0].mxu0
    %v2396 = vadd.f32 0.0, %v2395
    %2397 = vmatprep.mubr.f32.mxu0 %v1133
    %2398 = vmatmul.mubr.f32.gmra.mrb[0].mxu0 %v1131
    %v2399 = vpop.f32.mrb[0].mxu0
    %v2400 = vadd.f32 0.0, %v2399
    %v2401 = vpop.f32.mrb[0].mxu0
    %v2402 = vadd.f32 0.0, %v2401
    %2403 = vmatprep.mubr.f32.mxu0 %v1201
    %2404 = vmatmul.mubr.f32.gmra.mrb[0].mxu0 %v1200
    %v2405 = vpop.f32.mrb[0].mxu0
    %v2406 = vadd.f32 0.0, %v2405
    %v2407 = vpop.f32.mrb[0].mxu0
    %v2408 = vadd.f32 0.0, %v2407
    %2409 = vmatprep.mubr.f32.mxu0 %v1143
    %2410 = vmatmul.mubr.f32.gmra.mrb[0].mxu0 %v1140
    %v2411 = vpop.f32.mrb[0].mxu0
    %v2412 = vadd.f32 0.0, %v2411
    %v2413 = vpop.f32.mrb[0].mxu0
    %v2414 = vadd.f32 0.0, %v2413
    %2415 = vmatprep.mubr.f32.mxu0 %v1153
    %2416 = vmatmul.mubr.f32.gmra.mrb[0].mxu0 %v1151
    %v2417 = vpop.f32.mrb[0].mxu0
    %v2418 = vadd.f32 0.0, %v2417
    %v2419 = vpop.f32.mrb[0].mxu0
    %v2420 = vadd.f32 0.0, %v2419
    %2421 = vmatprep.mubr.f32.mxu0 %v1161
    %2422 = vmatmul.mubr.f32.gmra.mrb[0].mxu0 %v1159
    %v2423 = vpop.f32.mrb[0].mxu0
    %v2424 = vadd.f32 0.0, %v2423
    %v2425 = vpop.f32.mrb[0].mxu0
    %v2426 = vadd.f32 0.0, %v2425
    %2427 = vmatprep.mubr.f32.mxu0 %v1205
    %2428 = vmatmul.mubr.f32.gmra.mrb[0].mxu0 %v1204
    %v2429 = vpop.f32.mrb[0].mxu0
    %v2430 = vadd.f32 0.0, %v2429
    %v2431 = vpop.f32.mrb[0].mxu0
    %v2432 = vadd.f32 0.0, %v2431
    %2433 = vdwg.mxu0
    %2434 = vmatprep.subr.mxu0 %v1870
    %2435 = vmatpush1.msra.mxu0 %v1869
    %2436 = vmatprep.subr.mxu0 %v1877
    %2437 = vmatpush1.msra.mxu0 %v1876
    %2438 = vmatprep.subr.mxu0 %v1884
    %2439 = vmatpush1.msra.mxu0 %v1883
    %2440 = vmatprep.subr.mxu0 %v1891
    %2441 = vmatpush1.msra.mxu0 %v1890
    %2442 = vmatprep.subr.mxu0 %v1898
    %2443 = vmatpush1.msra.mxu0 %v1897
    %2444 = vmatprep.subr.mxu0 %v1905
    %2445 = vmatpush1.msra.mxu0 %v1904
    %2446 = vmatprep.subr.mxu0 %v1912
    %2447 = vmatpush1.msra.mxu0 %v1911
    %2448 = vmatprep.subr.mxu0 %v1919
    %2449 = vmatpush1.msra.mxu0 %v1918
    %2450 = vmatprep.subr.mxu0 %v1926
    %2451 = vmatpush1.msra.mxu0 %v1925
    %2452 = vmatprep.subr.mxu0 %v1933
    %2453 = vmatpush1.msra.mxu0 %v1932
    %2454 = vmatprep.subr.mxu0 %v1940
    %2455 = vmatpush1.msra.mxu0 %v1939
    %2456 = vmatprep.subr.mxu0 %v1947
    %2457 = vmatpush1.msra.mxu0 %v1946
    %2458 = vmatprep.subr.mxu0 %v1954
    %2459 = vmatpush1.msra.mxu0 %v1953
    %2460 = vmatprep.subr.mxu0 %v1961
    %2461 = vmatpush1.msra.mxu0 %v1960
    %2462 = vmatprep.subr.mxu0 %v1968
    %2463 = vmatpush1.msra.mxu0 %v1967
    %2464 = vmatprep.subr.mxu0 %v1975
    %2465 = vmatpush1.msra.mxu0 %v1974
    %2466 = vmatprep.subr.mxu0 %v1982
    %2467 = vmatpush1.msra.mxu0 %v1981
    %2468 = vmatprep.subr.mxu0 %v1989
    %2469 = vmatpush1.msra.mxu0 %v1988
    %2470 = vmatprep.subr.mxu0 %v1996
    %2471 = vmatpush1.msra.mxu0 %v1995
    %2472 = vmatprep.subr.mxu0 %v2003
    %2473 = vmatpush1.msra.mxu0 %v2002
    %2474 = vmatprep.subr.mxu0 %v2010
    %2475 = vmatpush1.msra.mxu0 %v2009
    %2476 = vmatprep.subr.mxu0 %v2017
    %2477 = vmatpush1.msra.mxu0 %v2016
    %2478 = vmatprep.subr.mxu0 %v2024
    %2479 = vmatpush1.msra.mxu0 %v2023
    %2480 = vmatprep.subr.mxu0 %v2031
    %2481 = vmatpush1.msra.mxu0 %v2030
    %2482 = vmatprep.subr.mxu0 %v2038
    %2483 = vmatpush1.msra.mxu0 %v2037
    %2484 = vmatprep.subr.mxu0 %v2045
    %2485 = vmatpush1.msra.mxu0 %v2044
    %2486 = vmatprep.subr.mxu0 %v2052
    %2487 = vmatpush1.msra.mxu0 %v2051
    %2488 = vmatprep.subr.mxu0 %v2059
    %2489 = vmatpush1.msra.mxu0 %v2058
    %2490 = vmatprep.subr.mxu0 %v2066
    %2491 = vmatpush1.msra.mxu0 %v2065
    %2492 = vmatprep.subr.mxu0 %v2073
    %2493 = vmatpush1.msra.mxu0 %v2072
    %2494 = vmatprep.subr.mxu0 0.0
    %2495 = vmatpush1.msra.mxu0 0.0
    %2496 = vmatprep.subr.mxu0 0.0
    %2497 = vmatpush1.msra.mxu0 0.0
    %2498 = vmatprep.mubr.f32.mxu0 %v2077
    %2499 = vmatmul.mubr.f32.gmra.mrb[0].mxu0 %v1118
    %v2500 = vpop.f32.mrb[0].mxu0
    %v2501 = vadd.f32 %v2388, %v2500
    %v2502 = vpop.f32.mrb[0].mxu0
    %v2503 = vadd.f32 %v2390, %v2502
    %2504 = vmatprep.mubr.f32.mxu0 %v2079
    %2505 = vmatmul.mubr.f32.gmra.mrb[0].mxu0 %v1127
    %v2506 = vpop.f32.mrb[0].mxu0
    %v2507 = vadd.f32 %v2394, %v2506
    %v2508 = vpop.f32.mrb[0].mxu0
    %v2509 = vadd.f32 %v2396, %v2508
    %2510 = vmatprep.mubr.f32.mxu0 %v2081
    %2511 = vmatmul.mubr.f32.gmra.mrb[0].mxu0 %v1135
    %v2512 = vpop.f32.mrb[0].mxu0
    %v2513 = vadd.f32 %v2400, %v2512
    %v2514 = vpop.f32.mrb[0].mxu0
    %v2515 = vadd.f32 %v2402, %v2514
    %2516 = vmatprep.mubr.f32.mxu0 %v2084
    %2517 = vmatmul.mubr.f32.gmra.mrb[0].mxu0 %v1202
    %v2518 = vpop.f32.mrb[0].mxu0
    %v2519 = vadd.f32 %v2406, %v2518
    %v2520 = vpop.f32.mrb[0].mxu0
    %v2521 = vadd.f32 %v2408, %v2520
    %2522 = vmatprep.mubr.f32.mxu0 %v2086
    %2523 = vmatmul.mubr.f32.gmra.mrb[0].mxu0 %v1146
    %v2524 = vpop.f32.mrb[0].mxu0
    %v2525 = vadd.f32 %v2412, %v2524
    %v2526 = vpop.f32.mrb[0].mxu0
    %v2527 = vadd.f32 %v2414, %v2526
    %2528 = vmatprep.mubr.f32.mxu0 %v2088
    %2529 = vmatmul.mubr.f32.gmra.mrb[0].mxu0 %v1155
    %v2530 = vpop.f32.mrb[0].mxu0
    %v2531 = vadd.f32 %v2418, %v2530
    %v2532 = vpop.f32.mrb[0].mxu0
    %v2533 = vadd.f32 %v2420, %v2532
    %2534 = vmatprep.mubr.f32.mxu0 %v2090
    %2535 = vmatmul.mubr.f32.gmra.mrb[0].mxu0 %v1163
    %v2536 = vpop.f32.mrb[0].mxu0
    %v2537 = vadd.f32 %v2424, %v2536
    %v2538 = vpop.f32.mrb[0].mxu0
    %v2539 = vadd.f32 %v2426, %v2538
    %2540 = vmatprep.mubr.f32.mxu0 %v2093
    %2541 = vmatmul.mubr.f32.gmra.mrb[0].mxu0 %v1206
    %v2542 = vpop.f32.mrb[0].mxu0
    %v2543 = vadd.f32 %v2430, %v2542
    %v2544 = vpop.f32.mrb[0].mxu0
    %v2545 = vadd.f32 %v2432, %v2544
    %2546 = vdwg.mxu0
    %2547 = vmatprep.subr.mxu0 %v1648
    %2548 = vmatpush1.msra.mxu0 %v1647
    %2549 = vmatprep.subr.mxu0 %v1655
    %2550 = vmatpush1.msra.mxu0 %v1654
    %2551 = vmatprep.subr.mxu0 %v1662
    %2552 = vmatpush1.msra.mxu0 %v1661
    %2553 = vmatprep.subr.mxu0 %v1669
    %2554 = vmatpush1.msra.mxu0 %v1668
    %2555 = vmatprep.subr.mxu0 %v1676
    %2556 = vmatpush1.msra.mxu0 %v1675
    %2557 = vmatprep.subr.mxu0 %v1683
    %2558 = vmatpush1.msra.mxu0 %v1682
    %2559 = vmatprep.subr.mxu0 %v1690
    %2560 = vmatpush1.msra.mxu0 %v1689
    %2561 = vmatprep.subr.mxu0 %v1697
    %2562 = vmatpush1.msra.mxu0 %v1696
    %2563 = vmatprep.subr.mxu0 %v1704
    %2564 = vmatpush1.msra.mxu0 %v1703
    %2565 = vmatprep.subr.mxu0 %v1711
    %2566 = vmatpush1.msra.mxu0 %v1710
    %2567 = vmatprep.subr.mxu0 %v1718
    %2568 = vmatpush1.msra.mxu0 %v1717
    %2569 = vmatprep.subr.mxu0 %v1725
    %2570 = vmatpush1.msra.mxu0 %v1724
    %2571 = vmatprep.subr.mxu0 %v1732
    %2572 = vmatpush1.msra.mxu0 %v1731
    %2573 = vmatprep.subr.mxu0 %v1739
    %2574 = vmatpush1.msra.mxu0 %v1738
    %2575 = vmatprep.subr.mxu0 %v1746
    %2576 = vmatpush1.msra.mxu0 %v1745
    %2577 = vmatprep.subr.mxu0 %v1753
    %2578 = vmatpush1.msra.mxu0 %v1752
    %2579 = vmatprep.subr.mxu0 %v1760
    %2580 = vmatpush1.msra.mxu0 %v1759
    %2581 = vmatprep.subr.mxu0 %v1767
    %2582 = vmatpush1.msra.mxu0 %v1766
    %2583 = vmatprep.subr.mxu0 %v1774
    %2584 = vmatpush1.msra.mxu0 %v1773
    %2585 = vmatprep.subr.mxu0 %v1781
    %2586 = vmatpush1.msra.mxu0 %v1780
    %2587 = vmatprep.subr.mxu0 %v1788
    %2588 = vmatpush1.msra.mxu0 %v1787
    %2589 = vmatprep.subr.mxu0 %v1795
    %2590 = vmatpush1.msra.mxu0 %v1794
    %2591 = vmatprep.subr.mxu0 %v1802
    %2592 = vmatpush1.msra.mxu0 %v1801
    %2593 = vmatprep.subr.mxu0 %v1809
    %2594 = vmatpush1.msra.mxu0 %v1808
    %2595 = vmatprep.subr.mxu0 %v1816
    %2596 = vmatpush1.msra.mxu0 %v1815
    %2597 = vmatprep.subr.mxu0 %v1823
    %2598 = vmatpush1.msra.mxu0 %v1822
    %2599 = vmatprep.subr.mxu0 %v1830
    %2600 = vmatpush1.msra.mxu0 %v1829
    %2601 = vmatprep.subr.mxu0 %v1837
    %2602 = vmatpush1.msra.mxu0 %v1836
    %2603 = vmatprep.subr.mxu0 %v1844
    %2604 = vmatpush1.msra.mxu0 %v1843
    %2605 = vmatprep.subr.mxu0 %v1851
    %2606 = vmatpush1.msra.mxu0 %v1850
    %2607 = vmatprep.subr.mxu0 %v1858
    %2608 = vmatpush1.msra.mxu0 %v1857
    %2609 = vmatprep.subr.mxu0 %v1865
    %2610 = vmatpush1.msra.mxu0 %v1864
    %2611 = vmatprep.mubr.f32.mxu0 %v1115
    %2612 = vmatmul.mubr.f32.gmra.mrb[0].mxu0 %v1112
    %v2613 = vpop.f32.mrb[0].mxu0
    %v2614 = vadd.f32 0.0, %v2613
    %v2615 = vpop.f32.mrb[0].mxu0
    %v2616 = vadd.f32 0.0, %v2615
    %2617 = vmatprep.mubr.f32.mxu0 %v1125
    %2618 = vmatmul.mubr.f32.gmra.mrb[0].mxu0 %v1123
    %v2619 = vpop.f32.mrb[0].mxu0
    %v2620 = vadd.f32 0.0, %v2619
    %v2621 = vpop.f32.mrb[0].mxu0
    %v2622 = vadd.f32 0.0, %v2621
    %2623 = vmatprep.mubr.f32.mxu0 %v1133
    %2624 = vmatmul.mubr.f32.gmra.mrb[0].mxu0 %v1131
    %v2625 = vpop.f32.mrb[0].mxu0
    %v2626 = vadd.f32 0.0, %v2625
    %v2627 = vpop.f32.mrb[0].mxu0
    %v2628 = vadd.f32 0.0, %v2627
    %2629 = vmatprep.mubr.f32.mxu0 %v1201
    %2630 = vmatmul.mubr.f32.gmra.mrb[0].mxu0 %v1200
    %v2631 = vpop.f32.mrb[0].mxu0
    %v2632 = vadd.f32 0.0, %v2631
    %v2633 = vpop.f32.mrb[0].mxu0
    %v2634 = vadd.f32 0.0, %v2633
    %2635 = vmatprep.mubr.f32.mxu0 %v1143
    %2636 = vmatmul.mubr.f32.gmra.mrb[0].mxu0 %v1140
    %v2637 = vpop.f32.mrb[0].mxu0
    %v2638 = vadd.f32 0.0, %v2637
    %v2639 = vpop.f32.mrb[0].mxu0
    %v2640 = vadd.f32 0.0, %v2639
    %2641 = vmatprep.mubr.f32.mxu0 %v1153
    %2642 = vmatmul.mubr.f32.gmra.mrb[0].mxu0 %v1151
    %v2643 = vpop.f32.mrb[0].mxu0
    %v2644 = vadd.f32 0.0, %v2643
    %v2645 = vpop.f32.mrb[0].mxu0
    %v2646 = vadd.f32 0.0, %v2645
    %2647 = vmatprep.mubr.f32.mxu0 %v1161
    %2648 = vmatmul.mubr.f32.gmra.mrb[0].mxu0 %v1159
    %v2649 = vpop.f32.mrb[0].mxu0
    %v2650 = vadd.f32 0.0, %v2649
    %v2651 = vpop.f32.mrb[0].mxu0
    %v2652 = vadd.f32 0.0, %v2651
    %2653 = vmatprep.mubr.f32.mxu0 %v1205
    %2654 = vmatmul.mubr.f32.gmra.mrb[0].mxu0 %v1204
    %v2655 = vpop.f32.mrb[0].mxu0
    %v2656 = vadd.f32 0.0, %v2655
    %v2657 = vpop.f32.mrb[0].mxu0
    %v2658 = vadd.f32 0.0, %v2657
    %2659 = vdwg.mxu0
    %2660 = vmatprep.subr.mxu0 %v1872
    %2661 = vmatpush1.msra.mxu0 %v1871
    %2662 = vmatprep.subr.mxu0 %v1879
    %2663 = vmatpush1.msra.mxu0 %v1878
    %2664 = vmatprep.subr.mxu0 %v1886
    %2665 = vmatpush1.msra.mxu0 %v1885
    %2666 = vmatprep.subr.mxu0 %v1893
    %2667 = vmatpush1.msra.mxu0 %v1892
    %2668 = vmatprep.subr.mxu0 %v1900
    %2669 = vmatpush1.msra.mxu0 %v1899
    %2670 = vmatprep.subr.mxu0 %v1907
    %2671 = vmatpush1.msra.mxu0 %v1906
    %2672 = vmatprep.subr.mxu0 %v1914
    %2673 = vmatpush1.msra.mxu0 %v1913
    %2674 = vmatprep.subr.mxu0 %v1921
    %2675 = vmatpush1.msra.mxu0 %v1920
    %2676 = vmatprep.subr.mxu0 %v1928
    %2677 = vmatpush1.msra.mxu0 %v1927
    %2678 = vmatprep.subr.mxu0 %v1935
    %2679 = vmatpush1.msra.mxu0 %v1934
    %2680 = vmatprep.subr.mxu0 %v1942
    %2681 = vmatpush1.msra.mxu0 %v1941
    %2682 = vmatprep.subr.mxu0 %v1949
    %2683 = vmatpush1.msra.mxu0 %v1948
    %2684 = vmatprep.subr.mxu0 %v1956
    %2685 = vmatpush1.msra.mxu0 %v1955
    %2686 = vmatprep.subr.mxu0 %v1963
    %2687 = vmatpush1.msra.mxu0 %v1962
    %2688 = vmatprep.subr.mxu0 %v1970
    %2689 = vmatpush1.msra.mxu0 %v1969
    %2690 = vmatprep.subr.mxu0 %v1977
    %2691 = vmatpush1.msra.mxu0 %v1976
    %2692 = vmatprep.subr.mxu0 %v1984
    %2693 = vmatpush1.msra.mxu0 %v1983
    %2694 = vmatprep.subr.mxu0 %v1991
    %2695 = vmatpush1.msra.mxu0 %v1990
    %2696 = vmatprep.subr.mxu0 %v1998
    %2697 = vmatpush1.msra.mxu0 %v1997
    %2698 = vmatprep.subr.mxu0 %v2005
    %2699 = vmatpush1.msra.mxu0 %v2004
    %2700 = vmatprep.subr.mxu0 %v2012
    %2701 = vmatpush1.msra.mxu0 %v2011
    %2702 = vmatprep.subr.mxu0 %v2019
    %2703 = vmatpush1.msra.mxu0 %v2018
    %2704 = vmatprep.subr.mxu0 %v2026
    %2705 = vmatpush1.msra.mxu0 %v2025
    %2706 = vmatprep.subr.mxu0 %v2033
    %2707 = vmatpush1.msra.mxu0 %v2032
    %2708 = vmatprep.subr.mxu0 %v2040
    %2709 = vmatpush1.msra.mxu0 %v2039
    %2710 = vmatprep.subr.mxu0 %v2047
    %2711 = vmatpush1.msra.mxu0 %v2046
    %2712 = vmatprep.subr.mxu0 %v2054
    %2713 = vmatpush1.msra.mxu0 %v2053
    %2714 = vmatprep.subr.mxu0 %v2061
    %2715 = vmatpush1.msra.mxu0 %v2060
    %2716 = vmatprep.subr.mxu0 %v2068
    %2717 = vmatpush1.msra.mxu0 %v2067
    %2718 = vmatprep.subr.mxu0 %v2075
    %2719 = vmatpush1.msra.mxu0 %v2074
    %2720 = vmatprep.subr.mxu0 0.0
    %2721 = vmatpush1.msra.mxu0 0.0
    %2722 = vmatprep.subr.mxu0 0.0
    %2723 = vmatpush1.msra.mxu0 0.0
    %2724 = vmatprep.mubr.f32.mxu0 %v2077
    %2725 = vmatmul.mubr.f32.gmra.mrb[0].mxu0 %v1118
    %v2726 = vpop.f32.mrb[0].mxu0
    %v2727 = vadd.f32 %v2614, %v2726
    %v2728 = vpop.f32.mrb[0].mxu0
    %v2729 = vadd.f32 %v2616, %v2728
    %2730 = vmatprep.mubr.f32.mxu0 %v2079
    %2731 = vmatmul.mubr.f32.gmra.mrb[0].mxu0 %v1127
    %v2732 = vpop.f32.mrb[0].mxu0
    %v2733 = vadd.f32 %v2620, %v2732
    %v2734 = vpop.f32.mrb[0].mxu0
    %v2735 = vadd.f32 %v2622, %v2734
    %2736 = vmatprep.mubr.f32.mxu0 %v2081
    %2737 = vmatmul.mubr.f32.gmra.mrb[0].mxu0 %v1135
    %v2738 = vpop.f32.mrb[0].mxu0
    %v2739 = vadd.f32 %v2626, %v2738
    %v2740 = vpop.f32.mrb[0].mxu0
    %v2741 = vadd.f32 %v2628, %v2740
    %2742 = vmatprep.mubr.f32.mxu0 %v2084
    %2743 = vmatmul.mubr.f32.gmra.mrb[0].mxu0 %v1202
    %v2744 = vpop.f32.mrb[0].mxu0
    %v2745 = vadd.f32 %v2632, %v2744
    %v2746 = vpop.f32.mrb[0].mxu0
    %v2747 = vadd.f32 %v2634, %v2746
    %2748 = vmatprep.mubr.f32.mxu0 %v2086
    %2749 = vmatmul.mubr.f32.gmra.mrb[0].mxu0 %v1146
    %v2750 = vpop.f32.mrb[0].mxu0
    %v2751 = vadd.f32 %v2638, %v2750
    %v2752 = vpop.f32.mrb[0].mxu0
    %v2753 = vadd.f32 %v2640, %v2752
    %2754 = vmatprep.mubr.f32.mxu0 %v2088
    %2755 = vmatmul.mubr.f32.gmra.mrb[0].mxu0 %v1155
    %v2756 = vpop.f32.mrb[0].mxu0
    %v2757 = vadd.f32 %v2644, %v2756
    %v2758 = vpop.f32.mrb[0].mxu0
    %v2759 = vadd.f32 %v2646, %v2758
    %2760 = vmatprep.mubr.f32.mxu0 %v2090
    %2761 = vmatmul.mubr.f32.gmra.mrb[0].mxu0 %v1163
    %v2762 = vpop.f32.mrb[0].mxu0
    %v2763 = vadd.f32 %v2650, %v2762
    %v2764 = vpop.f32.mrb[0].mxu0
    %v2765 = vadd.f32 %v2652, %v2764
    %2766 = vmatprep.mubr.f32.mxu0 %v2093
    %2767 = vmatmul.mubr.f32.gmra.mrb[0].mxu0 %v1206
    %v2768 = vpop.f32.mrb[0].mxu0
    %v2769 = vadd.f32 %v2656, %v2768
    %v2770 = vpop.f32.mrb[0].mxu0
    %v2771 = vadd.f32 %v2658, %v2770
    %2772 = vdwg.mxu0
    %2773 = vmatprep.subr.mxu0 0.0
    %2774 = vmatpush1.msra.mxu0 %v1649
    %2775 = vmatprep.subr.mxu0 0.0
    %2776 = vmatpush1.msra.mxu0 %v1656
    %2777 = vmatprep.subr.mxu0 0.0
    %2778 = vmatpush1.msra.mxu0 %v1663
    %2779 = vmatprep.subr.mxu0 0.0
    %2780 = vmatpush1.msra.mxu0 %v1670
    %2781 = vmatprep.subr.mxu0 0.0
    %2782 = vmatpush1.msra.mxu0 %v1677
    %2783 = vmatprep.subr.mxu0 0.0
    %2784 = vmatpush1.msra.mxu0 %v1684
    %2785 = vmatprep.subr.mxu0 0.0
    %2786 = vmatpush1.msra.mxu0 %v1691
    %2787 = vmatprep.subr.mxu0 0.0
    %2788 = vmatpush1.msra.mxu0 %v1698
    %2789 = vmatprep.subr.mxu0 0.0
    %2790 = vmatpush1.msra.mxu0 %v1705
    %2791 = vmatprep.subr.mxu0 0.0
    %2792 = vmatpush1.msra.mxu0 %v1712
    %2793 = vmatprep.subr.mxu0 0.0
    %2794 = vmatpush1.msra.mxu0 %v1719
    %2795 = vmatprep.subr.mxu0 0.0
    %2796 = vmatpush1.msra.mxu0 %v1726
    %2797 = vmatprep.subr.mxu0 0.0
    %2798 = vmatpush1.msra.mxu0 %v1733
    %2799 = vmatprep.subr.mxu0 0.0
    %2800 = vmatpush1.msra.mxu0 %v1740
    %2801 = vmatprep.subr.mxu0 0.0
    %2802 = vmatpush1.msra.mxu0 %v1747
    %2803 = vmatprep.subr.mxu0 0.0
    %2804 = vmatpush1.msra.mxu0 %v1754
    %2805 = vmatprep.subr.mxu0 0.0
    %2806 = vmatpush1.msra.mxu0 %v1761
    %2807 = vmatprep.subr.mxu0 0.0
    %2808 = vmatpush1.msra.mxu0 %v1768
    %2809 = vmatprep.subr.mxu0 0.0
    %2810 = vmatpush1.msra.mxu0 %v1775
    %2811 = vmatprep.subr.mxu0 0.0
    %2812 = vmatpush1.msra.mxu0 %v1782
    %2813 = vmatprep.subr.mxu0 0.0
    %2814 = vmatpush1.msra.mxu0 %v1789
    %2815 = vmatprep.subr.mxu0 0.0
    %2816 = vmatpush1.msra.mxu0 %v1796
    %2817 = vmatprep.subr.mxu0 0.0
    %2818 = vmatpush1.msra.mxu0 %v1803
    %2819 = vmatprep.subr.mxu0 0.0
    %2820 = vmatpush1.msra.mxu0 %v1810
    %2821 = vmatprep.subr.mxu0 0.0
    %2822 = vmatpush1.msra.mxu0 %v1817
    %2823 = vmatprep.subr.mxu0 0.0
    %2824 = vmatpush1.msra.mxu0 %v1824
    %2825 = vmatprep.subr.mxu0 0.0
    %2826 = vmatpush1.msra.mxu0 %v1831
    %2827 = vmatprep.subr.mxu0 0.0
    %2828 = vmatpush1.msra.mxu0 %v1838
    %2829 = vmatprep.subr.mxu0 0.0
    %2830 = vmatpush1.msra.mxu0 %v1845
    %2831 = vmatprep.subr.mxu0 0.0
    %2832 = vmatpush1.msra.mxu0 %v1852
    %2833 = vmatprep.subr.mxu0 0.0
    %2834 = vmatpush1.msra.mxu0 %v1859
    %2835 = vmatprep.subr.mxu0 0.0
    %2836 = vmatpush1.msra.mxu0 %v1866
    %2837 = vmatprep.mubr.f32.mxu0 %v1115
    %2838 = vmatmul.mubr.f32.gmra.mrb[0].mxu0 %v1112
    %v2839 = vpop.f32.mrb[0].mxu0
    %v2840 = vadd.f32 0.0, %v2839
    %v2841 = vpop.f32.mrb[0].mxu0
    %2842 = vmatprep.mubr.f32.mxu0 %v1125
    %2843 = vmatmul.mubr.f32.gmra.mrb[0].mxu0 %v1123
    %v2844 = vpop.f32.mrb[0].mxu0
    %v2845 = vadd.f32 0.0, %v2844
    %v2846 = vpop.f32.mrb[0].mxu0
    %2847 = vmatprep.mubr.f32.mxu0 %v1133
    %2848 = vmatmul.mubr.f32.gmra.mrb[0].mxu0 %v1131
    %v2849 = vpop.f32.mrb[0].mxu0
    %v2850 = vadd.f32 0.0, %v2849
    %v2851 = vpop.f32.mrb[0].mxu0
    %2852 = vmatprep.mubr.f32.mxu0 %v1201
    %2853 = vmatmul.mubr.f32.gmra.mrb[0].mxu0 %v1200
    %v2854 = vpop.f32.mrb[0].mxu0
    %v2855 = vadd.f32 0.0, %v2854
    %v2856 = vpop.f32.mrb[0].mxu0
    %2857 = vmatprep.mubr.f32.mxu0 %v1143
    %2858 = vmatmul.mubr.f32.gmra.mrb[0].mxu0 %v1140
    %v2859 = vpop.f32.mrb[0].mxu0
    %v2860 = vadd.f32 0.0, %v2859
    %v2861 = vpop.f32.mrb[0].mxu0
    %2862 = vmatprep.mubr.f32.mxu0 %v1153
    %2863 = vmatmul.mubr.f32.gmra.mrb[0].mxu0 %v1151
    %v2864 = vpop.f32.mrb[0].mxu0
    %v2865 = vadd.f32 0.0, %v2864
    %v2866 = vpop.f32.mrb[0].mxu0
    %2867 = vmatprep.mubr.f32.mxu0 %v1161
    %2868 = vmatmul.mubr.f32.gmra.mrb[0].mxu0 %v1159
    %v2869 = vpop.f32.mrb[0].mxu0
    %v2870 = vadd.f32 0.0, %v2869
    %v2871 = vpop.f32.mrb[0].mxu0
    %2872 = vmatprep.mubr.f32.mxu0 %v1205
    %2873 = vmatmul.mubr.f32.gmra.mrb[0].mxu0 %v1204
    %v2874 = vpop.f32.mrb[0].mxu0
    %v2875 = vadd.f32 0.0, %v2874
    %v2876 = vpop.f32.mrb[0].mxu0
    %2877 = vdwg.mxu0
    %2878 = vmatprep.subr.mxu0 0.0
    %2879 = vmatpush1.msra.mxu0 %v1873
    %2880 = vmatprep.subr.mxu0 0.0
    %2881 = vmatpush1.msra.mxu0 %v1880
    %2882 = vmatprep.subr.mxu0 0.0
    %2883 = vmatpush1.msra.mxu0 %v1887
    %2884 = vmatprep.subr.mxu0 0.0
    %2885 = vmatpush1.msra.mxu0 %v1894
    %2886 = vmatprep.subr.mxu0 0.0
    %2887 = vmatpush1.msra.mxu0 %v1901
    %2888 = vmatprep.subr.mxu0 0.0
    %2889 = vmatpush1.msra.mxu0 %v1908
    %2890 = vmatprep.subr.mxu0 0.0
    %2891 = vmatpush1.msra.mxu0 %v1915
    %2892 = vmatprep.subr.mxu0 0.0
    %2893 = vmatpush1.msra.mxu0 %v1922
    %2894 = vmatprep.subr.mxu0 0.0
    %2895 = vmatpush1.msra.mxu0 %v1929
    %2896 = vmatprep.subr.mxu0 0.0
    %2897 = vmatpush1.msra.mxu0 %v1936
    %2898 = vmatprep.subr.mxu0 0.0
    %2899 = vmatpush1.msra.mxu0 %v1943
    %2900 = vmatprep.subr.mxu0 0.0
    %2901 = vmatpush1.msra.mxu0 %v1950
    %2902 = vmatprep.subr.mxu0 0.0
    %2903 = vmatpush1.msra.mxu0 %v1957
    %2904 = vmatprep.subr.mxu0 0.0
    %2905 = vmatpush1.msra.mxu0 %v1964
    %2906 = vmatprep.subr.mxu0 0.0
    %2907 = vmatpush1.msra.mxu0 %v1971
    %2908 = vmatprep.subr.mxu0 0.0
    %2909 = vmatpush1.msra.mxu0 %v1978
    %2910 = vmatprep.subr.mxu0 0.0
    %2911 = vmatpush1.msra.mxu0 %v1985
    %2912 = vmatprep.subr.mxu0 0.0
    %2913 = vmatpush1.msra.mxu0 %v1992
    %2914 = vmatprep.subr.mxu0 0.0
    %2915 = vmatpush1.msra.mxu0 %v1999
    %2916 = vmatprep.subr.mxu0 0.0
    %2917 = vmatpush1.msra.mxu0 %v2006
    %2918 = vmatprep.subr.mxu0 0.0
    %2919 = vmatpush1.msra.mxu0 %v2013
    %2920 = vmatprep.subr.mxu0 0.0
    %2921 = vmatpush1.msra.mxu0 %v2020
    %2922 = vmatprep.subr.mxu0 0.0
    %2923 = vmatpush1.msra.mxu0 %v2027
    %2924 = vmatprep.subr.mxu0 0.0
    %2925 = vmatpush1.msra.mxu0 %v2034
    %2926 = vmatprep.subr.mxu0 0.0
    %2927 = vmatpush1.msra.mxu0 %v2041
    %2928 = vmatprep.subr.mxu0 0.0
    %2929 = vmatpush1.msra.mxu0 %v2048
    %2930 = vmatprep.subr.mxu0 0.0
    %2931 = vmatpush1.msra.mxu0 %v2055
    %2932 = vmatprep.subr.mxu0 0.0
    %2933 = vmatpush1.msra.mxu0 %v2062
    %2934 = vmatprep.subr.mxu0 0.0
    %2935 = vmatpush1.msra.mxu0 %v2069
    %2936 = vmatprep.subr.mxu0 0.0
    %2937 = vmatpush1.msra.mxu0 %v2076
    %2938 = vmatprep.subr.mxu0 0.0
    %2939 = vmatpush1.msra.mxu0 0.0
    %2940 = vmatprep.subr.mxu0 0.0
    %2941 = vmatpush1.msra.mxu0 0.0
    %2942 = vmatprep.mubr.f32.mxu0 %v2077
    %2943 = vmatmul.mubr.f32.gmra.mrb[0].mxu0 %v1118
    %v2944 = vpop.f32.mrb[0].mxu0
    %v2945 = vadd.f32 %v2840, %v2944
    %v2946 = vpop.f32.mrb[0].mxu0
    %2947 = vmatprep.mubr.f32.mxu0 %v2079
    %2948 = vmatmul.mubr.f32.gmra.mrb[0].mxu0 %v1127
    %v2949 = vpop.f32.mrb[0].mxu0
    %v2950 = vadd.f32 %v2845, %v2949
    %v2951 = vpop.f32.mrb[0].mxu0
    %2952 = vmatprep.mubr.f32.mxu0 %v2081
    %2953 = vmatmul.mubr.f32.gmra.mrb[0].mxu0 %v1135
    %v2954 = vpop.f32.mrb[0].mxu0
    %v2955 = vadd.f32 %v2850, %v2954
    %v2956 = vpop.f32.mrb[0].mxu0
    %2957 = vmatprep.mubr.f32.mxu0 %v2084
    %2958 = vmatmul.mubr.f32.gmra.mrb[0].mxu0 %v1202
    %v2959 = vpop.f32.mrb[0].mxu0
    %v2960 = vadd.f32 %v2855, %v2959
    %v2961 = vpop.f32.mrb[0].mxu0
    %2962 = vmatprep.mubr.f32.mxu0 %v2086
    %2963 = vmatmul.mubr.f32.gmra.mrb[0].mxu0 %v1146
    %v2964 = vpop.f32.mrb[0].mxu0
    %v2965 = vadd.f32 %v2860, %v2964
    %v2966 = vpop.f32.mrb[0].mxu0
    %2967 = vmatprep.mubr.f32.mxu0 %v2088
    %2968 = vmatmul.mubr.f32.gmra.mrb[0].mxu0 %v1155
    %v2969 = vpop.f32.mrb[0].mxu0
    %v2970 = vadd.f32 %v2865, %v2969
    %v2971 = vpop.f32.mrb[0].mxu0
    %2972 = vmatprep.mubr.f32.mxu0 %v2090
    %2973 = vmatmul.mubr.f32.gmra.mrb[0].mxu0 %v1163
    %v2974 = vpop.f32.mrb[0].mxu0
    %v2975 = vadd.f32 %v2870, %v2974
    %v2976 = vpop.f32.mrb[0].mxu0
    %2977 = vmatprep.mubr.f32.mxu0 %v2093
    %2978 = vmatmul.mubr.f32.gmra.mrb[0].mxu0 %v1206
    %v2979 = vpop.f32.mrb[0].mxu0
    %v2980 = vadd.f32 %v2875, %v2979
    %v2981 = vpop.f32.mrb[0].mxu0
    %2982 = vdwg.mxu0
    %v2983 = vsel %vm821, %v1049, 0
    %v2985 = vsel %vm821, %v1053, 0
    %v2987 = vsel %vm821, %v1057, 0
    %v2989 = vsel %vm821, %v1061, 0
    %v2991 = vsel %vm821, %v1065, 0
    %v2993 = vsel %vm821, %v1069, 0
    %v2995 = vsel %vm821, %v1073, 0
    %v2997 = vsel %vm821, %v1077, 0
    %2999 = vmatprep.subr.mxu0 %v1209
    %3000 = vmatpush1.msra.mxu0 %v1208
    %3001 = vmatprep.subr.mxu0 %v1216
    %3002 = vmatpush1.msra.mxu0 %v1215
    %3003 = vmatprep.subr.mxu0 %v1223
    %3004 = vmatpush1.msra.mxu0 %v1222
    %3005 = vmatprep.subr.mxu0 %v1230
    %3006 = vmatpush1.msra.mxu0 %v1229
    %3007 = vmatprep.subr.mxu0 %v1237
    %3008 = vmatpush1.msra.mxu0 %v1236
    %3009 = vmatprep.subr.mxu0 %v1244
    %3010 = vmatpush1.msra.mxu0 %v1243
    %3011 = vmatprep.subr.mxu0 %v1251
    %3012 = vmatpush1.msra.mxu0 %v1250
    %3013 = vmatprep.subr.mxu0 %v1258
    %3014 = vmatpush1.msra.mxu0 %v1257
    %3015 = vmatprep.subr.mxu0 %v1265
    %3016 = vmatpush1.msra.mxu0 %v1264
    %3017 = vmatprep.subr.mxu0 %v1272
    %3018 = vmatpush1.msra.mxu0 %v1271
    %3019 = vmatprep.subr.mxu0 %v1279
    %3020 = vmatpush1.msra.mxu0 %v1278
    %3021 = vmatprep.subr.mxu0 %v1286
    %3022 = vmatpush1.msra.mxu0 %v1285
    %3023 = vmatprep.subr.mxu0 %v1293
    %3024 = vmatpush1.msra.mxu0 %v1292
    %3025 = vmatprep.subr.mxu0 %v1300
    %3026 = vmatpush1.msra.mxu0 %v1299
    %3027 = vmatprep.subr.mxu0 %v1307
    %3028 = vmatpush1.msra.mxu0 %v1306
    %3029 = vmatprep.subr.mxu0 %v1314
    %3030 = vmatpush1.msra.mxu0 %v1313
    %3031 = vmatprep.subr.mxu0 %v1321
    %3032 = vmatpush1.msra.mxu0 %v1320
    %3033 = vmatprep.subr.mxu0 %v1328
    %3034 = vmatpush1.msra.mxu0 %v1327
    %3035 = vmatprep.subr.mxu0 %v1335
    %3036 = vmatpush1.msra.mxu0 %v1334
    %3037 = vmatprep.subr.mxu0 %v1342
    %3038 = vmatpush1.msra.mxu0 %v1341
    %3039 = vmatprep.subr.mxu0 %v1349
    %3040 = vmatpush1.msra.mxu0 %v1348
    %3041 = vmatprep.subr.mxu0 %v1356
    %3042 = vmatpush1.msra.mxu0 %v1355
    %3043 = vmatprep.subr.mxu0 %v1363
    %3044 = vmatpush1.msra.mxu0 %v1362
    %3045 = vmatprep.subr.mxu0 %v1370
    %3046 = vmatpush1.msra.mxu0 %v1369
    %3047 = vmatprep.subr.mxu0 %v1377
    %3048 = vmatpush1.msra.mxu0 %v1376
    %3049 = vmatprep.subr.mxu0 %v1384
    %3050 = vmatpush1.msra.mxu0 %v1383
    %3051 = vmatprep.subr.mxu0 %v1391
    %3052 = vmatpush1.msra.mxu0 %v1390
    %3053 = vmatprep.subr.mxu0 %v1398
    %3054 = vmatpush1.msra.mxu0 %v1397
    %3055 = vmatprep.subr.mxu0 %v1405
    %3056 = vmatpush1.msra.mxu0 %v1404
    %3057 = vmatprep.subr.mxu0 %v1412
    %3058 = vmatpush1.msra.mxu0 %v1411
    %3059 = vmatprep.subr.mxu0 %v1419
    %3060 = vmatpush1.msra.mxu0 %v1418
    %3061 = vmatprep.subr.mxu0 %v1426
    %3062 = vmatpush1.msra.mxu0 %v1425
    %3063 = vmatprep.mubr.f32.mxu0 %v1047
    %3064 = vmatmul.mubr.f32.gmra.mrb[0].mxu0 %v1046
    %v3065 = vpop.f32.mrb[0].mxu0
    %v3066 = vadd.f32 %v2275, %v3065
    %v3067 = vpop.f32.mrb[0].mxu0
    %v3068 = vadd.f32 %v2277, %v3067
    %3069 = vmatprep.mubr.f32.mxu0 %v1051
    %3070 = vmatmul.mubr.f32.gmra.mrb[0].mxu0 %v1050
    %v3071 = vpop.f32.mrb[0].mxu0
    %v3072 = vadd.f32 %v2281, %v3071
    %v3073 = vpop.f32.mrb[0].mxu0
    %v3074 = vadd.f32 %v2283, %v3073
    %3075 = vmatprep.mubr.f32.mxu0 %v1055
    %3076 = vmatmul.mubr.f32.gmra.mrb[0].mxu0 %v1054
    %v3077 = vpop.f32.mrb[0].mxu0
    %v3078 = vadd.f32 %v2287, %v3077
    %v3079 = vpop.f32.mrb[0].mxu0
    %v3080 = vadd.f32 %v2289, %v3079
    %3081 = vmatprep.mubr.f32.mxu0 %v1059
    %3082 = vmatmul.mubr.f32.gmra.mrb[0].mxu0 %v1058
    %v3083 = vpop.f32.mrb[0].mxu0
    %v3084 = vadd.f32 %v2293, %v3083
    %v3085 = vpop.f32.mrb[0].mxu0
    %v3086 = vadd.f32 %v2295, %v3085
    %3087 = vmatprep.mubr.f32.mxu0 %v1063
    %3088 = vmatmul.mubr.f32.gmra.mrb[0].mxu0 %v1062
    %v3089 = vpop.f32.mrb[0].mxu0
    %v3090 = vadd.f32 %v2299, %v3089
    %v3091 = vpop.f32.mrb[0].mxu0
    %v3092 = vadd.f32 %v2301, %v3091
    %3093 = vmatprep.mubr.f32.mxu0 %v1067
    %3094 = vmatmul.mubr.f32.gmra.mrb[0].mxu0 %v1066
    %v3095 = vpop.f32.mrb[0].mxu0
    %v3096 = vadd.f32 %v2305, %v3095
    %v3097 = vpop.f32.mrb[0].mxu0
    %v3098 = vadd.f32 %v2307, %v3097
    %3099 = vmatprep.mubr.f32.mxu0 %v1071
    %3100 = vmatmul.mubr.f32.gmra.mrb[0].mxu0 %v1070
    %v3101 = vpop.f32.mrb[0].mxu0
    %v3102 = vadd.f32 %v2311, %v3101
    %v3103 = vpop.f32.mrb[0].mxu0
    %v3104 = vadd.f32 %v2313, %v3103
    %3105 = vmatprep.mubr.f32.mxu0 %v1075
    %3106 = vmatmul.mubr.f32.gmra.mrb[0].mxu0 %v1074
    %v3107 = vpop.f32.mrb[0].mxu0
    %v3108 = vadd.f32 %v2317, %v3107
    %v3109 = vpop.f32.mrb[0].mxu0
    %v3110 = vadd.f32 %v2319, %v3109
    %3111 = vdwg.mxu0
    %3112 = vmatprep.subr.mxu0 %v1433
    %3113 = vmatpush1.msra.mxu0 %v1432
    %3114 = vmatprep.subr.mxu0 %v1440
    %3115 = vmatpush1.msra.mxu0 %v1439
    %3116 = vmatprep.subr.mxu0 %v1447
    %3117 = vmatpush1.msra.mxu0 %v1446
    %3118 = vmatprep.subr.mxu0 %v1454
    %3119 = vmatpush1.msra.mxu0 %v1453
    %3120 = vmatprep.subr.mxu0 %v1461
    %3121 = vmatpush1.msra.mxu0 %v1460
    %3122 = vmatprep.subr.mxu0 %v1468
    %3123 = vmatpush1.msra.mxu0 %v1467
    %3124 = vmatprep.subr.mxu0 %v1475
    %3125 = vmatpush1.msra.mxu0 %v1474
    %3126 = vmatprep.subr.mxu0 %v1482
    %3127 = vmatpush1.msra.mxu0 %v1481
    %3128 = vmatprep.subr.mxu0 %v1489
    %3129 = vmatpush1.msra.mxu0 %v1488
    %3130 = vmatprep.subr.mxu0 %v1496
    %3131 = vmatpush1.msra.mxu0 %v1495
    %3132 = vmatprep.subr.mxu0 %v1503
    %3133 = vmatpush1.msra.mxu0 %v1502
    %3134 = vmatprep.subr.mxu0 %v1510
    %3135 = vmatpush1.msra.mxu0 %v1509
    %3136 = vmatprep.subr.mxu0 %v1517
    %3137 = vmatpush1.msra.mxu0 %v1516
    %3138 = vmatprep.subr.mxu0 %v1524
    %3139 = vmatpush1.msra.mxu0 %v1523
    %3140 = vmatprep.subr.mxu0 %v1531
    %3141 = vmatpush1.msra.mxu0 %v1530
    %3142 = vmatprep.subr.mxu0 %v1538
    %3143 = vmatpush1.msra.mxu0 %v1537
    %3144 = vmatprep.subr.mxu0 %v1545
    %3145 = vmatpush1.msra.mxu0 %v1544
    %3146 = vmatprep.subr.mxu0 %v1552
    %3147 = vmatpush1.msra.mxu0 %v1551
    %3148 = vmatprep.subr.mxu0 %v1559
    %3149 = vmatpush1.msra.mxu0 %v1558
    %3150 = vmatprep.subr.mxu0 %v1566
    %3151 = vmatpush1.msra.mxu0 %v1565
    %3152 = vmatprep.subr.mxu0 %v1573
    %3153 = vmatpush1.msra.mxu0 %v1572
    %3154 = vmatprep.subr.mxu0 %v1580
    %3155 = vmatpush1.msra.mxu0 %v1579
    %3156 = vmatprep.subr.mxu0 %v1587
    %3157 = vmatpush1.msra.mxu0 %v1586
    %3158 = vmatprep.subr.mxu0 %v1594
    %3159 = vmatpush1.msra.mxu0 %v1593
    %3160 = vmatprep.subr.mxu0 %v1601
    %3161 = vmatpush1.msra.mxu0 %v1600
    %3162 = vmatprep.subr.mxu0 %v1608
    %3163 = vmatpush1.msra.mxu0 %v1607
    %3164 = vmatprep.subr.mxu0 %v1615
    %3165 = vmatpush1.msra.mxu0 %v1614
    %3166 = vmatprep.subr.mxu0 %v1622
    %3167 = vmatpush1.msra.mxu0 %v1621
    %3168 = vmatprep.subr.mxu0 %v1629
    %3169 = vmatpush1.msra.mxu0 %v1628
    %3170 = vmatprep.subr.mxu0 %v1636
    %3171 = vmatpush1.msra.mxu0 %v1635
    %3172 = vmatprep.subr.mxu0 0.0
    %3173 = vmatpush1.msra.mxu0 0.0
    %3174 = vmatprep.subr.mxu0 0.0
    %3175 = vmatpush1.msra.mxu0 0.0
    %3176 = vmatprep.mubr.f32.mxu0 %v2983
    %3177 = vmatmul.mubr.f32.gmra.mrb[0].mxu0 %v1048
    %v3178 = vpop.f32.mrb[0].mxu0
    %v3179 = vadd.f32 %v3066, %v3178
    %v3180 = vpop.f32.mrb[0].mxu0
    %v3181 = vadd.f32 %v3068, %v3180
    %3182 = vmatprep.mubr.f32.mxu0 %v2985
    %3183 = vmatmul.mubr.f32.gmra.mrb[0].mxu0 %v1052
    %v3184 = vpop.f32.mrb[0].mxu0
    %v3185 = vadd.f32 %v3072, %v3184
    %v3186 = vpop.f32.mrb[0].mxu0
    %v3187 = vadd.f32 %v3074, %v3186
    %3188 = vmatprep.mubr.f32.mxu0 %v2987
    %3189 = vmatmul.mubr.f32.gmra.mrb[0].mxu0 %v1056
    %v3190 = vpop.f32.mrb[0].mxu0
    %v3191 = vadd.f32 %v3078, %v3190
    %v3192 = vpop.f32.mrb[0].mxu0
    %v3193 = vadd.f32 %v3080, %v3192
    %3194 = vmatprep.mubr.f32.mxu0 %v2989
    %3195 = vmatmul.mubr.f32.gmra.mrb[0].mxu0 %v1060
    %v3196 = vpop.f32.mrb[0].mxu0
    %v3197 = vadd.f32 %v3084, %v3196
    %v3198 = vpop.f32.mrb[0].mxu0
    %v3199 = vadd.f32 %v3086, %v3198
    %3200 = vmatprep.mubr.f32.mxu0 %v2991
    %3201 = vmatmul.mubr.f32.gmra.mrb[0].mxu0 %v1064
    %v3202 = vpop.f32.mrb[0].mxu0
    %v3203 = vadd.f32 %v3090, %v3202
    %v3204 = vpop.f32.mrb[0].mxu0
    %v3205 = vadd.f32 %v3092, %v3204
    %3206 = vmatprep.mubr.f32.mxu0 %v2993
    %3207 = vmatmul.mubr.f32.gmra.mrb[0].mxu0 %v1068
    %v3208 = vpop.f32.mrb[0].mxu0
    %v3209 = vadd.f32 %v3096, %v3208
    %v3210 = vpop.f32.mrb[0].mxu0
    %v3211 = vadd.f32 %v3098, %v3210
    %3212 = vmatprep.mubr.f32.mxu0 %v2995
    %3213 = vmatmul.mubr.f32.gmra.mrb[0].mxu0 %v1072
    %v3214 = vpop.f32.mrb[0].mxu0
    %v3215 = vadd.f32 %v3102, %v3214
    %v3216 = vpop.f32.mrb[0].mxu0
    %v3217 = vadd.f32 %v3104, %v3216
    %3218 = vmatprep.mubr.f32.mxu0 %v2997
    %3219 = vmatmul.mubr.f32.gmra.mrb[0].mxu0 %v1076
    %v3220 = vpop.f32.mrb[0].mxu0
    %v3221 = vadd.f32 %v3108, %v3220
    %v3222 = vpop.f32.mrb[0].mxu0
    %v3223 = vadd.f32 %v3110, %v3222
    %3224 = vdwg.mxu0
    %3225 = vmatprep.subr.mxu0 %v1211
    %3226 = vmatpush1.msra.mxu0 %v1210
    %3227 = vmatprep.subr.mxu0 %v1218
    %3228 = vmatpush1.msra.mxu0 %v1217
    %3229 = vmatprep.subr.mxu0 %v1225
    %3230 = vmatpush1.msra.mxu0 %v1224
    %3231 = vmatprep.subr.mxu0 %v1232
    %3232 = vmatpush1.msra.mxu0 %v1231
    %3233 = vmatprep.subr.mxu0 %v1239
    %3234 = vmatpush1.msra.mxu0 %v1238
    %3235 = vmatprep.subr.mxu0 %v1246
    %3236 = vmatpush1.msra.mxu0 %v1245
    %3237 = vmatprep.subr.mxu0 %v1253
    %3238 = vmatpush1.msra.mxu0 %v1252
    %3239 = vmatprep.subr.mxu0 %v1260
    %3240 = vmatpush1.msra.mxu0 %v1259
    %3241 = vmatprep.subr.mxu0 %v1267
    %3242 = vmatpush1.msra.mxu0 %v1266
    %3243 = vmatprep.subr.mxu0 %v1274
    %3244 = vmatpush1.msra.mxu0 %v1273
    %3245 = vmatprep.subr.mxu0 %v1281
    %3246 = vmatpush1.msra.mxu0 %v1280
    %3247 = vmatprep.subr.mxu0 %v1288
    %3248 = vmatpush1.msra.mxu0 %v1287
    %3249 = vmatprep.subr.mxu0 %v1295
    %3250 = vmatpush1.msra.mxu0 %v1294
    %3251 = vmatprep.subr.mxu0 %v1302
    %3252 = vmatpush1.msra.mxu0 %v1301
    %3253 = vmatprep.subr.mxu0 %v1309
    %3254 = vmatpush1.msra.mxu0 %v1308
    %3255 = vmatprep.subr.mxu0 %v1316
    %3256 = vmatpush1.msra.mxu0 %v1315
    %3257 = vmatprep.subr.mxu0 %v1323
    %3258 = vmatpush1.msra.mxu0 %v1322
    %3259 = vmatprep.subr.mxu0 %v1330
    %3260 = vmatpush1.msra.mxu0 %v1329
    %3261 = vmatprep.subr.mxu0 %v1337
    %3262 = vmatpush1.msra.mxu0 %v1336
    %3263 = vmatprep.subr.mxu0 %v1344
    %3264 = vmatpush1.msra.mxu0 %v1343
    %3265 = vmatprep.subr.mxu0 %v1351
    %3266 = vmatpush1.msra.mxu0 %v1350
    %3267 = vmatprep.subr.mxu0 %v1358
    %3268 = vmatpush1.msra.mxu0 %v1357
    %3269 = vmatprep.subr.mxu0 %v1365
    %3270 = vmatpush1.msra.mxu0 %v1364
    %3271 = vmatprep.subr.mxu0 %v1372
    %3272 = vmatpush1.msra.mxu0 %v1371
    %3273 = vmatprep.subr.mxu0 %v1379
    %3274 = vmatpush1.msra.mxu0 %v1378
    %3275 = vmatprep.subr.mxu0 %v1386
    %3276 = vmatpush1.msra.mxu0 %v1385
    %3277 = vmatprep.subr.mxu0 %v1393
    %3278 = vmatpush1.msra.mxu0 %v1392
    %3279 = vmatprep.subr.mxu0 %v1400
    %3280 = vmatpush1.msra.mxu0 %v1399
    %3281 = vmatprep.subr.mxu0 %v1407
    %3282 = vmatpush1.msra.mxu0 %v1406
    %3283 = vmatprep.subr.mxu0 %v1414
    %3284 = vmatpush1.msra.mxu0 %v1413
    %3285 = vmatprep.subr.mxu0 %v1421
    %3286 = vmatpush1.msra.mxu0 %v1420
    %3287 = vmatprep.subr.mxu0 %v1428
    %3288 = vmatpush1.msra.mxu0 %v1427
    %3289 = vmatprep.mubr.f32.mxu0 %v1047
    %3290 = vmatmul.mubr.f32.gmra.mrb[0].mxu0 %v1046
    %v3291 = vpop.f32.mrb[0].mxu0
    %v3292 = vadd.f32 %v2501, %v3291
    %v3293 = vpop.f32.mrb[0].mxu0
    %v3294 = vadd.f32 %v2503, %v3293
    %3295 = vmatprep.mubr.f32.mxu0 %v1051
    %3296 = vmatmul.mubr.f32.gmra.mrb[0].mxu0 %v1050
    %v3297 = vpop.f32.mrb[0].mxu0
    %v3298 = vadd.f32 %v2507, %v3297
    %v3299 = vpop.f32.mrb[0].mxu0
    %v3300 = vadd.f32 %v2509, %v3299
    %3301 = vmatprep.mubr.f32.mxu0 %v1055
    %3302 = vmatmul.mubr.f32.gmra.mrb[0].mxu0 %v1054
    %v3303 = vpop.f32.mrb[0].mxu0
    %v3304 = vadd.f32 %v2513, %v3303
    %v3305 = vpop.f32.mrb[0].mxu0
    %v3306 = vadd.f32 %v2515, %v3305
    %3307 = vmatprep.mubr.f32.mxu0 %v1059
    %3308 = vmatmul.mubr.f32.gmra.mrb[0].mxu0 %v1058
    %v3309 = vpop.f32.mrb[0].mxu0
    %v3310 = vadd.f32 %v2519, %v3309
    %v3311 = vpop.f32.mrb[0].mxu0
    %v3312 = vadd.f32 %v2521, %v3311
    %3313 = vmatprep.mubr.f32.mxu0 %v1063
    %3314 = vmatmul.mubr.f32.gmra.mrb[0].mxu0 %v1062
    %v3315 = vpop.f32.mrb[0].mxu0
    %v3316 = vadd.f32 %v2525, %v3315
    %v3317 = vpop.f32.mrb[0].mxu0
    %v3318 = vadd.f32 %v2527, %v3317
    %3319 = vmatprep.mubr.f32.mxu0 %v1067
    %3320 = vmatmul.mubr.f32.gmra.mrb[0].mxu0 %v1066
    %v3321 = vpop.f32.mrb[0].mxu0
    %v3322 = vadd.f32 %v2531, %v3321
    %v3323 = vpop.f32.mrb[0].mxu0
    %v3324 = vadd.f32 %v2533, %v3323
    %3325 = vmatprep.mubr.f32.mxu0 %v1071
    %3326 = vmatmul.mubr.f32.gmra.mrb[0].mxu0 %v1070
    %v3327 = vpop.f32.mrb[0].mxu0
    %v3328 = vadd.f32 %v2537, %v3327
    %v3329 = vpop.f32.mrb[0].mxu0
    %v3330 = vadd.f32 %v2539, %v3329
    %3331 = vmatprep.mubr.f32.mxu0 %v1075
    %3332 = vmatmul.mubr.f32.gmra.mrb[0].mxu0 %v1074
    %v3333 = vpop.f32.mrb[0].mxu0
    %v3334 = vadd.f32 %v2543, %v3333
    %v3335 = vpop.f32.mrb[0].mxu0
    %v3336 = vadd.f32 %v2545, %v3335
    %3337 = vdwg.mxu0
    %3338 = vmatprep.subr.mxu0 %v1435
    %3339 = vmatpush1.msra.mxu0 %v1434
    %3340 = vmatprep.subr.mxu0 %v1442
    %3341 = vmatpush1.msra.mxu0 %v1441
    %3342 = vmatprep.subr.mxu0 %v1449
    %3343 = vmatpush1.msra.mxu0 %v1448
    %3344 = vmatprep.subr.mxu0 %v1456
    %3345 = vmatpush1.msra.mxu0 %v1455
    %3346 = vmatprep.subr.mxu0 %v1463
    %3347 = vmatpush1.msra.mxu0 %v1462
    %3348 = vmatprep.subr.mxu0 %v1470
    %3349 = vmatpush1.msra.mxu0 %v1469
    %3350 = vmatprep.subr.mxu0 %v1477
    %3351 = vmatpush1.msra.mxu0 %v1476
    %3352 = vmatprep.subr.mxu0 %v1484
    %3353 = vmatpush1.msra.mxu0 %v1483
    %3354 = vmatprep.subr.mxu0 %v1491
    %3355 = vmatpush1.msra.mxu0 %v1490
    %3356 = vmatprep.subr.mxu0 %v1498
    %3357 = vmatpush1.msra.mxu0 %v1497
    %3358 = vmatprep.subr.mxu0 %v1505
    %3359 = vmatpush1.msra.mxu0 %v1504
    %3360 = vmatprep.subr.mxu0 %v1512
    %3361 = vmatpush1.msra.mxu0 %v1511
    %3362 = vmatprep.subr.mxu0 %v1519
    %3363 = vmatpush1.msra.mxu0 %v1518
    %3364 = vmatprep.subr.mxu0 %v1526
    %3365 = vmatpush1.msra.mxu0 %v1525
    %3366 = vmatprep.subr.mxu0 %v1533
    %3367 = vmatpush1.msra.mxu0 %v1532
    %3368 = vmatprep.subr.mxu0 %v1540
    %3369 = vmatpush1.msra.mxu0 %v1539
    %3370 = vmatprep.subr.mxu0 %v1547
    %3371 = vmatpush1.msra.mxu0 %v1546
    %3372 = vmatprep.subr.mxu0 %v1554
    %3373 = vmatpush1.msra.mxu0 %v1553
    %3374 = vmatprep.subr.mxu0 %v1561
    %3375 = vmatpush1.msra.mxu0 %v1560
    %3376 = vmatprep.subr.mxu0 %v1568
    %3377 = vmatpush1.msra.mxu0 %v1567
    %3378 = vmatprep.subr.mxu0 %v1575
    %3379 = vmatpush1.msra.mxu0 %v1574
    %3380 = vmatprep.subr.mxu0 %v1582
    %3381 = vmatpush1.msra.mxu0 %v1581
    %3382 = vmatprep.subr.mxu0 %v1589
    %3383 = vmatpush1.msra.mxu0 %v1588
    %3384 = vmatprep.subr.mxu0 %v1596
    %3385 = vmatpush1.msra.mxu0 %v1595
    %3386 = vmatprep.subr.mxu0 %v1603
    %3387 = vmatpush1.msra.mxu0 %v1602
    %3388 = vmatprep.subr.mxu0 %v1610
    %3389 = vmatpush1.msra.mxu0 %v1609
    %3390 = vmatprep.subr.mxu0 %v1617
    %3391 = vmatpush1.msra.mxu0 %v1616
    %3392 = vmatprep.subr.mxu0 %v1624
    %3393 = vmatpush1.msra.mxu0 %v1623
    %3394 = vmatprep.subr.mxu0 %v1631
    %3395 = vmatpush1.msra.mxu0 %v1630
    %3396 = vmatprep.subr.mxu0 %v1638
    %3397 = vmatpush1.msra.mxu0 %v1637
    %3398 = vmatprep.subr.mxu0 0.0
    %3399 = vmatpush1.msra.mxu0 0.0
    %3400 = vmatprep.subr.mxu0 0.0
    %3401 = vmatpush1.msra.mxu0 0.0
    %3402 = vmatprep.mubr.f32.mxu0 %v2983
    %3403 = vmatmul.mubr.f32.gmra.mrb[0].mxu0 %v1048
    %v3404 = vpop.f32.mrb[0].mxu0
    %v3405 = vadd.f32 %v3292, %v3404
    %v3406 = vpop.f32.mrb[0].mxu0
    %v3407 = vadd.f32 %v3294, %v3406
    %3408 = vmatprep.mubr.f32.mxu0 %v2985
    %3409 = vmatmul.mubr.f32.gmra.mrb[0].mxu0 %v1052
    %v3410 = vpop.f32.mrb[0].mxu0
    %v3411 = vadd.f32 %v3298, %v3410
    %v3412 = vpop.f32.mrb[0].mxu0
    %v3413 = vadd.f32 %v3300, %v3412
    %3414 = vmatprep.mubr.f32.mxu0 %v2987
    %3415 = vmatmul.mubr.f32.gmra.mrb[0].mxu0 %v1056
    %v3416 = vpop.f32.mrb[0].mxu0
    %v3417 = vadd.f32 %v3304, %v3416
    %v3418 = vpop.f32.mrb[0].mxu0
    %v3419 = vadd.f32 %v3306, %v3418
    %3420 = vmatprep.mubr.f32.mxu0 %v2989
    %3421 = vmatmul.mubr.f32.gmra.mrb[0].mxu0 %v1060
    %v3422 = vpop.f32.mrb[0].mxu0
    %v3423 = vadd.f32 %v3310, %v3422
    %v3424 = vpop.f32.mrb[0].mxu0
    %v3425 = vadd.f32 %v3312, %v3424
    %3426 = vmatprep.mubr.f32.mxu0 %v2991
    %3427 = vmatmul.mubr.f32.gmra.mrb[0].mxu0 %v1064
    %v3428 = vpop.f32.mrb[0].mxu0
    %v3429 = vadd.f32 %v3316, %v3428
    %v3430 = vpop.f32.mrb[0].mxu0
    %v3431 = vadd.f32 %v3318, %v3430
    %3432 = vmatprep.mubr.f32.mxu0 %v2993
    %3433 = vmatmul.mubr.f32.gmra.mrb[0].mxu0 %v1068
    %v3434 = vpop.f32.mrb[0].mxu0
    %v3435 = vadd.f32 %v3322, %v3434
    %v3436 = vpop.f32.mrb[0].mxu0
    %v3437 = vadd.f32 %v3324, %v3436
    %3438 = vmatprep.mubr.f32.mxu0 %v2995
    %3439 = vmatmul.mubr.f32.gmra.mrb[0].mxu0 %v1072
    %v3440 = vpop.f32.mrb[0].mxu0
    %v3441 = vadd.f32 %v3328, %v3440
    %v3442 = vpop.f32.mrb[0].mxu0
    %v3443 = vadd.f32 %v3330, %v3442
    %3444 = vmatprep.mubr.f32.mxu0 %v2997
    %3445 = vmatmul.mubr.f32.gmra.mrb[0].mxu0 %v1076
    %v3446 = vpop.f32.mrb[0].mxu0
    %v3447 = vadd.f32 %v3334, %v3446
    %v3448 = vpop.f32.mrb[0].mxu0
    %v3449 = vadd.f32 %v3336, %v3448
    %3450 = vdwg.mxu0
    %3451 = vmatprep.subr.mxu0 %v1213
    %3452 = vmatpush1.msra.mxu0 %v1212
    %3453 = vmatprep.subr.mxu0 %v1220
    %3454 = vmatpush1.msra.mxu0 %v1219
    %3455 = vmatprep.subr.mxu0 %v1227
    %3456 = vmatpush1.msra.mxu0 %v1226
    %3457 = vmatprep.subr.mxu0 %v1234
    %3458 = vmatpush1.msra.mxu0 %v1233
    %3459 = vmatprep.subr.mxu0 %v1241
    %3460 = vmatpush1.msra.mxu0 %v1240
    %3461 = vmatprep.subr.mxu0 %v1248
    %3462 = vmatpush1.msra.mxu0 %v1247
    %3463 = vmatprep.subr.mxu0 %v1255
    %3464 = vmatpush1.msra.mxu0 %v1254
    %3465 = vmatprep.subr.mxu0 %v1262
    %3466 = vmatpush1.msra.mxu0 %v1261
    %3467 = vmatprep.subr.mxu0 %v1269
    %3468 = vmatpush1.msra.mxu0 %v1268
    %3469 = vmatprep.subr.mxu0 %v1276
    %3470 = vmatpush1.msra.mxu0 %v1275
    %3471 = vmatprep.subr.mxu0 %v1283
    %3472 = vmatpush1.msra.mxu0 %v1282
    %3473 = vmatprep.subr.mxu0 %v1290
    %3474 = vmatpush1.msra.mxu0 %v1289
    %3475 = vmatprep.subr.mxu0 %v1297
    %3476 = vmatpush1.msra.mxu0 %v1296
    %3477 = vmatprep.subr.mxu0 %v1304
    %3478 = vmatpush1.msra.mxu0 %v1303
    %3479 = vmatprep.subr.mxu0 %v1311
    %3480 = vmatpush1.msra.mxu0 %v1310
    %3481 = vmatprep.subr.mxu0 %v1318
    %3482 = vmatpush1.msra.mxu0 %v1317
    %3483 = vmatprep.subr.mxu0 %v1325
    %3484 = vmatpush1.msra.mxu0 %v1324
    %3485 = vmatprep.subr.mxu0 %v1332
    %3486 = vmatpush1.msra.mxu0 %v1331
    %3487 = vmatprep.subr.mxu0 %v1339
    %3488 = vmatpush1.msra.mxu0 %v1338
    %3489 = vmatprep.subr.mxu0 %v1346
    %3490 = vmatpush1.msra.mxu0 %v1345
    %3491 = vmatprep.subr.mxu0 %v1353
    %3492 = vmatpush1.msra.mxu0 %v1352
    %3493 = vmatprep.subr.mxu0 %v1360
    %3494 = vmatpush1.msra.mxu0 %v1359
    %3495 = vmatprep.subr.mxu0 %v1367
    %3496 = vmatpush1.msra.mxu0 %v1366
    %3497 = vmatprep.subr.mxu0 %v1374
    %3498 = vmatpush1.msra.mxu0 %v1373
    %3499 = vmatprep.subr.mxu0 %v1381
    %3500 = vmatpush1.msra.mxu0 %v1380
    %3501 = vmatprep.subr.mxu0 %v1388
    %3502 = vmatpush1.msra.mxu0 %v1387
    %3503 = vmatprep.subr.mxu0 %v1395
    %3504 = vmatpush1.msra.mxu0 %v1394
    %3505 = vmatprep.subr.mxu0 %v1402
    %3506 = vmatpush1.msra.mxu0 %v1401
    %3507 = vmatprep.subr.mxu0 %v1409
    %3508 = vmatpush1.msra.mxu0 %v1408
    %3509 = vmatprep.subr.mxu0 %v1416
    %3510 = vmatpush1.msra.mxu0 %v1415
    %3511 = vmatprep.subr.mxu0 %v1423
    %3512 = vmatpush1.msra.mxu0 %v1422
    %3513 = vmatprep.subr.mxu0 %v1430
    %3514 = vmatpush1.msra.mxu0 %v1429
    %3515 = vmatprep.mubr.f32.mxu0 %v1047
    %3516 = vmatmul.mubr.f32.gmra.mrb[0].mxu0 %v1046
    %v3517 = vpop.f32.mrb[0].mxu0
    %v3518 = vadd.f32 %v2727, %v3517
    %v3519 = vpop.f32.mrb[0].mxu0
    %v3520 = vadd.f32 %v2729, %v3519
    %3521 = vmatprep.mubr.f32.mxu0 %v1051
    %3522 = vmatmul.mubr.f32.gmra.mrb[0].mxu0 %v1050
    %v3523 = vpop.f32.mrb[0].mxu0
    %v3524 = vadd.f32 %v2733, %v3523
    %v3525 = vpop.f32.mrb[0].mxu0
    %v3526 = vadd.f32 %v2735, %v3525
    %3527 = vmatprep.mubr.f32.mxu0 %v1055
    %3528 = vmatmul.mubr.f32.gmra.mrb[0].mxu0 %v1054
    %v3529 = vpop.f32.mrb[0].mxu0
    %v3530 = vadd.f32 %v2739, %v3529
    %v3531 = vpop.f32.mrb[0].mxu0
    %v3532 = vadd.f32 %v2741, %v3531
    %3533 = vmatprep.mubr.f32.mxu0 %v1059
    %3534 = vmatmul.mubr.f32.gmra.mrb[0].mxu0 %v1058
    %v3535 = vpop.f32.mrb[0].mxu0
    %v3536 = vadd.f32 %v2745, %v3535
    %v3537 = vpop.f32.mrb[0].mxu0
    %v3538 = vadd.f32 %v2747, %v3537
    %3539 = vmatprep.mubr.f32.mxu0 %v1063
    %3540 = vmatmul.mubr.f32.gmra.mrb[0].mxu0 %v1062
    %v3541 = vpop.f32.mrb[0].mxu0
    %v3542 = vadd.f32 %v2751, %v3541
    %v3543 = vpop.f32.mrb[0].mxu0
    %v3544 = vadd.f32 %v2753, %v3543
    %3545 = vmatprep.mubr.f32.mxu0 %v1067
    %3546 = vmatmul.mubr.f32.gmra.mrb[0].mxu0 %v1066
    %v3547 = vpop.f32.mrb[0].mxu0
    %v3548 = vadd.f32 %v2757, %v3547
    %v3549 = vpop.f32.mrb[0].mxu0
    %v3550 = vadd.f32 %v2759, %v3549
    %3551 = vmatprep.mubr.f32.mxu0 %v1071
    %3552 = vmatmul.mubr.f32.gmra.mrb[0].mxu0 %v1070
    %v3553 = vpop.f32.mrb[0].mxu0
    %v3554 = vadd.f32 %v2763, %v3553
    %v3555 = vpop.f32.mrb[0].mxu0
    %v3556 = vadd.f32 %v2765, %v3555
    %3557 = vmatprep.mubr.f32.mxu0 %v1075
    %3558 = vmatmul.mubr.f32.gmra.mrb[0].mxu0 %v1074
    %v3559 = vpop.f32.mrb[0].mxu0
    %v3560 = vadd.f32 %v2769, %v3559
    %v3561 = vpop.f32.mrb[0].mxu0
    %v3562 = vadd.f32 %v2771, %v3561
    %3563 = vdwg.mxu0
    %3564 = vmatprep.subr.mxu0 %v1437
    %3565 = vmatpush1.msra.mxu0 %v1436
    %3566 = vmatprep.subr.mxu0 %v1444
    %3567 = vmatpush1.msra.mxu0 %v1443
    %3568 = vmatprep.subr.mxu0 %v1451
    %3569 = vmatpush1.msra.mxu0 %v1450
    %3570 = vmatprep.subr.mxu0 %v1458
    %3571 = vmatpush1.msra.mxu0 %v1457
    %3572 = vmatprep.subr.mxu0 %v1465
    %3573 = vmatpush1.msra.mxu0 %v1464
    %3574 = vmatprep.subr.mxu0 %v1472
    %3575 = vmatpush1.msra.mxu0 %v1471
    %3576 = vmatprep.subr.mxu0 %v1479
    %3577 = vmatpush1.msra.mxu0 %v1478
    %3578 = vmatprep.subr.mxu0 %v1486
    %3579 = vmatpush1.msra.mxu0 %v1485
    %3580 = vmatprep.subr.mxu0 %v1493
    %3581 = vmatpush1.msra.mxu0 %v1492
    %3582 = vmatprep.subr.mxu0 %v1500
    %3583 = vmatpush1.msra.mxu0 %v1499
    %3584 = vmatprep.subr.mxu0 %v1507
    %3585 = vmatpush1.msra.mxu0 %v1506
    %3586 = vmatprep.subr.mxu0 %v1514
    %3587 = vmatpush1.msra.mxu0 %v1513
    %3588 = vmatprep.subr.mxu0 %v1521
    %3589 = vmatpush1.msra.mxu0 %v1520
    %3590 = vmatprep.subr.mxu0 %v1528
    %3591 = vmatpush1.msra.mxu0 %v1527
    %3592 = vmatprep.subr.mxu0 %v1535
    %3593 = vmatpush1.msra.mxu0 %v1534
    %3594 = vmatprep.subr.mxu0 %v1542
    %3595 = vmatpush1.msra.mxu0 %v1541
    %3596 = vmatprep.subr.mxu0 %v1549
    %3597 = vmatpush1.msra.mxu0 %v1548
    %3598 = vmatprep.subr.mxu0 %v1556
    %3599 = vmatpush1.msra.mxu0 %v1555
    %3600 = vmatprep.subr.mxu0 %v1563
    %3601 = vmatpush1.msra.mxu0 %v1562
    %3602 = vmatprep.subr.mxu0 %v1570
    %3603 = vmatpush1.msra.mxu0 %v1569
    %3604 = vmatprep.subr.mxu0 %v1577
    %3605 = vmatpush1.msra.mxu0 %v1576
    %3606 = vmatprep.subr.mxu0 %v1584
    %3607 = vmatpush1.msra.mxu0 %v1583
    %3608 = vmatprep.subr.mxu0 %v1591
    %3609 = vmatpush1.msra.mxu0 %v1590
    %3610 = vmatprep.subr.mxu0 %v1598
    %3611 = vmatpush1.msra.mxu0 %v1597
    %3612 = vmatprep.subr.mxu0 %v1605
    %3613 = vmatpush1.msra.mxu0 %v1604
    %3614 = vmatprep.subr.mxu0 %v1612
    %3615 = vmatpush1.msra.mxu0 %v1611
    %3616 = vmatprep.subr.mxu0 %v1619
    %3617 = vmatpush1.msra.mxu0 %v1618
    %3618 = vmatprep.subr.mxu0 %v1626
    %3619 = vmatpush1.msra.mxu0 %v1625
    %3620 = vmatprep.subr.mxu0 %v1633
    %3621 = vmatpush1.msra.mxu0 %v1632
    %3622 = vmatprep.subr.mxu0 %v1640
    %3623 = vmatpush1.msra.mxu0 %v1639
    %3624 = vmatprep.subr.mxu0 0.0
    %3625 = vmatpush1.msra.mxu0 0.0
    %3626 = vmatprep.subr.mxu0 0.0
    %3627 = vmatpush1.msra.mxu0 0.0
    %3628 = vmatprep.mubr.f32.mxu0 %v2983
    %3629 = vmatmul.mubr.f32.gmra.mrb[0].mxu0 %v1048
    %v3630 = vpop.f32.mrb[0].mxu0
    %v3631 = vadd.f32 %v3518, %v3630
    %v3632 = vpop.f32.mrb[0].mxu0
    %v3633 = vadd.f32 %v3520, %v3632
    %3634 = vmatprep.mubr.f32.mxu0 %v2985
    %3635 = vmatmul.mubr.f32.gmra.mrb[0].mxu0 %v1052
    %v3636 = vpop.f32.mrb[0].mxu0
    %v3637 = vadd.f32 %v3524, %v3636
    %v3638 = vpop.f32.mrb[0].mxu0
    %v3639 = vadd.f32 %v3526, %v3638
    %3640 = vmatprep.mubr.f32.mxu0 %v2987
    %3641 = vmatmul.mubr.f32.gmra.mrb[0].mxu0 %v1056
    %v3642 = vpop.f32.mrb[0].mxu0
    %v3643 = vadd.f32 %v3530, %v3642
    %v3644 = vpop.f32.mrb[0].mxu0
    %v3645 = vadd.f32 %v3532, %v3644
    %3646 = vmatprep.mubr.f32.mxu0 %v2989
    %3647 = vmatmul.mubr.f32.gmra.mrb[0].mxu0 %v1060
    %v3648 = vpop.f32.mrb[0].mxu0
    %v3649 = vadd.f32 %v3536, %v3648
    %v3650 = vpop.f32.mrb[0].mxu0
    %v3651 = vadd.f32 %v3538, %v3650
    %3652 = vmatprep.mubr.f32.mxu0 %v2991
    %3653 = vmatmul.mubr.f32.gmra.mrb[0].mxu0 %v1064
    %v3654 = vpop.f32.mrb[0].mxu0
    %v3655 = vadd.f32 %v3542, %v3654
    %v3656 = vpop.f32.mrb[0].mxu0
    %v3657 = vadd.f32 %v3544, %v3656
    %3658 = vmatprep.mubr.f32.mxu0 %v2993
    %3659 = vmatmul.mubr.f32.gmra.mrb[0].mxu0 %v1068
    %v3660 = vpop.f32.mrb[0].mxu0
    %v3661 = vadd.f32 %v3548, %v3660
    %v3662 = vpop.f32.mrb[0].mxu0
    %v3663 = vadd.f32 %v3550, %v3662
    %3664 = vmatprep.mubr.f32.mxu0 %v2995
    %3665 = vmatmul.mubr.f32.gmra.mrb[0].mxu0 %v1072
    %v3666 = vpop.f32.mrb[0].mxu0
    %v3667 = vadd.f32 %v3554, %v3666
    %v3668 = vpop.f32.mrb[0].mxu0
    %v3669 = vadd.f32 %v3556, %v3668
    %3670 = vmatprep.mubr.f32.mxu0 %v2997
    %3671 = vmatmul.mubr.f32.gmra.mrb[0].mxu0 %v1076
    %v3672 = vpop.f32.mrb[0].mxu0
    %v3673 = vadd.f32 %v3560, %v3672
    %v3674 = vpop.f32.mrb[0].mxu0
    %v3675 = vadd.f32 %v3562, %v3674
    %3676 = vdwg.mxu0
    %3677 = vmatprep.subr.mxu0 0.0
    %3678 = vmatpush1.msra.mxu0 %v1214
    %3679 = vmatprep.subr.mxu0 0.0
    %3680 = vmatpush1.msra.mxu0 %v1221
    %3681 = vmatprep.subr.mxu0 0.0
    %3682 = vmatpush1.msra.mxu0 %v1228
    %3683 = vmatprep.subr.mxu0 0.0
    %3684 = vmatpush1.msra.mxu0 %v1235
    %3685 = vmatprep.subr.mxu0 0.0
    %3686 = vmatpush1.msra.mxu0 %v1242
    %3687 = vmatprep.subr.mxu0 0.0
    %3688 = vmatpush1.msra.mxu0 %v1249
    %3689 = vmatprep.subr.mxu0 0.0
    %3690 = vmatpush1.msra.mxu0 %v1256
    %3691 = vmatprep.subr.mxu0 0.0
    %3692 = vmatpush1.msra.mxu0 %v1263
    %3693 = vmatprep.subr.mxu0 0.0
    %3694 = vmatpush1.msra.mxu0 %v1270
    %3695 = vmatprep.subr.mxu0 0.0
    %3696 = vmatpush1.msra.mxu0 %v1277
    %3697 = vmatprep.subr.mxu0 0.0
    %3698 = vmatpush1.msra.mxu0 %v1284
    %3699 = vmatprep.subr.mxu0 0.0
    %3700 = vmatpush1.msra.mxu0 %v1291
    %3701 = vmatprep.subr.mxu0 0.0
    %3702 = vmatpush1.msra.mxu0 %v1298
    %3703 = vmatprep.subr.mxu0 0.0
    %3704 = vmatpush1.msra.mxu0 %v1305
    %3705 = vmatprep.subr.mxu0 0.0
    %3706 = vmatpush1.msra.mxu0 %v1312
    %3707 = vmatprep.subr.mxu0 0.0
    %3708 = vmatpush1.msra.mxu0 %v1319
    %3709 = vmatprep.subr.mxu0 0.0
    %3710 = vmatpush1.msra.mxu0 %v1326
    %3711 = vmatprep.subr.mxu0 0.0
    %3712 = vmatpush1.msra.mxu0 %v1333
    %3713 = vmatprep.subr.mxu0 0.0
    %3714 = vmatpush1.msra.mxu0 %v1340
    %3715 = vmatprep.subr.mxu0 0.0
    %3716 = vmatpush1.msra.mxu0 %v1347
    %3717 = vmatprep.subr.mxu0 0.0
    %3718 = vmatpush1.msra.mxu0 %v1354
    %3719 = vmatprep.subr.mxu0 0.0
    %3720 = vmatpush1.msra.mxu0 %v1361
    %3721 = vmatprep.subr.mxu0 0.0
    %3722 = vmatpush1.msra.mxu0 %v1368
    %3723 = vmatprep.subr.mxu0 0.0
    %3724 = vmatpush1.msra.mxu0 %v1375
    %3725 = vmatprep.subr.mxu0 0.0
    %3726 = vmatpush1.msra.mxu0 %v1382
    %3727 = vmatprep.subr.mxu0 0.0
    %3728 = vmatpush1.msra.mxu0 %v1389
    %3729 = vmatprep.subr.mxu0 0.0
    %3730 = vmatpush1.msra.mxu0 %v1396
    %3731 = vmatprep.subr.mxu0 0.0
    %3732 = vmatpush1.msra.mxu0 %v1403
    %3733 = vmatprep.subr.mxu0 0.0
    %3734 = vmatpush1.msra.mxu0 %v1410
    %3735 = vmatprep.subr.mxu0 0.0
    %3736 = vmatpush1.msra.mxu0 %v1417
    %3737 = vmatprep.subr.mxu0 0.0
    %3738 = vmatpush1.msra.mxu0 %v1424
    %3739 = vmatprep.subr.mxu0 0.0
    %3740 = vmatpush1.msra.mxu0 %v1431
    %3741 = vmatprep.mubr.f32.mxu0 %v1047
    %3742 = vmatmul.mubr.f32.gmra.mrb[0].mxu0 %v1046
    %v3743 = vpop.f32.mrb[0].mxu0
    %v3744 = vadd.f32 %v2945, %v3743
    %v3745 = vpop.f32.mrb[0].mxu0
    %3746 = vmatprep.mubr.f32.mxu0 %v1051
    %3747 = vmatmul.mubr.f32.gmra.mrb[0].mxu0 %v1050
    %v3748 = vpop.f32.mrb[0].mxu0
    %v3749 = vadd.f32 %v2950, %v3748
    %v3750 = vpop.f32.mrb[0].mxu0
    %3751 = vmatprep.mubr.f32.mxu0 %v1055
    %3752 = vmatmul.mubr.f32.gmra.mrb[0].mxu0 %v1054
    %v3753 = vpop.f32.mrb[0].mxu0
    %v3754 = vadd.f32 %v2955, %v3753
    %v3755 = vpop.f32.mrb[0].mxu0
    %3756 = vmatprep.mubr.f32.mxu0 %v1059
    %3757 = vmatmul.mubr.f32.gmra.mrb[0].mxu0 %v1058
    %v3758 = vpop.f32.mrb[0].mxu0
    %v3759 = vadd.f32 %v2960, %v3758
    %v3760 = vpop.f32.mrb[0].mxu0
    %3761 = vmatprep.mubr.f32.mxu0 %v1063
    %3762 = vmatmul.mubr.f32.gmra.mrb[0].mxu0 %v1062
    %v3763 = vpop.f32.mrb[0].mxu0
    %v3764 = vadd.f32 %v2965, %v3763
    %v3765 = vpop.f32.mrb[0].mxu0
    %3766 = vmatprep.mubr.f32.mxu0 %v1067
    %3767 = vmatmul.mubr.f32.gmra.mrb[0].mxu0 %v1066
    %v3768 = vpop.f32.mrb[0].mxu0
    %v3769 = vadd.f32 %v2970, %v3768
    %v3770 = vpop.f32.mrb[0].mxu0
    %3771 = vmatprep.mubr.f32.mxu0 %v1071
    %3772 = vmatmul.mubr.f32.gmra.mrb[0].mxu0 %v1070
    %v3773 = vpop.f32.mrb[0].mxu0
    %v3774 = vadd.f32 %v2975, %v3773
    %v3775 = vpop.f32.mrb[0].mxu0
    %3776 = vmatprep.mubr.f32.mxu0 %v1075
    %3777 = vmatmul.mubr.f32.gmra.mrb[0].mxu0 %v1074
    %v3778 = vpop.f32.mrb[0].mxu0
    %v3779 = vadd.f32 %v2980, %v3778
    %v3780 = vpop.f32.mrb[0].mxu0
    %3781 = vdwg.mxu0
    %3782 = vmatprep.subr.mxu0 0.0
    %3783 = vmatpush1.msra.mxu0 %v1438
    %3784 = vmatprep.subr.mxu0 0.0
    %3785 = vmatpush1.msra.mxu0 %v1445
    %3786 = vmatprep.subr.mxu0 0.0
    %3787 = vmatpush1.msra.mxu0 %v1452
    %3788 = vmatprep.subr.mxu0 0.0
    %3789 = vmatpush1.msra.mxu0 %v1459
    %3790 = vmatprep.subr.mxu0 0.0
    %3791 = vmatpush1.msra.mxu0 %v1466
    %3792 = vmatprep.subr.mxu0 0.0
    %3793 = vmatpush1.msra.mxu0 %v1473
    %3794 = vmatprep.subr.mxu0 0.0
    %3795 = vmatpush1.msra.mxu0 %v1480
    %3796 = vmatprep.subr.mxu0 0.0
    %3797 = vmatpush1.msra.mxu0 %v1487
    %3798 = vmatprep.subr.mxu0 0.0
    %3799 = vmatpush1.msra.mxu0 %v1494
    %3800 = vmatprep.subr.mxu0 0.0
    %3801 = vmatpush1.msra.mxu0 %v1501
    %3802 = vmatprep.subr.mxu0 0.0
    %3803 = vmatpush1.msra.mxu0 %v1508
    %3804 = vmatprep.subr.mxu0 0.0
    %3805 = vmatpush1.msra.mxu0 %v1515
    %3806 = vmatprep.subr.mxu0 0.0
    %3807 = vmatpush1.msra.mxu0 %v1522
    %3808 = vmatprep.subr.mxu0 0.0
    %3809 = vmatpush1.msra.mxu0 %v1529
    %3810 = vmatprep.subr.mxu0 0.0
    %3811 = vmatpush1.msra.mxu0 %v1536
    %3812 = vmatprep.subr.mxu0 0.0
    %3813 = vmatpush1.msra.mxu0 %v1543
    %3814 = vmatprep.subr.mxu0 0.0
    %3815 = vmatpush1.msra.mxu0 %v1550
    %3816 = vmatprep.subr.mxu0 0.0
    %3817 = vmatpush1.msra.mxu0 %v1557
    %3818 = vmatprep.subr.mxu0 0.0
    %3819 = vmatpush1.msra.mxu0 %v1564
    %3820 = vmatprep.subr.mxu0 0.0
    %3821 = vmatpush1.msra.mxu0 %v1571
    %3822 = vmatprep.subr.mxu0 0.0
    %3823 = vmatpush1.msra.mxu0 %v1578
    %3824 = vmatprep.subr.mxu0 0.0
    %3825 = vmatpush1.msra.mxu0 %v1585
    %3826 = vmatprep.subr.mxu0 0.0
    %3827 = vmatpush1.msra.mxu0 %v1592
    %3828 = vmatprep.subr.mxu0 0.0
    %3829 = vmatpush1.msra.mxu0 %v1599
    %3830 = vmatprep.subr.mxu0 0.0
    %3831 = vmatpush1.msra.mxu0 %v1606
    %3832 = vmatprep.subr.mxu0 0.0
    %3833 = vmatpush1.msra.mxu0 %v1613
    %3834 = vmatprep.subr.mxu0 0.0
    %3835 = vmatpush1.msra.mxu0 %v1620
    %3836 = vmatprep.subr.mxu0 0.0
    %3837 = vmatpush1.msra.mxu0 %v1627
    %3838 = vmatprep.subr.mxu0 0.0
    %3839 = vmatpush1.msra.mxu0 %v1634
    %3840 = vmatprep.subr.mxu0 0.0
    %3841 = vmatpush1.msra.mxu0 %v1641
    %3842 = vmatprep.subr.mxu0 0.0
    %3843 = vmatpush1.msra.mxu0 0.0
    %3844 = vmatprep.subr.mxu0 0.0
    %3845 = vmatpush1.msra.mxu0 0.0
    %3846 = vmatprep.mubr.f32.mxu0 %v2983
    %3847 = vmatmul.mubr.f32.gmra.mrb[0].mxu0 %v1048
    %v3848 = vpop.f32.mrb[0].mxu0
    %v3849 = vadd.f32 %v3744, %v3848
    %v3850 = vpop.f32.mrb[0].mxu0
    %3851 = vmatprep.mubr.f32.mxu0 %v2985
    %3852 = vmatmul.mubr.f32.gmra.mrb[0].mxu0 %v1052
    %v3853 = vpop.f32.mrb[0].mxu0
    %v3854 = vadd.f32 %v3749, %v3853
    %v3855 = vpop.f32.mrb[0].mxu0
    %3856 = vmatprep.mubr.f32.mxu0 %v2987
    %3857 = vmatmul.mubr.f32.gmra.mrb[0].mxu0 %v1056
    %v3858 = vpop.f32.mrb[0].mxu0
    %v3859 = vadd.f32 %v3754, %v3858
    %v3860 = vpop.f32.mrb[0].mxu0
    %3861 = vmatprep.mubr.f32.mxu0 %v2989
    %3862 = vmatmul.mubr.f32.gmra.mrb[0].mxu0 %v1060
    %v3863 = vpop.f32.mrb[0].mxu0
    %v3864 = vadd.f32 %v3759, %v3863
    %v3865 = vpop.f32.mrb[0].mxu0
    %3866 = vmatprep.mubr.f32.mxu0 %v2991
    %3867 = vmatmul.mubr.f32.gmra.mrb[0].mxu0 %v1064
    %v3868 = vpop.f32.mrb[0].mxu0
    %v3869 = vadd.f32 %v3764, %v3868
    %v3870 = vpop.f32.mrb[0].mxu0
    %3871 = vmatprep.mubr.f32.mxu0 %v2993
    %3872 = vmatmul.mubr.f32.gmra.mrb[0].mxu0 %v1068
    %v3873 = vpop.f32.mrb[0].mxu0
    %v3874 = vadd.f32 %v3769, %v3873
    %v3875 = vpop.f32.mrb[0].mxu0
    %3876 = vmatprep.mubr.f32.mxu0 %v2995
    %3877 = vmatmul.mubr.f32.gmra.mrb[0].mxu0 %v1072
    %v3878 = vpop.f32.mrb[0].mxu0
    %v3879 = vadd.f32 %v3774, %v3878
    %v3880 = vpop.f32.mrb[0].mxu0
    %3881 = vmatprep.mubr.f32.mxu0 %v2997
    %3882 = vmatmul.mubr.f32.gmra.mrb[0].mxu0 %v1076
    %v3883 = vpop.f32.mrb[0].mxu0
    %v3884 = vadd.f32 %v3779, %v3883
    %v3885 = vpop.f32.mrb[0].mxu0
    %3886 = vdwg.mxu0
    %v3887 = vld [vmem:[#allocation6] sm:$0xff]
    %v3889 = vlaneseq
    %v3890 = vshrl.u32 %v3889, 7
    %v3891 = vsub.s32 0, %v3890
    %v3892 = vrot.slane %v3887, %v3891
    %v3893 = vlaneseq
    %v3894 = vshrl.u32 %v3893, 7
    %v3895 = vsub.s32 1, %v3894
    %v3896 = vrot.slane %v3887, %v3895
    %v3897 = vlaneseq
    %v3898 = vshrl.u32 %v3897, 7
    %v3899 = vsub.s32 2, %v3898
    %v3900 = vrot.slane %v3887, %v3899
    %v3901 = vlaneseq
    %v3902 = vshrl.u32 %v3901, 7
    %v3903 = vsub.s32 3, %v3902
    %v3904 = vrot.slane %v3887, %v3903
    %v3905 = vlaneseq
    %v3906 = vshrl.u32 %v3905, 7
    %v3907 = vsub.s32 4, %v3906
    %v3908 = vrot.slane %v3887, %v3907
    %v3909 = vlaneseq
    %v3910 = vshrl.u32 %v3909, 7
    %v3911 = vsub.s32 5, %v3910
    %v3912 = vrot.slane %v3887, %v3911
    %v3913 = vlaneseq
    %v3914 = vshrl.u32 %v3913, 7
    %v3915 = vsub.s32 6, %v3914
    %v3916 = vrot.slane %v3887, %v3915
    %v3924 = vadd.f32 %v3179, %v3892
    %v3925 = vadd.f32 %v3181, %v3896
    %v3926 = vadd.f32 %v3405, %v3900
    %v3927 = vadd.f32 %v3407, %v3904
    %v3928 = vadd.f32 %v3631, %v3908
    %v3929 = vadd.f32 %v3633, %v3912
    %v3930 = vadd.f32 %v3849, %v3916
    %v3931 = vadd.f32 %v3185, %v3892
    %v3932 = vadd.f32 %v3187, %v3896
    %v3933 = vadd.f32 %v3411, %v3900
    %v3934 = vadd.f32 %v3413, %v3904
    %v3935 = vadd.f32 %v3637, %v3908
    %v3936 = vadd.f32 %v3639, %v3912
    %v3937 = vadd.f32 %v3854, %v3916
    %v3938 = vadd.f32 %v3191, %v3892
    %v3939 = vadd.f32 %v3193, %v3896
    %v3940 = vadd.f32 %v3417, %v3900
    %v3941 = vadd.f32 %v3419, %v3904
    %v3942 = vadd.f32 %v3643, %v3908
    %v3943 = vadd.f32 %v3645, %v3912
    %v3944 = vadd.f32 %v3859, %v3916
    %v3945 = vadd.f32 %v3197, %v3892
    %v3946 = vadd.f32 %v3199, %v3896
    %v3947 = vadd.f32 %v3423, %v3900
    %v3948 = vadd.f32 %v3425, %v3904
    %v3949 = vadd.f32 %v3649, %v3908
    %v3950 = vadd.f32 %v3651, %v3912
    %v3951 = vadd.f32 %v3864, %v3916
    %v3952 = vadd.f32 %v3203, %v3892
    %v3953 = vadd.f32 %v3205, %v3896
    %v3954 = vadd.f32 %v3429, %v3900
    %v3955 = vadd.f32 %v3431, %v3904
    %v3956 = vadd.f32 %v3655, %v3908
    %v3957 = vadd.f32 %v3657, %v3912
    %v3958 = vadd.f32 %v3869, %v3916
    %v3959 = vadd.f32 %v3209, %v3892
    %v3960 = vadd.f32 %v3211, %v3896
    %v3961 = vadd.f32 %v3435, %v3900
    %v3962 = vadd.f32 %v3437, %v3904
    %v3963 = vadd.f32 %v3661, %v3908
    %v3964 = vadd.f32 %v3663, %v3912
    %v3965 = vadd.f32 %v3874, %v3916
    %v3966 = vadd.f32 %v3215, %v3892
    %v3967 = vadd.f32 %v3217, %v3896
    %v3968 = vadd.f32 %v3441, %v3900
    %v3969 = vadd.f32 %v3443, %v3904
    %v3970 = vadd.f32 %v3667, %v3908
    %v3971 = vadd.f32 %v3669, %v3912
    %v3972 = vadd.f32 %v3879, %v3916
    %v3973 = vadd.f32 %v3221, %v3892
    %v3974 = vadd.f32 %v3223, %v3896
    %v3975 = vadd.f32 %v3447, %v3900
    %v3976 = vadd.f32 %v3449, %v3904
    %v3977 = vadd.f32 %v3673, %v3908
    %v3978 = vadd.f32 %v3675, %v3912
    %v3979 = vadd.f32 %v3884, %v3916
    %v3980 = vmax.f32 %v3924, 0.0
    %v3981 = vmax.f32 %v3925, 0.0
    %v3982 = vmax.f32 %v3926, 0.0
    %v3983 = vmax.f32 %v3927, 0.0
    %v3984 = vmax.f32 %v3928, 0.0
    %v3985 = vmax.f32 %v3929, 0.0
    %v3986 = vmax.f32 %v3930, 0.0
    %v3987 = vmax.f32 %v3931, 0.0
    %v3988 = vmax.f32 %v3932, 0.0
    %v3989 = vmax.f32 %v3933, 0.0
    %v3990 = vmax.f32 %v3934, 0.0
    %v3991 = vmax.f32 %v3935, 0.0
    %v3992 = vmax.f32 %v3936, 0.0
    %v3993 = vmax.f32 %v3937, 0.0
    %v3994 = vmax.f32 %v3938, 0.0
    %v3995 = vmax.f32 %v3939, 0.0
    %v3996 = vmax.f32 %v3940, 0.0
    %v3997 = vmax.f32 %v3941, 0.0
    %v3998 = vmax.f32 %v3942, 0.0
    %v3999 = vmax.f32 %v3943, 0.0
    %v4000 = vmax.f32 %v3944, 0.0
    %v4001 = vmax.f32 %v3945, 0.0
    %v4002 = vmax.f32 %v3946, 0.0
    %v4003 = vmax.f32 %v3947, 0.0
    %v4004 = vmax.f32 %v3948, 0.0
    %v4005 = vmax.f32 %v3949, 0.0
    %v4006 = vmax.f32 %v3950, 0.0
    %v4007 = vmax.f32 %v3951, 0.0
    %v4008 = vmax.f32 %v3952, 0.0
    %v4009 = vmax.f32 %v3953, 0.0
    %v4010 = vmax.f32 %v3954, 0.0
    %v4011 = vmax.f32 %v3955, 0.0
    %v4012 = vmax.f32 %v3956, 0.0
    %v4013 = vmax.f32 %v3957, 0.0
    %v4014 = vmax.f32 %v3958, 0.0
    %v4015 = vmax.f32 %v3959, 0.0
    %v4016 = vmax.f32 %v3960, 0.0
    %v4017 = vmax.f32 %v3961, 0.0
    %v4018 = vmax.f32 %v3962, 0.0
    %v4019 = vmax.f32 %v3963, 0.0
    %v4020 = vmax.f32 %v3964, 0.0
    %v4021 = vmax.f32 %v3965, 0.0
    %v4022 = vmax.f32 %v3966, 0.0
    %v4023 = vmax.f32 %v3967, 0.0
    %v4024 = vmax.f32 %v3968, 0.0
    %v4025 = vmax.f32 %v3969, 0.0
    %v4026 = vmax.f32 %v3970, 0.0
    %v4027 = vmax.f32 %v3971, 0.0
    %v4028 = vmax.f32 %v3972, 0.0
    %v4029 = vmax.f32 %v3973, 0.0
    %v4030 = vmax.f32 %v3974, 0.0
    %v4031 = vmax.f32 %v3975, 0.0
    %v4032 = vmax.f32 %v3976, 0.0
    %v4033 = vmax.f32 %v3977, 0.0
    %v4034 = vmax.f32 %v3978, 0.0
    %v4035 = vmax.f32 %v3979, 0.0
    %4092 = vrot.lane.b32.xlu0 %v3980, 96
    %v4093 = vpop.permute.xlu0 %4092
    %4094 = vrot.lane.b32.xlu0 %v3981, 96
    %v4095 = vpop.permute.xlu0 %4094
    %4096 = vrot.lane.b32.xlu0 %v3982, 96
    %v4097 = vpop.permute.xlu0 %4096
    %4098 = vrot.lane.b32.xlu0 %v3983, 96
    %v4099 = vpop.permute.xlu0 %4098
    %4100 = vrot.lane.b32.xlu0 %v3984, 96
    %v4101 = vpop.permute.xlu0 %4100
    %4102 = vrot.lane.b32.xlu0 %v3985, 96
    %v4103 = vpop.permute.xlu0 %4102
    %4104 = vrot.lane.b32.xlu0 %v3986, 96
    %v4105 = vpop.permute.xlu0 %4104
    %4106 = vrot.lane.b32.xlu0 %v3987, 96
    %v4107 = vpop.permute.xlu0 %4106
    %4108 = vrot.lane.b32.xlu0 %v3988, 96
    %v4109 = vpop.permute.xlu0 %4108
    %4110 = vrot.lane.b32.xlu0 %v3989, 96
    %v4111 = vpop.permute.xlu0 %4110
    %4112 = vrot.lane.b32.xlu0 %v3990, 96
    %v4113 = vpop.permute.xlu0 %4112
    %4114 = vrot.lane.b32.xlu0 %v3991, 96
    %v4115 = vpop.permute.xlu0 %4114
    %4116 = vrot.lane.b32.xlu0 %v3992, 96
    %v4117 = vpop.permute.xlu0 %4116
    %4118 = vrot.lane.b32.xlu0 %v3993, 96
    %v4119 = vpop.permute.xlu0 %4118
    %4120 = vrot.lane.b32.xlu0 %v3994, 96
    %v4121 = vpop.permute.xlu0 %4120
    %4122 = vrot.lane.b32.xlu0 %v3995, 96
    %v4123 = vpop.permute.xlu0 %4122
    %4124 = vrot.lane.b32.xlu0 %v3996, 96
    %v4125 = vpop.permute.xlu0 %4124
    %4126 = vrot.lane.b32.xlu0 %v3997, 96
    %v4127 = vpop.permute.xlu0 %4126
    %4128 = vrot.lane.b32.xlu0 %v3998, 96
    %v4129 = vpop.permute.xlu0 %4128
    %4130 = vrot.lane.b32.xlu0 %v3999, 96
    %v4131 = vpop.permute.xlu0 %4130
    %4132 = vrot.lane.b32.xlu0 %v4000, 96
    %v4133 = vpop.permute.xlu0 %4132
    %4134 = vrot.lane.b32.xlu0 %v4001, 96
    %v4135 = vpop.permute.xlu0 %4134
    %4136 = vrot.lane.b32.xlu0 %v4002, 96
    %v4137 = vpop.permute.xlu0 %4136
    %4138 = vrot.lane.b32.xlu0 %v4003, 96
    %v4139 = vpop.permute.xlu0 %4138
    %4140 = vrot.lane.b32.xlu0 %v4004, 96
    %v4141 = vpop.permute.xlu0 %4140
    %4142 = vrot.lane.b32.xlu0 %v4005, 96
    %v4143 = vpop.permute.xlu0 %4142
    %4144 = vrot.lane.b32.xlu0 %v4006, 96
    %v4145 = vpop.permute.xlu0 %4144
    %4146 = vrot.lane.b32.xlu0 %v4007, 96
    %v4147 = vpop.permute.xlu0 %4146
    %4148 = vrot.lane.b32.xlu0 %v4008, 96
    %v4149 = vpop.permute.xlu0 %4148
    %4150 = vrot.lane.b32.xlu0 %v4009, 96
    %v4151 = vpop.permute.xlu0 %4150
    %4152 = vrot.lane.b32.xlu0 %v4010, 96
    %v4153 = vpop.permute.xlu0 %4152
    %4154 = vrot.lane.b32.xlu0 %v4011, 96
    %v4155 = vpop.permute.xlu0 %4154
    %4156 = vrot.lane.b32.xlu0 %v4012, 96
    %v4157 = vpop.permute.xlu0 %4156
    %4158 = vrot.lane.b32.xlu0 %v4013, 96
    %v4159 = vpop.permute.xlu0 %4158
    %4160 = vrot.lane.b32.xlu0 %v4014, 96
    %v4161 = vpop.permute.xlu0 %4160
    %4162 = vrot.lane.b32.xlu0 %v4015, 96
    %v4163 = vpop.permute.xlu0 %4162
    %4164 = vrot.lane.b32.xlu0 %v4016, 96
    %v4165 = vpop.permute.xlu0 %4164
    %4166 = vrot.lane.b32.xlu0 %v4017, 96
    %v4167 = vpop.permute.xlu0 %4166
    %4168 = vrot.lane.b32.xlu0 %v4018, 96
    %v4169 = vpop.permute.xlu0 %4168
    %4170 = vrot.lane.b32.xlu0 %v4019, 96
    %v4171 = vpop.permute.xlu0 %4170
    %4172 = vrot.lane.b32.xlu0 %v4020, 96
    %v4173 = vpop.permute.xlu0 %4172
    %4174 = vrot.lane.b32.xlu0 %v4021, 96
    %v4175 = vpop.permute.xlu0 %4174
    %4176 = vrot.lane.b32.xlu0 %v4022, 96
    %v4177 = vpop.permute.xlu0 %4176
    %4178 = vrot.lane.b32.xlu0 %v4023, 96
    %v4179 = vpop.permute.xlu0 %4178
    %4180 = vrot.lane.b32.xlu0 %v4024, 96
    %v4181 = vpop.permute.xlu0 %4180
    %4182 = vrot.lane.b32.xlu0 %v4025, 96
    %v4183 = vpop.permute.xlu0 %4182
    %4184 = vrot.lane.b32.xlu0 %v4026, 96
    %v4185 = vpop.permute.xlu0 %4184
    %4186 = vrot.lane.b32.xlu0 %v4027, 96
    %v4187 = vpop.permute.xlu0 %4186
    %4188 = vrot.lane.b32.xlu0 %v4028, 96
    %v4189 = vpop.permute.xlu0 %4188
    %4190 = vrot.lane.b32.xlu0 %v4029, 96
    %v4191 = vpop.permute.xlu0 %4190
    %4192 = vrot.lane.b32.xlu0 %v4030, 96
    %v4193 = vpop.permute.xlu0 %4192
    %4194 = vrot.lane.b32.xlu0 %v4031, 96
    %v4195 = vpop.permute.xlu0 %4194
    %4196 = vrot.lane.b32.xlu0 %v4032, 96
    %v4197 = vpop.permute.xlu0 %4196
    %4198 = vrot.lane.b32.xlu0 %v4033, 96
    %v4199 = vpop.permute.xlu0 %4198
    %4200 = vrot.lane.b32.xlu0 %v4034, 96
    %v4201 = vpop.permute.xlu0 %4200
    %4202 = vrot.lane.b32.xlu0 %v4035, 96
    %v4203 = vpop.permute.xlu0 %4202
    %vm4204 = vcmask 785408
    %v4205 = vsel %vm4204, %v4093, %v4095
    %v4206 = vsel %vm4204, %v4095, %v4097
    %v4207 = vsel %vm4204, %v4097, %v4099
    %v4208 = vsel %vm4204, %v4099, %v4101
    %v4209 = vsel %vm4204, %v4101, %v4103
    %v4210 = vsel %vm4204, %v4103, %v4105
    %v4211 = vsel %vm4204, %v4107, %v4109
    %v4212 = vsel %vm4204, %v4109, %v4111
    %v4213 = vsel %vm4204, %v4111, %v4113
    %v4214 = vsel %vm4204, %v4113, %v4115
    %v4215 = vsel %vm4204, %v4115, %v4117
    %v4216 = vsel %vm4204, %v4117, %v4119
    %v4217 = vsel %vm4204, %v4121, %v4123
    %v4218 = vsel %vm4204, %v4123, %v4125
    %v4219 = vsel %vm4204, %v4125, %v4127
    %v4220 = vsel %vm4204, %v4127, %v4129
    %v4221 = vsel %vm4204, %v4129, %v4131
    %v4222 = vsel %vm4204, %v4131, %v4133
    %v4223 = vsel %vm4204, %v4135, %v4137
    %v4224 = vsel %vm4204, %v4137, %v4139
    %v4225 = vsel %vm4204, %v4139, %v4141
    %v4226 = vsel %vm4204, %v4141, %v4143
    %v4227 = vsel %vm4204, %v4143, %v4145
    %v4228 = vsel %vm4204, %v4145, %v4147
    %v4229 = vsel %vm4204, %v4149, %v4151
    %v4230 = vsel %vm4204, %v4151, %v4153
    %v4231 = vsel %vm4204, %v4153, %v4155
    %v4232 = vsel %vm4204, %v4155, %v4157
    %v4233 = vsel %vm4204, %v4157, %v4159
    %v4234 = vsel %vm4204, %v4159, %v4161
    %v4235 = vsel %vm4204, %v4163, %v4165
    %v4236 = vsel %vm4204, %v4165, %v4167
    %v4237 = vsel %vm4204, %v4167, %v4169
    %v4238 = vsel %vm4204, %v4169, %v4171
    %v4239 = vsel %vm4204, %v4171, %v4173
    %v4240 = vsel %vm4204, %v4173, %v4175
    %v4241 = vsel %vm4204, %v4177, %v4179
    %v4242 = vsel %vm4204, %v4179, %v4181
    %v4243 = vsel %vm4204, %v4181, %v4183
    %v4244 = vsel %vm4204, %v4183, %v4185
    %v4245 = vsel %vm4204, %v4185, %v4187
    %v4246 = vsel %vm4204, %v4187, %v4189
    %v4247 = vsel %vm4204, %v4191, %v4193
    %v4248 = vsel %vm4204, %v4193, %v4195
    %v4249 = vsel %vm4204, %v4195, %v4197
    %v4250 = vsel %vm4204, %v4197, %v4199
    %v4251 = vsel %vm4204, %v4199, %v4201
    %v4252 = vsel %vm4204, %v4201, %v4203
    %v4301 = vmax.f32 %v3980, %v4205
    %v4302 = vmax.f32 %v3981, %v4206
    %v4303 = vmax.f32 %v3982, %v4207
    %v4304 = vmax.f32 %v3983, %v4208
    %v4305 = vmax.f32 %v3984, %v4209
    %v4306 = vmax.f32 %v3985, %v4210
    %v4307 = vmax.f32 %v3987, %v4211
    %v4308 = vmax.f32 %v3988, %v4212
    %v4309 = vmax.f32 %v3989, %v4213
    %v4310 = vmax.f32 %v3990, %v4214
    %v4311 = vmax.f32 %v3991, %v4215
    %v4312 = vmax.f32 %v3992, %v4216
    %v4313 = vmax.f32 %v3994, %v4217
    %v4314 = vmax.f32 %v3995, %v4218
    %v4315 = vmax.f32 %v3996, %v4219
    %v4316 = vmax.f32 %v3997, %v4220
    %v4317 = vmax.f32 %v3998, %v4221
    %v4318 = vmax.f32 %v3999, %v4222
    %v4319 = vmax.f32 %v4001, %v4223
    %v4320 = vmax.f32 %v4002, %v4224
    %v4321 = vmax.f32 %v4003, %v4225
    %v4322 = vmax.f32 %v4004, %v4226
    %v4323 = vmax.f32 %v4005, %v4227
    %v4324 = vmax.f32 %v4006, %v4228
    %v4325 = vmax.f32 %v4008, %v4229
    %v4326 = vmax.f32 %v4009, %v4230
    %v4327 = vmax.f32 %v4010, %v4231
    %v4328 = vmax.f32 %v4011, %v4232
    %v4329 = vmax.f32 %v4012, %v4233
    %v4330 = vmax.f32 %v4013, %v4234
    %v4331 = vmax.f32 %v4015, %v4235
    %v4332 = vmax.f32 %v4016, %v4236
    %v4333 = vmax.f32 %v4017, %v4237
    %v4334 = vmax.f32 %v4018, %v4238
    %v4335 = vmax.f32 %v4019, %v4239
    %v4336 = vmax.f32 %v4020, %v4240
    %v4337 = vmax.f32 %v4022, %v4241
    %v4338 = vmax.f32 %v4023, %v4242
    %v4339 = vmax.f32 %v4024, %v4243
    %v4340 = vmax.f32 %v4025, %v4244
    %v4341 = vmax.f32 %v4026, %v4245
    %v4342 = vmax.f32 %v4027, %v4246
    %v4343 = vmax.f32 %v4029, %v4247
    %v4344 = vmax.f32 %v4030, %v4248
    %v4345 = vmax.f32 %v4031, %v4249
    %v4346 = vmax.f32 %v4032, %v4250
    %v4347 = vmax.f32 %v4033, %v4251
    %v4348 = vmax.f32 %v4034, %v4252
    %v4397 = vrot.slane %v4301, 1
    %v4398 = vrot.slane %v4307, 1
    %v4399 = vsel %vm73, %v4397, %v4398
    %v4400 = vrot.slane %v4302, 1
    %v4401 = vrot.slane %v4308, 1
    %v4402 = vsel %vm73, %v4400, %v4401
    %v4403 = vrot.slane %v4303, 1
    %v4404 = vrot.slane %v4309, 1
    %v4405 = vsel %vm73, %v4403, %v4404
    %v4406 = vrot.slane %v4304, 1
    %v4407 = vrot.slane %v4310, 1
    %v4408 = vsel %vm73, %v4406, %v4407
    %v4409 = vrot.slane %v4305, 1
    %v4410 = vrot.slane %v4311, 1
    %v4411 = vsel %vm73, %v4409, %v4410
    %v4412 = vrot.slane %v4306, 1
    %v4413 = vrot.slane %v4312, 1
    %v4414 = vsel %vm73, %v4412, %v4413
    %v4415 = vrot.slane %v4313, 1
    %v4416 = vsel %vm73, %v4398, %v4415
    %v4417 = vrot.slane %v4314, 1
    %v4418 = vsel %vm73, %v4401, %v4417
    %v4419 = vrot.slane %v4315, 1
    %v4420 = vsel %vm73, %v4404, %v4419
    %v4421 = vrot.slane %v4316, 1
    %v4422 = vsel %vm73, %v4407, %v4421
    %v4423 = vrot.slane %v4317, 1
    %v4424 = vsel %vm73, %v4410, %v4423
    %v4425 = vrot.slane %v4318, 1
    %v4426 = vsel %vm73, %v4413, %v4425
    %v4427 = vrot.slane %v4319, 1
    %v4428 = vsel %vm73, %v4415, %v4427
    %v4429 = vrot.slane %v4320, 1
    %v4430 = vsel %vm73, %v4417, %v4429
    %v4431 = vrot.slane %v4321, 1
    %v4432 = vsel %vm73, %v4419, %v4431
    %v4433 = vrot.slane %v4322, 1
    %v4434 = vsel %vm73, %v4421, %v4433
    %v4435 = vrot.slane %v4323, 1
    %v4436 = vsel %vm73, %v4423, %v4435
    %v4437 = vrot.slane %v4324, 1
    %v4438 = vsel %vm73, %v4425, %v4437
    %v4439 = vrot.slane %v4325, 1
    %v4440 = vrot.slane %v4331, 1
    %v4441 = vsel %vm73, %v4439, %v4440
    %v4442 = vrot.slane %v4326, 1
    %v4443 = vrot.slane %v4332, 1
    %v4444 = vsel %vm73, %v4442, %v4443
    %v4445 = vrot.slane %v4327, 1
    %v4446 = vrot.slane %v4333, 1
    %v4447 = vsel %vm73, %v4445, %v4446
    %v4448 = vrot.slane %v4328, 1
    %v4449 = vrot.slane %v4334, 1
    %v4450 = vsel %vm73, %v4448, %v4449
    %v4451 = vrot.slane %v4329, 1
    %v4452 = vrot.slane %v4335, 1
    %v4453 = vsel %vm73, %v4451, %v4452
    %v4454 = vrot.slane %v4330, 1
    %v4455 = vrot.slane %v4336, 1
    %v4456 = vsel %vm73, %v4454, %v4455
    %v4457 = vrot.slane %v4337, 1
    %v4458 = vsel %vm73, %v4440, %v4457
    %v4459 = vrot.slane %v4338, 1
    %v4460 = vsel %vm73, %v4443, %v4459
    %v4461 = vrot.slane %v4339, 1
    %v4462 = vsel %vm73, %v4446, %v4461
    %v4463 = vrot.slane %v4340, 1
    %v4464 = vsel %vm73, %v4449, %v4463
    %v4465 = vrot.slane %v4341, 1
    %v4466 = vsel %vm73, %v4452, %v4465
    %v4467 = vrot.slane %v4342, 1
    %v4468 = vsel %vm73, %v4455, %v4467
    %v4469 = vrot.slane %v4343, 1
    %v4470 = vsel %vm73, %v4457, %v4469
    %v4471 = vrot.slane %v4344, 1
    %v4472 = vsel %vm73, %v4459, %v4471
    %v4473 = vrot.slane %v4345, 1
    %v4474 = vsel %vm73, %v4461, %v4473
    %v4475 = vrot.slane %v4346, 1
    %v4476 = vsel %vm73, %v4463, %v4475
    %v4477 = vrot.slane %v4347, 1
    %v4478 = vsel %vm73, %v4465, %v4477
    %v4479 = vrot.slane %v4348, 1
    %v4480 = vsel %vm73, %v4467, %v4479
    %v4517 = vmax.f32 %v4301, %v4399
    %v4518 = vmax.f32 %v4302, %v4402
    %v4519 = vmax.f32 %v4303, %v4405
    %v4520 = vmax.f32 %v4304, %v4408
    %v4521 = vmax.f32 %v4305, %v4411
    %v4522 = vmax.f32 %v4306, %v4414
    %v4523 = vmax.f32 %v4307, %v4416
    %v4524 = vmax.f32 %v4308, %v4418
    %v4525 = vmax.f32 %v4309, %v4420
    %v4526 = vmax.f32 %v4310, %v4422
    %v4527 = vmax.f32 %v4311, %v4424
    %v4528 = vmax.f32 %v4312, %v4426
    %v4529 = vmax.f32 %v4313, %v4428
    %v4530 = vmax.f32 %v4314, %v4430
    %v4531 = vmax.f32 %v4315, %v4432
    %v4532 = vmax.f32 %v4316, %v4434
    %v4533 = vmax.f32 %v4317, %v4436
    %v4534 = vmax.f32 %v4318, %v4438
    %v4535 = vmax.f32 %v4325, %v4441
    %v4536 = vmax.f32 %v4326, %v4444
    %v4537 = vmax.f32 %v4327, %v4447
    %v4538 = vmax.f32 %v4328, %v4450
    %v4539 = vmax.f32 %v4329, %v4453
    %v4540 = vmax.f32 %v4330, %v4456
    %v4541 = vmax.f32 %v4331, %v4458
    %v4542 = vmax.f32 %v4332, %v4460
    %v4543 = vmax.f32 %v4333, %v4462
    %v4544 = vmax.f32 %v4334, %v4464
    %v4545 = vmax.f32 %v4335, %v4466
    %v4546 = vmax.f32 %v4336, %v4468
    %v4547 = vmax.f32 %v4337, %v4470
    %v4548 = vmax.f32 %v4338, %v4472
    %v4549 = vmax.f32 %v4339, %v4474
    %v4550 = vmax.f32 %v4340, %v4476
    %v4551 = vmax.f32 %v4341, %v4478
    %v4552 = vmax.f32 %v4342, %v4480
    %v4553 = vpack.c.bf16 %v4523, %v4517
    %v4554 = vpack.c.bf16 %v4524, %v4518
    %v4555 = vpack.c.bf16 %v4525, %v4519
    %v4556 = vpack.c.bf16 %v4526, %v4520
    %v4557 = vpack.c.bf16 %v4527, %v4521
    %v4558 = vpack.c.bf16 %v4528, %v4522
    %v4559 = vpack.c.bf16 %v4529, %v4529
    %v4560 = vpack.c.bf16 %v4530, %v4530
    %v4561 = vpack.c.bf16 %v4531, %v4531
    %v4562 = vpack.c.bf16 %v4532, %v4532
    %v4563 = vpack.c.bf16 %v4533, %v4533
    %v4564 = vpack.c.bf16 %v4534, %v4534
    %v4565 = vpack.c.bf16 %v4541, %v4535
    %v4566 = vpack.c.bf16 %v4542, %v4536
    %v4567 = vpack.c.bf16 %v4543, %v4537
    %v4568 = vpack.c.bf16 %v4544, %v4538
    %v4569 = vpack.c.bf16 %v4545, %v4539
    %v4570 = vpack.c.bf16 %v4546, %v4540
    %v4571 = vpack.c.bf16 %v4547, %v4547
    %v4572 = vpack.c.bf16 %v4548, %v4548
    %v4573 = vpack.c.bf16 %v4549, %v4549
    %v4574 = vpack.c.bf16 %v4550, %v4550
    %v4575 = vpack.c.bf16 %v4551, %v4551
    %v4576 = vpack.c.bf16 %v4552, %v4552
    %v4601 = vunpack.c.l.b16 %v4553
    %v4602 = vunpack.c.l.b16 %v4554
    %v4603 = vunpack.c.l.b16 %v4555
    %v4604 = vunpack.c.l.b16 %v4556
    %v4605 = vunpack.c.l.b16 %v4557
    %v4606 = vunpack.c.l.b16 %v4558
    %v4607 = vunpack.c.h.b16 %v4553
    %v4608 = vunpack.c.h.b16 %v4554
    %v4609 = vunpack.c.h.b16 %v4555
    %v4610 = vunpack.c.h.b16 %v4556
    %v4611 = vunpack.c.h.b16 %v4557
    %v4612 = vunpack.c.h.b16 %v4558
    %v4613 = vunpack.c.l.b16 %v4559
    %v4614 = vunpack.c.l.b16 %v4560
    %v4615 = vunpack.c.l.b16 %v4561
    %v4616 = vunpack.c.l.b16 %v4562
    %v4617 = vunpack.c.l.b16 %v4563
    %v4618 = vunpack.c.l.b16 %v4564
    %v4619 = vunpack.c.l.b16 %v4565
    %v4620 = vunpack.c.l.b16 %v4566
    %v4621 = vunpack.c.l.b16 %v4567
    %v4622 = vunpack.c.l.b16 %v4568
    %v4623 = vunpack.c.l.b16 %v4569
    %v4624 = vunpack.c.l.b16 %v4570
    %v4625 = vunpack.c.h.b16 %v4565
    %v4626 = vunpack.c.h.b16 %v4566
    %v4627 = vunpack.c.h.b16 %v4567
    %v4628 = vunpack.c.h.b16 %v4568
    %v4629 = vunpack.c.h.b16 %v4569
    %v4630 = vunpack.c.h.b16 %v4570
    %v4631 = vunpack.c.l.b16 %v4571
    %v4632 = vunpack.c.l.b16 %v4572
    %v4633 = vunpack.c.l.b16 %v4573
    %v4634 = vunpack.c.l.b16 %v4574
    %v4635 = vunpack.c.l.b16 %v4575
    %v4636 = vunpack.c.l.b16 %v4576
    %v4637 = vpack.c.b16 %v4602, %v4601
    %v4638 = vpack.c.b16 %v4604, %v4603
    %v4639 = vpack.c.b16 %v4606, %v4605
    %v4640 = vpack.c.b16 %v4608, %v4607
    %v4641 = vpack.c.b16 %v4610, %v4609
    %v4642 = vpack.c.b16 %v4612, %v4611
    %v4643 = vpack.c.b16 %v4614, %v4613
    %v4644 = vpack.c.b16 %v4616, %v4615
    %v4645 = vpack.c.b16 %v4618, %v4617
    %v4646 = vpack.c.b16 %v4620, %v4619
    %v4647 = vpack.c.b16 %v4622, %v4621
    %v4648 = vpack.c.b16 %v4624, %v4623
    %v4649 = vpack.c.b16 %v4626, %v4625
    %v4650 = vpack.c.b16 %v4628, %v4627
    %v4651 = vpack.c.b16 %v4630, %v4629
    %v4652 = vpack.c.b16 %v4632, %v4631
    %v4653 = vpack.c.b16 %v4634, %v4633
    %v4654 = vpack.c.b16 %v4636, %v4635
    %4673 = vst [vmem:[%s5] sm:$0xff] %v4637
    %4674 = vst [vmem:[%s5 + $0x8] sm:$0xff] %v4638
    %4675 = vst [vmem:[%s5 + $0x10] sm:$0xff] %v4639
    %4676 = vst [vmem:[%s5 + $0x18] sm:$0xff] %v4640
    %4677 = vst [vmem:[%s5 + $0x20] sm:$0xff] %v4641
    %4678 = vst [vmem:[%s5 + $0x28] sm:$0xff] %v4642
    %4679 = vst [vmem:[%s5 + $0x30] sm:$0xff] %v4643
    %4680 = vst [vmem:[%s5 + $0x38] sm:$0xff] %v4644
    %4681 = vst [vmem:[%s5 + $0x40] sm:$0xff] %v4645
    %4682 = vst [vmem:[%s5 + $0x48] sm:$0xff] %v4646
    %4683 = vst [vmem:[%s5 + $0x50] sm:$0xff] %v4647
    %4684 = vst [vmem:[%s5 + $0x58] sm:$0xff] %v4648
    %4685 = vst [vmem:[%s5 + $0x60] sm:$0xff] %v4649
    %4686 = vst [vmem:[%s5 + $0x68] sm:$0xff] %v4650
    %4687 = vst [vmem:[%s5 + $0x70] sm:$0xff] %v4651
    %4688 = vst [vmem:[%s5 + $0x78] sm:$0xff] %v4652
    %4689 = vst [vmem:[%s5 + $0x80] sm:$0xff] %v4653
    %4690 = vst [vmem:[%s5 + $0x88] sm:$0xff] %v4654
    // Predicated region
    $region34: #{net_forward.2} parent=1 // pred_check
      _
    $region35: #{net_forward.2} parent=1 // pred_check_branch
      %4692 = sbr.rel (0) target = $region37
    $region36: #{net_forward.2} parent=1 // pred_region
      _
    $region37: #{net_forward.2} parent=1 // pred_fallthru
      _
    // Predicated region
    $region38: #{net_forward.2} parent=1 // pred_check
      _
    $region39: #{net_forward.2} parent=1 // pred_check_branch
      %4694 = sbr.rel (0) target = $region41
    $region40: #{net_forward.2} parent=1 // pred_region
      _
    $region41: #{net_forward.2} parent=1 // pred_fallthru
      _
    %4695 = vsyncpa [#allocation3], 1
    %4696 = vsyncpa [#allocation5], 1

</llo_original>
